<compile_context>
chip_gen: v7x
topology: tpu7x:2x2x1
jax: 0.10.0
libtpu: 0.0.40
codegen_flags: <defaults>
</compile_context>

<pallas_src>
import functools

import jax
import jax.numpy as jnp
from jax import lax
from jax.experimental import pallas as pl
from jax.experimental.pallas import tpu as pltpu

EPS = 1e-5
EXPANSION = 4
LANE = 128


# ----------------------- per-generation tuning knobs -------------------------
@functools.lru_cache(maxsize=1)
def _tpu_caps():
    """(max_tile_rows, vmem_limit_bytes) sized per TPU generation."""
    vmem_phys = 64 * 1024 * 1024
    try:
        vmem_phys = int(pltpu.get_tpu_info().vmem_capacity_bytes)
    except Exception:
        pass
    if vmem_phys >= 96 * 1024 * 1024:        # v5e / v6e: 128 MiB VMEM
        return 1024, 96 * 1024 * 1024
    return 512, 40 * 1024 * 1024             # v7x-class: 64 MiB physical VMEM


# ----------------------------- small utilities -------------------------------
def _rup128(n):
    return ((n + LANE - 1) // LANE) * LANE


def _pad_axis(a, axis, target):
    pad = target - a.shape[axis]
    if pad == 0:
        return a
    widths = [(0, 0)] * a.ndim
    widths[axis] = (0, pad)
    return jnp.pad(a, widths)


def _pick_tile(m, cap):
    """Largest divisor of m that is <= cap, preferring multiples of 8."""
    cap = min(cap, m)
    best, best8 = 1, 0
    d = 1
    while d * d <= m:
        if m % d == 0:
            for t in (d, m // d):
                if t <= cap:
                    best = max(best, t)
                    if t % 8 == 0:
                        best8 = max(best8, t)
        d += 1
    # TODO(synk): for awkward m with no multiple-of-8 divisor <= cap, pad the
    # row dim and mask padded rows out of the BN statistics instead.
    return best8 if best8 else best


def _pick_row_tile(m, bytes_per_row, resident_bytes, vmem_limit, cap):
    """Row tile keeping resident weights + double-buffered tiles in budget."""
    budget = int(0.70 * vmem_limit) - resident_bytes
    if budget <= 0:
        budget = vmem_limit // 4
    cap = max(8, min(cap, budget // max(1, 2 * bytes_per_row)))
    return _pick_tile(m, cap)


def _cparams(vmem_limit):
    return pltpu.CompilerParams(dimension_semantics=("parallel",),
                                vmem_limit_bytes=vmem_limit)


def _row_spec(tile, cols):          # activation tile, indexed by grid step
    return pl.BlockSpec((tile, cols), lambda i: (i, 0))


def _full_spec(shape):              # resident (weights / folded BN params)
    nd = len(shape)
    return pl.BlockSpec(shape, lambda i: (0,) * nd)


def _stat_spec(cols):               # per-tile BN partial statistics (8 rows)
    return pl.BlockSpec((1, 8, cols), lambda i: (i, 0, 0))


def _img_spec(block4):              # one NHWC image per grid step
    return pl.BlockSpec(block4, lambda b: (b, 0, 0, 0))


# ------------------------------ kernel helpers --------------------------------
def _stats_block(y):
    # y: (rows, C) f32 -> (1, 8, C); rows 0/1 hold [sum, sum_sq], rest zero.
    # 8 sublanes => unmasked store of the per-tile partials.
    c = y.shape[-1]
    s0 = jnp.sum(y, axis=0, keepdims=True)
    s1 = jnp.sum(y * y, axis=0, keepdims=True)
    pad = jnp.zeros((6, c), jnp.float32)
    return jnp.concatenate([s0, s1, pad], axis=0).reshape(1, 8, c)


def _affine_relu(y_ref, s_ref, b_ref):
    # folded BN affine (+ReLU) of the previous layer, applied on read (f32).
    return jnp.maximum(y_ref[...].astype(jnp.float32) * s_ref[...] + b_ref[...],
                       0.0)


# --------------------------------- kernels ------------------------------------
def _conv1x1_stats_kernel(x_ref, w_ref, y_ref, st_ref):
    # conv1 (1x1): bf16 MXU matmul, f32 accumulation, streamed BN1 partials.
    y = jnp.dot(x_ref[...], w_ref[...], preferred_element_type=jnp.float32)
    y_ref[...] = y.astype(y_ref.dtype)
    st_ref[...] = _stats_block(y)


def _conv3x3_stats_kernel(h1_ref, s_ref, b_ref, w_ref, y_ref, st_ref,
                          shift_ref, *, hh, ww, ho, wo, stride):
    # bn1-apply + relu fused with conv2 (3x3, pad=1, stride).
    # shift_ref (bf16, (hh+2, wo, 3*C)) holds the three kw-shifted copies of
    # the zero-padded image contiguously on the lane axis; each kh tap is then
    # a leading-axis row slice and one MXU matmul with K = 3*C.
    c = s_ref.shape[-1]
    scale = s_ref[...].reshape(1, 1, c)
    bias = b_ref[...].reshape(1, 1, c)
    act = jnp.maximum(h1_ref[0].astype(jnp.float32) * scale + bias,
                      0.0).astype(jnp.bfloat16)

    # Zero only the halo cells; the interior is fully rewritten every step,
    # so no whole-scratch memset and no cross-grid-step dependence.
    zrow = jnp.zeros((1, wo, 3 * c), jnp.bfloat16)
    shift_ref[0:1, :, :] = zrow
    shift_ref[hh + 1:hh + 2, :, :] = zrow
    shift_ref[1:hh + 1, 0:1, 0:c] = jnp.zeros((hh, 1, c), jnp.bfloat16)
    nv2 = min(wo, (ww - 2) // stride + 1)        # valid output cols for kw=2
    if nv2 < wo:
        shift_ref[1:hh + 1, nv2:wo, 2 * c:3 * c] = jnp.zeros(
            (hh, wo - nv2, c), jnp.bfloat16)

    if stride == 1:
        shift_ref[1:hh + 1, 1:wo, 0:c] = act[:, :ww - 1, :]
        shift_ref[1:hh + 1, :, c:2 * c] = act
        shift_ref[1:hh + 1, 0:wo - 1, 2 * c:3 * c] = act[:, 1:, :]
    else:
        # TODO(synk): strided value slices / strided leading-axis pl.ds reads
        # are only exercised when a block uses stride != 1 (untested here).
        shift_ref[1:hh + 1, 1:wo, 0:c] = \
            act[:, stride - 1:(wo - 1) * stride:stride, :]
        shift_ref[1:hh + 1, :, c:2 * c] = \
            act[:, 0:(wo - 1) * stride + 1:stride, :]
        shift_ref[1:hh + 1, 0:nv2, 2 * c:3 * c] = \
            act[:, 1:(nv2 - 1) * stride + 2:stride, :]

    # Accumulate the 3 kh taps in a kernel-local value (no scratch RMW).
    acc = jnp.zeros((ho * wo, c), jnp.float32)
    for kh in range(3):
        if stride == 1:
            rows = shift_ref[kh:kh + ho, :, :]
        else:
            rows = shift_ref[pl.ds(kh, ho, stride), :, :]
        acc = acc + jnp.dot(rows.reshape(ho * wo, 3 * c), w_ref[kh],
                            preferred_element_type=jnp.float32)

    y_ref[...] = acc.reshape(1, ho, wo, c).astype(y_ref.dtype)
    st_ref[...] = _stats_block(acc)


def _conv3_sc_kernel(y2_ref, s2_ref, b2_ref, w3_ref, xsc_ref, ws_ref,
                     y3_ref, ysc_ref, st3_ref, sts_ref):
    # bn2-apply+relu fused with conv3 (1x1) and the 1x1 shortcut conv; streams
    # BN3 / BN_shortcut partial stats.
    h = _affine_relu(y2_ref, s2_ref, b2_ref).astype(jnp.bfloat16)
    y3 = jnp.dot(h, w3_ref[...], preferred_element_type=jnp.float32)
    ysc = jnp.dot(xsc_ref[...], ws_ref[...], preferred_element_type=jnp.float32)
    y3_ref[...] = y3.astype(y3_ref.dtype)
    ysc_ref[...] = ysc.astype(ysc_ref.dtype)
    st3_ref[...] = _stats_block(y3)
    sts_ref[...] = _stats_block(ysc)


def _conv3_id_kernel(y2_ref, s2_ref, b2_ref, w3_ref, y3_ref, st3_ref):
    h = _affine_relu(y2_ref, s2_ref, b2_ref).astype(jnp.bfloat16)
    y3 = jnp.dot(h, w3_ref[...], preferred_element_type=jnp.float32)
    y3_ref[...] = y3.astype(y3_ref.dtype)
    st3_ref[...] = _stats_block(y3)


def _final_sc_kernel(y3_ref, ysc_ref, s3_ref, b3_ref, ss_ref, bs_ref, o_ref):
    ce = o_ref.shape[-1]           # channel slice folded into the out_spec
    main = y3_ref[...].astype(jnp.float32) * s3_ref[...] + b3_ref[...]
    sc = ysc_ref[...].astype(jnp.float32) * ss_ref[...] + bs_ref[...]
    o_ref[...] = jnp.maximum(main + sc, 0.0)[:, :ce].astype(o_ref.dtype)


def _final_id_kernel(y3_ref, xid_ref, s3_ref, b3_ref, o_ref):
    ce = o_ref.shape[-1]
    main = y3_ref[...].astype(jnp.float32) * s3_ref[...] + b3_ref[...]
    out = jnp.maximum(main + xid_ref[...].astype(jnp.float32), 0.0)
    o_ref[...] = out[:, :ce].astype(o_ref.dtype)


# ----------------------------- BN streaming fold ------------------------------
def _fold_bn(stats_partial, gamma, beta, count):
    # stats_partial: (tiles, 8, C) with rows 0/1 = [sum, sum_sq].
    s = jnp.sum(stats_partial, axis=0)
    mean = s[0] / count
    var = jnp.maximum(s[1] / count - mean * mean, 0.0)
    scale = gamma * lax.rsqrt(var + EPS)
    bias = beta - mean * scale
    return scale.astype(jnp.float32), bias.astype(jnp.float32)


# --------------------------------- wrapper ------------------------------------
def init_params(key, in_channels, out_channels):
    """Deterministic synthetic parameters (shapes from BottleNeck.__init__)."""
    cm = out_channels
    ce = EXPANSION * out_channels
    ks = jax.random.split(key, 12)
    return {
        "w1": 0.1 * jax.random.normal(ks[0], (in_channels, cm), jnp.float32),
        "g1": 1.0 + 0.1 * jax.random.normal(ks[1], (1, cm), jnp.float32),
        "b1": 0.1 * jax.random.normal(ks[2], (1, cm), jnp.float32),
        "w2": 0.1 * jax.random.normal(ks[3], (3, 3, cm, cm), jnp.float32),
        "g2": 1.0 + 0.1 * jax.random.normal(ks[4], (1, cm), jnp.float32),
        "b2": 0.1 * jax.random.normal(ks[5], (1, cm), jnp.float32),
        "w3": 0.1 * jax.random.normal(ks[6], (cm, ce), jnp.float32),
        "g3": 1.0 + 0.1 * jax.random.normal(ks[7], (1, ce), jnp.float32),
        "b3": 0.1 * jax.random.normal(ks[8], (1, ce), jnp.float32),
        "ws": 0.1 * jax.random.normal(ks[9], (in_channels, ce), jnp.float32),
        "gs": 1.0 + 0.1 * jax.random.normal(ks[10], (1, ce), jnp.float32),
        "bs": 0.1 * jax.random.normal(ks[11], (1, ce), jnp.float32),
    }


def bottleneck_forward(x_nchw, params, in_channels, out_channels, stride=1):
    n, c, h, w = x_nchw.shape
    assert c == in_channels
    cm, ce = out_channels, EXPANSION * out_channels
    cin_p, cm_p, ce_p = _rup128(in_channels), _rup128(cm), _rup128(ce)
    ho = (h - 1) // stride + 1
    wo = (w - 1) // stride + 1
    m_in, m_out = n * h * w, n * ho * wo
    max_rows, vmem_limit = _tpu_caps()
    cparams = _cparams(vmem_limit)

    # ---- layout / padding glue (lane-dense channels, bf16 operands) ---------
    x_nhwc = jnp.transpose(x_nchw, (0, 2, 3, 1)).astype(jnp.float32)
    x_img = _pad_axis(x_nhwc, 3, cin_p).astype(jnp.bfloat16)     # (N,H,W,Cin_p)
    x_flat = x_img.reshape(m_in, cin_p)

    w1 = _pad_axis(_pad_axis(params["w1"], 0, cin_p), 1, cm_p).astype(jnp.bfloat16)
    w2 = _pad_axis(_pad_axis(params["w2"], 2, cm_p), 3, cm_p)
    w2 = w2.reshape(3, 3 * cm_p, cm_p).astype(jnp.bfloat16)      # (kh, kw*Cin, Cout)
    w3 = _pad_axis(_pad_axis(params["w3"], 0, cm_p), 1, ce_p).astype(jnp.bfloat16)
    ws = _pad_axis(_pad_axis(params["ws"], 0, cin_p), 1, ce_p).astype(jnp.bfloat16)
    g1, b1 = _pad_axis(params["g1"], 1, cm_p), _pad_axis(params["b1"], 1, cm_p)
    g2, b2 = _pad_axis(params["g2"], 1, cm_p), _pad_axis(params["b2"], 1, cm_p)
    g3, b3 = _pad_axis(params["g3"], 1, ce_p), _pad_axis(params["b3"], 1, ce_p)
    gs, bs = _pad_axis(params["gs"], 1, ce_p), _pad_axis(params["bs"], 1, ce_p)

    # ---- K1: conv1 (1x1) + BN1 partial stats --------------------------------
    tm1 = _pick_row_tile(m_in, bytes_per_row=2 * (cin_p + cm_p),
                         resident_bytes=2 * cin_p * cm_p,
                         vmem_limit=vmem_limit, cap=max_rows)
    nt1 = m_in // tm1
    y1, st1 = pl.pallas_call(
        _conv1x1_stats_kernel,
        grid=(nt1,),
        in_specs=[_row_spec(tm1, cin_p), _full_spec((cin_p, cm_p))],
        out_specs=[_row_spec(tm1, cm_p), _stat_spec(cm_p)],
        out_shape=[jax.ShapeDtypeStruct((m_in, cm_p), jnp.bfloat16),
                   jax.ShapeDtypeStruct((nt1, 8, cm_p), jnp.float32)],
        compiler_params=cparams,
    )(x_flat, w1)
    scale1, bias1 = _fold_bn(st1, g1, b1, m_in)

    # ---- K2: bn1+relu fused with conv2 (3x3, kw-fused K=3*C matmuls) --------
    # TODO(synk): re-tile K2 over (n, row-strips) with a 1-row halo for better
    # pipelining / multi-TensorCore balance when batch is small and images big.
    y1_img = y1.reshape(n, h, w, cm_p)
    k2 = functools.partial(_conv3x3_stats_kernel,
                           hh=h, ww=w, ho=ho, wo=wo, stride=stride)
    y2, st2 = pl.pallas_call(
        k2,
        grid=(n,),
        in_specs=[_img_spec((1, h, w, cm_p)),
                  _full_spec((1, cm_p)), _full_spec((1, cm_p)),
                  _full_spec((3, 3 * cm_p, cm_p))],
        out_specs=[_img_spec((1, ho, wo, cm_p)), _stat_spec(cm_p)],
        out_shape=[jax.ShapeDtypeStruct((n, ho, wo, cm_p), jnp.bfloat16),
                   jax.ShapeDtypeStruct((n, 8, cm_p), jnp.float32)],
        scratch_shapes=[pltpu.VMEM((h + 2, wo, 3 * cm_p), jnp.bfloat16)],
        compiler_params=cparams,
    )(y1_img, scale1, bias1, w2)
    scale2, bias2 = _fold_bn(st2, g2, b2, m_out)
    y2_flat = y2.reshape(m_out, cm_p)

    use_conv_sc = (stride != 1) or (in_channels != ce)

    if use_conv_sc:
        if stride == 1:
            xsc = x_flat
        else:
            # TODO(synk): feed x through a strided image index_map instead of
            # materializing the downsampled copy in the wrapper.
            xsc = x_img[:, ::stride, ::stride, :].reshape(m_out, cin_p)

        # ---- K3: bn2+relu fused with conv3 + shortcut conv + stats ----------
        tm3 = _pick_row_tile(m_out, bytes_per_row=2 * (cm_p + cin_p + 2 * ce_p),
                             resident_bytes=2 * (cm_p + cin_p) * ce_p,
                             vmem_limit=vmem_limit, cap=max_rows)
        nt3 = m_out // tm3
        y3, ysc, st3, sts = pl.pallas_call(
            _conv3_sc_kernel,
            grid=(nt3,),
            in_specs=[_row_spec(tm3, cm_p),
                      _full_spec((1, cm_p)), _full_spec((1, cm_p)),
                      _full_spec((cm_p, ce_p)),
                      _row_spec(tm3, cin_p), _full_spec((cin_p, ce_p))],
            out_specs=[_row_spec(tm3, ce_p), _row_spec(tm3, ce_p),
                       _stat_spec(ce_p), _stat_spec(ce_p)],
            out_shape=[jax.ShapeDtypeStruct((m_out, ce_p), jnp.bfloat16),
                       jax.ShapeDtypeStruct((m_out, ce_p), jnp.bfloat16),
                       jax.ShapeDtypeStruct((nt3, 8, ce_p), jnp.float32),
                       jax.ShapeDtypeStruct((nt3, 8, ce_p), jnp.float32)],
            compiler_params=cparams,
        )(y2_flat, scale2, bias2, w3, xsc, ws)
        scale3, bias3 = _fold_bn(st3, g3, b3, m_out)
        scale_s, bias_s = _fold_bn(sts, gs, bs, m_out)

        # ---- K4: bn3 + bn_sc + residual add + relu ---------------------------
        tm4 = _pick_row_tile(m_out, bytes_per_row=4 * ce_p + 4 * ce,
                             resident_bytes=0, vmem_limit=vmem_limit,
                             cap=max_rows)
        nt4 = m_out // tm4
        out_flat = pl.pallas_call(
            _final_sc_kernel,
            grid=(nt4,),
            in_specs=[_row_spec(tm4, ce_p), _row_spec(tm4, ce_p),
                      _full_spec((1, ce_p)), _full_spec((1, ce_p)),
                      _full_spec((1, ce_p)), _full_spec((1, ce_p))],
            out_specs=_row_spec(tm4, ce),
            out_shape=jax.ShapeDtypeStruct((m_out, ce), jnp.float32),
            compiler_params=cparams,
        )(y3, ysc, scale3, bias3, scale_s, bias_s)
    else:
        # identity shortcut: stride == 1 and in_channels == expansion*out.
        tm3 = _pick_row_tile(m_out, bytes_per_row=2 * (cm_p + ce_p),
                             resident_bytes=2 * cm_p * ce_p,
                             vmem_limit=vmem_limit, cap=max_rows)
        nt3 = m_out // tm3
        y3, st3 = pl.pallas_call(
            _conv3_id_kernel,
            grid=(nt3,),
            in_specs=[_row_spec(tm3, cm_p),
                      _full_spec((1, cm_p)), _full_spec((1, cm_p)),
                      _full_spec((cm_p, ce_p))],
            out_specs=[_row_spec(tm3, ce_p), _stat_spec(ce_p)],
            out_shape=[jax.ShapeDtypeStruct((m_out, ce_p), jnp.bfloat16),
                       jax.ShapeDtypeStruct((nt3, 8, ce_p), jnp.float32)],
            compiler_params=cparams,
        )(y2_flat, scale2, bias2, w3)
        scale3, bias3 = _fold_bn(st3, g3, b3, m_out)

        tm4 = _pick_row_tile(m_out, bytes_per_row=4 * ce_p + 4 * ce,
                             resident_bytes=0, vmem_limit=vmem_limit,
                             cap=max_rows)
        nt4 = m_out // tm4
        out_flat = pl.pallas_call(
            _final_id_kernel,
            grid=(nt4,),
            in_specs=[_row_spec(tm4, ce_p), _row_spec(tm4, ce_p),
                      _full_spec((1, ce_p)), _full_spec((1, ce_p))],
            out_specs=_row_spec(tm4, ce),
            out_shape=jax.ShapeDtypeStruct((m_out, ce), jnp.float32),
            compiler_params=cparams,
        )(y3, x_flat, scale3, bias3)

    out = out_flat.reshape(n, ho, wo, ce)
    # TODO(synk): callers that can consume NHWC / bf16 should skip this final
    # transpose (it is an extra full HBM read+write pass outside the kernels).
    return jnp.transpose(out, (0, 3, 1, 2))  # back to NCHW


# ------------------------------ pure-JAX reference ----------------------------
def bottleneck_reference(x_nchw, params, in_channels, out_channels, stride=1,
                         mimic_bf16=True):
    """mimic_bf16=False: exact f32 module semantics.
       mimic_bf16=True : same math, but rounds matmul operands / stored
       intermediates to bf16 exactly where the kernels do (tight oracle)."""
    cast = ((lambda a: a.astype(jnp.bfloat16).astype(jnp.float32))
            if mimic_bf16 else (lambda a: a))
    cm, ce = out_channels, EXPANSION * out_channels
    dn = ("NHWC", "HWIO", "NHWC")
    x = jnp.transpose(x_nchw, (0, 2, 3, 1)).astype(jnp.float32)

    def conv(inp, wgt, s, pad):
        return lax.conv_general_dilated(cast(inp), cast(wgt), (s, s), pad,
                                        dimension_numbers=dn,
                                        precision=lax.Precision.HIGHEST)

    def bn(y, g, b):
        mean = jnp.mean(y, axis=(0, 1, 2), keepdims=True)
        var = jnp.mean((y - mean) ** 2, axis=(0, 1, 2), keepdims=True)
        scale = g.reshape(1, 1, 1, -1) * lax.rsqrt(var + EPS)
        bias = b.reshape(1, 1, 1, -1) - mean * scale
        return cast(y) * scale + bias   # affine applied to the stored value

    y1 = conv(x, params["w1"].reshape(1, 1, in_channels, cm), 1, "VALID")
    h1 = jnp.maximum(bn(y1, params["g1"], params["b1"]), 0.0)
    y2 = conv(h1, params["w2"], stride, ((1, 1), (1, 1)))
    h2 = jnp.maximum(bn(y2, params["g2"], params["b2"]), 0.0)
    y3 = conv(h2, params["w3"].reshape(1, 1, cm, ce), 1, "VALID")
    main = bn(y3, params["g3"], params["b3"])
    if stride != 1 or in_channels != ce:
        ysc = conv(x, params["ws"].reshape(1, 1, in_channels, ce), stride, "VALID")
        sc = bn(ysc, params["gs"], params["bs"])
    else:
        sc = cast(x)
    out = jnp.maximum(main + sc, 0.0)
    return jnp.transpose(out, (0, 3, 1, 2))


if __name__ == "__main__":
    key = jax.random.PRNGKey(0)
    kx, kp, kx2, kp2 = jax.random.split(key, 4)
    fwd = jax.jit(bottleneck_forward, static_argnums=(2, 3, 4))

    # ---- config A: conv shortcut (expansion*out != in), stride 1 ------------
    N, C_IN, H, W = 4, 8, 16, 16
    C_OUT, STRIDE = 4, 1
    x = jax.random.normal(kx, (N, C_IN, H, W), jnp.float32)
    params = init_params(kp, C_IN, C_OUT)
    out = jax.block_until_ready(fwd(x, params, C_IN, C_OUT, STRIDE))
    assert out.shape == (N, EXPANSION * C_OUT, H, W), out.shape

    ref_bf = bottleneck_reference(x, params, C_IN, C_OUT, STRIDE, mimic_bf16=True)
    assert jnp.allclose(out, ref_bf, atol=5e-3, rtol=5e-3), \
        float(jnp.max(jnp.abs(out - ref_bf)))
    ref_f32 = bottleneck_reference(x, params, C_IN, C_OUT, STRIDE, mimic_bf16=False)
    assert jnp.allclose(out, ref_f32, atol=1.5e-1, rtol=1.5e-1), \
        float(jnp.max(jnp.abs(out - ref_f32)))

    # ---- config B: identity shortcut (in == expansion*out), stride 1 --------
    N2, C_IN2, H2, W2, C_OUT2 = 2, 16, 8, 8, 4
    x2 = jax.random.normal(kx2, (N2, C_IN2, H2, W2), jnp.float32)
    params2 = init_params(kp2, C_IN2, C_OUT2)
    out2 = jax.block_until_ready(fwd(x2, params2, C_IN2, C_OUT2, 1))
    assert out2.shape == (N2, EXPANSION * C_OUT2, H2, W2), out2.shape
    ref2 = bottleneck_reference(x2, params2, C_IN2, C_OUT2, 1, mimic_bf16=True)
    assert jnp.allclose(out2, ref2, atol=5e-3, rtol=5e-3), \
        float(jnp.max(jnp.abs(out2 - ref2)))

    print("KERNEL_OK")
</pallas_src>

<mosaic_0001>
module attributes {stable_mosaic.version = 11 : i64} {
  func.func @_conv1x1_stats_kernel(%arg0: i32, %arg1: memref<512x128xbf16, #tpu.memory_space<vmem>>, %arg2: memref<128x128xbf16, #tpu.memory_space<vmem>>, %arg3: memref<512x128xbf16, #tpu.memory_space<vmem>>, %arg4: memref<1x8x128xf32, #tpu.memory_space<vmem>>) attributes {dimension_semantics = [#tpu.dimension_semantics<parallel>], iteration_bounds = array<i64: 2>, scalar_prefetch = 0 : i64, scratch_operands = 0 : i64, tpu.core_type = #tpu.core_type<tc>, window_params = [{transform_indices = @transform_0, window_bounds = array<i64: 512, 128>}, {pipeline_mode = #tpu.pipeline_mode<synchronous>, transform_indices = @transform_1, window_bounds = array<i64: 128, 128>}, {transform_indices = @transform_2, window_bounds = array<i64: 512, 128>}, {transform_indices = @transform_3, window_bounds = array<i64: 1, 8, 128>}]} {
    %c0 = arith.constant 0 : index
    %c0_0 = arith.constant 0 : index
    %0 = vector.load %arg1[%c0, %c0_0] : memref<512x128xbf16, #tpu.memory_space<vmem>>, vector<512x128xbf16>
    %c0_1 = arith.constant 0 : index
    %c0_2 = arith.constant 0 : index
    %1 = vector.load %arg2[%c0_1, %c0_2] : memref<128x128xbf16, #tpu.memory_space<vmem>>, vector<128x128xbf16>
    %cst = arith.constant dense<0.000000e+00> : vector<512x128xf32>
    %2 = tpu.matmul %0, %1, %cst {dimension_numbers = #tpu.dot_dimension_numbers<[1], [0], [0], [1], [0, 0, 1, 1], [], []>} : vector<512x128xbf16>, vector<128x128xbf16>, vector<512x128xf32> -> vector<512x128xf32>
    %3 = arith.truncf %2 : vector<512x128xf32> to vector<512x128xbf16>
    %c0_3 = arith.constant 0 : index
    %c0_4 = arith.constant 0 : index
    %4 = vector.load %arg3[%c0_3, %c0_4] : memref<512x128xbf16, #tpu.memory_space<vmem>>, vector<512x128xbf16>
    tpu.vector_store %arg3[%c0_3, %c0_4], %3 {strides = array<i32>} : memref<512x128xbf16, #tpu.memory_space<vmem>>, vector<512x128xbf16>,
    %cst_5 = arith.constant dense<0.000000e+00> : vector<128xf32>
    %5 = vector.multi_reduction <add>, %2, %cst_5 [0] : vector<512x128xf32> to vector<128xf32>
    %6 = vector.shape_cast %5 : vector<128xf32> to vector<1x128xf32>
    %7 = arith.mulf %2, %2 : vector<512x128xf32>
    %cst_6 = arith.constant dense<0.000000e+00> : vector<128xf32>
    %8 = vector.multi_reduction <add>, %7, %cst_6 [0] : vector<512x128xf32> to vector<128xf32>
    %9 = vector.shape_cast %8 : vector<128xf32> to vector<1x128xf32>
    %cst_7 = arith.constant 0.000000e+00 : f32
    %10 = vector.broadcast %cst_7 : f32 to vector<6x128xf32>
    %11 = tpu.concatenate %6, %9, %10 in 0 : vector<1x128xf32>, vector<1x128xf32>, vector<6x128xf32> -> vector<8x128xf32>
    %12 = vector.shape_cast %11 : vector<8x128xf32> to vector<1x8x128xf32>
    %c0_8 = arith.constant 0 : index
    %c0_9 = arith.constant 0 : index
    %c0_10 = arith.constant 0 : index
    %13 = vector.load %arg4[%c0_8, %c0_9, %c0_10] : memref<1x8x128xf32, #tpu.memory_space<vmem>>, vector<1x8x128xf32>
    tpu.vector_store %arg4[%c0_8, %c0_9, %c0_10], %12 {strides = array<i32>} : memref<1x8x128xf32, #tpu.memory_space<vmem>>, vector<1x8x128xf32>,
    return
  }
  func.func @transform_0(%arg0: i32) -> (i32, i32) {
    %c0_i32 = arith.constant 0 : i32
    %c0_i32_0 = arith.constant 0 : i32
    return %arg0, %c0_i32 : i32, i32
  }
  func.func @transform_1(%arg0: i32) -> (i32, i32) {
    %c0_i32 = arith.constant 0 : i32
    %c0_i32_0 = arith.constant 0 : i32
    %c0_i32_1 = arith.constant 0 : i32
    return %c0_i32, %c0_i32_0 : i32, i32
  }
  func.func @transform_2(%arg0: i32) -> (i32, i32) {
    %c0_i32 = arith.constant 0 : i32
    %c0_i32_0 = arith.constant 0 : i32
    return %arg0, %c0_i32 : i32, i32
  }
  func.func @transform_3(%arg0: i32) -> (i32, i32, i32) {
    %c0_i32 = arith.constant 0 : i32
    %c0_i32_0 = arith.constant 0 : i32
    %c0_i32_1 = arith.constant 0 : i32
    return %arg0, %c0_i32, %c0_i32_0 : i32, i32, i32
  }
}

module attributes {stable_mosaic.version = 11 : i64} {
  func.func @_conv3x3_stats_kernel(%arg0: i32, %arg1: memref<1x16x16x128xbf16, #tpu.memory_space<vmem>>, %arg2: memref<1x128xf32, #tpu.memory_space<vmem>>, %arg3: memref<1x128xf32, #tpu.memory_space<vmem>>, %arg4: memref<3x384x128xbf16, #tpu.memory_space<vmem>>, %arg5: memref<1x16x16x128xbf16, #tpu.memory_space<vmem>>, %arg6: memref<1x8x128xf32, #tpu.memory_space<vmem>>, %arg7: memref<18x16x384xbf16, #tpu.memory_space<vmem>>) attributes {dimension_semantics = [#tpu.dimension_semantics<parallel>], iteration_bounds = array<i64: 4>, scalar_prefetch = 0 : i64, scratch_operands = 1 : i64, tpu.core_type = #tpu.core_type<tc>, window_params = [{transform_indices = @transform_0, window_bounds = array<i64: 1, 16, 16, 128>}, {pipeline_mode = #tpu.pipeline_mode<synchronous>, transform_indices = @transform_1, window_bounds = array<i64: 1, 128>}, {pipeline_mode = #tpu.pipeline_mode<synchronous>, transform_indices = @transform_2, window_bounds = array<i64: 1, 128>}, {pipeline_mode = #tpu.pipeline_mode<synchronous>, transform_indices = @transform_3, window_bounds = array<i64: 3, 384, 128>}, {transform_indices = @transform_4, window_bounds = array<i64: 1, 16, 16, 128>}, {transform_indices = @transform_5, window_bounds = array<i64: 1, 8, 128>}]} {
    %c0 = arith.constant 0 : index
    %c0_0 = arith.constant 0 : index
    %0 = vector.load %arg2[%c0, %c0_0] : memref<1x128xf32, #tpu.memory_space<vmem>>, vector<1x128xf32>
    %1 = vector.shape_cast %0 : vector<1x128xf32> to vector<1x1x128xf32>
    %c0_1 = arith.constant 0 : index
    %c0_2 = arith.constant 0 : index
    %2 = vector.load %arg3[%c0_1, %c0_2] : memref<1x128xf32, #tpu.memory_space<vmem>>, vector<1x128xf32>
    %3 = vector.shape_cast %2 : vector<1x128xf32> to vector<1x1x128xf32>
    %c0_3 = arith.constant 0 : index
    %c0_4 = arith.constant 0 : index
    %c0_5 = arith.constant 0 : index
    %c0_6 = arith.constant 0 : index
    %4 = vector.load %arg1[%c0_3, %c0_4, %c0_5, %c0_6] : memref<1x16x16x128xbf16, #tpu.memory_space<vmem>>, vector<1x16x16x128xbf16>
    %5 = vector.shape_cast %4 : vector<1x16x16x128xbf16> to vector<16x16x128xbf16>
    %6 = arith.extf %5 : vector<16x16x128xbf16> to vector<16x16x128xf32>
    %7 = vector.broadcast %1 : vector<1x1x128xf32> to vector<16x16x128xf32>
    %8 = arith.mulf %6, %7 : vector<16x16x128xf32>
    %9 = vector.broadcast %3 : vector<1x1x128xf32> to vector<16x16x128xf32>
    %10 = arith.addf %8, %9 : vector<16x16x128xf32>
    %cst = arith.constant 0.000000e+00 : f32
    %11 = vector.broadcast %cst : f32 to vector<16x16x128xf32>
    %12 = arith.maximumf %10, %11 : vector<16x16x128xf32>
    %13 = arith.truncf %12 : vector<16x16x128xf32> to vector<16x16x128xbf16>
    %cst_7 = arith.constant 0.000000e+00 : bf16
    %14 = vector.broadcast %cst_7 : bf16 to vector<1x16x384xbf16>
    %c0_8 = arith.constant 0 : index
    %c0_9 = arith.constant 0 : index
    %c0_10 = arith.constant 0 : index
    %15 = vector.load %arg7[%c0_8, %c0_9, %c0_10] : memref<18x16x384xbf16, #tpu.memory_space<vmem>>, vector<1x16x384xbf16>
    tpu.vector_store %arg7[%c0_8, %c0_9, %c0_10], %14 {strides = array<i32>} : memref<18x16x384xbf16, #tpu.memory_space<vmem>>, vector<1x16x384xbf16>,
    %c17 = arith.constant 17 : index
    %c0_11 = arith.constant 0 : index
    %c0_12 = arith.constant 0 : index
    %16 = vector.load %arg7[%c17, %c0_11, %c0_12] : memref<18x16x384xbf16, #tpu.memory_space<vmem>>, vector<1x16x384xbf16>
    tpu.vector_store %arg7[%c17, %c0_11, %c0_12], %14 {strides = array<i32>} : memref<18x16x384xbf16, #tpu.memory_space<vmem>>, vector<1x16x384xbf16>,
    %cst_13 = arith.constant 0.000000e+00 : bf16
    %17 = vector.broadcast %cst_13 : bf16 to vector<16x1x128xbf16>
    %c1 = arith.constant 1 : index
    %c0_14 = arith.constant 0 : index
    %c0_15 = arith.constant 0 : index
    %18 = vector.load %arg7[%c1, %c0_14, %c0_15] : memref<18x16x384xbf16, #tpu.memory_space<vmem>>, vector<16x1x128xbf16>
    tpu.vector_store %arg7[%c1, %c0_14, %c0_15], %17 {strides = array<i32>} : memref<18x16x384xbf16, #tpu.memory_space<vmem>>, vector<16x1x128xbf16>,
    %cst_16 = arith.constant 0.000000e+00 : bf16
    %19 = vector.broadcast %cst_16 : bf16 to vector<16x1x128xbf16>
    %c1_17 = arith.constant 1 : index
    %c15 = arith.constant 15 : index
    %c256 = arith.constant 256 : index
    %20 = vector.load %arg7[%c1_17, %c15, %c256] : memref<18x16x384xbf16, #tpu.memory_space<vmem>>, vector<16x1x128xbf16>
    tpu.vector_store %arg7[%c1_17, %c15, %c256], %19 {strides = array<i32>} : memref<18x16x384xbf16, #tpu.memory_space<vmem>>, vector<16x1x128xbf16>,
    %21 = vector.extract_strided_slice %13 {offsets = [0, 0, 0], sizes = [16, 15, 128], strides = [1, 1, 1]} : vector<16x16x128xbf16> to vector<16x15x128xbf16>
    %c1_18 = arith.constant 1 : index
    %c1_19 = arith.constant 1 : index
    %c0_20 = arith.constant 0 : index
    %22 = vector.load %arg7[%c1_18, %c1_19, %c0_20] : memref<18x16x384xbf16, #tpu.memory_space<vmem>>, vector<16x15x128xbf16>
    tpu.vector_store %arg7[%c1_18, %c1_19, %c0_20], %21 {strides = array<i32>} : memref<18x16x384xbf16, #tpu.memory_space<vmem>>, vector<16x15x128xbf16>,
    %c1_21 = arith.constant 1 : index
    %c0_22 = arith.constant 0 : index
    %c128 = arith.constant 128 : index
    %23 = vector.load %arg7[%c1_21, %c0_22, %c128] : memref<18x16x384xbf16, #tpu.memory_space<vmem>>, vector<16x16x128xbf16>
    tpu.vector_store %arg7[%c1_21, %c0_22, %c128], %13 {strides = array<i32>} : memref<18x16x384xbf16, #tpu.memory_space<vmem>>, vector<16x16x128xbf16>,
    %24 = vector.extract_strided_slice %13 {offsets = [0, 1, 0], sizes = [16, 15, 128], strides = [1, 1, 1]} : vector<16x16x128xbf16> to vector<16x15x128xbf16>
    %c1_23 = arith.constant 1 : index
    %c0_24 = arith.constant 0 : index
    %c256_25 = arith.constant 256 : index
    %25 = vector.load %arg7[%c1_23, %c0_24, %c256_25] : memref<18x16x384xbf16, #tpu.memory_space<vmem>>, vector<16x15x128xbf16>
    tpu.vector_store %arg7[%c1_23, %c0_24, %c256_25], %24 {strides = array<i32>} : memref<18x16x384xbf16, #tpu.memory_space<vmem>>, vector<16x15x128xbf16>,
    %cst_26 = arith.constant 0.000000e+00 : f32
    %26 = vector.broadcast %cst_26 : f32 to vector<256x128xf32>
    %c0_27 = arith.constant 0 : index
    %c0_28 = arith.constant 0 : index
    %c0_29 = arith.constant 0 : index
    %27 = vector.load %arg7[%c0_27, %c0_28, %c0_29] : memref<18x16x384xbf16, #tpu.memory_space<vmem>>, vector<16x16x384xbf16>
    %28 = vector.shape_cast %27 : vector<16x16x384xbf16> to vector<256x384xbf16>
    %c0_30 = arith.constant 0 : index
    %c0_31 = arith.constant 0 : index
    %c0_32 = arith.constant 0 : index
    %29 = vector.load %arg4[%c0_30, %c0_31, %c0_32] : memref<3x384x128xbf16, #tpu.memory_space<vmem>>, vector<1x384x128xbf16>
    %30 = vector.shape_cast %29 : vector<1x384x128xbf16> to vector<384x128xbf16>
    %cst_33 = arith.constant dense<0.000000e+00> : vector<256x128xf32>
    %31 = tpu.matmul %28, %30, %cst_33 {dimension_numbers = #tpu.dot_dimension_numbers<[1], [0], [0], [1], [0, 0, 1, 1], [], []>} : vector<256x384xbf16>, vector<384x128xbf16>, vector<256x128xf32> -> vector<256x128xf32>
    %32 = arith.addf %26, %31 : vector<256x128xf32>
    %c1_34 = arith.constant 1 : index
    %c0_35 = arith.constant 0 : index
    %c0_36 = arith.constant 0 : index
    %33 = vector.load %arg7[%c1_34, %c0_35, %c0_36] : memref<18x16x384xbf16, #tpu.memory_space<vmem>>, vector<16x16x384xbf16>
    %34 = vector.shape_cast %33 : vector<16x16x384xbf16> to vector<256x384xbf16>
    %c1_37 = arith.constant 1 : index
    %c0_38 = arith.constant 0 : index
    %c0_39 = arith.constant 0 : index
    %35 = vector.load %arg4[%c1_37, %c0_38, %c0_39] : memref<3x384x128xbf16, #tpu.memory_space<vmem>>, vector<1x384x128xbf16>
    %36 = vector.shape_cast %35 : vector<1x384x128xbf16> to vector<384x128xbf16>
    %cst_40 = arith.constant dense<0.000000e+00> : vector<256x128xf32>
    %37 = tpu.matmul %34, %36, %cst_40 {dimension_numbers = #tpu.dot_dimension_numbers<[1], [0], [0], [1], [0, 0, 1, 1], [], []>} : vector<256x384xbf16>, vector<384x128xbf16>, vector<256x128xf32> -> vector<256x128xf32>
    %38 = arith.addf %32, %37 : vector<256x128xf32>
    %c2 = arith.constant 2 : index
    %c0_41 = arith.constant 0 : index
    %c0_42 = arith.constant 0 : index
    %39 = vector.load %arg7[%c2, %c0_41, %c0_42] : memref<18x16x384xbf16, #tpu.memory_space<vmem>>, vector<16x16x384xbf16>
    %40 = vector.shape_cast %39 : vector<16x16x384xbf16> to vector<256x384xbf16>
    %c2_43 = arith.constant 2 : index
    %c0_44 = arith.constant 0 : index
    %c0_45 = arith.constant 0 : index
    %41 = vector.load %arg4[%c2_43, %c0_44, %c0_45] : memref<3x384x128xbf16, #tpu.memory_space<vmem>>, vector<1x384x128xbf16>
    %42 = vector.shape_cast %41 : vector<1x384x128xbf16> to vector<384x128xbf16>
    %cst_46 = arith.constant dense<0.000000e+00> : vector<256x128xf32>
    %43 = tpu.matmul %40, %42, %cst_46 {dimension_numbers = #tpu.dot_dimension_numbers<[1], [0], [0], [1], [0, 0, 1, 1], [], []>} : vector<256x384xbf16>, vector<384x128xbf16>, vector<256x128xf32> -> vector<256x128xf32>
    %44 = arith.addf %38, %43 : vector<256x128xf32>
    %45 = vector.shape_cast %44 : vector<256x128xf32> to vector<1x16x16x128xf32>
    %46 = arith.truncf %45 : vector<1x16x16x128xf32> to vector<1x16x16x128xbf16>
    %c0_47 = arith.constant 0 : index
    %c0_48 = arith.constant 0 : index
    %c0_49 = arith.constant 0 : index
    %c0_50 = arith.constant 0 : index
    %47 = vector.load %arg5[%c0_47, %c0_48, %c0_49, %c0_50] : memref<1x16x16x128xbf16, #tpu.memory_space<vmem>>, vector<1x16x16x128xbf16>
    tpu.vector_store %arg5[%c0_47, %c0_48, %c0_49, %c0_50], %46 {strides = array<i32>} : memref<1x16x16x128xbf16, #tpu.memory_space<vmem>>, vector<1x16x16x128xbf16>,
    %cst_51 = arith.constant dense<0.000000e+00> : vector<128xf32>
    %48 = vector.multi_reduction <add>, %44, %cst_51 [0] : vector<256x128xf32> to vector<128xf32>
    %49 = vector.shape_cast %48 : vector<128xf32> to vector<1x128xf32>
    %50 = arith.mulf %44, %44 : vector<256x128xf32>
    %cst_52 = arith.constant dense<0.000000e+00> : vector<128xf32>
    %51 = vector.multi_reduction <add>, %50, %cst_52 [0] : vector<256x128xf32> to vector<128xf32>
    %52 = vector.shape_cast %51 : vector<128xf32> to vector<1x128xf32>
    %cst_53 = arith.constant 0.000000e+00 : f32
    %53 = vector.broadcast %cst_53 : f32 to vector<6x128xf32>
    %54 = tpu.concatenate %49, %52, %53 in 0 : vector<1x128xf32>, vector<1x128xf32>, vector<6x128xf32> -> vector<8x128xf32>
    %55 = vector.shape_cast %54 : vector<8x128xf32> to vector<1x8x128xf32>
    %c0_54 = arith.constant 0 : index
    %c0_55 = arith.constant 0 : index
    %c0_56 = arith.constant 0 : index
    %56 = vector.load %arg6[%c0_54, %c0_55, %c0_56] : memref<1x8x128xf32, #tpu.memory_space<vmem>>, vector<1x8x128xf32>
    tpu.vector_store %arg6[%c0_54, %c0_55, %c0_56], %55 {strides = array<i32>} : memref<1x8x128xf32, #tpu.memory_space<vmem>>, vector<1x8x128xf32>,
    return
  }
  func.func @transform_0(%arg0: i32) -> (i32, i32, i32, i32) {
    %c0_i32 = arith.constant 0 : i32
    %c0_i32_0 = arith.constant 0 : i32
    %c0_i32_1 = arith.constant 0 : i32
    %c0_i32_2 = arith.constant 0 : i32
    return %arg0, %c0_i32, %c0_i32_0, %c0_i32_1 : i32, i32, i32, i32
  }
  func.func @transform_1(%arg0: i32) -> (i32, i32) {
    %c0_i32 = arith.constant 0 : i32
    %c0_i32_0 = arith.constant 0 : i32
    %c0_i32_1 = arith.constant 0 : i32
    return %c0_i32, %c0_i32_0 : i32, i32
  }
  func.func @transform_2(%arg0: i32) -> (i32, i32) {
    %c0_i32 = arith.constant 0 : i32
    %c0_i32_0 = arith.constant 0 : i32
    %c0_i32_1 = arith.constant 0 : i32
    return %c0_i32, %c0_i32_0 : i32, i32
  }
  func.func @transform_3(%arg0: i32) -> (i32, i32, i32) {
    %c0_i32 = arith.constant 0 : i32
    %c0_i32_0 = arith.constant 0 : i32
    %c0_i32_1 = arith.constant 0 : i32
    %c0_i32_2 = arith.constant 0 : i32
    return %c0_i32, %c0_i32_0, %c0_i32_1 : i32, i32, i32
  }
  func.func @transform_4(%arg0: i32) -> (i32, i32, i32, i32) {
    %c0_i32 = arith.constant 0 : i32
    %c0_i32_0 = arith.constant 0 : i32
    %c0_i32_1 = arith.constant 0 : i32
    %c0_i32_2 = arith.constant 0 : i32
    return %arg0, %c0_i32, %c0_i32_0, %c0_i32_1 : i32, i32, i32, i32
  }
  func.func @transform_5(%arg0: i32) -> (i32, i32, i32) {
    %c0_i32 = arith.constant 0 : i32
    %c0_i32_0 = arith.constant 0 : i32
    %c0_i32_1 = arith.constant 0 : i32
    return %arg0, %c0_i32, %c0_i32_0 : i32, i32, i32
  }
}

module attributes {stable_mosaic.version = 11 : i64} {
  func.func @_conv3_sc_kernel(%arg0: i32, %arg1: memref<512x128xbf16, #tpu.memory_space<vmem>>, %arg2: memref<1x128xf32, #tpu.memory_space<vmem>>, %arg3: memref<1x128xf32, #tpu.memory_space<vmem>>, %arg4: memref<128x128xbf16, #tpu.memory_space<vmem>>, %arg5: memref<512x128xbf16, #tpu.memory_space<vmem>>, %arg6: memref<128x128xbf16, #tpu.memory_space<vmem>>, %arg7: memref<512x128xbf16, #tpu.memory_space<vmem>>, %arg8: memref<512x128xbf16, #tpu.memory_space<vmem>>, %arg9: memref<1x8x128xf32, #tpu.memory_space<vmem>>, %arg10: memref<1x8x128xf32, #tpu.memory_space<vmem>>) attributes {dimension_semantics = [#tpu.dimension_semantics<parallel>], iteration_bounds = array<i64: 2>, scalar_prefetch = 0 : i64, scratch_operands = 0 : i64, tpu.core_type = #tpu.core_type<tc>, window_params = [{transform_indices = @transform_0, window_bounds = array<i64: 512, 128>}, {pipeline_mode = #tpu.pipeline_mode<synchronous>, transform_indices = @transform_1, window_bounds = array<i64: 1, 128>}, {pipeline_mode = #tpu.pipeline_mode<synchronous>, transform_indices = @transform_2, window_bounds = array<i64: 1, 128>}, {pipeline_mode = #tpu.pipeline_mode<synchronous>, transform_indices = @transform_3, window_bounds = array<i64: 128, 128>}, {transform_indices = @transform_4, window_bounds = array<i64: 512, 128>}, {pipeline_mode = #tpu.pipeline_mode<synchronous>, transform_indices = @transform_5, window_bounds = array<i64: 128, 128>}, {transform_indices = @transform_6, window_bounds = array<i64: 512, 128>}, {transform_indices = @transform_7, window_bounds = array<i64: 512, 128>}, {transform_indices = @transform_8, window_bounds = array<i64: 1, 8, 128>}, {transform_indices = @transform_9, window_bounds = array<i64: 1, 8, 128>}]} {
    %c0 = arith.constant 0 : index
    %c0_0 = arith.constant 0 : index
    %0 = vector.load %arg1[%c0, %c0_0] : memref<512x128xbf16, #tpu.memory_space<vmem>>, vector<512x128xbf16>
    %1 = arith.extf %0 : vector<512x128xbf16> to vector<512x128xf32>
    %c0_1 = arith.constant 0 : index
    %c0_2 = arith.constant 0 : index
    %2 = vector.load %arg2[%c0_1, %c0_2] : memref<1x128xf32, #tpu.memory_space<vmem>>, vector<1x128xf32>
    %3 = vector.broadcast %2 : vector<1x128xf32> to vector<512x128xf32>
    %4 = arith.mulf %1, %3 : vector<512x128xf32>
    %c0_3 = arith.constant 0 : index
    %c0_4 = arith.constant 0 : index
    %5 = vector.load %arg3[%c0_3, %c0_4] : memref<1x128xf32, #tpu.memory_space<vmem>>, vector<1x128xf32>
    %6 = vector.broadcast %5 : vector<1x128xf32> to vector<512x128xf32>
    %7 = arith.addf %4, %6 : vector<512x128xf32>
    %cst = arith.constant 0.000000e+00 : f32
    %8 = vector.broadcast %cst : f32 to vector<512x128xf32>
    %9 = arith.maximumf %7, %8 : vector<512x128xf32>
    %10 = arith.truncf %9 : vector<512x128xf32> to vector<512x128xbf16>
    %c0_5 = arith.constant 0 : index
    %c0_6 = arith.constant 0 : index
    %11 = vector.load %arg4[%c0_5, %c0_6] : memref<128x128xbf16, #tpu.memory_space<vmem>>, vector<128x128xbf16>
    %cst_7 = arith.constant dense<0.000000e+00> : vector<512x128xf32>
    %12 = tpu.matmul %10, %11, %cst_7 {dimension_numbers = #tpu.dot_dimension_numbers<[1], [0], [0], [1], [0, 0, 1, 1], [], []>} : vector<512x128xbf16>, vector<128x128xbf16>, vector<512x128xf32> -> vector<512x128xf32>
    %c0_8 = arith.constant 0 : index
    %c0_9 = arith.constant 0 : index
    %13 = vector.load %arg5[%c0_8, %c0_9] : memref<512x128xbf16, #tpu.memory_space<vmem>>, vector<512x128xbf16>
    %c0_10 = arith.constant 0 : index
    %c0_11 = arith.constant 0 : index
    %14 = vector.load %arg6[%c0_10, %c0_11] : memref<128x128xbf16, #tpu.memory_space<vmem>>, vector<128x128xbf16>
    %cst_12 = arith.constant dense<0.000000e+00> : vector<512x128xf32>
    %15 = tpu.matmul %13, %14, %cst_12 {dimension_numbers = #tpu.dot_dimension_numbers<[1], [0], [0], [1], [0, 0, 1, 1], [], []>} : vector<512x128xbf16>, vector<128x128xbf16>, vector<512x128xf32> -> vector<512x128xf32>
    %16 = arith.truncf %12 : vector<512x128xf32> to vector<512x128xbf16>
    %c0_13 = arith.constant 0 : index
    %c0_14 = arith.constant 0 : index
    %17 = vector.load %arg7[%c0_13, %c0_14] : memref<512x128xbf16, #tpu.memory_space<vmem>>, vector<512x128xbf16>
    tpu.vector_store %arg7[%c0_13, %c0_14], %16 {strides = array<i32>} : memref<512x128xbf16, #tpu.memory_space<vmem>>, vector<512x128xbf16>,
    %18 = arith.truncf %15 : vector<512x128xf32> to vector<512x128xbf16>
    %c0_15 = arith.constant 0 : index
    %c0_16 = arith.constant 0 : index
    %19 = vector.load %arg8[%c0_15, %c0_16] : memref<512x128xbf16, #tpu.memory_space<vmem>>, vector<512x128xbf16>
    tpu.vector_store %arg8[%c0_15, %c0_16], %18 {strides = array<i32>} : memref<512x128xbf16, #tpu.memory_space<vmem>>, vector<512x128xbf16>,
    %cst_17 = arith.constant dense<0.000000e+00> : vector<128xf32>
    %20 = vector.multi_reduction <add>, %12, %cst_17 [0] : vector<512x128xf32> to vector<128xf32>
    %21 = vector.shape_cast %20 : vector<128xf32> to vector<1x128xf32>
    %22 = arith.mulf %12, %12 : vector<512x128xf32>
    %cst_18 = arith.constant dense<0.000000e+00> : vector<128xf32>
    %23 = vector.multi_reduction <add>, %22, %cst_18 [0] : vector<512x128xf32> to vector<128xf32>
    %24 = vector.shape_cast %23 : vector<128xf32> to vector<1x128xf32>
    %cst_19 = arith.constant 0.000000e+00 : f32
    %25 = vector.broadcast %cst_19 : f32 to vector<6x128xf32>
    %26 = tpu.concatenate %21, %24, %25 in 0 : vector<1x128xf32>, vector<1x128xf32>, vector<6x128xf32> -> vector<8x128xf32>
    %27 = vector.shape_cast %26 : vector<8x128xf32> to vector<1x8x128xf32>
    %c0_20 = arith.constant 0 : index
    %c0_21 = arith.constant 0 : index
    %c0_22 = arith.constant 0 : index
    %28 = vector.load %arg9[%c0_20, %c0_21, %c0_22] : memref<1x8x128xf32, #tpu.memory_space<vmem>>, vector<1x8x128xf32>
    tpu.vector_store %arg9[%c0_20, %c0_21, %c0_22], %27 {strides = array<i32>} : memref<1x8x128xf32, #tpu.memory_space<vmem>>, vector<1x8x128xf32>,
    %cst_23 = arith.constant dense<0.000000e+00> : vector<128xf32>
    %29 = vector.multi_reduction <add>, %15, %cst_23 [0] : vector<512x128xf32> to vector<128xf32>
    %30 = vector.shape_cast %29 : vector<128xf32> to vector<1x128xf32>
    %31 = arith.mulf %15, %15 : vector<512x128xf32>
    %cst_24 = arith.constant dense<0.000000e+00> : vector<128xf32>
    %32 = vector.multi_reduction <add>, %31, %cst_24 [0] : vector<512x128xf32> to vector<128xf32>
    %33 = vector.shape_cast %32 : vector<128xf32> to vector<1x128xf32>
    %cst_25 = arith.constant 0.000000e+00 : f32
    %34 = vector.broadcast %cst_25 : f32 to vector<6x128xf32>
    %35 = tpu.concatenate %30, %33, %34 in 0 : vector<1x128xf32>, vector<1x128xf32>, vector<6x128xf32> -> vector<8x128xf32>
    %36 = vector.shape_cast %35 : vector<8x128xf32> to vector<1x8x128xf32>
    %c0_26 = arith.constant 0 : index
    %c0_27 = arith.constant 0 : index
    %c0_28 = arith.constant 0 : index
    %37 = vector.load %arg10[%c0_26, %c0_27, %c0_28] : memref<1x8x128xf32, #tpu.memory_space<vmem>>, vector<1x8x128xf32>
    tpu.vector_store %arg10[%c0_26, %c0_27, %c0_28], %36 {strides = array<i32>} : memref<1x8x128xf32, #tpu.memory_space<vmem>>, vector<1x8x128xf32>,
    return
  }
  func.func @transform_0(%arg0: i32) -> (i32, i32) {
    %c0_i32 = arith.constant 0 : i32
    %c0_i32_0 = arith.constant 0 : i32
    return %arg0, %c0_i32 : i32, i32
  }
  func.func @transform_1(%arg0: i32) -> (i32, i32) {
    %c0_i32 = arith.constant 0 : i32
    %c0_i32_0 = arith.constant 0 : i32
    %c0_i32_1 = arith.constant 0 : i32
    return %c0_i32, %c0_i32_0 : i32, i32
  }
  func.func @transform_2(%arg0: i32) -> (i32, i32) {
    %c0_i32 = arith.constant 0 : i32
    %c0_i32_0 = arith.constant 0 : i32
    %c0_i32_1 = arith.constant 0 : i32
    return %c0_i32, %c0_i32_0 : i32, i32
  }
  func.func @transform_3(%arg0: i32) -> (i32, i32) {
    %c0_i32 = arith.constant 0 : i32
    %c0_i32_0 = arith.constant 0 : i32
    %c0_i32_1 = arith.constant 0 : i32
    return %c0_i32, %c0_i32_0 : i32, i32
  }
  func.func @transform_4(%arg0: i32) -> (i32, i32) {
    %c0_i32 = arith.constant 0 : i32
    %c0_i32_0 = arith.constant 0 : i32
    return %arg0, %c0_i32 : i32, i32
  }
  func.func @transform_5(%arg0: i32) -> (i32, i32) {
    %c0_i32 = arith.constant 0 : i32
    %c0_i32_0 = arith.constant 0 : i32
    %c0_i32_1 = arith.constant 0 : i32
    return %c0_i32, %c0_i32_0 : i32, i32
  }
  func.func @transform_6(%arg0: i32) -> (i32, i32) {
    %c0_i32 = arith.constant 0 : i32
    %c0_i32_0 = arith.constant 0 : i32
    return %arg0, %c0_i32 : i32, i32
  }
  func.func @transform_7(%arg0: i32) -> (i32, i32) {
    %c0_i32 = arith.constant 0 : i32
    %c0_i32_0 = arith.constant 0 : i32
    return %arg0, %c0_i32 : i32, i32
  }
  func.func @transform_8(%arg0: i32) -> (i32, i32, i32) {
    %c0_i32 = arith.constant 0 : i32
    %c0_i32_0 = arith.constant 0 : i32
    %c0_i32_1 = arith.constant 0 : i32
    return %arg0, %c0_i32, %c0_i32_0 : i32, i32, i32
  }
  func.func @transform_9(%arg0: i32) -> (i32, i32, i32) {
    %c0_i32 = arith.constant 0 : i32
    %c0_i32_0 = arith.constant 0 : i32
    %c0_i32_1 = arith.constant 0 : i32
    return %arg0, %c0_i32, %c0_i32_0 : i32, i32, i32
  }
}

module attributes {stable_mosaic.version = 11 : i64} {
  func.func @_final_sc_kernel(%arg0: i32, %arg1: memref<512x128xbf16, #tpu.memory_space<vmem>>, %arg2: memref<512x128xbf16, #tpu.memory_space<vmem>>, %arg3: memref<1x128xf32, #tpu.memory_space<vmem>>, %arg4: memref<1x128xf32, #tpu.memory_space<vmem>>, %arg5: memref<1x128xf32, #tpu.memory_space<vmem>>, %arg6: memref<1x128xf32, #tpu.memory_space<vmem>>, %arg7: memref<512x16xf32, #tpu.memory_space<vmem>>) attributes {dimension_semantics = [#tpu.dimension_semantics<parallel>], iteration_bounds = array<i64: 2>, scalar_prefetch = 0 : i64, scratch_operands = 0 : i64, tpu.core_type = #tpu.core_type<tc>, window_params = [{transform_indices = @transform_0, window_bounds = array<i64: 512, 128>}, {transform_indices = @transform_1, window_bounds = array<i64: 512, 128>}, {pipeline_mode = #tpu.pipeline_mode<synchronous>, transform_indices = @transform_2, window_bounds = array<i64: 1, 128>}, {pipeline_mode = #tpu.pipeline_mode<synchronous>, transform_indices = @transform_3, window_bounds = array<i64: 1, 128>}, {pipeline_mode = #tpu.pipeline_mode<synchronous>, transform_indices = @transform_4, window_bounds = array<i64: 1, 128>}, {pipeline_mode = #tpu.pipeline_mode<synchronous>, transform_indices = @transform_5, window_bounds = array<i64: 1, 128>}, {transform_indices = @transform_6, window_bounds = array<i64: 512, 16>}]} {
    %c0 = arith.constant 0 : index
    %c0_0 = arith.constant 0 : index
    %0 = vector.load %arg1[%c0, %c0_0] : memref<512x128xbf16, #tpu.memory_space<vmem>>, vector<512x128xbf16>
    %1 = arith.extf %0 : vector<512x128xbf16> to vector<512x128xf32>
    %c0_1 = arith.constant 0 : index
    %c0_2 = arith.constant 0 : index
    %2 = vector.load %arg3[%c0_1, %c0_2] : memref<1x128xf32, #tpu.memory_space<vmem>>, vector<1x128xf32>
    %3 = vector.broadcast %2 : vector<1x128xf32> to vector<512x128xf32>
    %4 = arith.mulf %1, %3 : vector<512x128xf32>
    %c0_3 = arith.constant 0 : index
    %c0_4 = arith.constant 0 : index
    %5 = vector.load %arg4[%c0_3, %c0_4] : memref<1x128xf32, #tpu.memory_space<vmem>>, vector<1x128xf32>
    %6 = vector.broadcast %5 : vector<1x128xf32> to vector<512x128xf32>
    %7 = arith.addf %4, %6 : vector<512x128xf32>
    %c0_5 = arith.constant 0 : index
    %c0_6 = arith.constant 0 : index
    %8 = vector.load %arg2[%c0_5, %c0_6] : memref<512x128xbf16, #tpu.memory_space<vmem>>, vector<512x128xbf16>
    %9 = arith.extf %8 : vector<512x128xbf16> to vector<512x128xf32>
    %c0_7 = arith.constant 0 : index
    %c0_8 = arith.constant 0 : index
    %10 = vector.load %arg5[%c0_7, %c0_8] : memref<1x128xf32, #tpu.memory_space<vmem>>, vector<1x128xf32>
    %11 = vector.broadcast %10 : vector<1x128xf32> to vector<512x128xf32>
    %12 = arith.mulf %9, %11 : vector<512x128xf32>
    %c0_9 = arith.constant 0 : index
    %c0_10 = arith.constant 0 : index
    %13 = vector.load %arg6[%c0_9, %c0_10] : memref<1x128xf32, #tpu.memory_space<vmem>>, vector<1x128xf32>
    %14 = vector.broadcast %13 : vector<1x128xf32> to vector<512x128xf32>
    %15 = arith.addf %12, %14 : vector<512x128xf32>
    %16 = arith.addf %7, %15 : vector<512x128xf32>
    %cst = arith.constant 0.000000e+00 : f32
    %17 = vector.broadcast %cst : f32 to vector<512x128xf32>
    %18 = arith.maximumf %16, %17 : vector<512x128xf32>
    %19 = vector.extract_strided_slice %18 {offsets = [0, 0], sizes = [512, 16], strides = [1, 1]} : vector<512x128xf32> to vector<512x16xf32>
    %c0_11 = arith.constant 0 : index
    %c0_12 = arith.constant 0 : index
    %20 = vector.load %arg7[%c0_11, %c0_12] : memref<512x16xf32, #tpu.memory_space<vmem>>, vector<512x16xf32>
    tpu.vector_store %arg7[%c0_11, %c0_12], %19 {strides = array<i32>} : memref<512x16xf32, #tpu.memory_space<vmem>>, vector<512x16xf32>,
    return
  }
  func.func @transform_0(%arg0: i32) -> (i32, i32) {
    %c0_i32 = arith.constant 0 : i32
    %c0_i32_0 = arith.constant 0 : i32
    return %arg0, %c0_i32 : i32, i32
  }
  func.func @transform_1(%arg0: i32) -> (i32, i32) {
    %c0_i32 = arith.constant 0 : i32
    %c0_i32_0 = arith.constant 0 : i32
    return %arg0, %c0_i32 : i32, i32
  }
  func.func @transform_2(%arg0: i32) -> (i32, i32) {
    %c0_i32 = arith.constant 0 : i32
    %c0_i32_0 = arith.constant 0 : i32
    %c0_i32_1 = arith.constant 0 : i32
    return %c0_i32, %c0_i32_0 : i32, i32
  }
  func.func @transform_3(%arg0: i32) -> (i32, i32) {
    %c0_i32 = arith.constant 0 : i32
    %c0_i32_0 = arith.constant 0 : i32
    %c0_i32_1 = arith.constant 0 : i32
    return %c0_i32, %c0_i32_0 : i32, i32
  }
  func.func @transform_4(%arg0: i32) -> (i32, i32) {
    %c0_i32 = arith.constant 0 : i32
    %c0_i32_0 = arith.constant 0 : i32
    %c0_i32_1 = arith.constant 0 : i32
    return %c0_i32, %c0_i32_0 : i32, i32
  }
  func.func @transform_5(%arg0: i32) -> (i32, i32) {
    %c0_i32 = arith.constant 0 : i32
    %c0_i32_0 = arith.constant 0 : i32
    %c0_i32_1 = arith.constant 0 : i32
    return %c0_i32, %c0_i32_0 : i32, i32
  }
  func.func @transform_6(%arg0: i32) -> (i32, i32) {
    %c0_i32 = arith.constant 0 : i32
    %c0_i32_0 = arith.constant 0 : i32
    return %arg0, %c0_i32 : i32, i32
  }
}

</mosaic_0001>

<llo_original>
// kernel: bottleneck_forward.4
$region0: #{bottleneck_forward.4}
  #allocation0 [shape = 'u32[]', space=smem, size = 0x4, offset = 0x4, fixed_abs, tag = 'smem constant byte address 0x4 - core index']
  #allocation1 [shape = 'u32[144,128]{1,0:T(1,128)}', space=vmem, size = 0x12000, scoped, tag = 'internal scratch']
  %s0 = inlined_call_operand.vmem [shape: bf16[1024,128], index: 0, kind: input, shape index: {}]
  %s1 = inlined_call_operand.vmem [shape: bf16[128,128], index: 1, kind: input, shape index: {}]
  %s2 = inlined_call_operand.vmem [shape: bf16[1024,128], index: 2, kind: output, shape index: {0}]
  %s3 = inlined_call_operand.vmem [shape: f32[2,8,128], index: 3, kind: output, shape index: {1}]
  %4 = xla_tuple %s2, %s3
  %s5 = sld [smem:[#allocation0]]
  $region49: #{bottleneck_forward.4} parent=0
    _
  %s7 = ssub.s32 1, %s5
  %s8 = scalar_select 0, %s7, %s5
  loop: start=0, step=1, limit=4
  $region2: #{bottleneck_forward.4} parent=0 // loop_pre_header
    _
  $region3: #{bottleneck_forward.4} parent=0 // loop_header
    %s10 = sphi 0, %s14
    %p11 = scmp.ge.s32.totalorder %s10, 4
    %s20 = sphi 0, %s22
    %s23 = sphi 0, %s20
    %s24 = sphi 0, %s23
    %s40 = sphi 0, %s24
    %s44 = sphi 0, %s44
    %s46 = sphi 0, %s44
    %s47 = sphi 0, %s46
    %s61 = sphi 0, %s47
    %s67 = sphi 0, %s69
    %s70 = sphi 0, %s67
    %s71 = sphi 0, %s70
    %s87 = sphi 0, %s71
    %s93 = sphi 0, %s95
    %s96 = sphi 0, %s93
    %s97 = sphi 0, %s96
    %s113 = sphi 0, %s97
  $region4: #{bottleneck_forward.4} parent=0 // loop_header_branch
    %13 = sbr.rel (%p11) target = $region8
  $region5: #{bottleneck_forward.4} parent=0 // loop_body
    %s15 = ssub.s32 %s10, 1
    %s16 = ssub.s32 %s10, 2
    %s17 = sadd.s32 %s10, 1
    %s18 = ssub.s32 %s10, %s17
    %p19 = scmp.eq.s32.totalorder %s18, 0
    %s21 = sadd.s32 %s20, 1
    %s22 = scalar_select %p19, %s20, %s21
    %p25 = pneg %p19
    %p26 = scmp.eq.s32.totalorder %s10, 1
    %p27 = por %p25, %p26
    %p28 = scmp.ne.s32.totalorder %s20, %s23
    %p29 = scmp.eq.s32.totalorder %s10, 0
    %p30 = por %p28, %p29
    %p31 = scmp.ne.s32.totalorder %s20, %s23
    %p32 = scmp.eq.s32.totalorder %s15, 1
    %p33 = por %p31, %p32
    %p34 = scmp.ne.s32.totalorder %s23, %s24
    %p35 = scmp.eq.s32.totalorder %s15, 0
    %p36 = por %p34, %p35
    %p37 = scmp.ne.s32.totalorder %s23, %s24
    %p38 = scmp.eq.s32.totalorder %s16, 1
    %p39 = por %p37, %p38
    %p41 = scmp.ne.s32.totalorder %s24, %s40
    %p42 = scmp.eq.s32.totalorder %s16, 0
    %p43 = por %p41, %p42
    %s45 = sadd.s32 %s44, 1
    %p48 = scmp.eq.s32.totalorder %s10, 1
    %p49 = scmp.ne.s32.totalorder %s44, %s46
    %p50 = scmp.eq.s32.totalorder %s10, 0
    %p51 = por %p49, %p50
    %p52 = scmp.ne.s32.totalorder %s44, %s46
    %p53 = scmp.eq.s32.totalorder %s15, 1
    %p54 = por %p52, %p53
    %p55 = scmp.ne.s32.totalorder %s46, %s47
    %p56 = scmp.eq.s32.totalorder %s15, 0
    %p57 = por %p55, %p56
    %p58 = scmp.ne.s32.totalorder %s46, %s47
    %p59 = scmp.eq.s32.totalorder %s16, 1
    %p60 = por %p58, %p59
    %p62 = scmp.ne.s32.totalorder %s47, %s61
    %p63 = scmp.eq.s32.totalorder %s16, 0
    %p64 = por %p62, %p63
    %s65 = ssub.s32 %s10, %s17
    %p66 = scmp.eq.s32.totalorder %s65, 0
    %s68 = sadd.s32 %s67, 1
    %s69 = scalar_select %p66, %s67, %s68
    %p72 = pneg %p66
    %p73 = scmp.eq.s32.totalorder %s10, 1
    %p74 = por %p72, %p73
    %p75 = scmp.ne.s32.totalorder %s67, %s70
    %p76 = scmp.eq.s32.totalorder %s10, 0
    %p77 = por %p75, %p76
    %p78 = scmp.ne.s32.totalorder %s67, %s70
    %p79 = scmp.eq.s32.totalorder %s15, 1
    %p80 = por %p78, %p79
    %p81 = scmp.ne.s32.totalorder %s70, %s71
    %p82 = scmp.eq.s32.totalorder %s15, 0
    %p83 = por %p81, %p82
    %p84 = scmp.ne.s32.totalorder %s70, %s71
    %p85 = scmp.eq.s32.totalorder %s16, 1
    %p86 = por %p84, %p85
    %p88 = scmp.ne.s32.totalorder %s71, %s87
    %p89 = scmp.eq.s32.totalorder %s16, 0
    %p90 = por %p88, %p89
    %s91 = ssub.s32 %s10, %s17
    %p92 = scmp.eq.s32.totalorder %s91, 0
    %s94 = sadd.s32 %s93, 1
    %s95 = scalar_select %p92, %s93, %s94
    %p98 = pneg %p92
    %p99 = scmp.eq.s32.totalorder %s10, 1
    %p100 = por %p98, %p99
    %p101 = scmp.ne.s32.totalorder %s93, %s96
    %p102 = scmp.eq.s32.totalorder %s10, 0
    %p103 = por %p101, %p102
    %p104 = scmp.ne.s32.totalorder %s93, %s96
    %p105 = scmp.eq.s32.totalorder %s15, 1
    %p106 = por %p104, %p105
    %p107 = scmp.ne.s32.totalorder %s96, %s97
    %p108 = scmp.eq.s32.totalorder %s15, 0
    %p109 = por %p107, %p108
    %p110 = scmp.ne.s32.totalorder %s96, %s97
    %p111 = scmp.eq.s32.totalorder %s16, 1
    %p112 = por %p110, %p111
    %p114 = scmp.ne.s32.totalorder %s97, %s113
    %p115 = scmp.eq.s32.totalorder %s16, 0
    %p116 = por %p114, %p115
    %p117 = scmp.le.s32.totalorder 1, %s10
    %p118 = scmp.lt.s32.totalorder %s10, 3
    %p119 = pnand %p117, %p118
    %p120 = pneg %p119
    // Predicated region
    $region9: #{bottleneck_forward.4} parent=5 // pred_check
      _
    $region10: #{bottleneck_forward.4} parent=5 // pred_check_branch
      %122 = sbr.rel (%p119) target = $region12
    $region11: #{bottleneck_forward.4} parent=5 // pred_region
      %s123 = ssub.s32 %s10, 1
      // Predicated region
      $region13: #{bottleneck_forward.4} parent=11 // pred_check
        %p124 = pneg %p57
      $region14: #{bottleneck_forward.4} parent=11 // pred_check_branch
        %126 = sbr.rel (%p124) target = $region16
      $region15: #{bottleneck_forward.4} parent=11 // pred_region
        _
      $region16: #{bottleneck_forward.4} parent=11 // pred_fallthru
        _
    $region12: #{bottleneck_forward.4} parent=5 // pred_fallthru
      _
    %p127 = scmp.lt.s32.totalorder %s10, 2
    // Predicated region
    $region17: #{bottleneck_forward.4} parent=5 // pred_check
      %p128 = pneg %p127
    $region18: #{bottleneck_forward.4} parent=5 // pred_check_branch
      %130 = sbr.rel (%p128) target = $region20
    $region19: #{bottleneck_forward.4} parent=5 // pred_region
      // Predicated region
      $region21: #{bottleneck_forward.4} parent=19 // pred_check
        %p131 = pneg %p30
      $region22: #{bottleneck_forward.4} parent=19 // pred_check_branch
        %133 = sbr.rel (%p131) target = $region24
      $region23: #{bottleneck_forward.4} parent=19 // pred_region
        %s134 = smul.u32 64, %s10
        %p135 = scmp.lt.s32.totalorder %s134, 127
        %s136 = scalar_select %p135, %s134, 127
        %s137 = smul.addr %s136, 4
        %s138 = scalar_lea.vmem %s0, %s137
        %s139 = smul.u32 64, %s10
      $region24: #{bottleneck_forward.4} parent=19 // pred_fallthru
        _
    $region20: #{bottleneck_forward.4} parent=5 // pred_fallthru
      _
    %p140 = scmp.le.s32.totalorder 1, %s10
    %p141 = scmp.lt.s32.totalorder %s10, 3
    %p142 = pnand %p140, %p141
    %p143 = pneg %p142
    // Predicated region
    $region25: #{bottleneck_forward.4} parent=5 // pred_check
      _
    $region26: #{bottleneck_forward.4} parent=5 // pred_check_branch
      %145 = sbr.rel (%p142) target = $region28
    $region27: #{bottleneck_forward.4} parent=5 // pred_region
      %s146 = ssub.s32 %s10, 1
      %s147 = smul.u32 64, %s15
      %p148 = scmp.lt.s32.totalorder %s147, 127
      %s149 = scalar_select %p148, %s147, 127
      %s150 = smul.addr %s149, 4
      %s151 = scalar_lea.vmem %s0, %s150
      %p152 = pneg %p36
      %p153 = pneg %p33
      %p154 = pneg %p57
      %p155 = pneg %p54
      %p156 = pneg %p83
      %p157 = pneg %p80
      %s158 = smul.u32 64, %s15
      %p159 = scmp.lt.s32.totalorder %s158, 127
      %s160 = scalar_select %p159, %s158, 127
      %s161 = smul.addr %s160, 4
      %s162 = scalar_lea.vmem %s2, %s161
      %p163 = pneg %p109
      %p164 = pneg %p106
      %p165 = scmp.lt.s32.totalorder %s15, 1
      %s166 = scalar_select %p165, %s15, 1
      %s167 = smul.addr %s166, 8
      %s168 = scalar_lea.vmem %s3, %s167
      %s169 = smul.u32 64, %s15
      %p170 = scmp.lt.s32.totalorder %s169, 127
      %s171 = scalar_select %p170, %s169, 127
      %s172 = smul.addr %s171, 4
      %s173 = scalar_lea.vmem %s0, %s172
      %s174 = smul.u32 64, %s15
      %s175 = smul.u32 64, %s15
      %p176 = scmp.lt.s32.totalorder %s175, 127
      %s177 = scalar_select %p176, %s175, 127
      %s178 = smul.addr %s177, 4
      %s179 = scalar_lea.vmem %s2, %s178
      %s180 = smul.u32 64, %s15
      %p181 = scmp.lt.s32.totalorder %s15, 1
      %s182 = scalar_select %p181, %s15, 1
      %s183 = smul.addr %s182, 8
      %s184 = scalar_lea.vmem %s3, %s183
      %v186 = vld [vmem:[%s173] sm:$0xf]
      %v187 = vld [vmem:[%s173 + $0x4] sm:$0xf]
      %v188 = vld [vmem:[%s173 + $0x8] sm:$0xf]
      %v189 = vld [vmem:[%s173 + $0xc] sm:$0xf]
      %v190 = vld [vmem:[%s173 + $0x10] sm:$0xf]
      %v191 = vld [vmem:[%s173 + $0x14] sm:$0xf]
      %v192 = vld [vmem:[%s173 + $0x18] sm:$0xf]
      %v193 = vld [vmem:[%s173 + $0x1c] sm:$0xf]
      %v194 = vld [vmem:[%s173 + $0x20] sm:$0xf]
      %v195 = vld [vmem:[%s173 + $0x24] sm:$0xf]
      %v196 = vld [vmem:[%s173 + $0x28] sm:$0xf]
      %v197 = vld [vmem:[%s173 + $0x2c] sm:$0xf]
      %v198 = vld [vmem:[%s173 + $0x30] sm:$0xf]
      %v199 = vld [vmem:[%s173 + $0x34] sm:$0xf]
      %v200 = vld [vmem:[%s173 + $0x38] sm:$0xf]
      %v201 = vld [vmem:[%s173 + $0x3c] sm:$0xf]
      %v202 = vld [vmem:[%s173 + $0x40] sm:$0xf]
      %v203 = vld [vmem:[%s173 + $0x44] sm:$0xf]
      %v204 = vld [vmem:[%s173 + $0x48] sm:$0xf]
      %v205 = vld [vmem:[%s173 + $0x4c] sm:$0xf]
      %v206 = vld [vmem:[%s173 + $0x50] sm:$0xf]
      %v207 = vld [vmem:[%s173 + $0x54] sm:$0xf]
      %v208 = vld [vmem:[%s173 + $0x58] sm:$0xf]
      %v209 = vld [vmem:[%s173 + $0x5c] sm:$0xf]
      %v210 = vld [vmem:[%s173 + $0x60] sm:$0xf]
      %v211 = vld [vmem:[%s173 + $0x64] sm:$0xf]
      %v212 = vld [vmem:[%s173 + $0x68] sm:$0xf]
      %v213 = vld [vmem:[%s173 + $0x6c] sm:$0xf]
      %v214 = vld [vmem:[%s173 + $0x70] sm:$0xf]
      %v215 = vld [vmem:[%s173 + $0x74] sm:$0xf]
      %v216 = vld [vmem:[%s173 + $0x78] sm:$0xf]
      %v217 = vld [vmem:[%s173 + $0x7c] sm:$0xf]
      %v218 = vld [vmem:[%s173 + $0x80] sm:$0xf]
      %v219 = vld [vmem:[%s173 + $0x84] sm:$0xf]
      %v220 = vld [vmem:[%s173 + $0x88] sm:$0xf]
      %v221 = vld [vmem:[%s173 + $0x8c] sm:$0xf]
      %v222 = vld [vmem:[%s173 + $0x90] sm:$0xf]
      %v223 = vld [vmem:[%s173 + $0x94] sm:$0xf]
      %v224 = vld [vmem:[%s173 + $0x98] sm:$0xf]
      %v225 = vld [vmem:[%s173 + $0x9c] sm:$0xf]
      %v226 = vld [vmem:[%s173 + $0xa0] sm:$0xf]
      %v227 = vld [vmem:[%s173 + $0xa4] sm:$0xf]
      %v228 = vld [vmem:[%s173 + $0xa8] sm:$0xf]
      %v229 = vld [vmem:[%s173 + $0xac] sm:$0xf]
      %v230 = vld [vmem:[%s173 + $0xb0] sm:$0xf]
      %v231 = vld [vmem:[%s173 + $0xb4] sm:$0xf]
      %v232 = vld [vmem:[%s173 + $0xb8] sm:$0xf]
      %v233 = vld [vmem:[%s173 + $0xbc] sm:$0xf]
      %v234 = vld [vmem:[%s173 + $0xc0] sm:$0xf]
      %v235 = vld [vmem:[%s173 + $0xc4] sm:$0xf]
      %v236 = vld [vmem:[%s173 + $0xc8] sm:$0xf]
      %v237 = vld [vmem:[%s173 + $0xcc] sm:$0xf]
      %v238 = vld [vmem:[%s173 + $0xd0] sm:$0xf]
      %v239 = vld [vmem:[%s173 + $0xd4] sm:$0xf]
      %v240 = vld [vmem:[%s173 + $0xd8] sm:$0xf]
      %v241 = vld [vmem:[%s173 + $0xdc] sm:$0xf]
      %v242 = vld [vmem:[%s173 + $0xe0] sm:$0xf]
      %v243 = vld [vmem:[%s173 + $0xe4] sm:$0xf]
      %v244 = vld [vmem:[%s173 + $0xe8] sm:$0xf]
      %v245 = vld [vmem:[%s173 + $0xec] sm:$0xf]
      %v246 = vld [vmem:[%s173 + $0xf0] sm:$0xf]
      %v247 = vld [vmem:[%s173 + $0xf4] sm:$0xf]
      %v248 = vld [vmem:[%s173 + $0xf8] sm:$0xf]
      %v249 = vld [vmem:[%s173 + $0xfc] sm:$0xf]
      %v250 = vld [vmem:[%s1] sm:$0xf]
      %v251 = vld [vmem:[%s1 + $0x4] sm:$0xf]
      %v252 = vld [vmem:[%s1 + $0x8] sm:$0xf]
      %v253 = vld [vmem:[%s1 + $0xc] sm:$0xf]
      %v254 = vld [vmem:[%s1 + $0x10] sm:$0xf]
      %v255 = vld [vmem:[%s1 + $0x14] sm:$0xf]
      %v256 = vld [vmem:[%s1 + $0x18] sm:$0xf]
      %v257 = vld [vmem:[%s1 + $0x1c] sm:$0xf]
      %v258 = vld [vmem:[%s1 + $0x20] sm:$0xf]
      %v259 = vld [vmem:[%s1 + $0x24] sm:$0xf]
      %v260 = vld [vmem:[%s1 + $0x28] sm:$0xf]
      %v261 = vld [vmem:[%s1 + $0x2c] sm:$0xf]
      %v262 = vld [vmem:[%s1 + $0x30] sm:$0xf]
      %v263 = vld [vmem:[%s1 + $0x34] sm:$0xf]
      %v264 = vld [vmem:[%s1 + $0x38] sm:$0xf]
      %v265 = vld [vmem:[%s1 + $0x3c] sm:$0xf]
      %v330 = vunpack.c.l.b16 %v186
      %v331 = vunpack.c.l.b16 %v187
      %v332 = vunpack.c.l.b16 %v188
      %v333 = vunpack.c.l.b16 %v189
      %v334 = vunpack.c.l.b16 %v190
      %v335 = vunpack.c.l.b16 %v191
      %v336 = vunpack.c.l.b16 %v192
      %v337 = vunpack.c.l.b16 %v193
      %v338 = vunpack.c.l.b16 %v194
      %v339 = vunpack.c.l.b16 %v195
      %v340 = vunpack.c.l.b16 %v196
      %v341 = vunpack.c.l.b16 %v197
      %v342 = vunpack.c.l.b16 %v198
      %v343 = vunpack.c.l.b16 %v199
      %v344 = vunpack.c.l.b16 %v200
      %v345 = vunpack.c.l.b16 %v201
      %v346 = vunpack.c.l.b16 %v202
      %v347 = vunpack.c.l.b16 %v203
      %v348 = vunpack.c.l.b16 %v204
      %v349 = vunpack.c.l.b16 %v205
      %v350 = vunpack.c.l.b16 %v206
      %v351 = vunpack.c.l.b16 %v207
      %v352 = vunpack.c.l.b16 %v208
      %v353 = vunpack.c.l.b16 %v209
      %v354 = vunpack.c.l.b16 %v210
      %v355 = vunpack.c.l.b16 %v211
      %v356 = vunpack.c.l.b16 %v212
      %v357 = vunpack.c.l.b16 %v213
      %v358 = vunpack.c.l.b16 %v214
      %v359 = vunpack.c.l.b16 %v215
      %v360 = vunpack.c.l.b16 %v216
      %v361 = vunpack.c.l.b16 %v217
      %v362 = vunpack.c.l.b16 %v218
      %v363 = vunpack.c.l.b16 %v219
      %v364 = vunpack.c.l.b16 %v220
      %v365 = vunpack.c.l.b16 %v221
      %v366 = vunpack.c.l.b16 %v222
      %v367 = vunpack.c.l.b16 %v223
      %v368 = vunpack.c.l.b16 %v224
      %v369 = vunpack.c.l.b16 %v225
      %v370 = vunpack.c.l.b16 %v226
      %v371 = vunpack.c.l.b16 %v227
      %v372 = vunpack.c.l.b16 %v228
      %v373 = vunpack.c.l.b16 %v229
      %v374 = vunpack.c.l.b16 %v230
      %v375 = vunpack.c.l.b16 %v231
      %v376 = vunpack.c.l.b16 %v232
      %v377 = vunpack.c.l.b16 %v233
      %v378 = vunpack.c.l.b16 %v234
      %v379 = vunpack.c.l.b16 %v235
      %v380 = vunpack.c.l.b16 %v236
      %v381 = vunpack.c.l.b16 %v237
      %v382 = vunpack.c.l.b16 %v238
      %v383 = vunpack.c.l.b16 %v239
      %v384 = vunpack.c.l.b16 %v240
      %v385 = vunpack.c.l.b16 %v241
      %v386 = vunpack.c.l.b16 %v242
      %v387 = vunpack.c.l.b16 %v243
      %v388 = vunpack.c.l.b16 %v244
      %v389 = vunpack.c.l.b16 %v245
      %v390 = vunpack.c.l.b16 %v246
      %v391 = vunpack.c.l.b16 %v247
      %v392 = vunpack.c.l.b16 %v248
      %v393 = vunpack.c.l.b16 %v249
      %v394 = vpack.c.b16 %v331, %v330
      %v395 = vpack.c.b16 %v333, %v332
      %v396 = vpack.c.b16 %v335, %v334
      %v397 = vpack.c.b16 %v337, %v336
      %v398 = vpack.c.b16 %v339, %v338
      %v399 = vpack.c.b16 %v341, %v340
      %v400 = vpack.c.b16 %v343, %v342
      %v401 = vpack.c.b16 %v345, %v344
      %v402 = vpack.c.b16 %v347, %v346
      %v403 = vpack.c.b16 %v349, %v348
      %v404 = vpack.c.b16 %v351, %v350
      %v405 = vpack.c.b16 %v353, %v352
      %v406 = vpack.c.b16 %v355, %v354
      %v407 = vpack.c.b16 %v357, %v356
      %v408 = vpack.c.b16 %v359, %v358
      %v409 = vpack.c.b16 %v361, %v360
      %v410 = vpack.c.b16 %v363, %v362
      %v411 = vpack.c.b16 %v365, %v364
      %v412 = vpack.c.b16 %v367, %v366
      %v413 = vpack.c.b16 %v369, %v368
      %v414 = vpack.c.b16 %v371, %v370
      %v415 = vpack.c.b16 %v373, %v372
      %v416 = vpack.c.b16 %v375, %v374
      %v417 = vpack.c.b16 %v377, %v376
      %v418 = vpack.c.b16 %v379, %v378
      %v419 = vpack.c.b16 %v381, %v380
      %v420 = vpack.c.b16 %v383, %v382
      %v421 = vpack.c.b16 %v385, %v384
      %v422 = vpack.c.b16 %v387, %v386
      %v423 = vpack.c.b16 %v389, %v388
      %v424 = vpack.c.b16 %v391, %v390
      %v425 = vpack.c.b16 %v393, %v392
      %v474 = vunpack.c.l.b16 %v250
      %v475 = vunpack.c.l.b16 %v251
      %v476 = vunpack.c.l.b16 %v252
      %v477 = vunpack.c.l.b16 %v253
      %v478 = vunpack.c.l.b16 %v254
      %v479 = vunpack.c.l.b16 %v255
      %v480 = vunpack.c.l.b16 %v256
      %v481 = vunpack.c.l.b16 %v257
      %v482 = vunpack.c.l.b16 %v258
      %v483 = vunpack.c.l.b16 %v259
      %v484 = vunpack.c.l.b16 %v260
      %v485 = vunpack.c.l.b16 %v261
      %v486 = vunpack.c.l.b16 %v262
      %v487 = vunpack.c.l.b16 %v263
      %v488 = vunpack.c.l.b16 %v264
      %v489 = vunpack.c.l.b16 %v265
      %v490 = vpack.c.b16 %v475, %v474
      %v491 = vpack.c.b16 %v477, %v476
      %v492 = vpack.c.b16 %v479, %v478
      %v493 = vpack.c.b16 %v481, %v480
      %v494 = vpack.c.b16 %v483, %v482
      %v495 = vpack.c.b16 %v485, %v484
      %v496 = vpack.c.b16 %v487, %v486
      %v497 = vpack.c.b16 %v489, %v488
      %506 = vmatprep.subr.bf16.mxu0 0
      %507 = vmatpush1.bf16.msra.mxu0 %v490
      %508 = vmatprep.subr.bf16.mxu0 0
      %509 = vmatpush1.bf16.msra.mxu0 %v491
      %510 = vmatprep.subr.bf16.mxu0 0
      %511 = vmatpush1.bf16.msra.mxu0 %v492
      %512 = vmatprep.subr.bf16.mxu0 0
      %513 = vmatpush1.bf16.msra.mxu0 %v493
      %514 = vmatprep.subr.bf16.mxu0 0
      %515 = vmatpush1.bf16.msra.mxu0 %v494
      %516 = vmatprep.subr.bf16.mxu0 0
      %517 = vmatpush1.bf16.msra.mxu0 %v495
      %518 = vmatprep.subr.bf16.mxu0 0
      %519 = vmatpush1.bf16.msra.mxu0 %v496
      %520 = vmatprep.subr.bf16.mxu0 0
      %521 = vmatpush1.bf16.msra.mxu0 %v497
      %522 = vmatprep.subr.bf16.mxu0 0
      %523 = vmatpush1.bf16.msra.mxu0 0
      %524 = vmatprep.subr.bf16.mxu0 0
      %525 = vmatpush1.bf16.msra.mxu0 0
      %526 = vmatprep.subr.bf16.mxu0 0
      %527 = vmatpush1.bf16.msra.mxu0 0
      %528 = vmatprep.subr.bf16.mxu0 0
      %529 = vmatpush1.bf16.msra.mxu0 0
      %530 = vmatprep.subr.bf16.mxu0 0
      %531 = vmatpush1.bf16.msra.mxu0 0
      %532 = vmatprep.subr.bf16.mxu0 0
      %533 = vmatpush1.bf16.msra.mxu0 0
      %534 = vmatprep.subr.bf16.mxu0 0
      %535 = vmatpush1.bf16.msra.mxu0 0
      %536 = vmatprep.subr.bf16.mxu0 0
      %537 = vmatpush1.bf16.msra.mxu0 0
      %538 = vmatprep.mubr.bf16.mxu0 0
      %539 = vmatmul.mubr.bf16.gmra.mrb[0].mxu0 %v394
      %v540 = vpop.f32.mrb[0].mxu0
      %v541 = vadd.f32 0.0, %v540
      %v542 = vpop.f32.mrb[0].mxu0
      %v543 = vpop.f32.mrb[0].mxu0
      %v544 = vadd.f32 0.0, %v543
      %v545 = vpop.f32.mrb[0].mxu0
      %546 = vmatprep.mubr.bf16.mxu0 0
      %547 = vmatmul.mubr.bf16.gmra.mrb[0].mxu0 %v395
      %v548 = vpop.f32.mrb[0].mxu0
      %v549 = vadd.f32 0.0, %v548
      %v550 = vpop.f32.mrb[0].mxu0
      %v551 = vpop.f32.mrb[0].mxu0
      %v552 = vadd.f32 0.0, %v551
      %v553 = vpop.f32.mrb[0].mxu0
      %554 = vmatprep.mubr.bf16.mxu0 0
      %555 = vmatmul.mubr.bf16.gmra.mrb[0].mxu0 %v396
      %v556 = vpop.f32.mrb[0].mxu0
      %v557 = vadd.f32 0.0, %v556
      %v558 = vpop.f32.mrb[0].mxu0
      %v559 = vpop.f32.mrb[0].mxu0
      %v560 = vadd.f32 0.0, %v559
      %v561 = vpop.f32.mrb[0].mxu0
      %562 = vmatprep.mubr.bf16.mxu0 0
      %563 = vmatmul.mubr.bf16.gmra.mrb[0].mxu0 %v397
      %v564 = vpop.f32.mrb[0].mxu0
      %v565 = vadd.f32 0.0, %v564
      %v566 = vpop.f32.mrb[0].mxu0
      %v567 = vpop.f32.mrb[0].mxu0
      %v568 = vadd.f32 0.0, %v567
      %v569 = vpop.f32.mrb[0].mxu0
      %570 = vmatprep.mubr.bf16.mxu0 0
      %571 = vmatmul.mubr.bf16.gmra.mrb[0].mxu0 %v398
      %v572 = vpop.f32.mrb[0].mxu0
      %v573 = vadd.f32 0.0, %v572
      %v574 = vpop.f32.mrb[0].mxu0
      %v575 = vpop.f32.mrb[0].mxu0
      %v576 = vadd.f32 0.0, %v575
      %v577 = vpop.f32.mrb[0].mxu0
      %578 = vmatprep.mubr.bf16.mxu0 0
      %579 = vmatmul.mubr.bf16.gmra.mrb[0].mxu0 %v399
      %v580 = vpop.f32.mrb[0].mxu0
      %v581 = vadd.f32 0.0, %v580
      %v582 = vpop.f32.mrb[0].mxu0
      %v583 = vpop.f32.mrb[0].mxu0
      %v584 = vadd.f32 0.0, %v583
      %v585 = vpop.f32.mrb[0].mxu0
      %586 = vmatprep.mubr.bf16.mxu0 0
      %587 = vmatmul.mubr.bf16.gmra.mrb[0].mxu0 %v400
      %v588 = vpop.f32.mrb[0].mxu0
      %v589 = vadd.f32 0.0, %v588
      %v590 = vpop.f32.mrb[0].mxu0
      %v591 = vpop.f32.mrb[0].mxu0
      %v592 = vadd.f32 0.0, %v591
      %v593 = vpop.f32.mrb[0].mxu0
      %594 = vmatprep.mubr.bf16.mxu0 0
      %595 = vmatmul.mubr.bf16.gmra.mrb[0].mxu0 %v401
      %v596 = vpop.f32.mrb[0].mxu0
      %v597 = vadd.f32 0.0, %v596
      %v598 = vpop.f32.mrb[0].mxu0
      %v599 = vpop.f32.mrb[0].mxu0
      %v600 = vadd.f32 0.0, %v599
      %v601 = vpop.f32.mrb[0].mxu0
      %602 = vmatprep.mubr.bf16.mxu0 0
      %603 = vmatmul.mubr.bf16.gmra.mrb[0].mxu0 %v402
      %v604 = vpop.f32.mrb[0].mxu0
      %v605 = vadd.f32 0.0, %v604
      %v606 = vpop.f32.mrb[0].mxu0
      %v607 = vpop.f32.mrb[0].mxu0
      %v608 = vadd.f32 0.0, %v607
      %v609 = vpop.f32.mrb[0].mxu0
      %610 = vmatprep.mubr.bf16.mxu0 0
      %611 = vmatmul.mubr.bf16.gmra.mrb[0].mxu0 %v403
      %v612 = vpop.f32.mrb[0].mxu0
      %v613 = vadd.f32 0.0, %v612
      %v614 = vpop.f32.mrb[0].mxu0
      %v615 = vpop.f32.mrb[0].mxu0
      %v616 = vadd.f32 0.0, %v615
      %v617 = vpop.f32.mrb[0].mxu0
      %618 = vmatprep.mubr.bf16.mxu0 0
      %619 = vmatmul.mubr.bf16.gmra.mrb[0].mxu0 %v404
      %v620 = vpop.f32.mrb[0].mxu0
      %v621 = vadd.f32 0.0, %v620
      %v622 = vpop.f32.mrb[0].mxu0
      %v623 = vpop.f32.mrb[0].mxu0
      %v624 = vadd.f32 0.0, %v623
      %v625 = vpop.f32.mrb[0].mxu0
      %626 = vmatprep.mubr.bf16.mxu0 0
      %627 = vmatmul.mubr.bf16.gmra.mrb[0].mxu0 %v405
      %v628 = vpop.f32.mrb[0].mxu0
      %v629 = vadd.f32 0.0, %v628
      %v630 = vpop.f32.mrb[0].mxu0
      %v631 = vpop.f32.mrb[0].mxu0
      %v632 = vadd.f32 0.0, %v631
      %v633 = vpop.f32.mrb[0].mxu0
      %634 = vmatprep.mubr.bf16.mxu0 0
      %635 = vmatmul.mubr.bf16.gmra.mrb[0].mxu0 %v406
      %v636 = vpop.f32.mrb[0].mxu0
      %v637 = vadd.f32 0.0, %v636
      %v638 = vpop.f32.mrb[0].mxu0
      %v639 = vpop.f32.mrb[0].mxu0
      %v640 = vadd.f32 0.0, %v639
      %v641 = vpop.f32.mrb[0].mxu0
      %642 = vmatprep.mubr.bf16.mxu0 0
      %643 = vmatmul.mubr.bf16.gmra.mrb[0].mxu0 %v407
      %v644 = vpop.f32.mrb[0].mxu0
      %v645 = vadd.f32 0.0, %v644
      %v646 = vpop.f32.mrb[0].mxu0
      %v647 = vpop.f32.mrb[0].mxu0
      %v648 = vadd.f32 0.0, %v647
      %v649 = vpop.f32.mrb[0].mxu0
      %650 = vmatprep.mubr.bf16.mxu0 0
      %651 = vmatmul.mubr.bf16.gmra.mrb[0].mxu0 %v408
      %v652 = vpop.f32.mrb[0].mxu0
      %v653 = vadd.f32 0.0, %v652
      %v654 = vpop.f32.mrb[0].mxu0
      %v655 = vpop.f32.mrb[0].mxu0
      %v656 = vadd.f32 0.0, %v655
      %v657 = vpop.f32.mrb[0].mxu0
      %658 = vmatprep.mubr.bf16.mxu0 0
      %659 = vmatmul.mubr.bf16.gmra.mrb[0].mxu0 %v409
      %v660 = vpop.f32.mrb[0].mxu0
      %v661 = vadd.f32 0.0, %v660
      %v662 = vpop.f32.mrb[0].mxu0
      %v663 = vpop.f32.mrb[0].mxu0
      %v664 = vadd.f32 0.0, %v663
      %v665 = vpop.f32.mrb[0].mxu0
      %666 = vmatprep.mubr.bf16.mxu0 0
      %667 = vmatmul.mubr.bf16.gmra.mrb[0].mxu0 %v410
      %v668 = vpop.f32.mrb[0].mxu0
      %v669 = vadd.f32 0.0, %v668
      %v670 = vpop.f32.mrb[0].mxu0
      %v671 = vpop.f32.mrb[0].mxu0
      %v672 = vadd.f32 0.0, %v671
      %v673 = vpop.f32.mrb[0].mxu0
      %674 = vmatprep.mubr.bf16.mxu0 0
      %675 = vmatmul.mubr.bf16.gmra.mrb[0].mxu0 %v411
      %v676 = vpop.f32.mrb[0].mxu0
      %v677 = vadd.f32 0.0, %v676
      %v678 = vpop.f32.mrb[0].mxu0
      %v679 = vpop.f32.mrb[0].mxu0
      %v680 = vadd.f32 0.0, %v679
      %v681 = vpop.f32.mrb[0].mxu0
      %682 = vmatprep.mubr.bf16.mxu0 0
      %683 = vmatmul.mubr.bf16.gmra.mrb[0].mxu0 %v412
      %v684 = vpop.f32.mrb[0].mxu0
      %v685 = vadd.f32 0.0, %v684
      %v686 = vpop.f32.mrb[0].mxu0
      %v687 = vpop.f32.mrb[0].mxu0
      %v688 = vadd.f32 0.0, %v687
      %v689 = vpop.f32.mrb[0].mxu0
      %690 = vmatprep.mubr.bf16.mxu0 0
      %691 = vmatmul.mubr.bf16.gmra.mrb[0].mxu0 %v413
      %v692 = vpop.f32.mrb[0].mxu0
      %v693 = vadd.f32 0.0, %v692
      %v694 = vpop.f32.mrb[0].mxu0
      %v695 = vpop.f32.mrb[0].mxu0
      %v696 = vadd.f32 0.0, %v695
      %v697 = vpop.f32.mrb[0].mxu0
      %698 = vmatprep.mubr.bf16.mxu0 0
      %699 = vmatmul.mubr.bf16.gmra.mrb[0].mxu0 %v414
      %v700 = vpop.f32.mrb[0].mxu0
      %v701 = vadd.f32 0.0, %v700
      %v702 = vpop.f32.mrb[0].mxu0
      %v703 = vpop.f32.mrb[0].mxu0
      %v704 = vadd.f32 0.0, %v703
      %v705 = vpop.f32.mrb[0].mxu0
      %706 = vmatprep.mubr.bf16.mxu0 0
      %707 = vmatmul.mubr.bf16.gmra.mrb[0].mxu0 %v415
      %v708 = vpop.f32.mrb[0].mxu0
      %v709 = vadd.f32 0.0, %v708
      %v710 = vpop.f32.mrb[0].mxu0
      %v711 = vpop.f32.mrb[0].mxu0
      %v712 = vadd.f32 0.0, %v711
      %v713 = vpop.f32.mrb[0].mxu0
      %714 = vmatprep.mubr.bf16.mxu0 0
      %715 = vmatmul.mubr.bf16.gmra.mrb[0].mxu0 %v416
      %v716 = vpop.f32.mrb[0].mxu0
      %v717 = vadd.f32 0.0, %v716
      %v718 = vpop.f32.mrb[0].mxu0
      %v719 = vpop.f32.mrb[0].mxu0
      %v720 = vadd.f32 0.0, %v719
      %v721 = vpop.f32.mrb[0].mxu0
      %722 = vmatprep.mubr.bf16.mxu0 0
      %723 = vmatmul.mubr.bf16.gmra.mrb[0].mxu0 %v417
      %v724 = vpop.f32.mrb[0].mxu0
      %v725 = vadd.f32 0.0, %v724
      %v726 = vpop.f32.mrb[0].mxu0
      %v727 = vpop.f32.mrb[0].mxu0
      %v728 = vadd.f32 0.0, %v727
      %v729 = vpop.f32.mrb[0].mxu0
      %730 = vmatprep.mubr.bf16.mxu0 0
      %731 = vmatmul.mubr.bf16.gmra.mrb[0].mxu0 %v418
      %v732 = vpop.f32.mrb[0].mxu0
      %v733 = vadd.f32 0.0, %v732
      %v734 = vpop.f32.mrb[0].mxu0
      %v735 = vpop.f32.mrb[0].mxu0
      %v736 = vadd.f32 0.0, %v735
      %v737 = vpop.f32.mrb[0].mxu0
      %738 = vmatprep.mubr.bf16.mxu0 0
      %739 = vmatmul.mubr.bf16.gmra.mrb[0].mxu0 %v419
      %v740 = vpop.f32.mrb[0].mxu0
      %v741 = vadd.f32 0.0, %v740
      %v742 = vpop.f32.mrb[0].mxu0
      %v743 = vpop.f32.mrb[0].mxu0
      %v744 = vadd.f32 0.0, %v743
      %v745 = vpop.f32.mrb[0].mxu0
      %746 = vmatprep.mubr.bf16.mxu0 0
      %747 = vmatmul.mubr.bf16.gmra.mrb[0].mxu0 %v420
      %v748 = vpop.f32.mrb[0].mxu0
      %v749 = vadd.f32 0.0, %v748
      %v750 = vpop.f32.mrb[0].mxu0
      %v751 = vpop.f32.mrb[0].mxu0
      %v752 = vadd.f32 0.0, %v751
      %v753 = vpop.f32.mrb[0].mxu0
      %754 = vmatprep.mubr.bf16.mxu0 0
      %755 = vmatmul.mubr.bf16.gmra.mrb[0].mxu0 %v421
      %v756 = vpop.f32.mrb[0].mxu0
      %v757 = vadd.f32 0.0, %v756
      %v758 = vpop.f32.mrb[0].mxu0
      %v759 = vpop.f32.mrb[0].mxu0
      %v760 = vadd.f32 0.0, %v759
      %v761 = vpop.f32.mrb[0].mxu0
      %762 = vmatprep.mubr.bf16.mxu0 0
      %763 = vmatmul.mubr.bf16.gmra.mrb[0].mxu0 %v422
      %v764 = vpop.f32.mrb[0].mxu0
      %v765 = vadd.f32 0.0, %v764
      %v766 = vpop.f32.mrb[0].mxu0
      %v767 = vpop.f32.mrb[0].mxu0
      %v768 = vadd.f32 0.0, %v767
      %v769 = vpop.f32.mrb[0].mxu0
      %770 = vmatprep.mubr.bf16.mxu0 0
      %771 = vmatmul.mubr.bf16.gmra.mrb[0].mxu0 %v423
      %v772 = vpop.f32.mrb[0].mxu0
      %v773 = vadd.f32 0.0, %v772
      %v774 = vpop.f32.mrb[0].mxu0
      %v775 = vpop.f32.mrb[0].mxu0
      %v776 = vadd.f32 0.0, %v775
      %v777 = vpop.f32.mrb[0].mxu0
      %778 = vmatprep.mubr.bf16.mxu0 0
      %779 = vmatmul.mubr.bf16.gmra.mrb[0].mxu0 %v424
      %v780 = vpop.f32.mrb[0].mxu0
      %v781 = vadd.f32 0.0, %v780
      %v782 = vpop.f32.mrb[0].mxu0
      %v783 = vpop.f32.mrb[0].mxu0
      %v784 = vadd.f32 0.0, %v783
      %v785 = vpop.f32.mrb[0].mxu0
      %786 = vmatprep.mubr.bf16.mxu0 0
      %787 = vmatmul.mubr.bf16.gmra.mrb[0].mxu0 %v425
      %v788 = vpop.f32.mrb[0].mxu0
      %v789 = vadd.f32 0.0, %v788
      %v790 = vpop.f32.mrb[0].mxu0
      %v791 = vpop.f32.mrb[0].mxu0
      %v792 = vadd.f32 0.0, %v791
      %v793 = vpop.f32.mrb[0].mxu0
      %794 = vdwg.mxu0
      %v795 = vpack.c.bf16 %v544, %v541
      %v796 = vpack.c.bf16 %v552, %v549
      %v797 = vpack.c.bf16 %v560, %v557
      %v798 = vpack.c.bf16 %v568, %v565
      %v799 = vpack.c.bf16 %v576, %v573
      %v800 = vpack.c.bf16 %v584, %v581
      %v801 = vpack.c.bf16 %v592, %v589
      %v802 = vpack.c.bf16 %v600, %v597
      %v803 = vpack.c.bf16 %v608, %v605
      %v804 = vpack.c.bf16 %v616, %v613
      %v805 = vpack.c.bf16 %v624, %v621
      %v806 = vpack.c.bf16 %v632, %v629
      %v807 = vpack.c.bf16 %v640, %v637
      %v808 = vpack.c.bf16 %v648, %v645
      %v809 = vpack.c.bf16 %v656, %v653
      %v810 = vpack.c.bf16 %v664, %v661
      %v811 = vpack.c.bf16 %v672, %v669
      %v812 = vpack.c.bf16 %v680, %v677
      %v813 = vpack.c.bf16 %v688, %v685
      %v814 = vpack.c.bf16 %v696, %v693
      %v815 = vpack.c.bf16 %v704, %v701
      %v816 = vpack.c.bf16 %v712, %v709
      %v817 = vpack.c.bf16 %v720, %v717
      %v818 = vpack.c.bf16 %v728, %v725
      %v819 = vpack.c.bf16 %v736, %v733
      %v820 = vpack.c.bf16 %v744, %v741
      %v821 = vpack.c.bf16 %v752, %v749
      %v822 = vpack.c.bf16 %v760, %v757
      %v823 = vpack.c.bf16 %v768, %v765
      %v824 = vpack.c.bf16 %v776, %v773
      %v825 = vpack.c.bf16 %v784, %v781
      %v826 = vpack.c.bf16 %v792, %v789
      %v859 = vunpack.c.l.b16 %v795
      %v860 = vunpack.c.h.b16 %v795
      %v861 = vunpack.c.l.b16 %v796
      %v862 = vunpack.c.h.b16 %v796
      %v863 = vunpack.c.l.b16 %v797
      %v864 = vunpack.c.h.b16 %v797
      %v865 = vunpack.c.l.b16 %v798
      %v866 = vunpack.c.h.b16 %v798
      %v867 = vunpack.c.l.b16 %v799
      %v868 = vunpack.c.h.b16 %v799
      %v869 = vunpack.c.l.b16 %v800
      %v870 = vunpack.c.h.b16 %v800
      %v871 = vunpack.c.l.b16 %v801
      %v872 = vunpack.c.h.b16 %v801
      %v873 = vunpack.c.l.b16 %v802
      %v874 = vunpack.c.h.b16 %v802
      %v875 = vunpack.c.l.b16 %v803
      %v876 = vunpack.c.h.b16 %v803
      %v877 = vunpack.c.l.b16 %v804
      %v878 = vunpack.c.h.b16 %v804
      %v879 = vunpack.c.l.b16 %v805
      %v880 = vunpack.c.h.b16 %v805
      %v881 = vunpack.c.l.b16 %v806
      %v882 = vunpack.c.h.b16 %v806
      %v883 = vunpack.c.l.b16 %v807
      %v884 = vunpack.c.h.b16 %v807
      %v885 = vunpack.c.l.b16 %v808
      %v886 = vunpack.c.h.b16 %v808
      %v887 = vunpack.c.l.b16 %v809
      %v888 = vunpack.c.h.b16 %v809
      %v889 = vunpack.c.l.b16 %v810
      %v890 = vunpack.c.h.b16 %v810
      %v891 = vunpack.c.l.b16 %v811
      %v892 = vunpack.c.h.b16 %v811
      %v893 = vunpack.c.l.b16 %v812
      %v894 = vunpack.c.h.b16 %v812
      %v895 = vunpack.c.l.b16 %v813
      %v896 = vunpack.c.h.b16 %v813
      %v897 = vunpack.c.l.b16 %v814
      %v898 = vunpack.c.h.b16 %v814
      %v899 = vunpack.c.l.b16 %v815
      %v900 = vunpack.c.h.b16 %v815
      %v901 = vunpack.c.l.b16 %v816
      %v902 = vunpack.c.h.b16 %v816
      %v903 = vunpack.c.l.b16 %v817
      %v904 = vunpack.c.h.b16 %v817
      %v905 = vunpack.c.l.b16 %v818
      %v906 = vunpack.c.h.b16 %v818
      %v907 = vunpack.c.l.b16 %v819
      %v908 = vunpack.c.h.b16 %v819
      %v909 = vunpack.c.l.b16 %v820
      %v910 = vunpack.c.h.b16 %v820
      %v911 = vunpack.c.l.b16 %v821
      %v912 = vunpack.c.h.b16 %v821
      %v913 = vunpack.c.l.b16 %v822
      %v914 = vunpack.c.h.b16 %v822
      %v915 = vunpack.c.l.b16 %v823
      %v916 = vunpack.c.h.b16 %v823
      %v917 = vunpack.c.l.b16 %v824
      %v918 = vunpack.c.h.b16 %v824
      %v919 = vunpack.c.l.b16 %v825
      %v920 = vunpack.c.h.b16 %v825
      %v921 = vunpack.c.l.b16 %v826
      %v922 = vunpack.c.h.b16 %v826
      %v923 = vpack.c.b16 %v859, %v859
      %v924 = vpack.c.b16 %v860, %v860
      %v925 = vpack.c.b16 %v861, %v861
      %v926 = vpack.c.b16 %v862, %v862
      %v927 = vpack.c.b16 %v863, %v863
      %v928 = vpack.c.b16 %v864, %v864
      %v929 = vpack.c.b16 %v865, %v865
      %v930 = vpack.c.b16 %v866, %v866
      %v931 = vpack.c.b16 %v867, %v867
      %v932 = vpack.c.b16 %v868, %v868
      %v933 = vpack.c.b16 %v869, %v869
      %v934 = vpack.c.b16 %v870, %v870
      %v935 = vpack.c.b16 %v871, %v871
      %v936 = vpack.c.b16 %v872, %v872
      %v937 = vpack.c.b16 %v873, %v873
      %v938 = vpack.c.b16 %v874, %v874
      %v939 = vpack.c.b16 %v875, %v875
      %v940 = vpack.c.b16 %v876, %v876
      %v941 = vpack.c.b16 %v877, %v877
      %v942 = vpack.c.b16 %v878, %v878
      %v943 = vpack.c.b16 %v879, %v879
      %v944 = vpack.c.b16 %v880, %v880
      %v945 = vpack.c.b16 %v881, %v881
      %v946 = vpack.c.b16 %v882, %v882
      %v947 = vpack.c.b16 %v883, %v883
      %v948 = vpack.c.b16 %v884, %v884
      %v949 = vpack.c.b16 %v885, %v885
      %v950 = vpack.c.b16 %v886, %v886
      %v951 = vpack.c.b16 %v887, %v887
      %v952 = vpack.c.b16 %v888, %v888
      %v953 = vpack.c.b16 %v889, %v889
      %v954 = vpack.c.b16 %v890, %v890
      %v955 = vpack.c.b16 %v891, %v891
      %v956 = vpack.c.b16 %v892, %v892
      %v957 = vpack.c.b16 %v893, %v893
      %v958 = vpack.c.b16 %v894, %v894
      %v959 = vpack.c.b16 %v895, %v895
      %v960 = vpack.c.b16 %v896, %v896
      %v961 = vpack.c.b16 %v897, %v897
      %v962 = vpack.c.b16 %v898, %v898
      %v963 = vpack.c.b16 %v899, %v899
      %v964 = vpack.c.b16 %v900, %v900
      %v965 = vpack.c.b16 %v901, %v901
      %v966 = vpack.c.b16 %v902, %v902
      %v967 = vpack.c.b16 %v903, %v903
      %v968 = vpack.c.b16 %v904, %v904
      %v969 = vpack.c.b16 %v905, %v905
      %v970 = vpack.c.b16 %v906, %v906
      %v971 = vpack.c.b16 %v907, %v907
      %v972 = vpack.c.b16 %v908, %v908
      %v973 = vpack.c.b16 %v909, %v909
      %v974 = vpack.c.b16 %v910, %v910
      %v975 = vpack.c.b16 %v911, %v911
      %v976 = vpack.c.b16 %v912, %v912
      %v977 = vpack.c.b16 %v913, %v913
      %v978 = vpack.c.b16 %v914, %v914
      %v979 = vpack.c.b16 %v915, %v915
      %v980 = vpack.c.b16 %v916, %v916
      %v981 = vpack.c.b16 %v917, %v917
      %v982 = vpack.c.b16 %v918, %v918
      %v983 = vpack.c.b16 %v919, %v919
      %v984 = vpack.c.b16 %v920, %v920
      %v985 = vpack.c.b16 %v921, %v921
      %v986 = vpack.c.b16 %v922, %v922
      %1051 = vst [vmem:[%s179] sm:$0xf] %v923
      %1052 = vst [vmem:[%s179 + $0x4] sm:$0xf] %v924
      %1053 = vst [vmem:[%s179 + $0x8] sm:$0xf] %v925
      %1054 = vst [vmem:[%s179 + $0xc] sm:$0xf] %v926
      %1055 = vst [vmem:[%s179 + $0x10] sm:$0xf] %v927
      %1056 = vst [vmem:[%s179 + $0x14] sm:$0xf] %v928
      %1057 = vst [vmem:[%s179 + $0x18] sm:$0xf] %v929
      %1058 = vst [vmem:[%s179 + $0x1c] sm:$0xf] %v930
      %1059 = vst [vmem:[%s179 + $0x20] sm:$0xf] %v931
      %1060 = vst [vmem:[%s179 + $0x24] sm:$0xf] %v932
      %1061 = vst [vmem:[%s179 + $0x28] sm:$0xf] %v933
      %1062 = vst [vmem:[%s179 + $0x2c] sm:$0xf] %v934
      %1063 = vst [vmem:[%s179 + $0x30] sm:$0xf] %v935
      %1064 = vst [vmem:[%s179 + $0x34] sm:$0xf] %v936
      %1065 = vst [vmem:[%s179 + $0x38] sm:$0xf] %v937
      %1066 = vst [vmem:[%s179 + $0x3c] sm:$0xf] %v938
      %1067 = vst [vmem:[%s179 + $0x40] sm:$0xf] %v939
      %1068 = vst [vmem:[%s179 + $0x44] sm:$0xf] %v940
      %1069 = vst [vmem:[%s179 + $0x48] sm:$0xf] %v941
      %1070 = vst [vmem:[%s179 + $0x4c] sm:$0xf] %v942
      %1071 = vst [vmem:[%s179 + $0x50] sm:$0xf] %v943
      %1072 = vst [vmem:[%s179 + $0x54] sm:$0xf] %v944
      %1073 = vst [vmem:[%s179 + $0x58] sm:$0xf] %v945
      %1074 = vst [vmem:[%s179 + $0x5c] sm:$0xf] %v946
      %1075 = vst [vmem:[%s179 + $0x60] sm:$0xf] %v947
      %1076 = vst [vmem:[%s179 + $0x64] sm:$0xf] %v948
      %1077 = vst [vmem:[%s179 + $0x68] sm:$0xf] %v949
      %1078 = vst [vmem:[%s179 + $0x6c] sm:$0xf] %v950
      %1079 = vst [vmem:[%s179 + $0x70] sm:$0xf] %v951
      %1080 = vst [vmem:[%s179 + $0x74] sm:$0xf] %v952
      %1081 = vst [vmem:[%s179 + $0x78] sm:$0xf] %v953
      %1082 = vst [vmem:[%s179 + $0x7c] sm:$0xf] %v954
      %1083 = vst [vmem:[%s179 + $0x80] sm:$0xf] %v955
      %1084 = vst [vmem:[%s179 + $0x84] sm:$0xf] %v956
      %1085 = vst [vmem:[%s179 + $0x88] sm:$0xf] %v957
      %1086 = vst [vmem:[%s179 + $0x8c] sm:$0xf] %v958
      %1087 = vst [vmem:[%s179 + $0x90] sm:$0xf] %v959
      %1088 = vst [vmem:[%s179 + $0x94] sm:$0xf] %v960
      %1089 = vst [vmem:[%s179 + $0x98] sm:$0xf] %v961
      %1090 = vst [vmem:[%s179 + $0x9c] sm:$0xf] %v962
      %1091 = vst [vmem:[%s179 + $0xa0] sm:$0xf] %v963
      %1092 = vst [vmem:[%s179 + $0xa4] sm:$0xf] %v964
      %1093 = vst [vmem:[%s179 + $0xa8] sm:$0xf] %v965
      %1094 = vst [vmem:[%s179 + $0xac] sm:$0xf] %v966
      %1095 = vst [vmem:[%s179 + $0xb0] sm:$0xf] %v967
      %1096 = vst [vmem:[%s179 + $0xb4] sm:$0xf] %v968
      %1097 = vst [vmem:[%s179 + $0xb8] sm:$0xf] %v969
      %1098 = vst [vmem:[%s179 + $0xbc] sm:$0xf] %v970
      %1099 = vst [vmem:[%s179 + $0xc0] sm:$0xf] %v971
      %1100 = vst [vmem:[%s179 + $0xc4] sm:$0xf] %v972
      %1101 = vst [vmem:[%s179 + $0xc8] sm:$0xf] %v973
      %1102 = vst [vmem:[%s179 + $0xcc] sm:$0xf] %v974
      %1103 = vst [vmem:[%s179 + $0xd0] sm:$0xf] %v975
      %1104 = vst [vmem:[%s179 + $0xd4] sm:$0xf] %v976
      %1105 = vst [vmem:[%s179 + $0xd8] sm:$0xf] %v977
      %1106 = vst [vmem:[%s179 + $0xdc] sm:$0xf] %v978
      %1107 = vst [vmem:[%s179 + $0xe0] sm:$0xf] %v979
      %1108 = vst [vmem:[%s179 + $0xe4] sm:$0xf] %v980
      %1109 = vst [vmem:[%s179 + $0xe8] sm:$0xf] %v981
      %1110 = vst [vmem:[%s179 + $0xec] sm:$0xf] %v982
      %1111 = vst [vmem:[%s179 + $0xf0] sm:$0xf] %v983
      %1112 = vst [vmem:[%s179 + $0xf4] sm:$0xf] %v984
      %1113 = vst [vmem:[%s179 + $0xf8] sm:$0xf] %v985
      %1114 = vst [vmem:[%s179 + $0xfc] sm:$0xf] %v986
      %v1115 = vadd.f32 %v541, %v544
      %v1116 = vadd.f32 %v1115, %v549
      %v1117 = vadd.f32 %v1116, %v552
      %v1118 = vadd.f32 %v1117, %v557
      %v1119 = vadd.f32 %v1118, %v560
      %v1120 = vadd.f32 %v1119, %v565
      %v1121 = vadd.f32 %v1120, %v568
      %v1122 = vadd.f32 %v1121, %v573
      %v1123 = vadd.f32 %v1122, %v576
      %v1124 = vadd.f32 %v1123, %v581
      %v1125 = vadd.f32 %v1124, %v584
      %v1126 = vadd.f32 %v1125, %v589
      %v1127 = vadd.f32 %v1126, %v592
      %v1128 = vadd.f32 %v1127, %v597
      %v1129 = vadd.f32 %v1128, %v600
      %v1130 = vadd.f32 %v1129, %v605
      %v1131 = vadd.f32 %v1130, %v608
      %v1132 = vadd.f32 %v1131, %v613
      %v1133 = vadd.f32 %v1132, %v616
      %v1134 = vadd.f32 %v1133, %v621
      %v1135 = vadd.f32 %v1134, %v624
      %v1136 = vadd.f32 %v1135, %v629
      %v1137 = vadd.f32 %v1136, %v632
      %v1138 = vadd.f32 %v1137, %v637
      %v1139 = vadd.f32 %v1138, %v640
      %v1140 = vadd.f32 %v1139, %v645
      %v1141 = vadd.f32 %v1140, %v648
      %v1142 = vadd.f32 %v1141, %v653
      %v1143 = vadd.f32 %v1142, %v656
      %v1144 = vadd.f32 %v1143, %v661
      %v1145 = vadd.f32 %v1144, %v664
      %v1146 = vadd.f32 %v1145, %v669
      %v1147 = vadd.f32 %v1146, %v672
      %v1148 = vadd.f32 %v1147, %v677
      %v1149 = vadd.f32 %v1148, %v680
      %v1150 = vadd.f32 %v1149, %v685
      %v1151 = vadd.f32 %v1150, %v688
      %v1152 = vadd.f32 %v1151, %v693
      %v1153 = vadd.f32 %v1152, %v696
      %v1154 = vadd.f32 %v1153, %v701
      %v1155 = vadd.f32 %v1154, %v704
      %v1156 = vadd.f32 %v1155, %v709
      %v1157 = vadd.f32 %v1156, %v712
      %v1158 = vadd.f32 %v1157, %v717
      %v1159 = vadd.f32 %v1158, %v720
      %v1160 = vadd.f32 %v1159, %v725
      %v1161 = vadd.f32 %v1160, %v728
      %v1162 = vadd.f32 %v1161, %v733
      %v1163 = vadd.f32 %v1162, %v736
      %v1164 = vadd.f32 %v1163, %v741
      %v1165 = vadd.f32 %v1164, %v744
      %v1166 = vadd.f32 %v1165, %v749
      %v1167 = vadd.f32 %v1166, %v752
      %v1168 = vadd.f32 %v1167, %v757
      %v1169 = vadd.f32 %v1168, %v760
      %v1170 = vadd.f32 %v1169, %v765
      %v1171 = vadd.f32 %v1170, %v768
      %v1172 = vadd.f32 %v1171, %v773
      %v1173 = vadd.f32 %v1172, %v776
      %v1174 = vadd.f32 %v1173, %v781
      %v1175 = vadd.f32 %v1174, %v784
      %v1176 = vadd.f32 %v1175, %v789
      %v1177 = vadd.f32 %v1176, %v792
      %v1178 = vrot.slane %v1177, 4
      %v1179 = vadd.f32 %v1177, %v1178
      %v1180 = vrot.slane %v1179, 2
      %v1181 = vadd.f32 %v1179, %v1180
      %v1182 = vrot.slane %v1181, 1
      %v1183 = vadd.f32 %v1181, %v1182
      %v1184 = vmul.f32 %v541, %v541
      %v1185 = vmul.f32 %v544, %v544
      %v1186 = vmul.f32 %v549, %v549
      %v1187 = vmul.f32 %v552, %v552
      %v1188 = vmul.f32 %v557, %v557
      %v1189 = vmul.f32 %v560, %v560
      %v1190 = vmul.f32 %v565, %v565
      %v1191 = vmul.f32 %v568, %v568
      %v1192 = vmul.f32 %v573, %v573
      %v1193 = vmul.f32 %v576, %v576
      %v1194 = vmul.f32 %v581, %v581
      %v1195 = vmul.f32 %v584, %v584
      %v1196 = vmul.f32 %v589, %v589
      %v1197 = vmul.f32 %v592, %v592
      %v1198 = vmul.f32 %v597, %v597
      %v1199 = vmul.f32 %v600, %v600
      %v1200 = vmul.f32 %v605, %v605
      %v1201 = vmul.f32 %v608, %v608
      %v1202 = vmul.f32 %v613, %v613
      %v1203 = vmul.f32 %v616, %v616
      %v1204 = vmul.f32 %v621, %v621
      %v1205 = vmul.f32 %v624, %v624
      %v1206 = vmul.f32 %v629, %v629
      %v1207 = vmul.f32 %v632, %v632
      %v1208 = vmul.f32 %v637, %v637
      %v1209 = vmul.f32 %v640, %v640
      %v1210 = vmul.f32 %v645, %v645
      %v1211 = vmul.f32 %v648, %v648
      %v1212 = vmul.f32 %v653, %v653
      %v1213 = vmul.f32 %v656, %v656
      %v1214 = vmul.f32 %v661, %v661
      %v1215 = vmul.f32 %v664, %v664
      %v1216 = vmul.f32 %v669, %v669
      %v1217 = vmul.f32 %v672, %v672
      %v1218 = vmul.f32 %v677, %v677
      %v1219 = vmul.f32 %v680, %v680
      %v1220 = vmul.f32 %v685, %v685
      %v1221 = vmul.f32 %v688, %v688
      %v1222 = vmul.f32 %v693, %v693
      %v1223 = vmul.f32 %v696, %v696
      %v1224 = vmul.f32 %v701, %v701
      %v1225 = vmul.f32 %v704, %v704
      %v1226 = vmul.f32 %v709, %v709
      %v1227 = vmul.f32 %v712, %v712
      %v1228 = vmul.f32 %v717, %v717
      %v1229 = vmul.f32 %v720, %v720
      %v1230 = vmul.f32 %v725, %v725
      %v1231 = vmul.f32 %v728, %v728
      %v1232 = vmul.f32 %v733, %v733
      %v1233 = vmul.f32 %v736, %v736
      %v1234 = vmul.f32 %v741, %v741
      %v1235 = vmul.f32 %v744, %v744
      %v1236 = vmul.f32 %v749, %v749
      %v1237 = vmul.f32 %v752, %v752
      %v1238 = vmul.f32 %v757, %v757
      %v1239 = vmul.f32 %v760, %v760
      %v1240 = vmul.f32 %v765, %v765
      %v1241 = vmul.f32 %v768, %v768
      %v1242 = vmul.f32 %v773, %v773
      %v1243 = vmul.f32 %v776, %v776
      %v1244 = vmul.f32 %v781, %v781
      %v1245 = vmul.f32 %v784, %v784
      %v1246 = vmul.f32 %v789, %v789
      %v1247 = vmul.f32 %v792, %v792
      %v1248 = vadd.f32 %v1184, %v1185
      %v1249 = vadd.f32 %v1248, %v1186
      %v1250 = vadd.f32 %v1249, %v1187
      %v1251 = vadd.f32 %v1250, %v1188
      %v1252 = vadd.f32 %v1251, %v1189
      %v1253 = vadd.f32 %v1252, %v1190
      %v1254 = vadd.f32 %v1253, %v1191
      %v1255 = vadd.f32 %v1254, %v1192
      %v1256 = vadd.f32 %v1255, %v1193
      %v1257 = vadd.f32 %v1256, %v1194
      %v1258 = vadd.f32 %v1257, %v1195
      %v1259 = vadd.f32 %v1258, %v1196
      %v1260 = vadd.f32 %v1259, %v1197
      %v1261 = vadd.f32 %v1260, %v1198
      %v1262 = vadd.f32 %v1261, %v1199
      %v1263 = vadd.f32 %v1262, %v1200
      %v1264 = vadd.f32 %v1263, %v1201
      %v1265 = vadd.f32 %v1264, %v1202
      %v1266 = vadd.f32 %v1265, %v1203
      %v1267 = vadd.f32 %v1266, %v1204
      %v1268 = vadd.f32 %v1267, %v1205
      %v1269 = vadd.f32 %v1268, %v1206
      %v1270 = vadd.f32 %v1269, %v1207
      %v1271 = vadd.f32 %v1270, %v1208
      %v1272 = vadd.f32 %v1271, %v1209
      %v1273 = vadd.f32 %v1272, %v1210
      %v1274 = vadd.f32 %v1273, %v1211
      %v1275 = vadd.f32 %v1274, %v1212
      %v1276 = vadd.f32 %v1275, %v1213
      %v1277 = vadd.f32 %v1276, %v1214
      %v1278 = vadd.f32 %v1277, %v1215
      %v1279 = vadd.f32 %v1278, %v1216
      %v1280 = vadd.f32 %v1279, %v1217
      %v1281 = vadd.f32 %v1280, %v1218
      %v1282 = vadd.f32 %v1281, %v1219
      %v1283 = vadd.f32 %v1282, %v1220
      %v1284 = vadd.f32 %v1283, %v1221
      %v1285 = vadd.f32 %v1284, %v1222
      %v1286 = vadd.f32 %v1285, %v1223
      %v1287 = vadd.f32 %v1286, %v1224
      %v1288 = vadd.f32 %v1287, %v1225
      %v1289 = vadd.f32 %v1288, %v1226
      %v1290 = vadd.f32 %v1289, %v1227
      %v1291 = vadd.f32 %v1290, %v1228
      %v1292 = vadd.f32 %v1291, %v1229
      %v1293 = vadd.f32 %v1292, %v1230
      %v1294 = vadd.f32 %v1293, %v1231
      %v1295 = vadd.f32 %v1294, %v1232
      %v1296 = vadd.f32 %v1295, %v1233
      %v1297 = vadd.f32 %v1296, %v1234
      %v1298 = vadd.f32 %v1297, %v1235
      %v1299 = vadd.f32 %v1298, %v1236
      %v1300 = vadd.f32 %v1299, %v1237
      %v1301 = vadd.f32 %v1300, %v1238
      %v1302 = vadd.f32 %v1301, %v1239
      %v1303 = vadd.f32 %v1302, %v1240
      %v1304 = vadd.f32 %v1303, %v1241
      %v1305 = vadd.f32 %v1304, %v1242
      %v1306 = vadd.f32 %v1305, %v1243
      %v1307 = vadd.f32 %v1306, %v1244
      %v1308 = vadd.f32 %v1307, %v1245
      %v1309 = vadd.f32 %v1308, %v1246
      %v1310 = vadd.f32 %v1309, %v1247
      %v1311 = vrot.slane %v1310, 4
      %v1312 = vadd.f32 %v1310, %v1311
      %v1313 = vrot.slane %v1312, 2
      %v1314 = vadd.f32 %v1312, %v1313
      %v1315 = vrot.slane %v1314, 1
      %v1316 = vadd.f32 %v1314, %v1315
      %vm1317 = vcmask 1040384
      %v1318 = vsel %vm1317, %v1183, %v1316
      %vm1319 = vcmask 1041408
      %v1320 = vsel %vm1319, %v1318, 0.0
      %1321 = vst [vmem:[%s184] sm:$0xff] %v1320
      %s1322 = smul.u32 64, %s15
      %p1323 = scmp.lt.s32.totalorder %s1322, 127
      %s1324 = scalar_select %p1323, %s1322, 127
      %s1325 = smul.addr %s1324, 4
      %s1326 = scalar_lea.vmem %s2, %s1325
      %p1327 = scmp.lt.s32.totalorder %s15, 1
      %s1328 = scalar_select %p1327, %s15, 1
      %s1329 = smul.addr %s1328, 8
      %s1330 = scalar_lea.vmem %s3, %s1329
      // Predicated region
      $region29: #{bottleneck_forward.4} parent=27 // pred_check
        %p1331 = pneg %p80
      $region30: #{bottleneck_forward.4} parent=27 // pred_check_branch
        %1333 = sbr.rel (%p1331) target = $region32
      $region31: #{bottleneck_forward.4} parent=27 // pred_region
        %s1334 = smul.u32 64, %s15
      $region32: #{bottleneck_forward.4} parent=27 // pred_fallthru
        _
      // Predicated region
      $region33: #{bottleneck_forward.4} parent=27 // pred_check
        %p1335 = pneg %p106
      $region34: #{bottleneck_forward.4} parent=27 // pred_check_branch
        %1337 = sbr.rel (%p1335) target = $region36
      $region35: #{bottleneck_forward.4} parent=27 // pred_region
        _
      $region36: #{bottleneck_forward.4} parent=27 // pred_fallthru
        _
    $region28: #{bottleneck_forward.4} parent=5 // pred_fallthru
      _
    %p1338 = scmp.le.s32.totalorder 2, %s10
    // Predicated region
    $region37: #{bottleneck_forward.4} parent=5 // pred_check
      %p1339 = pneg %p1338
    $region38: #{bottleneck_forward.4} parent=5 // pred_check_branch
      %1341 = sbr.rel (%p1339) target = $region40
    $region39: #{bottleneck_forward.4} parent=5 // pred_region
      %s1342 = ssub.s32 %s10, 2
      // Predicated region
      $region41: #{bottleneck_forward.4} parent=39 // pred_check
        %p1343 = pneg %p86
      $region42: #{bottleneck_forward.4} parent=39 // pred_check_branch
        %1345 = sbr.rel (%p1343) target = $region44
      $region43: #{bottleneck_forward.4} parent=39 // pred_region
        %s1346 = smul.u32 64, %s16
        %p1347 = scmp.lt.s32.totalorder %s1346, 127
        %s1348 = scalar_select %p1347, %s1346, 127
        %s1349 = smul.addr %s1348, 4
        %s1350 = scalar_lea.vmem %s2, %s1349
      $region44: #{bottleneck_forward.4} parent=39 // pred_fallthru
        _
      // Predicated region
      $region45: #{bottleneck_forward.4} parent=39 // pred_check
        %p1351 = pneg %p112
      $region46: #{bottleneck_forward.4} parent=39 // pred_check_branch
        %1353 = sbr.rel (%p1351) target = $region48
      $region47: #{bottleneck_forward.4} parent=39 // pred_region
        %p1354 = scmp.lt.s32.totalorder %s16, 1
        %s1355 = scalar_select %p1354, %s16, 1
        %s1356 = smul.addr %s1355, 8
        %s1357 = scalar_lea.vmem %s3, %s1356
      $region48: #{bottleneck_forward.4} parent=39 // pred_fallthru
        _
    $region40: #{bottleneck_forward.4} parent=5 // pred_fallthru
      _
  $region6: #{bottleneck_forward.4} parent=0 // loop_footer
    %s14 = sadd.s32 1, %s10
  $region7: #{bottleneck_forward.4} parent=0 // loop_footer_branch
    %9 = sbr.rel target = $region3
  $region8: #{bottleneck_forward.4} parent=0 // loop_exit
    _

// kernel: bottleneck_forward.7
$region0: #{bottleneck_forward.7}
  #allocation0 [shape = 'u32[]', space=smem, size = 0x4, offset = 0x4, fixed_abs, tag = 'smem constant byte address 0x4 - core index']
  #allocation1 [shape = 'u32[144,128]{1,0:T(1,128)}', space=vmem, size = 0x12000, scoped, tag = 'internal scratch']
  %s0 = inlined_call_operand.vmem [shape: bf16[1024,128], index: 0, kind: input, shape index: {}]
  %s1 = inlined_call_operand.vmem [shape: bf16[1024,128], index: 1, kind: input, shape index: {}]
  %s2 = inlined_call_operand.vmem [shape: f32[1,128], index: 2, kind: input, shape index: {}]
  %s3 = inlined_call_operand.vmem [shape: f32[1,128], index: 3, kind: input, shape index: {}]
  %s4 = inlined_call_operand.vmem [shape: f32[1,128], index: 4, kind: input, shape index: {}]
  %s5 = inlined_call_operand.vmem [shape: f32[1,128], index: 5, kind: input, shape index: {}]
  %s6 = inlined_call_operand.vmem [shape: f32[1024,16], index: 6, kind: output, shape index: {}]
  %s7 = sld [smem:[#allocation0]]
  $region57: #{bottleneck_forward.7} parent=0
    _
  %s9 = ssub.s32 1, %s7
  %s10 = scalar_select 0, %s9, %s7
  loop: start=0, step=1, limit=4
  $region2: #{bottleneck_forward.7} parent=0 // loop_pre_header
    _
  $region3: #{bottleneck_forward.7} parent=0 // loop_header
    %s12 = sphi 0, %s16
    %p13 = scmp.ge.s32.totalorder %s12, 4
    %s22 = sphi 0, %s24
    %s25 = sphi 0, %s22
    %s26 = sphi 0, %s25
    %s42 = sphi 0, %s26
    %s48 = sphi 0, %s50
    %s51 = sphi 0, %s48
    %s52 = sphi 0, %s51
    %s68 = sphi 0, %s52
    %s72 = sphi 0, %s72
    %s74 = sphi 0, %s72
    %s75 = sphi 0, %s74
    %s89 = sphi 0, %s75
    %s93 = sphi 0, %s93
    %s95 = sphi 0, %s93
    %s96 = sphi 0, %s95
    %s110 = sphi 0, %s96
    %s114 = sphi 0, %s114
    %s116 = sphi 0, %s114
    %s117 = sphi 0, %s116
    %s131 = sphi 0, %s117
    %s135 = sphi 0, %s135
    %s137 = sphi 0, %s135
    %s138 = sphi 0, %s137
    %s152 = sphi 0, %s138
    %s158 = sphi 0, %s160
    %s161 = sphi 0, %s158
    %s162 = sphi 0, %s161
    %s178 = sphi 0, %s162
  $region4: #{bottleneck_forward.7} parent=0 // loop_header_branch
    %15 = sbr.rel (%p13) target = $region8
  $region5: #{bottleneck_forward.7} parent=0 // loop_body
    %s17 = ssub.s32 %s12, 1
    %s18 = ssub.s32 %s12, 2
    %s19 = sadd.s32 %s12, 1
    %s20 = ssub.s32 %s12, %s19
    %p21 = scmp.eq.s32.totalorder %s20, 0
    %s23 = sadd.s32 %s22, 1
    %s24 = scalar_select %p21, %s22, %s23
    %p27 = pneg %p21
    %p28 = scmp.eq.s32.totalorder %s12, 1
    %p29 = por %p27, %p28
    %p30 = scmp.ne.s32.totalorder %s22, %s25
    %p31 = scmp.eq.s32.totalorder %s12, 0
    %p32 = por %p30, %p31
    %p33 = scmp.ne.s32.totalorder %s22, %s25
    %p34 = scmp.eq.s32.totalorder %s17, 1
    %p35 = por %p33, %p34
    %p36 = scmp.ne.s32.totalorder %s25, %s26
    %p37 = scmp.eq.s32.totalorder %s17, 0
    %p38 = por %p36, %p37
    %p39 = scmp.ne.s32.totalorder %s25, %s26
    %p40 = scmp.eq.s32.totalorder %s18, 1
    %p41 = por %p39, %p40
    %p43 = scmp.ne.s32.totalorder %s26, %s42
    %p44 = scmp.eq.s32.totalorder %s18, 0
    %p45 = por %p43, %p44
    %s46 = ssub.s32 %s12, %s19
    %p47 = scmp.eq.s32.totalorder %s46, 0
    %s49 = sadd.s32 %s48, 1
    %s50 = scalar_select %p47, %s48, %s49
    %p53 = pneg %p47
    %p54 = scmp.eq.s32.totalorder %s12, 1
    %p55 = por %p53, %p54
    %p56 = scmp.ne.s32.totalorder %s48, %s51
    %p57 = scmp.eq.s32.totalorder %s12, 0
    %p58 = por %p56, %p57
    %p59 = scmp.ne.s32.totalorder %s48, %s51
    %p60 = scmp.eq.s32.totalorder %s17, 1
    %p61 = por %p59, %p60
    %p62 = scmp.ne.s32.totalorder %s51, %s52
    %p63 = scmp.eq.s32.totalorder %s17, 0
    %p64 = por %p62, %p63
    %p65 = scmp.ne.s32.totalorder %s51, %s52
    %p66 = scmp.eq.s32.totalorder %s18, 1
    %p67 = por %p65, %p66
    %p69 = scmp.ne.s32.totalorder %s52, %s68
    %p70 = scmp.eq.s32.totalorder %s18, 0
    %p71 = por %p69, %p70
    %s73 = sadd.s32 %s72, 1
    %p76 = scmp.eq.s32.totalorder %s12, 1
    %p77 = scmp.ne.s32.totalorder %s72, %s74
    %p78 = scmp.eq.s32.totalorder %s12, 0
    %p79 = por %p77, %p78
    %p80 = scmp.ne.s32.totalorder %s72, %s74
    %p81 = scmp.eq.s32.totalorder %s17, 1
    %p82 = por %p80, %p81
    %p83 = scmp.ne.s32.totalorder %s74, %s75
    %p84 = scmp.eq.s32.totalorder %s17, 0
    %p85 = por %p83, %p84
    %p86 = scmp.ne.s32.totalorder %s74, %s75
    %p87 = scmp.eq.s32.totalorder %s18, 1
    %p88 = por %p86, %p87
    %p90 = scmp.ne.s32.totalorder %s75, %s89
    %p91 = scmp.eq.s32.totalorder %s18, 0
    %p92 = por %p90, %p91
    %s94 = sadd.s32 %s93, 1
    %p97 = scmp.eq.s32.totalorder %s12, 1
    %p98 = scmp.ne.s32.totalorder %s93, %s95
    %p99 = scmp.eq.s32.totalorder %s12, 0
    %p100 = por %p98, %p99
    %p101 = scmp.ne.s32.totalorder %s93, %s95
    %p102 = scmp.eq.s32.totalorder %s17, 1
    %p103 = por %p101, %p102
    %p104 = scmp.ne.s32.totalorder %s95, %s96
    %p105 = scmp.eq.s32.totalorder %s17, 0
    %p106 = por %p104, %p105
    %p107 = scmp.ne.s32.totalorder %s95, %s96
    %p108 = scmp.eq.s32.totalorder %s18, 1
    %p109 = por %p107, %p108
    %p111 = scmp.ne.s32.totalorder %s96, %s110
    %p112 = scmp.eq.s32.totalorder %s18, 0
    %p113 = por %p111, %p112
    %s115 = sadd.s32 %s114, 1
    %p118 = scmp.eq.s32.totalorder %s12, 1
    %p119 = scmp.ne.s32.totalorder %s114, %s116
    %p120 = scmp.eq.s32.totalorder %s12, 0
    %p121 = por %p119, %p120
    %p122 = scmp.ne.s32.totalorder %s114, %s116
    %p123 = scmp.eq.s32.totalorder %s17, 1
    %p124 = por %p122, %p123
    %p125 = scmp.ne.s32.totalorder %s116, %s117
    %p126 = scmp.eq.s32.totalorder %s17, 0
    %p127 = por %p125, %p126
    %p128 = scmp.ne.s32.totalorder %s116, %s117
    %p129 = scmp.eq.s32.totalorder %s18, 1
    %p130 = por %p128, %p129
    %p132 = scmp.ne.s32.totalorder %s117, %s131
    %p133 = scmp.eq.s32.totalorder %s18, 0
    %p134 = por %p132, %p133
    %s136 = sadd.s32 %s135, 1
    %p139 = scmp.eq.s32.totalorder %s12, 1
    %p140 = scmp.ne.s32.totalorder %s135, %s137
    %p141 = scmp.eq.s32.totalorder %s12, 0
    %p142 = por %p140, %p141
    %p143 = scmp.ne.s32.totalorder %s135, %s137
    %p144 = scmp.eq.s32.totalorder %s17, 1
    %p145 = por %p143, %p144
    %p146 = scmp.ne.s32.totalorder %s137, %s138
    %p147 = scmp.eq.s32.totalorder %s17, 0
    %p148 = por %p146, %p147
    %p149 = scmp.ne.s32.totalorder %s137, %s138
    %p150 = scmp.eq.s32.totalorder %s18, 1
    %p151 = por %p149, %p150
    %p153 = scmp.ne.s32.totalorder %s138, %s152
    %p154 = scmp.eq.s32.totalorder %s18, 0
    %p155 = por %p153, %p154
    %s156 = ssub.s32 %s12, %s19
    %p157 = scmp.eq.s32.totalorder %s156, 0
    %s159 = sadd.s32 %s158, 1
    %s160 = scalar_select %p157, %s158, %s159
    %p163 = pneg %p157
    %p164 = scmp.eq.s32.totalorder %s12, 1
    %p165 = por %p163, %p164
    %p166 = scmp.ne.s32.totalorder %s158, %s161
    %p167 = scmp.eq.s32.totalorder %s12, 0
    %p168 = por %p166, %p167
    %p169 = scmp.ne.s32.totalorder %s158, %s161
    %p170 = scmp.eq.s32.totalorder %s17, 1
    %p171 = por %p169, %p170
    %p172 = scmp.ne.s32.totalorder %s161, %s162
    %p173 = scmp.eq.s32.totalorder %s17, 0
    %p174 = por %p172, %p173
    %p175 = scmp.ne.s32.totalorder %s161, %s162
    %p176 = scmp.eq.s32.totalorder %s18, 1
    %p177 = por %p175, %p176
    %p179 = scmp.ne.s32.totalorder %s162, %s178
    %p180 = scmp.eq.s32.totalorder %s18, 0
    %p181 = por %p179, %p180
    %p182 = scmp.le.s32.totalorder 1, %s12
    %p183 = scmp.lt.s32.totalorder %s12, 3
    %p184 = pnand %p182, %p183
    %p185 = pneg %p184
    // Predicated region
    $region9: #{bottleneck_forward.7} parent=5 // pred_check
      _
    $region10: #{bottleneck_forward.7} parent=5 // pred_check_branch
      %187 = sbr.rel (%p184) target = $region12
    $region11: #{bottleneck_forward.7} parent=5 // pred_region
      %s188 = ssub.s32 %s12, 1
      // Predicated region
      $region13: #{bottleneck_forward.7} parent=11 // pred_check
        %p189 = pneg %p85
      $region14: #{bottleneck_forward.7} parent=11 // pred_check_branch
        %191 = sbr.rel (%p189) target = $region16
      $region15: #{bottleneck_forward.7} parent=11 // pred_region
        _
      $region16: #{bottleneck_forward.7} parent=11 // pred_fallthru
        _
      // Predicated region
      $region17: #{bottleneck_forward.7} parent=11 // pred_check
        %p192 = pneg %p106
      $region18: #{bottleneck_forward.7} parent=11 // pred_check_branch
        %194 = sbr.rel (%p192) target = $region20
      $region19: #{bottleneck_forward.7} parent=11 // pred_region
        _
      $region20: #{bottleneck_forward.7} parent=11 // pred_fallthru
        _
      // Predicated region
      $region21: #{bottleneck_forward.7} parent=11 // pred_check
        %p195 = pneg %p127
      $region22: #{bottleneck_forward.7} parent=11 // pred_check_branch
        %197 = sbr.rel (%p195) target = $region24
      $region23: #{bottleneck_forward.7} parent=11 // pred_region
        _
      $region24: #{bottleneck_forward.7} parent=11 // pred_fallthru
        _
      // Predicated region
      $region25: #{bottleneck_forward.7} parent=11 // pred_check
        %p198 = pneg %p148
      $region26: #{bottleneck_forward.7} parent=11 // pred_check_branch
        %200 = sbr.rel (%p198) target = $region28
      $region27: #{bottleneck_forward.7} parent=11 // pred_region
        _
      $region28: #{bottleneck_forward.7} parent=11 // pred_fallthru
        _
    $region12: #{bottleneck_forward.7} parent=5 // pred_fallthru
      _
    %p201 = scmp.lt.s32.totalorder %s12, 2
    // Predicated region
    $region29: #{bottleneck_forward.7} parent=5 // pred_check
      %p202 = pneg %p201
    $region30: #{bottleneck_forward.7} parent=5 // pred_check_branch
      %204 = sbr.rel (%p202) target = $region32
    $region31: #{bottleneck_forward.7} parent=5 // pred_region
      // Predicated region
      $region33: #{bottleneck_forward.7} parent=31 // pred_check
        %p205 = pneg %p32
      $region34: #{bottleneck_forward.7} parent=31 // pred_check_branch
        %207 = sbr.rel (%p205) target = $region36
      $region35: #{bottleneck_forward.7} parent=31 // pred_region
        %s208 = smul.u32 64, %s12
        %p209 = scmp.lt.s32.totalorder %s208, 127
        %s210 = scalar_select %p209, %s208, 127
        %s211 = smul.addr %s210, 4
        %s212 = scalar_lea.vmem %s0, %s211
        %s213 = smul.u32 64, %s12
      $region36: #{bottleneck_forward.7} parent=31 // pred_fallthru
        _
      // Predicated region
      $region37: #{bottleneck_forward.7} parent=31 // pred_check
        %p214 = pneg %p58
      $region38: #{bottleneck_forward.7} parent=31 // pred_check_branch
        %216 = sbr.rel (%p214) target = $region40
      $region39: #{bottleneck_forward.7} parent=31 // pred_region
        %s217 = smul.u32 64, %s12
        %p218 = scmp.lt.s32.totalorder %s217, 127
        %s219 = scalar_select %p218, %s217, 127
        %s220 = smul.addr %s219, 4
        %s221 = scalar_lea.vmem %s1, %s220
        %s222 = smul.u32 64, %s12
      $region40: #{bottleneck_forward.7} parent=31 // pred_fallthru
        _
    $region32: #{bottleneck_forward.7} parent=5 // pred_fallthru
      _
    %p223 = scmp.le.s32.totalorder 1, %s12
    %p224 = scmp.lt.s32.totalorder %s12, 3
    %p225 = pnand %p223, %p224
    %p226 = pneg %p225
    // Predicated region
    $region41: #{bottleneck_forward.7} parent=5 // pred_check
      _
    $region42: #{bottleneck_forward.7} parent=5 // pred_check_branch
      %228 = sbr.rel (%p225) target = $region44
    $region43: #{bottleneck_forward.7} parent=5 // pred_region
      %s229 = ssub.s32 %s12, 1
      %s230 = smul.u32 64, %s17
      %p231 = scmp.lt.s32.totalorder %s230, 127
      %s232 = scalar_select %p231, %s230, 127
      %s233 = smul.addr %s232, 4
      %s234 = scalar_lea.vmem %s0, %s233
      %p235 = pneg %p38
      %p236 = pneg %p35
      %s237 = smul.u32 64, %s17
      %p238 = scmp.lt.s32.totalorder %s237, 127
      %s239 = scalar_select %p238, %s237, 127
      %s240 = smul.addr %s239, 4
      %s241 = scalar_lea.vmem %s1, %s240
      %p242 = pneg %p64
      %p243 = pneg %p61
      %p244 = pneg %p85
      %p245 = pneg %p82
      %p246 = pneg %p106
      %p247 = pneg %p103
      %p248 = pneg %p127
      %p249 = pneg %p124
      %p250 = pneg %p148
      %p251 = pneg %p145
      %p252 = pneg %p174
      %p253 = pneg %p171
      %s254 = smul.u32 64, %s17
      %p255 = scmp.lt.s32.totalorder %s254, 127
      %s256 = scalar_select %p255, %s254, 127
      %s257 = smul.addr %s256, 8
      %s258 = scalar_lea.vmem %s6, %s257
      %s259 = smul.u32 64, %s17
      %p260 = scmp.lt.s32.totalorder %s259, 127
      %s261 = scalar_select %p260, %s259, 127
      %s262 = smul.addr %s261, 4
      %s263 = scalar_lea.vmem %s0, %s262
      %s264 = smul.u32 64, %s17
      %s265 = smul.u32 64, %s17
      %p266 = scmp.lt.s32.totalorder %s265, 127
      %s267 = scalar_select %p266, %s265, 127
      %s268 = smul.addr %s267, 4
      %s269 = scalar_lea.vmem %s1, %s268
      %s270 = smul.u32 64, %s17
      %s271 = smul.u32 64, %s17
      %p272 = scmp.lt.s32.totalorder %s271, 127
      %s273 = scalar_select %p272, %s271, 127
      %s274 = smul.addr %s273, 8
      %s275 = scalar_lea.vmem %s6, %s274
      %s276 = smul.u32 64, %s17
      %v277 = vld [vmem:[%s263] sm:$0xf]
      %v278 = vld [vmem:[%s263 + $0x4] sm:$0xf]
      %v279 = vld [vmem:[%s263 + $0x8] sm:$0xf]
      %v280 = vld [vmem:[%s263 + $0xc] sm:$0xf]
      %v281 = vld [vmem:[%s263 + $0x10] sm:$0xf]
      %v282 = vld [vmem:[%s263 + $0x14] sm:$0xf]
      %v283 = vld [vmem:[%s263 + $0x18] sm:$0xf]
      %v284 = vld [vmem:[%s263 + $0x1c] sm:$0xf]
      %v285 = vld [vmem:[%s263 + $0x20] sm:$0xf]
      %v286 = vld [vmem:[%s263 + $0x24] sm:$0xf]
      %v287 = vld [vmem:[%s263 + $0x28] sm:$0xf]
      %v288 = vld [vmem:[%s263 + $0x2c] sm:$0xf]
      %v289 = vld [vmem:[%s263 + $0x30] sm:$0xf]
      %v290 = vld [vmem:[%s263 + $0x34] sm:$0xf]
      %v291 = vld [vmem:[%s263 + $0x38] sm:$0xf]
      %v292 = vld [vmem:[%s263 + $0x3c] sm:$0xf]
      %v293 = vld [vmem:[%s263 + $0x40] sm:$0xf]
      %v294 = vld [vmem:[%s263 + $0x44] sm:$0xf]
      %v295 = vld [vmem:[%s263 + $0x48] sm:$0xf]
      %v296 = vld [vmem:[%s263 + $0x4c] sm:$0xf]
      %v297 = vld [vmem:[%s263 + $0x50] sm:$0xf]
      %v298 = vld [vmem:[%s263 + $0x54] sm:$0xf]
      %v299 = vld [vmem:[%s263 + $0x58] sm:$0xf]
      %v300 = vld [vmem:[%s263 + $0x5c] sm:$0xf]
      %v301 = vld [vmem:[%s263 + $0x60] sm:$0xf]
      %v302 = vld [vmem:[%s263 + $0x64] sm:$0xf]
      %v303 = vld [vmem:[%s263 + $0x68] sm:$0xf]
      %v304 = vld [vmem:[%s263 + $0x6c] sm:$0xf]
      %v305 = vld [vmem:[%s263 + $0x70] sm:$0xf]
      %v306 = vld [vmem:[%s263 + $0x74] sm:$0xf]
      %v307 = vld [vmem:[%s263 + $0x78] sm:$0xf]
      %v308 = vld [vmem:[%s263 + $0x7c] sm:$0xf]
      %v309 = vld [vmem:[%s263 + $0x80] sm:$0xf]
      %v310 = vld [vmem:[%s263 + $0x84] sm:$0xf]
      %v311 = vld [vmem:[%s263 + $0x88] sm:$0xf]
      %v312 = vld [vmem:[%s263 + $0x8c] sm:$0xf]
      %v313 = vld [vmem:[%s263 + $0x90] sm:$0xf]
      %v314 = vld [vmem:[%s263 + $0x94] sm:$0xf]
      %v315 = vld [vmem:[%s263 + $0x98] sm:$0xf]
      %v316 = vld [vmem:[%s263 + $0x9c] sm:$0xf]
      %v317 = vld [vmem:[%s263 + $0xa0] sm:$0xf]
      %v318 = vld [vmem:[%s263 + $0xa4] sm:$0xf]
      %v319 = vld [vmem:[%s263 + $0xa8] sm:$0xf]
      %v320 = vld [vmem:[%s263 + $0xac] sm:$0xf]
      %v321 = vld [vmem:[%s263 + $0xb0] sm:$0xf]
      %v322 = vld [vmem:[%s263 + $0xb4] sm:$0xf]
      %v323 = vld [vmem:[%s263 + $0xb8] sm:$0xf]
      %v324 = vld [vmem:[%s263 + $0xbc] sm:$0xf]
      %v325 = vld [vmem:[%s263 + $0xc0] sm:$0xf]
      %v326 = vld [vmem:[%s263 + $0xc4] sm:$0xf]
      %v327 = vld [vmem:[%s263 + $0xc8] sm:$0xf]
      %v328 = vld [vmem:[%s263 + $0xcc] sm:$0xf]
      %v329 = vld [vmem:[%s263 + $0xd0] sm:$0xf]
      %v330 = vld [vmem:[%s263 + $0xd4] sm:$0xf]
      %v331 = vld [vmem:[%s263 + $0xd8] sm:$0xf]
      %v332 = vld [vmem:[%s263 + $0xdc] sm:$0xf]
      %v333 = vld [vmem:[%s263 + $0xe0] sm:$0xf]
      %v334 = vld [vmem:[%s263 + $0xe4] sm:$0xf]
      %v335 = vld [vmem:[%s263 + $0xe8] sm:$0xf]
      %v336 = vld [vmem:[%s263 + $0xec] sm:$0xf]
      %v337 = vld [vmem:[%s263 + $0xf0] sm:$0xf]
      %v338 = vld [vmem:[%s263 + $0xf4] sm:$0xf]
      %v339 = vld [vmem:[%s263 + $0xf8] sm:$0xf]
      %v340 = vld [vmem:[%s263 + $0xfc] sm:$0xf]
      %v341 = vunpack.c.l.bf16 %v277
      %v342 = vunpack.c.l.bf16 %v278
      %v343 = vunpack.c.l.bf16 %v279
      %v344 = vunpack.c.l.bf16 %v280
      %v345 = vunpack.c.l.bf16 %v281
      %v346 = vunpack.c.l.bf16 %v282
      %v347 = vunpack.c.l.bf16 %v283
      %v348 = vunpack.c.l.bf16 %v284
      %v349 = vunpack.c.l.bf16 %v285
      %v350 = vunpack.c.l.bf16 %v286
      %v351 = vunpack.c.l.bf16 %v287
      %v352 = vunpack.c.l.bf16 %v288
      %v353 = vunpack.c.l.bf16 %v289
      %v354 = vunpack.c.l.bf16 %v290
      %v355 = vunpack.c.l.bf16 %v291
      %v356 = vunpack.c.l.bf16 %v292
      %v357 = vunpack.c.l.bf16 %v293
      %v358 = vunpack.c.l.bf16 %v294
      %v359 = vunpack.c.l.bf16 %v295
      %v360 = vunpack.c.l.bf16 %v296
      %v361 = vunpack.c.l.bf16 %v297
      %v362 = vunpack.c.l.bf16 %v298
      %v363 = vunpack.c.l.bf16 %v299
      %v364 = vunpack.c.l.bf16 %v300
      %v365 = vunpack.c.l.bf16 %v301
      %v366 = vunpack.c.l.bf16 %v302
      %v367 = vunpack.c.l.bf16 %v303
      %v368 = vunpack.c.l.bf16 %v304
      %v369 = vunpack.c.l.bf16 %v305
      %v370 = vunpack.c.l.bf16 %v306
      %v371 = vunpack.c.l.bf16 %v307
      %v372 = vunpack.c.l.bf16 %v308
      %v373 = vunpack.c.l.bf16 %v309
      %v374 = vunpack.c.l.bf16 %v310
      %v375 = vunpack.c.l.bf16 %v311
      %v376 = vunpack.c.l.bf16 %v312
      %v377 = vunpack.c.l.bf16 %v313
      %v378 = vunpack.c.l.bf16 %v314
      %v379 = vunpack.c.l.bf16 %v315
      %v380 = vunpack.c.l.bf16 %v316
      %v381 = vunpack.c.l.bf16 %v317
      %v382 = vunpack.c.l.bf16 %v318
      %v383 = vunpack.c.l.bf16 %v319
      %v384 = vunpack.c.l.bf16 %v320
      %v385 = vunpack.c.l.bf16 %v321
      %v386 = vunpack.c.l.bf16 %v322
      %v387 = vunpack.c.l.bf16 %v323
      %v388 = vunpack.c.l.bf16 %v324
      %v389 = vunpack.c.l.bf16 %v325
      %v390 = vunpack.c.l.bf16 %v326
      %v391 = vunpack.c.l.bf16 %v327
      %v392 = vunpack.c.l.bf16 %v328
      %v393 = vunpack.c.l.bf16 %v329
      %v394 = vunpack.c.l.bf16 %v330
      %v395 = vunpack.c.l.bf16 %v331
      %v396 = vunpack.c.l.bf16 %v332
      %v397 = vunpack.c.l.bf16 %v333
      %v398 = vunpack.c.l.bf16 %v334
      %v399 = vunpack.c.l.bf16 %v335
      %v400 = vunpack.c.l.bf16 %v336
      %v401 = vunpack.c.l.bf16 %v337
      %v402 = vunpack.c.l.bf16 %v338
      %v403 = vunpack.c.l.bf16 %v339
      %v404 = vunpack.c.l.bf16 %v340
      %v405 = vld [vmem:[%s2] sm:$0x1]
      %v407 = vlaneseq
      %v408 = vshrl.u32 %v407, 7
      %v409 = vsub.s32 0, %v408
      %v410 = vrot.slane %v405, %v409
      %v412 = vmul.f32 %v341, %v410
      %v413 = vmul.f32 %v342, %v410
      %v414 = vmul.f32 %v343, %v410
      %v415 = vmul.f32 %v344, %v410
      %v416 = vmul.f32 %v345, %v410
      %v417 = vmul.f32 %v346, %v410
      %v418 = vmul.f32 %v347, %v410
      %v419 = vmul.f32 %v348, %v410
      %v420 = vmul.f32 %v349, %v410
      %v421 = vmul.f32 %v350, %v410
      %v422 = vmul.f32 %v351, %v410
      %v423 = vmul.f32 %v352, %v410
      %v424 = vmul.f32 %v353, %v410
      %v425 = vmul.f32 %v354, %v410
      %v426 = vmul.f32 %v355, %v410
      %v427 = vmul.f32 %v356, %v410
      %v428 = vmul.f32 %v357, %v410
      %v429 = vmul.f32 %v358, %v410
      %v430 = vmul.f32 %v359, %v410
      %v431 = vmul.f32 %v360, %v410
      %v432 = vmul.f32 %v361, %v410
      %v433 = vmul.f32 %v362, %v410
      %v434 = vmul.f32 %v363, %v410
      %v435 = vmul.f32 %v364, %v410
      %v436 = vmul.f32 %v365, %v410
      %v437 = vmul.f32 %v366, %v410
      %v438 = vmul.f32 %v367, %v410
      %v439 = vmul.f32 %v368, %v410
      %v440 = vmul.f32 %v369, %v410
      %v441 = vmul.f32 %v370, %v410
      %v442 = vmul.f32 %v371, %v410
      %v443 = vmul.f32 %v372, %v410
      %v444 = vmul.f32 %v373, %v410
      %v445 = vmul.f32 %v374, %v410
      %v446 = vmul.f32 %v375, %v410
      %v447 = vmul.f32 %v376, %v410
      %v448 = vmul.f32 %v377, %v410
      %v449 = vmul.f32 %v378, %v410
      %v450 = vmul.f32 %v379, %v410
      %v451 = vmul.f32 %v380, %v410
      %v452 = vmul.f32 %v381, %v410
      %v453 = vmul.f32 %v382, %v410
      %v454 = vmul.f32 %v383, %v410
      %v455 = vmul.f32 %v384, %v410
      %v456 = vmul.f32 %v385, %v410
      %v457 = vmul.f32 %v386, %v410
      %v458 = vmul.f32 %v387, %v410
      %v459 = vmul.f32 %v388, %v410
      %v460 = vmul.f32 %v389, %v410
      %v461 = vmul.f32 %v390, %v410
      %v462 = vmul.f32 %v391, %v410
      %v463 = vmul.f32 %v392, %v410
      %v464 = vmul.f32 %v393, %v410
      %v465 = vmul.f32 %v394, %v410
      %v466 = vmul.f32 %v395, %v410
      %v467 = vmul.f32 %v396, %v410
      %v468 = vmul.f32 %v397, %v410
      %v469 = vmul.f32 %v398, %v410
      %v470 = vmul.f32 %v399, %v410
      %v471 = vmul.f32 %v400, %v410
      %v472 = vmul.f32 %v401, %v410
      %v473 = vmul.f32 %v402, %v410
      %v474 = vmul.f32 %v403, %v410
      %v475 = vmul.f32 %v404, %v410
      %v476 = vld [vmem:[%s3] sm:$0x1]
      %v478 = vlaneseq
      %v479 = vshrl.u32 %v478, 7
      %v480 = vsub.s32 0, %v479
      %v481 = vrot.slane %v476, %v480
      %v483 = vadd.f32 %v412, %v481
      %v484 = vadd.f32 %v413, %v481
      %v485 = vadd.f32 %v414, %v481
      %v486 = vadd.f32 %v415, %v481
      %v487 = vadd.f32 %v416, %v481
      %v488 = vadd.f32 %v417, %v481
      %v489 = vadd.f32 %v418, %v481
      %v490 = vadd.f32 %v419, %v481
      %v491 = vadd.f32 %v420, %v481
      %v492 = vadd.f32 %v421, %v481
      %v493 = vadd.f32 %v422, %v481
      %v494 = vadd.f32 %v423, %v481
      %v495 = vadd.f32 %v424, %v481
      %v496 = vadd.f32 %v425, %v481
      %v497 = vadd.f32 %v426, %v481
      %v498 = vadd.f32 %v427, %v481
      %v499 = vadd.f32 %v428, %v481
      %v500 = vadd.f32 %v429, %v481
      %v501 = vadd.f32 %v430, %v481
      %v502 = vadd.f32 %v431, %v481
      %v503 = vadd.f32 %v432, %v481
      %v504 = vadd.f32 %v433, %v481
      %v505 = vadd.f32 %v434, %v481
      %v506 = vadd.f32 %v435, %v481
      %v507 = vadd.f32 %v436, %v481
      %v508 = vadd.f32 %v437, %v481
      %v509 = vadd.f32 %v438, %v481
      %v510 = vadd.f32 %v439, %v481
      %v511 = vadd.f32 %v440, %v481
      %v512 = vadd.f32 %v441, %v481
      %v513 = vadd.f32 %v442, %v481
      %v514 = vadd.f32 %v443, %v481
      %v515 = vadd.f32 %v444, %v481
      %v516 = vadd.f32 %v445, %v481
      %v517 = vadd.f32 %v446, %v481
      %v518 = vadd.f32 %v447, %v481
      %v519 = vadd.f32 %v448, %v481
      %v520 = vadd.f32 %v449, %v481
      %v521 = vadd.f32 %v450, %v481
      %v522 = vadd.f32 %v451, %v481
      %v523 = vadd.f32 %v452, %v481
      %v524 = vadd.f32 %v453, %v481
      %v525 = vadd.f32 %v454, %v481
      %v526 = vadd.f32 %v455, %v481
      %v527 = vadd.f32 %v456, %v481
      %v528 = vadd.f32 %v457, %v481
      %v529 = vadd.f32 %v458, %v481
      %v530 = vadd.f32 %v459, %v481
      %v531 = vadd.f32 %v460, %v481
      %v532 = vadd.f32 %v461, %v481
      %v533 = vadd.f32 %v462, %v481
      %v534 = vadd.f32 %v463, %v481
      %v535 = vadd.f32 %v464, %v481
      %v536 = vadd.f32 %v465, %v481
      %v537 = vadd.f32 %v466, %v481
      %v538 = vadd.f32 %v467, %v481
      %v539 = vadd.f32 %v468, %v481
      %v540 = vadd.f32 %v469, %v481
      %v541 = vadd.f32 %v470, %v481
      %v542 = vadd.f32 %v471, %v481
      %v543 = vadd.f32 %v472, %v481
      %v544 = vadd.f32 %v473, %v481
      %v545 = vadd.f32 %v474, %v481
      %v546 = vadd.f32 %v475, %v481
      %v547 = vld [vmem:[%s269] sm:$0xf]
      %v548 = vld [vmem:[%s269 + $0x4] sm:$0xf]
      %v549 = vld [vmem:[%s269 + $0x8] sm:$0xf]
      %v550 = vld [vmem:[%s269 + $0xc] sm:$0xf]
      %v551 = vld [vmem:[%s269 + $0x10] sm:$0xf]
      %v552 = vld [vmem:[%s269 + $0x14] sm:$0xf]
      %v553 = vld [vmem:[%s269 + $0x18] sm:$0xf]
      %v554 = vld [vmem:[%s269 + $0x1c] sm:$0xf]
      %v555 = vld [vmem:[%s269 + $0x20] sm:$0xf]
      %v556 = vld [vmem:[%s269 + $0x24] sm:$0xf]
      %v557 = vld [vmem:[%s269 + $0x28] sm:$0xf]
      %v558 = vld [vmem:[%s269 + $0x2c] sm:$0xf]
      %v559 = vld [vmem:[%s269 + $0x30] sm:$0xf]
      %v560 = vld [vmem:[%s269 + $0x34] sm:$0xf]
      %v561 = vld [vmem:[%s269 + $0x38] sm:$0xf]
      %v562 = vld [vmem:[%s269 + $0x3c] sm:$0xf]
      %v563 = vld [vmem:[%s269 + $0x40] sm:$0xf]
      %v564 = vld [vmem:[%s269 + $0x44] sm:$0xf]
      %v565 = vld [vmem:[%s269 + $0x48] sm:$0xf]
      %v566 = vld [vmem:[%s269 + $0x4c] sm:$0xf]
      %v567 = vld [vmem:[%s269 + $0x50] sm:$0xf]
      %v568 = vld [vmem:[%s269 + $0x54] sm:$0xf]
      %v569 = vld [vmem:[%s269 + $0x58] sm:$0xf]
      %v570 = vld [vmem:[%s269 + $0x5c] sm:$0xf]
      %v571 = vld [vmem:[%s269 + $0x60] sm:$0xf]
      %v572 = vld [vmem:[%s269 + $0x64] sm:$0xf]
      %v573 = vld [vmem:[%s269 + $0x68] sm:$0xf]
      %v574 = vld [vmem:[%s269 + $0x6c] sm:$0xf]
      %v575 = vld [vmem:[%s269 + $0x70] sm:$0xf]
      %v576 = vld [vmem:[%s269 + $0x74] sm:$0xf]
      %v577 = vld [vmem:[%s269 + $0x78] sm:$0xf]
      %v578 = vld [vmem:[%s269 + $0x7c] sm:$0xf]
      %v579 = vld [vmem:[%s269 + $0x80] sm:$0xf]
      %v580 = vld [vmem:[%s269 + $0x84] sm:$0xf]
      %v581 = vld [vmem:[%s269 + $0x88] sm:$0xf]
      %v582 = vld [vmem:[%s269 + $0x8c] sm:$0xf]
      %v583 = vld [vmem:[%s269 + $0x90] sm:$0xf]
      %v584 = vld [vmem:[%s269 + $0x94] sm:$0xf]
      %v585 = vld [vmem:[%s269 + $0x98] sm:$0xf]
      %v586 = vld [vmem:[%s269 + $0x9c] sm:$0xf]
      %v587 = vld [vmem:[%s269 + $0xa0] sm:$0xf]
      %v588 = vld [vmem:[%s269 + $0xa4] sm:$0xf]
      %v589 = vld [vmem:[%s269 + $0xa8] sm:$0xf]
      %v590 = vld [vmem:[%s269 + $0xac] sm:$0xf]
      %v591 = vld [vmem:[%s269 + $0xb0] sm:$0xf]
      %v592 = vld [vmem:[%s269 + $0xb4] sm:$0xf]
      %v593 = vld [vmem:[%s269 + $0xb8] sm:$0xf]
      %v594 = vld [vmem:[%s269 + $0xbc] sm:$0xf]
      %v595 = vld [vmem:[%s269 + $0xc0] sm:$0xf]
      %v596 = vld [vmem:[%s269 + $0xc4] sm:$0xf]
      %v597 = vld [vmem:[%s269 + $0xc8] sm:$0xf]
      %v598 = vld [vmem:[%s269 + $0xcc] sm:$0xf]
      %v599 = vld [vmem:[%s269 + $0xd0] sm:$0xf]
      %v600 = vld [vmem:[%s269 + $0xd4] sm:$0xf]
      %v601 = vld [vmem:[%s269 + $0xd8] sm:$0xf]
      %v602 = vld [vmem:[%s269 + $0xdc] sm:$0xf]
      %v603 = vld [vmem:[%s269 + $0xe0] sm:$0xf]
      %v604 = vld [vmem:[%s269 + $0xe4] sm:$0xf]
      %v605 = vld [vmem:[%s269 + $0xe8] sm:$0xf]
      %v606 = vld [vmem:[%s269 + $0xec] sm:$0xf]
      %v607 = vld [vmem:[%s269 + $0xf0] sm:$0xf]
      %v608 = vld [vmem:[%s269 + $0xf4] sm:$0xf]
      %v609 = vld [vmem:[%s269 + $0xf8] sm:$0xf]
      %v610 = vld [vmem:[%s269 + $0xfc] sm:$0xf]
      %v611 = vunpack.c.l.bf16 %v547
      %v612 = vunpack.c.l.bf16 %v548
      %v613 = vunpack.c.l.bf16 %v549
      %v614 = vunpack.c.l.bf16 %v550
      %v615 = vunpack.c.l.bf16 %v551
      %v616 = vunpack.c.l.bf16 %v552
      %v617 = vunpack.c.l.bf16 %v553
      %v618 = vunpack.c.l.bf16 %v554
      %v619 = vunpack.c.l.bf16 %v555
      %v620 = vunpack.c.l.bf16 %v556
      %v621 = vunpack.c.l.bf16 %v557
      %v622 = vunpack.c.l.bf16 %v558
      %v623 = vunpack.c.l.bf16 %v559
      %v624 = vunpack.c.l.bf16 %v560
      %v625 = vunpack.c.l.bf16 %v561
      %v626 = vunpack.c.l.bf16 %v562
      %v627 = vunpack.c.l.bf16 %v563
      %v628 = vunpack.c.l.bf16 %v564
      %v629 = vunpack.c.l.bf16 %v565
      %v630 = vunpack.c.l.bf16 %v566
      %v631 = vunpack.c.l.bf16 %v567
      %v632 = vunpack.c.l.bf16 %v568
      %v633 = vunpack.c.l.bf16 %v569
      %v634 = vunpack.c.l.bf16 %v570
      %v635 = vunpack.c.l.bf16 %v571
      %v636 = vunpack.c.l.bf16 %v572
      %v637 = vunpack.c.l.bf16 %v573
      %v638 = vunpack.c.l.bf16 %v574
      %v639 = vunpack.c.l.bf16 %v575
      %v640 = vunpack.c.l.bf16 %v576
      %v641 = vunpack.c.l.bf16 %v577
      %v642 = vunpack.c.l.bf16 %v578
      %v643 = vunpack.c.l.bf16 %v579
      %v644 = vunpack.c.l.bf16 %v580
      %v645 = vunpack.c.l.bf16 %v581
      %v646 = vunpack.c.l.bf16 %v582
      %v647 = vunpack.c.l.bf16 %v583
      %v648 = vunpack.c.l.bf16 %v584
      %v649 = vunpack.c.l.bf16 %v585
      %v650 = vunpack.c.l.bf16 %v586
      %v651 = vunpack.c.l.bf16 %v587
      %v652 = vunpack.c.l.bf16 %v588
      %v653 = vunpack.c.l.bf16 %v589
      %v654 = vunpack.c.l.bf16 %v590
      %v655 = vunpack.c.l.bf16 %v591
      %v656 = vunpack.c.l.bf16 %v592
      %v657 = vunpack.c.l.bf16 %v593
      %v658 = vunpack.c.l.bf16 %v594
      %v659 = vunpack.c.l.bf16 %v595
      %v660 = vunpack.c.l.bf16 %v596
      %v661 = vunpack.c.l.bf16 %v597
      %v662 = vunpack.c.l.bf16 %v598
      %v663 = vunpack.c.l.bf16 %v599
      %v664 = vunpack.c.l.bf16 %v600
      %v665 = vunpack.c.l.bf16 %v601
      %v666 = vunpack.c.l.bf16 %v602
      %v667 = vunpack.c.l.bf16 %v603
      %v668 = vunpack.c.l.bf16 %v604
      %v669 = vunpack.c.l.bf16 %v605
      %v670 = vunpack.c.l.bf16 %v606
      %v671 = vunpack.c.l.bf16 %v607
      %v672 = vunpack.c.l.bf16 %v608
      %v673 = vunpack.c.l.bf16 %v609
      %v674 = vunpack.c.l.bf16 %v610
      %v675 = vld [vmem:[%s4] sm:$0x1]
      %v677 = vlaneseq
      %v678 = vshrl.u32 %v677, 7
      %v679 = vsub.s32 0, %v678
      %v680 = vrot.slane %v675, %v679
      %v682 = vmul.f32 %v611, %v680
      %v683 = vmul.f32 %v612, %v680
      %v684 = vmul.f32 %v613, %v680
      %v685 = vmul.f32 %v614, %v680
      %v686 = vmul.f32 %v615, %v680
      %v687 = vmul.f32 %v616, %v680
      %v688 = vmul.f32 %v617, %v680
      %v689 = vmul.f32 %v618, %v680
      %v690 = vmul.f32 %v619, %v680
      %v691 = vmul.f32 %v620, %v680
      %v692 = vmul.f32 %v621, %v680
      %v693 = vmul.f32 %v622, %v680
      %v694 = vmul.f32 %v623, %v680
      %v695 = vmul.f32 %v624, %v680
      %v696 = vmul.f32 %v625, %v680
      %v697 = vmul.f32 %v626, %v680
      %v698 = vmul.f32 %v627, %v680
      %v699 = vmul.f32 %v628, %v680
      %v700 = vmul.f32 %v629, %v680
      %v701 = vmul.f32 %v630, %v680
      %v702 = vmul.f32 %v631, %v680
      %v703 = vmul.f32 %v632, %v680
      %v704 = vmul.f32 %v633, %v680
      %v705 = vmul.f32 %v634, %v680
      %v706 = vmul.f32 %v635, %v680
      %v707 = vmul.f32 %v636, %v680
      %v708 = vmul.f32 %v637, %v680
      %v709 = vmul.f32 %v638, %v680
      %v710 = vmul.f32 %v639, %v680
      %v711 = vmul.f32 %v640, %v680
      %v712 = vmul.f32 %v641, %v680
      %v713 = vmul.f32 %v642, %v680
      %v714 = vmul.f32 %v643, %v680
      %v715 = vmul.f32 %v644, %v680
      %v716 = vmul.f32 %v645, %v680
      %v717 = vmul.f32 %v646, %v680
      %v718 = vmul.f32 %v647, %v680
      %v719 = vmul.f32 %v648, %v680
      %v720 = vmul.f32 %v649, %v680
      %v721 = vmul.f32 %v650, %v680
      %v722 = vmul.f32 %v651, %v680
      %v723 = vmul.f32 %v652, %v680
      %v724 = vmul.f32 %v653, %v680
      %v725 = vmul.f32 %v654, %v680
      %v726 = vmul.f32 %v655, %v680
      %v727 = vmul.f32 %v656, %v680
      %v728 = vmul.f32 %v657, %v680
      %v729 = vmul.f32 %v658, %v680
      %v730 = vmul.f32 %v659, %v680
      %v731 = vmul.f32 %v660, %v680
      %v732 = vmul.f32 %v661, %v680
      %v733 = vmul.f32 %v662, %v680
      %v734 = vmul.f32 %v663, %v680
      %v735 = vmul.f32 %v664, %v680
      %v736 = vmul.f32 %v665, %v680
      %v737 = vmul.f32 %v666, %v680
      %v738 = vmul.f32 %v667, %v680
      %v739 = vmul.f32 %v668, %v680
      %v740 = vmul.f32 %v669, %v680
      %v741 = vmul.f32 %v670, %v680
      %v742 = vmul.f32 %v671, %v680
      %v743 = vmul.f32 %v672, %v680
      %v744 = vmul.f32 %v673, %v680
      %v745 = vmul.f32 %v674, %v680
      %v746 = vld [vmem:[%s5] sm:$0x1]
      %v748 = vlaneseq
      %v749 = vshrl.u32 %v748, 7
      %v750 = vsub.s32 0, %v749
      %v751 = vrot.slane %v746, %v750
      %v753 = vadd.f32 %v682, %v751
      %v754 = vadd.f32 %v683, %v751
      %v755 = vadd.f32 %v684, %v751
      %v756 = vadd.f32 %v685, %v751
      %v757 = vadd.f32 %v686, %v751
      %v758 = vadd.f32 %v687, %v751
      %v759 = vadd.f32 %v688, %v751
      %v760 = vadd.f32 %v689, %v751
      %v761 = vadd.f32 %v690, %v751
      %v762 = vadd.f32 %v691, %v751
      %v763 = vadd.f32 %v692, %v751
      %v764 = vadd.f32 %v693, %v751
      %v765 = vadd.f32 %v694, %v751
      %v766 = vadd.f32 %v695, %v751
      %v767 = vadd.f32 %v696, %v751
      %v768 = vadd.f32 %v697, %v751
      %v769 = vadd.f32 %v698, %v751
      %v770 = vadd.f32 %v699, %v751
      %v771 = vadd.f32 %v700, %v751
      %v772 = vadd.f32 %v701, %v751
      %v773 = vadd.f32 %v702, %v751
      %v774 = vadd.f32 %v703, %v751
      %v775 = vadd.f32 %v704, %v751
      %v776 = vadd.f32 %v705, %v751
      %v777 = vadd.f32 %v706, %v751
      %v778 = vadd.f32 %v707, %v751
      %v779 = vadd.f32 %v708, %v751
      %v780 = vadd.f32 %v709, %v751
      %v781 = vadd.f32 %v710, %v751
      %v782 = vadd.f32 %v711, %v751
      %v783 = vadd.f32 %v712, %v751
      %v784 = vadd.f32 %v713, %v751
      %v785 = vadd.f32 %v714, %v751
      %v786 = vadd.f32 %v715, %v751
      %v787 = vadd.f32 %v716, %v751
      %v788 = vadd.f32 %v717, %v751
      %v789 = vadd.f32 %v718, %v751
      %v790 = vadd.f32 %v719, %v751
      %v791 = vadd.f32 %v720, %v751
      %v792 = vadd.f32 %v721, %v751
      %v793 = vadd.f32 %v722, %v751
      %v794 = vadd.f32 %v723, %v751
      %v795 = vadd.f32 %v724, %v751
      %v796 = vadd.f32 %v725, %v751
      %v797 = vadd.f32 %v726, %v751
      %v798 = vadd.f32 %v727, %v751
      %v799 = vadd.f32 %v728, %v751
      %v800 = vadd.f32 %v729, %v751
      %v801 = vadd.f32 %v730, %v751
      %v802 = vadd.f32 %v731, %v751
      %v803 = vadd.f32 %v732, %v751
      %v804 = vadd.f32 %v733, %v751
      %v805 = vadd.f32 %v734, %v751
      %v806 = vadd.f32 %v735, %v751
      %v807 = vadd.f32 %v736, %v751
      %v808 = vadd.f32 %v737, %v751
      %v809 = vadd.f32 %v738, %v751
      %v810 = vadd.f32 %v739, %v751
      %v811 = vadd.f32 %v740, %v751
      %v812 = vadd.f32 %v741, %v751
      %v813 = vadd.f32 %v742, %v751
      %v814 = vadd.f32 %v743, %v751
      %v815 = vadd.f32 %v744, %v751
      %v816 = vadd.f32 %v745, %v751
      %v817 = vadd.f32 %v483, %v753
      %v818 = vadd.f32 %v484, %v754
      %v819 = vadd.f32 %v485, %v755
      %v820 = vadd.f32 %v486, %v756
      %v821 = vadd.f32 %v487, %v757
      %v822 = vadd.f32 %v488, %v758
      %v823 = vadd.f32 %v489, %v759
      %v824 = vadd.f32 %v490, %v760
      %v825 = vadd.f32 %v491, %v761
      %v826 = vadd.f32 %v492, %v762
      %v827 = vadd.f32 %v493, %v763
      %v828 = vadd.f32 %v494, %v764
      %v829 = vadd.f32 %v495, %v765
      %v830 = vadd.f32 %v496, %v766
      %v831 = vadd.f32 %v497, %v767
      %v832 = vadd.f32 %v498, %v768
      %v833 = vadd.f32 %v499, %v769
      %v834 = vadd.f32 %v500, %v770
      %v835 = vadd.f32 %v501, %v771
      %v836 = vadd.f32 %v502, %v772
      %v837 = vadd.f32 %v503, %v773
      %v838 = vadd.f32 %v504, %v774
      %v839 = vadd.f32 %v505, %v775
      %v840 = vadd.f32 %v506, %v776
      %v841 = vadd.f32 %v507, %v777
      %v842 = vadd.f32 %v508, %v778
      %v843 = vadd.f32 %v509, %v779
      %v844 = vadd.f32 %v510, %v780
      %v845 = vadd.f32 %v511, %v781
      %v846 = vadd.f32 %v512, %v782
      %v847 = vadd.f32 %v513, %v783
      %v848 = vadd.f32 %v514, %v784
      %v849 = vadd.f32 %v515, %v785
      %v850 = vadd.f32 %v516, %v786
      %v851 = vadd.f32 %v517, %v787
      %v852 = vadd.f32 %v518, %v788
      %v853 = vadd.f32 %v519, %v789
      %v854 = vadd.f32 %v520, %v790
      %v855 = vadd.f32 %v521, %v791
      %v856 = vadd.f32 %v522, %v792
      %v857 = vadd.f32 %v523, %v793
      %v858 = vadd.f32 %v524, %v794
      %v859 = vadd.f32 %v525, %v795
      %v860 = vadd.f32 %v526, %v796
      %v861 = vadd.f32 %v527, %v797
      %v862 = vadd.f32 %v528, %v798
      %v863 = vadd.f32 %v529, %v799
      %v864 = vadd.f32 %v530, %v800
      %v865 = vadd.f32 %v531, %v801
      %v866 = vadd.f32 %v532, %v802
      %v867 = vadd.f32 %v533, %v803
      %v868 = vadd.f32 %v534, %v804
      %v869 = vadd.f32 %v535, %v805
      %v870 = vadd.f32 %v536, %v806
      %v871 = vadd.f32 %v537, %v807
      %v872 = vadd.f32 %v538, %v808
      %v873 = vadd.f32 %v539, %v809
      %v874 = vadd.f32 %v540, %v810
      %v875 = vadd.f32 %v541, %v811
      %v876 = vadd.f32 %v542, %v812
      %v877 = vadd.f32 %v543, %v813
      %v878 = vadd.f32 %v544, %v814
      %v879 = vadd.f32 %v545, %v815
      %v880 = vadd.f32 %v546, %v816
      %v881 = vmax.f32 %v817, 0.0
      %v882 = vmax.f32 %v818, 0.0
      %v883 = vmax.f32 %v819, 0.0
      %v884 = vmax.f32 %v820, 0.0
      %v885 = vmax.f32 %v821, 0.0
      %v886 = vmax.f32 %v822, 0.0
      %v887 = vmax.f32 %v823, 0.0
      %v888 = vmax.f32 %v824, 0.0
      %v889 = vmax.f32 %v825, 0.0
      %v890 = vmax.f32 %v826, 0.0
      %v891 = vmax.f32 %v827, 0.0
      %v892 = vmax.f32 %v828, 0.0
      %v893 = vmax.f32 %v829, 0.0
      %v894 = vmax.f32 %v830, 0.0
      %v895 = vmax.f32 %v831, 0.0
      %v896 = vmax.f32 %v832, 0.0
      %v897 = vmax.f32 %v833, 0.0
      %v898 = vmax.f32 %v834, 0.0
      %v899 = vmax.f32 %v835, 0.0
      %v900 = vmax.f32 %v836, 0.0
      %v901 = vmax.f32 %v837, 0.0
      %v902 = vmax.f32 %v838, 0.0
      %v903 = vmax.f32 %v839, 0.0
      %v904 = vmax.f32 %v840, 0.0
      %v905 = vmax.f32 %v841, 0.0
      %v906 = vmax.f32 %v842, 0.0
      %v907 = vmax.f32 %v843, 0.0
      %v908 = vmax.f32 %v844, 0.0
      %v909 = vmax.f32 %v845, 0.0
      %v910 = vmax.f32 %v846, 0.0
      %v911 = vmax.f32 %v847, 0.0
      %v912 = vmax.f32 %v848, 0.0
      %v913 = vmax.f32 %v849, 0.0
      %v914 = vmax.f32 %v850, 0.0
      %v915 = vmax.f32 %v851, 0.0
      %v916 = vmax.f32 %v852, 0.0
      %v917 = vmax.f32 %v853, 0.0
      %v918 = vmax.f32 %v854, 0.0
      %v919 = vmax.f32 %v855, 0.0
      %v920 = vmax.f32 %v856, 0.0
      %v921 = vmax.f32 %v857, 0.0
      %v922 = vmax.f32 %v858, 0.0
      %v923 = vmax.f32 %v859, 0.0
      %v924 = vmax.f32 %v860, 0.0
      %v925 = vmax.f32 %v861, 0.0
      %v926 = vmax.f32 %v862, 0.0
      %v927 = vmax.f32 %v863, 0.0
      %v928 = vmax.f32 %v864, 0.0
      %v929 = vmax.f32 %v865, 0.0
      %v930 = vmax.f32 %v866, 0.0
      %v931 = vmax.f32 %v867, 0.0
      %v932 = vmax.f32 %v868, 0.0
      %v933 = vmax.f32 %v869, 0.0
      %v934 = vmax.f32 %v870, 0.0
      %v935 = vmax.f32 %v871, 0.0
      %v936 = vmax.f32 %v872, 0.0
      %v937 = vmax.f32 %v873, 0.0
      %v938 = vmax.f32 %v874, 0.0
      %v939 = vmax.f32 %v875, 0.0
      %v940 = vmax.f32 %v876, 0.0
      %v941 = vmax.f32 %v877, 0.0
      %v942 = vmax.f32 %v878, 0.0
      %v943 = vmax.f32 %v879, 0.0
      %v944 = vmax.f32 %v880, 0.0
      %vm945 = vcmask 130048
      %946 = vst.msk [vmem:[%s275] sm:$0xff] %vm945, %v881
      %947 = vst.msk [vmem:[%s275 + $0x8] sm:$0xff] %vm945, %v882
      %948 = vst.msk [vmem:[%s275 + $0x10] sm:$0xff] %vm945, %v883
      %949 = vst.msk [vmem:[%s275 + $0x18] sm:$0xff] %vm945, %v884
      %950 = vst.msk [vmem:[%s275 + $0x20] sm:$0xff] %vm945, %v885
      %951 = vst.msk [vmem:[%s275 + $0x28] sm:$0xff] %vm945, %v886
      %952 = vst.msk [vmem:[%s275 + $0x30] sm:$0xff] %vm945, %v887
      %953 = vst.msk [vmem:[%s275 + $0x38] sm:$0xff] %vm945, %v888
      %954 = vst.msk [vmem:[%s275 + $0x40] sm:$0xff] %vm945, %v889
      %955 = vst.msk [vmem:[%s275 + $0x48] sm:$0xff] %vm945, %v890
      %956 = vst.msk [vmem:[%s275 + $0x50] sm:$0xff] %vm945, %v891
      %957 = vst.msk [vmem:[%s275 + $0x58] sm:$0xff] %vm945, %v892
      %958 = vst.msk [vmem:[%s275 + $0x60] sm:$0xff] %vm945, %v893
      %959 = vst.msk [vmem:[%s275 + $0x68] sm:$0xff] %vm945, %v894
      %960 = vst.msk [vmem:[%s275 + $0x70] sm:$0xff] %vm945, %v895
      %961 = vst.msk [vmem:[%s275 + $0x78] sm:$0xff] %vm945, %v896
      %962 = vst.msk [vmem:[%s275 + $0x80] sm:$0xff] %vm945, %v897
      %963 = vst.msk [vmem:[%s275 + $0x88] sm:$0xff] %vm945, %v898
      %964 = vst.msk [vmem:[%s275 + $0x90] sm:$0xff] %vm945, %v899
      %965 = vst.msk [vmem:[%s275 + $0x98] sm:$0xff] %vm945, %v900
      %966 = vst.msk [vmem:[%s275 + $0xa0] sm:$0xff] %vm945, %v901
      %967 = vst.msk [vmem:[%s275 + $0xa8] sm:$0xff] %vm945, %v902
      %968 = vst.msk [vmem:[%s275 + $0xb0] sm:$0xff] %vm945, %v903
      %969 = vst.msk [vmem:[%s275 + $0xb8] sm:$0xff] %vm945, %v904
      %970 = vst.msk [vmem:[%s275 + $0xc0] sm:$0xff] %vm945, %v905
      %971 = vst.msk [vmem:[%s275 + $0xc8] sm:$0xff] %vm945, %v906
      %972 = vst.msk [vmem:[%s275 + $0xd0] sm:$0xff] %vm945, %v907
      %973 = vst.msk [vmem:[%s275 + $0xd8] sm:$0xff] %vm945, %v908
      %974 = vst.msk [vmem:[%s275 + $0xe0] sm:$0xff] %vm945, %v909
      %975 = vst.msk [vmem:[%s275 + $0xe8] sm:$0xff] %vm945, %v910
      %976 = vst.msk [vmem:[%s275 + $0xf0] sm:$0xff] %vm945, %v911
      %977 = vst.msk [vmem:[%s275 + $0xf8] sm:$0xff] %vm945, %v912
      %978 = vst.msk [vmem:[%s275 + $0x100] sm:$0xff] %vm945, %v913
      %979 = vst.msk [vmem:[%s275 + $0x108] sm:$0xff] %vm945, %v914
      %980 = vst.msk [vmem:[%s275 + $0x110] sm:$0xff] %vm945, %v915
      %981 = vst.msk [vmem:[%s275 + $0x118] sm:$0xff] %vm945, %v916
      %982 = vst.msk [vmem:[%s275 + $0x120] sm:$0xff] %vm945, %v917
      %983 = vst.msk [vmem:[%s275 + $0x128] sm:$0xff] %vm945, %v918
      %984 = vst.msk [vmem:[%s275 + $0x130] sm:$0xff] %vm945, %v919
      %985 = vst.msk [vmem:[%s275 + $0x138] sm:$0xff] %vm945, %v920
      %986 = vst.msk [vmem:[%s275 + $0x140] sm:$0xff] %vm945, %v921
      %987 = vst.msk [vmem:[%s275 + $0x148] sm:$0xff] %vm945, %v922
      %988 = vst.msk [vmem:[%s275 + $0x150] sm:$0xff] %vm945, %v923
      %989 = vst.msk [vmem:[%s275 + $0x158] sm:$0xff] %vm945, %v924
      %990 = vst.msk [vmem:[%s275 + $0x160] sm:$0xff] %vm945, %v925
      %991 = vst.msk [vmem:[%s275 + $0x168] sm:$0xff] %vm945, %v926
      %992 = vst.msk [vmem:[%s275 + $0x170] sm:$0xff] %vm945, %v927
      %993 = vst.msk [vmem:[%s275 + $0x178] sm:$0xff] %vm945, %v928
      %994 = vst.msk [vmem:[%s275 + $0x180] sm:$0xff] %vm945, %v929
      %995 = vst.msk [vmem:[%s275 + $0x188] sm:$0xff] %vm945, %v930
      %996 = vst.msk [vmem:[%s275 + $0x190] sm:$0xff] %vm945, %v931
      %997 = vst.msk [vmem:[%s275 + $0x198] sm:$0xff] %vm945, %v932
      %998 = vst.msk [vmem:[%s275 + $0x1a0] sm:$0xff] %vm945, %v933
      %999 = vst.msk [vmem:[%s275 + $0x1a8] sm:$0xff] %vm945, %v934
      %1000 = vst.msk [vmem:[%s275 + $0x1b0] sm:$0xff] %vm945, %v935
      %1001 = vst.msk [vmem:[%s275 + $0x1b8] sm:$0xff] %vm945, %v936
      %1002 = vst.msk [vmem:[%s275 + $0x1c0] sm:$0xff] %vm945, %v937
      %1003 = vst.msk [vmem:[%s275 + $0x1c8] sm:$0xff] %vm945, %v938
      %1004 = vst.msk [vmem:[%s275 + $0x1d0] sm:$0xff] %vm945, %v939
      %1005 = vst.msk [vmem:[%s275 + $0x1d8] sm:$0xff] %vm945, %v940
      %1006 = vst.msk [vmem:[%s275 + $0x1e0] sm:$0xff] %vm945, %v941
      %1007 = vst.msk [vmem:[%s275 + $0x1e8] sm:$0xff] %vm945, %v942
      %1008 = vst.msk [vmem:[%s275 + $0x1f0] sm:$0xff] %vm945, %v943
      %1009 = vst.msk [vmem:[%s275 + $0x1f8] sm:$0xff] %vm945, %v944
      %s1010 = smul.u32 64, %s17
      %p1011 = scmp.lt.s32.totalorder %s1010, 127
      %s1012 = scalar_select %p1011, %s1010, 127
      %s1013 = smul.addr %s1012, 8
      %s1014 = scalar_lea.vmem %s6, %s1013
      // Predicated region
      $region45: #{bottleneck_forward.7} parent=43 // pred_check
        %p1015 = pneg %p171
      $region46: #{bottleneck_forward.7} parent=43 // pred_check_branch
        %1017 = sbr.rel (%p1015) target = $region48
      $region47: #{bottleneck_forward.7} parent=43 // pred_region
        %s1018 = smul.u32 64, %s17
      $region48: #{bottleneck_forward.7} parent=43 // pred_fallthru
        _
    $region44: #{bottleneck_forward.7} parent=5 // pred_fallthru
      _
    %p1019 = scmp.le.s32.totalorder 2, %s12
    // Predicated region
    $region49: #{bottleneck_forward.7} parent=5 // pred_check
      %p1020 = pneg %p1019
    $region50: #{bottleneck_forward.7} parent=5 // pred_check_branch
      %1022 = sbr.rel (%p1020) target = $region52
    $region51: #{bottleneck_forward.7} parent=5 // pred_region
      %s1023 = ssub.s32 %s12, 2
      // Predicated region
      $region53: #{bottleneck_forward.7} parent=51 // pred_check
        %p1024 = pneg %p177
      $region54: #{bottleneck_forward.7} parent=51 // pred_check_branch
        %1026 = sbr.rel (%p1024) target = $region56
      $region55: #{bottleneck_forward.7} parent=51 // pred_region
        %s1027 = smul.u32 64, %s18
        %p1028 = scmp.lt.s32.totalorder %s1027, 127
        %s1029 = scalar_select %p1028, %s1027, 127
        %s1030 = smul.addr %s1029, 8
        %s1031 = scalar_lea.vmem %s6, %s1030
      $region56: #{bottleneck_forward.7} parent=51 // pred_fallthru
        _
    $region52: #{bottleneck_forward.7} parent=5 // pred_fallthru
      _
  $region6: #{bottleneck_forward.7} parent=0 // loop_footer
    %s16 = sadd.s32 1, %s12
  $region7: #{bottleneck_forward.7} parent=0 // loop_footer_branch
    %11 = sbr.rel target = $region3
  $region8: #{bottleneck_forward.7} parent=0 // loop_exit
    _

// kernel: bottleneck_forward.6
$region0: #{bottleneck_forward.6}
  #allocation0 [shape = 'u32[]', space=smem, size = 0x4, offset = 0x4, fixed_abs, tag = 'smem constant byte address 0x4 - core index']
  #allocation1 [shape = 'u32[144,128]{1,0:T(1,128)}', space=vmem, size = 0x12000, scoped, tag = 'internal scratch']
  %s0 = inlined_call_operand.vmem [shape: bf16[1024,128], index: 0, kind: input, shape index: {}]
  %s1 = inlined_call_operand.vmem [shape: f32[1,128], index: 1, kind: input, shape index: {}]
  %s2 = inlined_call_operand.vmem [shape: f32[1,128], index: 2, kind: input, shape index: {}]
  %s3 = inlined_call_operand.vmem [shape: bf16[128,128], index: 3, kind: input, shape index: {}]
  %s4 = inlined_call_operand.vmem [shape: bf16[1024,128], index: 4, kind: input, shape index: {}]
  %s5 = inlined_call_operand.vmem [shape: bf16[128,128], index: 5, kind: input, shape index: {}]
  %s6 = inlined_call_operand.vmem [shape: bf16[1024,128], index: 6, kind: output, shape index: {0}]
  %s7 = inlined_call_operand.vmem [shape: bf16[1024,128], index: 7, kind: output, shape index: {1}]
  %s8 = inlined_call_operand.vmem [shape: f32[2,8,128], index: 8, kind: output, shape index: {2}]
  %s9 = inlined_call_operand.vmem [shape: f32[2,8,128], index: 9, kind: output, shape index: {3}]
  %10 = xla_tuple %s6, %s7, %s8, %s9
  %s11 = sld [smem:[#allocation0]]
  $region81: #{bottleneck_forward.6} parent=0
    _
  %s13 = ssub.s32 1, %s11
  %s14 = scalar_select 0, %s13, %s11
  loop: start=0, step=1, limit=4
  $region2: #{bottleneck_forward.6} parent=0 // loop_pre_header
    _
  $region3: #{bottleneck_forward.6} parent=0 // loop_header
    %s16 = sphi 0, %s20
    %p17 = scmp.ge.s32.totalorder %s16, 4
    %s26 = sphi 0, %s28
    %s29 = sphi 0, %s26
    %s30 = sphi 0, %s29
    %s46 = sphi 0, %s30
    %s50 = sphi 0, %s50
    %s52 = sphi 0, %s50
    %s53 = sphi 0, %s52
    %s67 = sphi 0, %s53
    %s71 = sphi 0, %s71
    %s73 = sphi 0, %s71
    %s74 = sphi 0, %s73
    %s88 = sphi 0, %s74
    %s92 = sphi 0, %s92
    %s94 = sphi 0, %s92
    %s95 = sphi 0, %s94
    %s109 = sphi 0, %s95
    %s115 = sphi 0, %s117
    %s118 = sphi 0, %s115
    %s119 = sphi 0, %s118
    %s135 = sphi 0, %s119
    %s139 = sphi 0, %s139
    %s141 = sphi 0, %s139
    %s142 = sphi 0, %s141
    %s156 = sphi 0, %s142
    %s162 = sphi 0, %s164
    %s165 = sphi 0, %s162
    %s166 = sphi 0, %s165
    %s182 = sphi 0, %s166
    %s188 = sphi 0, %s190
    %s191 = sphi 0, %s188
    %s192 = sphi 0, %s191
    %s208 = sphi 0, %s192
    %s214 = sphi 0, %s216
    %s217 = sphi 0, %s214
    %s218 = sphi 0, %s217
    %s234 = sphi 0, %s218
    %s240 = sphi 0, %s242
    %s243 = sphi 0, %s240
    %s244 = sphi 0, %s243
    %s260 = sphi 0, %s244
  $region4: #{bottleneck_forward.6} parent=0 // loop_header_branch
    %19 = sbr.rel (%p17) target = $region8
  $region5: #{bottleneck_forward.6} parent=0 // loop_body
    %s21 = ssub.s32 %s16, 1
    %s22 = ssub.s32 %s16, 2
    %s23 = sadd.s32 %s16, 1
    %s24 = ssub.s32 %s16, %s23
    %p25 = scmp.eq.s32.totalorder %s24, 0
    %s27 = sadd.s32 %s26, 1
    %s28 = scalar_select %p25, %s26, %s27
    %p31 = pneg %p25
    %p32 = scmp.eq.s32.totalorder %s16, 1
    %p33 = por %p31, %p32
    %p34 = scmp.ne.s32.totalorder %s26, %s29
    %p35 = scmp.eq.s32.totalorder %s16, 0
    %p36 = por %p34, %p35
    %p37 = scmp.ne.s32.totalorder %s26, %s29
    %p38 = scmp.eq.s32.totalorder %s21, 1
    %p39 = por %p37, %p38
    %p40 = scmp.ne.s32.totalorder %s29, %s30
    %p41 = scmp.eq.s32.totalorder %s21, 0
    %p42 = por %p40, %p41
    %p43 = scmp.ne.s32.totalorder %s29, %s30
    %p44 = scmp.eq.s32.totalorder %s22, 1
    %p45 = por %p43, %p44
    %p47 = scmp.ne.s32.totalorder %s30, %s46
    %p48 = scmp.eq.s32.totalorder %s22, 0
    %p49 = por %p47, %p48
    %s51 = sadd.s32 %s50, 1
    %p54 = scmp.eq.s32.totalorder %s16, 1
    %p55 = scmp.ne.s32.totalorder %s50, %s52
    %p56 = scmp.eq.s32.totalorder %s16, 0
    %p57 = por %p55, %p56
    %p58 = scmp.ne.s32.totalorder %s50, %s52
    %p59 = scmp.eq.s32.totalorder %s21, 1
    %p60 = por %p58, %p59
    %p61 = scmp.ne.s32.totalorder %s52, %s53
    %p62 = scmp.eq.s32.totalorder %s21, 0
    %p63 = por %p61, %p62
    %p64 = scmp.ne.s32.totalorder %s52, %s53
    %p65 = scmp.eq.s32.totalorder %s22, 1
    %p66 = por %p64, %p65
    %p68 = scmp.ne.s32.totalorder %s53, %s67
    %p69 = scmp.eq.s32.totalorder %s22, 0
    %p70 = por %p68, %p69
    %s72 = sadd.s32 %s71, 1
    %p75 = scmp.eq.s32.totalorder %s16, 1
    %p76 = scmp.ne.s32.totalorder %s71, %s73
    %p77 = scmp.eq.s32.totalorder %s16, 0
    %p78 = por %p76, %p77
    %p79 = scmp.ne.s32.totalorder %s71, %s73
    %p80 = scmp.eq.s32.totalorder %s21, 1
    %p81 = por %p79, %p80
    %p82 = scmp.ne.s32.totalorder %s73, %s74
    %p83 = scmp.eq.s32.totalorder %s21, 0
    %p84 = por %p82, %p83
    %p85 = scmp.ne.s32.totalorder %s73, %s74
    %p86 = scmp.eq.s32.totalorder %s22, 1
    %p87 = por %p85, %p86
    %p89 = scmp.ne.s32.totalorder %s74, %s88
    %p90 = scmp.eq.s32.totalorder %s22, 0
    %p91 = por %p89, %p90
    %s93 = sadd.s32 %s92, 1
    %p96 = scmp.eq.s32.totalorder %s16, 1
    %p97 = scmp.ne.s32.totalorder %s92, %s94
    %p98 = scmp.eq.s32.totalorder %s16, 0
    %p99 = por %p97, %p98
    %p100 = scmp.ne.s32.totalorder %s92, %s94
    %p101 = scmp.eq.s32.totalorder %s21, 1
    %p102 = por %p100, %p101
    %p103 = scmp.ne.s32.totalorder %s94, %s95
    %p104 = scmp.eq.s32.totalorder %s21, 0
    %p105 = por %p103, %p104
    %p106 = scmp.ne.s32.totalorder %s94, %s95
    %p107 = scmp.eq.s32.totalorder %s22, 1
    %p108 = por %p106, %p107
    %p110 = scmp.ne.s32.totalorder %s95, %s109
    %p111 = scmp.eq.s32.totalorder %s22, 0
    %p112 = por %p110, %p111
    %s113 = ssub.s32 %s16, %s23
    %p114 = scmp.eq.s32.totalorder %s113, 0
    %s116 = sadd.s32 %s115, 1
    %s117 = scalar_select %p114, %s115, %s116
    %p120 = pneg %p114
    %p121 = scmp.eq.s32.totalorder %s16, 1
    %p122 = por %p120, %p121
    %p123 = scmp.ne.s32.totalorder %s115, %s118
    %p124 = scmp.eq.s32.totalorder %s16, 0
    %p125 = por %p123, %p124
    %p126 = scmp.ne.s32.totalorder %s115, %s118
    %p127 = scmp.eq.s32.totalorder %s21, 1
    %p128 = por %p126, %p127
    %p129 = scmp.ne.s32.totalorder %s118, %s119
    %p130 = scmp.eq.s32.totalorder %s21, 0
    %p131 = por %p129, %p130
    %p132 = scmp.ne.s32.totalorder %s118, %s119
    %p133 = scmp.eq.s32.totalorder %s22, 1
    %p134 = por %p132, %p133
    %p136 = scmp.ne.s32.totalorder %s119, %s135
    %p137 = scmp.eq.s32.totalorder %s22, 0
    %p138 = por %p136, %p137
    %s140 = sadd.s32 %s139, 1
    %p143 = scmp.eq.s32.totalorder %s16, 1
    %p144 = scmp.ne.s32.totalorder %s139, %s141
    %p145 = scmp.eq.s32.totalorder %s16, 0
    %p146 = por %p144, %p145
    %p147 = scmp.ne.s32.totalorder %s139, %s141
    %p148 = scmp.eq.s32.totalorder %s21, 1
    %p149 = por %p147, %p148
    %p150 = scmp.ne.s32.totalorder %s141, %s142
    %p151 = scmp.eq.s32.totalorder %s21, 0
    %p152 = por %p150, %p151
    %p153 = scmp.ne.s32.totalorder %s141, %s142
    %p154 = scmp.eq.s32.totalorder %s22, 1
    %p155 = por %p153, %p154
    %p157 = scmp.ne.s32.totalorder %s142, %s156
    %p158 = scmp.eq.s32.totalorder %s22, 0
    %p159 = por %p157, %p158
    %s160 = ssub.s32 %s16, %s23
    %p161 = scmp.eq.s32.totalorder %s160, 0
    %s163 = sadd.s32 %s162, 1
    %s164 = scalar_select %p161, %s162, %s163
    %p167 = pneg %p161
    %p168 = scmp.eq.s32.totalorder %s16, 1
    %p169 = por %p167, %p168
    %p170 = scmp.ne.s32.totalorder %s162, %s165
    %p171 = scmp.eq.s32.totalorder %s16, 0
    %p172 = por %p170, %p171
    %p173 = scmp.ne.s32.totalorder %s162, %s165
    %p174 = scmp.eq.s32.totalorder %s21, 1
    %p175 = por %p173, %p174
    %p176 = scmp.ne.s32.totalorder %s165, %s166
    %p177 = scmp.eq.s32.totalorder %s21, 0
    %p178 = por %p176, %p177
    %p179 = scmp.ne.s32.totalorder %s165, %s166
    %p180 = scmp.eq.s32.totalorder %s22, 1
    %p181 = por %p179, %p180
    %p183 = scmp.ne.s32.totalorder %s166, %s182
    %p184 = scmp.eq.s32.totalorder %s22, 0
    %p185 = por %p183, %p184
    %s186 = ssub.s32 %s16, %s23
    %p187 = scmp.eq.s32.totalorder %s186, 0
    %s189 = sadd.s32 %s188, 1
    %s190 = scalar_select %p187, %s188, %s189
    %p193 = pneg %p187
    %p194 = scmp.eq.s32.totalorder %s16, 1
    %p195 = por %p193, %p194
    %p196 = scmp.ne.s32.totalorder %s188, %s191
    %p197 = scmp.eq.s32.totalorder %s16, 0
    %p198 = por %p196, %p197
    %p199 = scmp.ne.s32.totalorder %s188, %s191
    %p200 = scmp.eq.s32.totalorder %s21, 1
    %p201 = por %p199, %p200
    %p202 = scmp.ne.s32.totalorder %s191, %s192
    %p203 = scmp.eq.s32.totalorder %s21, 0
    %p204 = por %p202, %p203
    %p205 = scmp.ne.s32.totalorder %s191, %s192
    %p206 = scmp.eq.s32.totalorder %s22, 1
    %p207 = por %p205, %p206
    %p209 = scmp.ne.s32.totalorder %s192, %s208
    %p210 = scmp.eq.s32.totalorder %s22, 0
    %p211 = por %p209, %p210
    %s212 = ssub.s32 %s16, %s23
    %p213 = scmp.eq.s32.totalorder %s212, 0
    %s215 = sadd.s32 %s214, 1
    %s216 = scalar_select %p213, %s214, %s215
    %p219 = pneg %p213
    %p220 = scmp.eq.s32.totalorder %s16, 1
    %p221 = por %p219, %p220
    %p222 = scmp.ne.s32.totalorder %s214, %s217
    %p223 = scmp.eq.s32.totalorder %s16, 0
    %p224 = por %p222, %p223
    %p225 = scmp.ne.s32.totalorder %s214, %s217
    %p226 = scmp.eq.s32.totalorder %s21, 1
    %p227 = por %p225, %p226
    %p228 = scmp.ne.s32.totalorder %s217, %s218
    %p229 = scmp.eq.s32.totalorder %s21, 0
    %p230 = por %p228, %p229
    %p231 = scmp.ne.s32.totalorder %s217, %s218
    %p232 = scmp.eq.s32.totalorder %s22, 1
    %p233 = por %p231, %p232
    %p235 = scmp.ne.s32.totalorder %s218, %s234
    %p236 = scmp.eq.s32.totalorder %s22, 0
    %p237 = por %p235, %p236
    %s238 = ssub.s32 %s16, %s23
    %p239 = scmp.eq.s32.totalorder %s238, 0
    %s241 = sadd.s32 %s240, 1
    %s242 = scalar_select %p239, %s240, %s241
    %p245 = pneg %p239
    %p246 = scmp.eq.s32.totalorder %s16, 1
    %p247 = por %p245, %p246
    %p248 = scmp.ne.s32.totalorder %s240, %s243
    %p249 = scmp.eq.s32.totalorder %s16, 0
    %p250 = por %p248, %p249
    %p251 = scmp.ne.s32.totalorder %s240, %s243
    %p252 = scmp.eq.s32.totalorder %s21, 1
    %p253 = por %p251, %p252
    %p254 = scmp.ne.s32.totalorder %s243, %s244
    %p255 = scmp.eq.s32.totalorder %s21, 0
    %p256 = por %p254, %p255
    %p257 = scmp.ne.s32.totalorder %s243, %s244
    %p258 = scmp.eq.s32.totalorder %s22, 1
    %p259 = por %p257, %p258
    %p261 = scmp.ne.s32.totalorder %s244, %s260
    %p262 = scmp.eq.s32.totalorder %s22, 0
    %p263 = por %p261, %p262
    %p264 = scmp.le.s32.totalorder 1, %s16
    %p265 = scmp.lt.s32.totalorder %s16, 3
    %p266 = pnand %p264, %p265
    %p267 = pneg %p266
    // Predicated region
    $region9: #{bottleneck_forward.6} parent=5 // pred_check
      _
    $region10: #{bottleneck_forward.6} parent=5 // pred_check_branch
      %269 = sbr.rel (%p266) target = $region12
    $region11: #{bottleneck_forward.6} parent=5 // pred_region
      %s270 = ssub.s32 %s16, 1
      // Predicated region
      $region13: #{bottleneck_forward.6} parent=11 // pred_check
        %p271 = pneg %p63
      $region14: #{bottleneck_forward.6} parent=11 // pred_check_branch
        %273 = sbr.rel (%p271) target = $region16
      $region15: #{bottleneck_forward.6} parent=11 // pred_region
        _
      $region16: #{bottleneck_forward.6} parent=11 // pred_fallthru
        _
      // Predicated region
      $region17: #{bottleneck_forward.6} parent=11 // pred_check
        %p274 = pneg %p84
      $region18: #{bottleneck_forward.6} parent=11 // pred_check_branch
        %276 = sbr.rel (%p274) target = $region20
      $region19: #{bottleneck_forward.6} parent=11 // pred_region
        _
      $region20: #{bottleneck_forward.6} parent=11 // pred_fallthru
        _
      // Predicated region
      $region21: #{bottleneck_forward.6} parent=11 // pred_check
        %p277 = pneg %p105
      $region22: #{bottleneck_forward.6} parent=11 // pred_check_branch
        %279 = sbr.rel (%p277) target = $region24
      $region23: #{bottleneck_forward.6} parent=11 // pred_region
        _
      $region24: #{bottleneck_forward.6} parent=11 // pred_fallthru
        _
      // Predicated region
      $region25: #{bottleneck_forward.6} parent=11 // pred_check
        %p280 = pneg %p152
      $region26: #{bottleneck_forward.6} parent=11 // pred_check_branch
        %282 = sbr.rel (%p280) target = $region28
      $region27: #{bottleneck_forward.6} parent=11 // pred_region
        _
      $region28: #{bottleneck_forward.6} parent=11 // pred_fallthru
        _
    $region12: #{bottleneck_forward.6} parent=5 // pred_fallthru
      _
    %p283 = scmp.lt.s32.totalorder %s16, 2
    // Predicated region
    $region29: #{bottleneck_forward.6} parent=5 // pred_check
      %p284 = pneg %p283
    $region30: #{bottleneck_forward.6} parent=5 // pred_check_branch
      %286 = sbr.rel (%p284) target = $region32
    $region31: #{bottleneck_forward.6} parent=5 // pred_region
      // Predicated region
      $region33: #{bottleneck_forward.6} parent=31 // pred_check
        %p287 = pneg %p36
      $region34: #{bottleneck_forward.6} parent=31 // pred_check_branch
        %289 = sbr.rel (%p287) target = $region36
      $region35: #{bottleneck_forward.6} parent=31 // pred_region
        %s290 = smul.u32 64, %s16
        %p291 = scmp.lt.s32.totalorder %s290, 127
        %s292 = scalar_select %p291, %s290, 127
        %s293 = smul.addr %s292, 4
        %s294 = scalar_lea.vmem %s0, %s293
        %s295 = smul.u32 64, %s16
      $region36: #{bottleneck_forward.6} parent=31 // pred_fallthru
        _
      // Predicated region
      $region37: #{bottleneck_forward.6} parent=31 // pred_check
        %p296 = pneg %p125
      $region38: #{bottleneck_forward.6} parent=31 // pred_check_branch
        %298 = sbr.rel (%p296) target = $region40
      $region39: #{bottleneck_forward.6} parent=31 // pred_region
        %s299 = smul.u32 64, %s16
        %p300 = scmp.lt.s32.totalorder %s299, 127
        %s301 = scalar_select %p300, %s299, 127
        %s302 = smul.addr %s301, 4
        %s303 = scalar_lea.vmem %s4, %s302
        %s304 = smul.u32 64, %s16
      $region40: #{bottleneck_forward.6} parent=31 // pred_fallthru
        _
    $region32: #{bottleneck_forward.6} parent=5 // pred_fallthru
      _
    %p305 = scmp.le.s32.totalorder 1, %s16
    %p306 = scmp.lt.s32.totalorder %s16, 3
    %p307 = pnand %p305, %p306
    %p308 = pneg %p307
    // Predicated region
    $region41: #{bottleneck_forward.6} parent=5 // pred_check
      _
    $region42: #{bottleneck_forward.6} parent=5 // pred_check_branch
      %310 = sbr.rel (%p307) target = $region44
    $region43: #{bottleneck_forward.6} parent=5 // pred_region
      %s311 = ssub.s32 %s16, 1
      %s312 = smul.u32 64, %s21
      %p313 = scmp.lt.s32.totalorder %s312, 127
      %s314 = scalar_select %p313, %s312, 127
      %s315 = smul.addr %s314, 4
      %s316 = scalar_lea.vmem %s0, %s315
      %p317 = pneg %p42
      %p318 = pneg %p39
      %p319 = pneg %p63
      %p320 = pneg %p60
      %p321 = pneg %p84
      %p322 = pneg %p81
      %p323 = pneg %p105
      %p324 = pneg %p102
      %s325 = smul.u32 64, %s21
      %p326 = scmp.lt.s32.totalorder %s325, 127
      %s327 = scalar_select %p326, %s325, 127
      %s328 = smul.addr %s327, 4
      %s329 = scalar_lea.vmem %s4, %s328
      %p330 = pneg %p131
      %p331 = pneg %p128
      %p332 = pneg %p152
      %p333 = pneg %p149
      %p334 = pneg %p178
      %p335 = pneg %p175
      %s336 = smul.u32 64, %s21
      %p337 = scmp.lt.s32.totalorder %s336, 127
      %s338 = scalar_select %p337, %s336, 127
      %s339 = smul.addr %s338, 4
      %s340 = scalar_lea.vmem %s6, %s339
      %p341 = pneg %p204
      %p342 = pneg %p201
      %s343 = smul.u32 64, %s21
      %p344 = scmp.lt.s32.totalorder %s343, 127
      %s345 = scalar_select %p344, %s343, 127
      %s346 = smul.addr %s345, 4
      %s347 = scalar_lea.vmem %s7, %s346
      %p348 = pneg %p230
      %p349 = pneg %p227
      %p350 = scmp.lt.s32.totalorder %s21, 1
      %s351 = scalar_select %p350, %s21, 1
      %s352 = smul.addr %s351, 8
      %s353 = scalar_lea.vmem %s8, %s352
      %p354 = pneg %p256
      %p355 = pneg %p253
      %p356 = scmp.lt.s32.totalorder %s21, 1
      %s357 = scalar_select %p356, %s21, 1
      %s358 = smul.addr %s357, 8
      %s359 = scalar_lea.vmem %s9, %s358
      %s360 = smul.u32 64, %s21
      %p361 = scmp.lt.s32.totalorder %s360, 127
      %s362 = scalar_select %p361, %s360, 127
      %s363 = smul.addr %s362, 4
      %s364 = scalar_lea.vmem %s0, %s363
      %s365 = smul.u32 64, %s21
      %s366 = smul.u32 64, %s21
      %p367 = scmp.lt.s32.totalorder %s366, 127
      %s368 = scalar_select %p367, %s366, 127
      %s369 = smul.addr %s368, 4
      %s370 = scalar_lea.vmem %s4, %s369
      %s371 = smul.u32 64, %s21
      %s372 = smul.u32 64, %s21
      %p373 = scmp.lt.s32.totalorder %s372, 127
      %s374 = scalar_select %p373, %s372, 127
      %s375 = smul.addr %s374, 4
      %s376 = scalar_lea.vmem %s6, %s375
      %s377 = smul.u32 64, %s21
      %s378 = smul.u32 64, %s21
      %p379 = scmp.lt.s32.totalorder %s378, 127
      %s380 = scalar_select %p379, %s378, 127
      %s381 = smul.addr %s380, 4
      %s382 = scalar_lea.vmem %s7, %s381
      %s383 = smul.u32 64, %s21
      %p384 = scmp.lt.s32.totalorder %s21, 1
      %s385 = scalar_select %p384, %s21, 1
      %s386 = smul.addr %s385, 8
      %s387 = scalar_lea.vmem %s8, %s386
      %p388 = scmp.lt.s32.totalorder %s21, 1
      %s389 = scalar_select %p388, %s21, 1
      %s390 = smul.addr %s389, 8
      %s391 = scalar_lea.vmem %s9, %s390
      %v393 = vld [vmem:[%s364] sm:$0xf]
      %v394 = vld [vmem:[%s364 + $0x4] sm:$0xf]
      %v395 = vld [vmem:[%s364 + $0x8] sm:$0xf]
      %v396 = vld [vmem:[%s364 + $0xc] sm:$0xf]
      %v397 = vld [vmem:[%s364 + $0x10] sm:$0xf]
      %v398 = vld [vmem:[%s364 + $0x14] sm:$0xf]
      %v399 = vld [vmem:[%s364 + $0x18] sm:$0xf]
      %v400 = vld [vmem:[%s364 + $0x1c] sm:$0xf]
      %v401 = vld [vmem:[%s364 + $0x20] sm:$0xf]
      %v402 = vld [vmem:[%s364 + $0x24] sm:$0xf]
      %v403 = vld [vmem:[%s364 + $0x28] sm:$0xf]
      %v404 = vld [vmem:[%s364 + $0x2c] sm:$0xf]
      %v405 = vld [vmem:[%s364 + $0x30] sm:$0xf]
      %v406 = vld [vmem:[%s364 + $0x34] sm:$0xf]
      %v407 = vld [vmem:[%s364 + $0x38] sm:$0xf]
      %v408 = vld [vmem:[%s364 + $0x3c] sm:$0xf]
      %v409 = vld [vmem:[%s364 + $0x40] sm:$0xf]
      %v410 = vld [vmem:[%s364 + $0x44] sm:$0xf]
      %v411 = vld [vmem:[%s364 + $0x48] sm:$0xf]
      %v412 = vld [vmem:[%s364 + $0x4c] sm:$0xf]
      %v413 = vld [vmem:[%s364 + $0x50] sm:$0xf]
      %v414 = vld [vmem:[%s364 + $0x54] sm:$0xf]
      %v415 = vld [vmem:[%s364 + $0x58] sm:$0xf]
      %v416 = vld [vmem:[%s364 + $0x5c] sm:$0xf]
      %v417 = vld [vmem:[%s364 + $0x60] sm:$0xf]
      %v418 = vld [vmem:[%s364 + $0x64] sm:$0xf]
      %v419 = vld [vmem:[%s364 + $0x68] sm:$0xf]
      %v420 = vld [vmem:[%s364 + $0x6c] sm:$0xf]
      %v421 = vld [vmem:[%s364 + $0x70] sm:$0xf]
      %v422 = vld [vmem:[%s364 + $0x74] sm:$0xf]
      %v423 = vld [vmem:[%s364 + $0x78] sm:$0xf]
      %v424 = vld [vmem:[%s364 + $0x7c] sm:$0xf]
      %v425 = vld [vmem:[%s364 + $0x80] sm:$0xf]
      %v426 = vld [vmem:[%s364 + $0x84] sm:$0xf]
      %v427 = vld [vmem:[%s364 + $0x88] sm:$0xf]
      %v428 = vld [vmem:[%s364 + $0x8c] sm:$0xf]
      %v429 = vld [vmem:[%s364 + $0x90] sm:$0xf]
      %v430 = vld [vmem:[%s364 + $0x94] sm:$0xf]
      %v431 = vld [vmem:[%s364 + $0x98] sm:$0xf]
      %v432 = vld [vmem:[%s364 + $0x9c] sm:$0xf]
      %v433 = vld [vmem:[%s364 + $0xa0] sm:$0xf]
      %v434 = vld [vmem:[%s364 + $0xa4] sm:$0xf]
      %v435 = vld [vmem:[%s364 + $0xa8] sm:$0xf]
      %v436 = vld [vmem:[%s364 + $0xac] sm:$0xf]
      %v437 = vld [vmem:[%s364 + $0xb0] sm:$0xf]
      %v438 = vld [vmem:[%s364 + $0xb4] sm:$0xf]
      %v439 = vld [vmem:[%s364 + $0xb8] sm:$0xf]
      %v440 = vld [vmem:[%s364 + $0xbc] sm:$0xf]
      %v441 = vld [vmem:[%s364 + $0xc0] sm:$0xf]
      %v442 = vld [vmem:[%s364 + $0xc4] sm:$0xf]
      %v443 = vld [vmem:[%s364 + $0xc8] sm:$0xf]
      %v444 = vld [vmem:[%s364 + $0xcc] sm:$0xf]
      %v445 = vld [vmem:[%s364 + $0xd0] sm:$0xf]
      %v446 = vld [vmem:[%s364 + $0xd4] sm:$0xf]
      %v447 = vld [vmem:[%s364 + $0xd8] sm:$0xf]
      %v448 = vld [vmem:[%s364 + $0xdc] sm:$0xf]
      %v449 = vld [vmem:[%s364 + $0xe0] sm:$0xf]
      %v450 = vld [vmem:[%s364 + $0xe4] sm:$0xf]
      %v451 = vld [vmem:[%s364 + $0xe8] sm:$0xf]
      %v452 = vld [vmem:[%s364 + $0xec] sm:$0xf]
      %v453 = vld [vmem:[%s364 + $0xf0] sm:$0xf]
      %v454 = vld [vmem:[%s364 + $0xf4] sm:$0xf]
      %v455 = vld [vmem:[%s364 + $0xf8] sm:$0xf]
      %v456 = vld [vmem:[%s364 + $0xfc] sm:$0xf]
      %v457 = vunpack.c.l.bf16 %v393
      %v458 = vunpack.c.l.bf16 %v394
      %v459 = vunpack.c.l.bf16 %v395
      %v460 = vunpack.c.l.bf16 %v396
      %v461 = vunpack.c.l.bf16 %v397
      %v462 = vunpack.c.l.bf16 %v398
      %v463 = vunpack.c.l.bf16 %v399
      %v464 = vunpack.c.l.bf16 %v400
      %v465 = vunpack.c.l.bf16 %v401
      %v466 = vunpack.c.l.bf16 %v402
      %v467 = vunpack.c.l.bf16 %v403
      %v468 = vunpack.c.l.bf16 %v404
      %v469 = vunpack.c.l.bf16 %v405
      %v470 = vunpack.c.l.bf16 %v406
      %v471 = vunpack.c.l.bf16 %v407
      %v472 = vunpack.c.l.bf16 %v408
      %v473 = vunpack.c.l.bf16 %v409
      %v474 = vunpack.c.l.bf16 %v410
      %v475 = vunpack.c.l.bf16 %v411
      %v476 = vunpack.c.l.bf16 %v412
      %v477 = vunpack.c.l.bf16 %v413
      %v478 = vunpack.c.l.bf16 %v414
      %v479 = vunpack.c.l.bf16 %v415
      %v480 = vunpack.c.l.bf16 %v416
      %v481 = vunpack.c.l.bf16 %v417
      %v482 = vunpack.c.l.bf16 %v418
      %v483 = vunpack.c.l.bf16 %v419
      %v484 = vunpack.c.l.bf16 %v420
      %v485 = vunpack.c.l.bf16 %v421
      %v486 = vunpack.c.l.bf16 %v422
      %v487 = vunpack.c.l.bf16 %v423
      %v488 = vunpack.c.l.bf16 %v424
      %v489 = vunpack.c.l.bf16 %v425
      %v490 = vunpack.c.l.bf16 %v426
      %v491 = vunpack.c.l.bf16 %v427
      %v492 = vunpack.c.l.bf16 %v428
      %v493 = vunpack.c.l.bf16 %v429
      %v494 = vunpack.c.l.bf16 %v430
      %v495 = vunpack.c.l.bf16 %v431
      %v496 = vunpack.c.l.bf16 %v432
      %v497 = vunpack.c.l.bf16 %v433
      %v498 = vunpack.c.l.bf16 %v434
      %v499 = vunpack.c.l.bf16 %v435
      %v500 = vunpack.c.l.bf16 %v436
      %v501 = vunpack.c.l.bf16 %v437
      %v502 = vunpack.c.l.bf16 %v438
      %v503 = vunpack.c.l.bf16 %v439
      %v504 = vunpack.c.l.bf16 %v440
      %v505 = vunpack.c.l.bf16 %v441
      %v506 = vunpack.c.l.bf16 %v442
      %v507 = vunpack.c.l.bf16 %v443
      %v508 = vunpack.c.l.bf16 %v444
      %v509 = vunpack.c.l.bf16 %v445
      %v510 = vunpack.c.l.bf16 %v446
      %v511 = vunpack.c.l.bf16 %v447
      %v512 = vunpack.c.l.bf16 %v448
      %v513 = vunpack.c.l.bf16 %v449
      %v514 = vunpack.c.l.bf16 %v450
      %v515 = vunpack.c.l.bf16 %v451
      %v516 = vunpack.c.l.bf16 %v452
      %v517 = vunpack.c.l.bf16 %v453
      %v518 = vunpack.c.l.bf16 %v454
      %v519 = vunpack.c.l.bf16 %v455
      %v520 = vunpack.c.l.bf16 %v456
      %v521 = vld [vmem:[%s1] sm:$0x1]
      %v523 = vlaneseq
      %v524 = vshrl.u32 %v523, 7
      %v525 = vsub.s32 0, %v524
      %v526 = vrot.slane %v521, %v525
      %v528 = vmul.f32 %v457, %v526
      %v529 = vmul.f32 %v458, %v526
      %v530 = vmul.f32 %v459, %v526
      %v531 = vmul.f32 %v460, %v526
      %v532 = vmul.f32 %v461, %v526
      %v533 = vmul.f32 %v462, %v526
      %v534 = vmul.f32 %v463, %v526
      %v535 = vmul.f32 %v464, %v526
      %v536 = vmul.f32 %v465, %v526
      %v537 = vmul.f32 %v466, %v526
      %v538 = vmul.f32 %v467, %v526
      %v539 = vmul.f32 %v468, %v526
      %v540 = vmul.f32 %v469, %v526
      %v541 = vmul.f32 %v470, %v526
      %v542 = vmul.f32 %v471, %v526
      %v543 = vmul.f32 %v472, %v526
      %v544 = vmul.f32 %v473, %v526
      %v545 = vmul.f32 %v474, %v526
      %v546 = vmul.f32 %v475, %v526
      %v547 = vmul.f32 %v476, %v526
      %v548 = vmul.f32 %v477, %v526
      %v549 = vmul.f32 %v478, %v526
      %v550 = vmul.f32 %v479, %v526
      %v551 = vmul.f32 %v480, %v526
      %v552 = vmul.f32 %v481, %v526
      %v553 = vmul.f32 %v482, %v526
      %v554 = vmul.f32 %v483, %v526
      %v555 = vmul.f32 %v484, %v526
      %v556 = vmul.f32 %v485, %v526
      %v557 = vmul.f32 %v486, %v526
      %v558 = vmul.f32 %v487, %v526
      %v559 = vmul.f32 %v488, %v526
      %v560 = vmul.f32 %v489, %v526
      %v561 = vmul.f32 %v490, %v526
      %v562 = vmul.f32 %v491, %v526
      %v563 = vmul.f32 %v492, %v526
      %v564 = vmul.f32 %v493, %v526
      %v565 = vmul.f32 %v494, %v526
      %v566 = vmul.f32 %v495, %v526
      %v567 = vmul.f32 %v496, %v526
      %v568 = vmul.f32 %v497, %v526
      %v569 = vmul.f32 %v498, %v526
      %v570 = vmul.f32 %v499, %v526
      %v571 = vmul.f32 %v500, %v526
      %v572 = vmul.f32 %v501, %v526
      %v573 = vmul.f32 %v502, %v526
      %v574 = vmul.f32 %v503, %v526
      %v575 = vmul.f32 %v504, %v526
      %v576 = vmul.f32 %v505, %v526
      %v577 = vmul.f32 %v506, %v526
      %v578 = vmul.f32 %v507, %v526
      %v579 = vmul.f32 %v508, %v526
      %v580 = vmul.f32 %v509, %v526
      %v581 = vmul.f32 %v510, %v526
      %v582 = vmul.f32 %v511, %v526
      %v583 = vmul.f32 %v512, %v526
      %v584 = vmul.f32 %v513, %v526
      %v585 = vmul.f32 %v514, %v526
      %v586 = vmul.f32 %v515, %v526
      %v587 = vmul.f32 %v516, %v526
      %v588 = vmul.f32 %v517, %v526
      %v589 = vmul.f32 %v518, %v526
      %v590 = vmul.f32 %v519, %v526
      %v591 = vmul.f32 %v520, %v526
      %v592 = vld [vmem:[%s2] sm:$0x1]
      %v594 = vlaneseq
      %v595 = vshrl.u32 %v594, 7
      %v596 = vsub.s32 0, %v595
      %v597 = vrot.slane %v592, %v596
      %v599 = vadd.f32 %v528, %v597
      %v600 = vadd.f32 %v529, %v597
      %v601 = vadd.f32 %v530, %v597
      %v602 = vadd.f32 %v531, %v597
      %v603 = vadd.f32 %v532, %v597
      %v604 = vadd.f32 %v533, %v597
      %v605 = vadd.f32 %v534, %v597
      %v606 = vadd.f32 %v535, %v597
      %v607 = vadd.f32 %v536, %v597
      %v608 = vadd.f32 %v537, %v597
      %v609 = vadd.f32 %v538, %v597
      %v610 = vadd.f32 %v539, %v597
      %v611 = vadd.f32 %v540, %v597
      %v612 = vadd.f32 %v541, %v597
      %v613 = vadd.f32 %v542, %v597
      %v614 = vadd.f32 %v543, %v597
      %v615 = vadd.f32 %v544, %v597
      %v616 = vadd.f32 %v545, %v597
      %v617 = vadd.f32 %v546, %v597
      %v618 = vadd.f32 %v547, %v597
      %v619 = vadd.f32 %v548, %v597
      %v620 = vadd.f32 %v549, %v597
      %v621 = vadd.f32 %v550, %v597
      %v622 = vadd.f32 %v551, %v597
      %v623 = vadd.f32 %v552, %v597
      %v624 = vadd.f32 %v553, %v597
      %v625 = vadd.f32 %v554, %v597
      %v626 = vadd.f32 %v555, %v597
      %v627 = vadd.f32 %v556, %v597
      %v628 = vadd.f32 %v557, %v597
      %v629 = vadd.f32 %v558, %v597
      %v630 = vadd.f32 %v559, %v597
      %v631 = vadd.f32 %v560, %v597
      %v632 = vadd.f32 %v561, %v597
      %v633 = vadd.f32 %v562, %v597
      %v634 = vadd.f32 %v563, %v597
      %v635 = vadd.f32 %v564, %v597
      %v636 = vadd.f32 %v565, %v597
      %v637 = vadd.f32 %v566, %v597
      %v638 = vadd.f32 %v567, %v597
      %v639 = vadd.f32 %v568, %v597
      %v640 = vadd.f32 %v569, %v597
      %v641 = vadd.f32 %v570, %v597
      %v642 = vadd.f32 %v571, %v597
      %v643 = vadd.f32 %v572, %v597
      %v644 = vadd.f32 %v573, %v597
      %v645 = vadd.f32 %v574, %v597
      %v646 = vadd.f32 %v575, %v597
      %v647 = vadd.f32 %v576, %v597
      %v648 = vadd.f32 %v577, %v597
      %v649 = vadd.f32 %v578, %v597
      %v650 = vadd.f32 %v579, %v597
      %v651 = vadd.f32 %v580, %v597
      %v652 = vadd.f32 %v581, %v597
      %v653 = vadd.f32 %v582, %v597
      %v654 = vadd.f32 %v583, %v597
      %v655 = vadd.f32 %v584, %v597
      %v656 = vadd.f32 %v585, %v597
      %v657 = vadd.f32 %v586, %v597
      %v658 = vadd.f32 %v587, %v597
      %v659 = vadd.f32 %v588, %v597
      %v660 = vadd.f32 %v589, %v597
      %v661 = vadd.f32 %v590, %v597
      %v662 = vadd.f32 %v591, %v597
      %v663 = vmax.f32 %v599, 0.0
      %v664 = vmax.f32 %v600, 0.0
      %v665 = vmax.f32 %v601, 0.0
      %v666 = vmax.f32 %v602, 0.0
      %v667 = vmax.f32 %v603, 0.0
      %v668 = vmax.f32 %v604, 0.0
      %v669 = vmax.f32 %v605, 0.0
      %v670 = vmax.f32 %v606, 0.0
      %v671 = vmax.f32 %v607, 0.0
      %v672 = vmax.f32 %v608, 0.0
      %v673 = vmax.f32 %v609, 0.0
      %v674 = vmax.f32 %v610, 0.0
      %v675 = vmax.f32 %v611, 0.0
      %v676 = vmax.f32 %v612, 0.0
      %v677 = vmax.f32 %v613, 0.0
      %v678 = vmax.f32 %v614, 0.0
      %v679 = vmax.f32 %v615, 0.0
      %v680 = vmax.f32 %v616, 0.0
      %v681 = vmax.f32 %v617, 0.0
      %v682 = vmax.f32 %v618, 0.0
      %v683 = vmax.f32 %v619, 0.0
      %v684 = vmax.f32 %v620, 0.0
      %v685 = vmax.f32 %v621, 0.0
      %v686 = vmax.f32 %v622, 0.0
      %v687 = vmax.f32 %v623, 0.0
      %v688 = vmax.f32 %v624, 0.0
      %v689 = vmax.f32 %v625, 0.0
      %v690 = vmax.f32 %v626, 0.0
      %v691 = vmax.f32 %v627, 0.0
      %v692 = vmax.f32 %v628, 0.0
      %v693 = vmax.f32 %v629, 0.0
      %v694 = vmax.f32 %v630, 0.0
      %v695 = vmax.f32 %v631, 0.0
      %v696 = vmax.f32 %v632, 0.0
      %v697 = vmax.f32 %v633, 0.0
      %v698 = vmax.f32 %v634, 0.0
      %v699 = vmax.f32 %v635, 0.0
      %v700 = vmax.f32 %v636, 0.0
      %v701 = vmax.f32 %v637, 0.0
      %v702 = vmax.f32 %v638, 0.0
      %v703 = vmax.f32 %v639, 0.0
      %v704 = vmax.f32 %v640, 0.0
      %v705 = vmax.f32 %v641, 0.0
      %v706 = vmax.f32 %v642, 0.0
      %v707 = vmax.f32 %v643, 0.0
      %v708 = vmax.f32 %v644, 0.0
      %v709 = vmax.f32 %v645, 0.0
      %v710 = vmax.f32 %v646, 0.0
      %v711 = vmax.f32 %v647, 0.0
      %v712 = vmax.f32 %v648, 0.0
      %v713 = vmax.f32 %v649, 0.0
      %v714 = vmax.f32 %v650, 0.0
      %v715 = vmax.f32 %v651, 0.0
      %v716 = vmax.f32 %v652, 0.0
      %v717 = vmax.f32 %v653, 0.0
      %v718 = vmax.f32 %v654, 0.0
      %v719 = vmax.f32 %v655, 0.0
      %v720 = vmax.f32 %v656, 0.0
      %v721 = vmax.f32 %v657, 0.0
      %v722 = vmax.f32 %v658, 0.0
      %v723 = vmax.f32 %v659, 0.0
      %v724 = vmax.f32 %v660, 0.0
      %v725 = vmax.f32 %v661, 0.0
      %v726 = vmax.f32 %v662, 0.0
      %v727 = vpack.c.bf16 %v664, %v663
      %v728 = vpack.c.bf16 %v666, %v665
      %v729 = vpack.c.bf16 %v668, %v667
      %v730 = vpack.c.bf16 %v670, %v669
      %v731 = vpack.c.bf16 %v672, %v671
      %v732 = vpack.c.bf16 %v674, %v673
      %v733 = vpack.c.bf16 %v676, %v675
      %v734 = vpack.c.bf16 %v678, %v677
      %v735 = vpack.c.bf16 %v680, %v679
      %v736 = vpack.c.bf16 %v682, %v681
      %v737 = vpack.c.bf16 %v684, %v683
      %v738 = vpack.c.bf16 %v686, %v685
      %v739 = vpack.c.bf16 %v688, %v687
      %v740 = vpack.c.bf16 %v690, %v689
      %v741 = vpack.c.bf16 %v692, %v691
      %v742 = vpack.c.bf16 %v694, %v693
      %v743 = vpack.c.bf16 %v696, %v695
      %v744 = vpack.c.bf16 %v698, %v697
      %v745 = vpack.c.bf16 %v700, %v699
      %v746 = vpack.c.bf16 %v702, %v701
      %v747 = vpack.c.bf16 %v704, %v703
      %v748 = vpack.c.bf16 %v706, %v705
      %v749 = vpack.c.bf16 %v708, %v707
      %v750 = vpack.c.bf16 %v710, %v709
      %v751 = vpack.c.bf16 %v712, %v711
      %v752 = vpack.c.bf16 %v714, %v713
      %v753 = vpack.c.bf16 %v716, %v715
      %v754 = vpack.c.bf16 %v718, %v717
      %v755 = vpack.c.bf16 %v720, %v719
      %v756 = vpack.c.bf16 %v722, %v721
      %v757 = vpack.c.bf16 %v724, %v723
      %v758 = vpack.c.bf16 %v726, %v725
      %v759 = vld [vmem:[%s3] sm:$0xf]
      %v760 = vld [vmem:[%s3 + $0x4] sm:$0xf]
      %v761 = vld [vmem:[%s3 + $0x8] sm:$0xf]
      %v762 = vld [vmem:[%s3 + $0xc] sm:$0xf]
      %v763 = vld [vmem:[%s3 + $0x10] sm:$0xf]
      %v764 = vld [vmem:[%s3 + $0x14] sm:$0xf]
      %v765 = vld [vmem:[%s3 + $0x18] sm:$0xf]
      %v766 = vld [vmem:[%s3 + $0x1c] sm:$0xf]
      %v767 = vld [vmem:[%s3 + $0x20] sm:$0xf]
      %v768 = vld [vmem:[%s3 + $0x24] sm:$0xf]
      %v769 = vld [vmem:[%s3 + $0x28] sm:$0xf]
      %v770 = vld [vmem:[%s3 + $0x2c] sm:$0xf]
      %v771 = vld [vmem:[%s3 + $0x30] sm:$0xf]
      %v772 = vld [vmem:[%s3 + $0x34] sm:$0xf]
      %v773 = vld [vmem:[%s3 + $0x38] sm:$0xf]
      %v774 = vld [vmem:[%s3 + $0x3c] sm:$0xf]
      %v791 = vunpack.c.l.b16 %v759
      %v792 = vunpack.c.l.b16 %v760
      %v793 = vunpack.c.l.b16 %v761
      %v794 = vunpack.c.l.b16 %v762
      %v795 = vunpack.c.l.b16 %v763
      %v796 = vunpack.c.l.b16 %v764
      %v797 = vunpack.c.l.b16 %v765
      %v798 = vunpack.c.l.b16 %v766
      %v799 = vunpack.c.l.b16 %v767
      %v800 = vunpack.c.l.b16 %v768
      %v801 = vunpack.c.l.b16 %v769
      %v802 = vunpack.c.l.b16 %v770
      %v803 = vunpack.c.l.b16 %v771
      %v804 = vunpack.c.l.b16 %v772
      %v805 = vunpack.c.l.b16 %v773
      %v806 = vunpack.c.l.b16 %v774
      %v807 = vpack.c.b16 %v792, %v791
      %v808 = vpack.c.b16 %v794, %v793
      %v809 = vpack.c.b16 %v796, %v795
      %v810 = vpack.c.b16 %v798, %v797
      %v811 = vpack.c.b16 %v800, %v799
      %v812 = vpack.c.b16 %v802, %v801
      %v813 = vpack.c.b16 %v804, %v803
      %v814 = vpack.c.b16 %v806, %v805
      %823 = vmatprep.subr.bf16.mxu0 0
      %824 = vmatpush1.bf16.msra.mxu0 %v807
      %825 = vmatprep.subr.bf16.mxu0 0
      %826 = vmatpush1.bf16.msra.mxu0 %v808
      %827 = vmatprep.subr.bf16.mxu0 0
      %828 = vmatpush1.bf16.msra.mxu0 %v809
      %829 = vmatprep.subr.bf16.mxu0 0
      %830 = vmatpush1.bf16.msra.mxu0 %v810
      %831 = vmatprep.subr.bf16.mxu0 0
      %832 = vmatpush1.bf16.msra.mxu0 %v811
      %833 = vmatprep.subr.bf16.mxu0 0
      %834 = vmatpush1.bf16.msra.mxu0 %v812
      %835 = vmatprep.subr.bf16.mxu0 0
      %836 = vmatpush1.bf16.msra.mxu0 %v813
      %837 = vmatprep.subr.bf16.mxu0 0
      %838 = vmatpush1.bf16.msra.mxu0 %v814
      %839 = vmatprep.subr.bf16.mxu0 0
      %840 = vmatpush1.bf16.msra.mxu0 0
      %841 = vmatprep.subr.bf16.mxu0 0
      %842 = vmatpush1.bf16.msra.mxu0 0
      %843 = vmatprep.subr.bf16.mxu0 0
      %844 = vmatpush1.bf16.msra.mxu0 0
      %845 = vmatprep.subr.bf16.mxu0 0
      %846 = vmatpush1.bf16.msra.mxu0 0
      %847 = vmatprep.subr.bf16.mxu0 0
      %848 = vmatpush1.bf16.msra.mxu0 0
      %849 = vmatprep.subr.bf16.mxu0 0
      %850 = vmatpush1.bf16.msra.mxu0 0
      %851 = vmatprep.subr.bf16.mxu0 0
      %852 = vmatpush1.bf16.msra.mxu0 0
      %853 = vmatprep.subr.bf16.mxu0 0
      %854 = vmatpush1.bf16.msra.mxu0 0
      %855 = vmatprep.mubr.bf16.mxu0 0
      %856 = vmatmul.mubr.bf16.gmra.mrb[0].mxu0 %v727
      %v857 = vpop.f32.mrb[0].mxu0
      %v858 = vadd.f32 0.0, %v857
      %v859 = vpop.f32.mrb[0].mxu0
      %v860 = vpop.f32.mrb[0].mxu0
      %v861 = vadd.f32 0.0, %v860
      %v862 = vpop.f32.mrb[0].mxu0
      %863 = vmatprep.mubr.bf16.mxu0 0
      %864 = vmatmul.mubr.bf16.gmra.mrb[0].mxu0 %v728
      %v865 = vpop.f32.mrb[0].mxu0
      %v866 = vadd.f32 0.0, %v865
      %v867 = vpop.f32.mrb[0].mxu0
      %v868 = vpop.f32.mrb[0].mxu0
      %v869 = vadd.f32 0.0, %v868
      %v870 = vpop.f32.mrb[0].mxu0
      %871 = vmatprep.mubr.bf16.mxu0 0
      %872 = vmatmul.mubr.bf16.gmra.mrb[0].mxu0 %v729
      %v873 = vpop.f32.mrb[0].mxu0
      %v874 = vadd.f32 0.0, %v873
      %v875 = vpop.f32.mrb[0].mxu0
      %v876 = vpop.f32.mrb[0].mxu0
      %v877 = vadd.f32 0.0, %v876
      %v878 = vpop.f32.mrb[0].mxu0
      %879 = vmatprep.mubr.bf16.mxu0 0
      %880 = vmatmul.mubr.bf16.gmra.mrb[0].mxu0 %v730
      %v881 = vpop.f32.mrb[0].mxu0
      %v882 = vadd.f32 0.0, %v881
      %v883 = vpop.f32.mrb[0].mxu0
      %v884 = vpop.f32.mrb[0].mxu0
      %v885 = vadd.f32 0.0, %v884
      %v886 = vpop.f32.mrb[0].mxu0
      %887 = vmatprep.mubr.bf16.mxu0 0
      %888 = vmatmul.mubr.bf16.gmra.mrb[0].mxu0 %v731
      %v889 = vpop.f32.mrb[0].mxu0
      %v890 = vadd.f32 0.0, %v889
      %v891 = vpop.f32.mrb[0].mxu0
      %v892 = vpop.f32.mrb[0].mxu0
      %v893 = vadd.f32 0.0, %v892
      %v894 = vpop.f32.mrb[0].mxu0
      %895 = vmatprep.mubr.bf16.mxu0 0
      %896 = vmatmul.mubr.bf16.gmra.mrb[0].mxu0 %v732
      %v897 = vpop.f32.mrb[0].mxu0
      %v898 = vadd.f32 0.0, %v897
      %v899 = vpop.f32.mrb[0].mxu0
      %v900 = vpop.f32.mrb[0].mxu0
      %v901 = vadd.f32 0.0, %v900
      %v902 = vpop.f32.mrb[0].mxu0
      %903 = vmatprep.mubr.bf16.mxu0 0
      %904 = vmatmul.mubr.bf16.gmra.mrb[0].mxu0 %v733
      %v905 = vpop.f32.mrb[0].mxu0
      %v906 = vadd.f32 0.0, %v905
      %v907 = vpop.f32.mrb[0].mxu0
      %v908 = vpop.f32.mrb[0].mxu0
      %v909 = vadd.f32 0.0, %v908
      %v910 = vpop.f32.mrb[0].mxu0
      %911 = vmatprep.mubr.bf16.mxu0 0
      %912 = vmatmul.mubr.bf16.gmra.mrb[0].mxu0 %v734
      %v913 = vpop.f32.mrb[0].mxu0
      %v914 = vadd.f32 0.0, %v913
      %v915 = vpop.f32.mrb[0].mxu0
      %v916 = vpop.f32.mrb[0].mxu0
      %v917 = vadd.f32 0.0, %v916
      %v918 = vpop.f32.mrb[0].mxu0
      %919 = vmatprep.mubr.bf16.mxu0 0
      %920 = vmatmul.mubr.bf16.gmra.mrb[0].mxu0 %v735
      %v921 = vpop.f32.mrb[0].mxu0
      %v922 = vadd.f32 0.0, %v921
      %v923 = vpop.f32.mrb[0].mxu0
      %v924 = vpop.f32.mrb[0].mxu0
      %v925 = vadd.f32 0.0, %v924
      %v926 = vpop.f32.mrb[0].mxu0
      %927 = vmatprep.mubr.bf16.mxu0 0
      %928 = vmatmul.mubr.bf16.gmra.mrb[0].mxu0 %v736
      %v929 = vpop.f32.mrb[0].mxu0
      %v930 = vadd.f32 0.0, %v929
      %v931 = vpop.f32.mrb[0].mxu0
      %v932 = vpop.f32.mrb[0].mxu0
      %v933 = vadd.f32 0.0, %v932
      %v934 = vpop.f32.mrb[0].mxu0
      %935 = vmatprep.mubr.bf16.mxu0 0
      %936 = vmatmul.mubr.bf16.gmra.mrb[0].mxu0 %v737
      %v937 = vpop.f32.mrb[0].mxu0
      %v938 = vadd.f32 0.0, %v937
      %v939 = vpop.f32.mrb[0].mxu0
      %v940 = vpop.f32.mrb[0].mxu0
      %v941 = vadd.f32 0.0, %v940
      %v942 = vpop.f32.mrb[0].mxu0
      %943 = vmatprep.mubr.bf16.mxu0 0
      %944 = vmatmul.mubr.bf16.gmra.mrb[0].mxu0 %v738
      %v945 = vpop.f32.mrb[0].mxu0
      %v946 = vadd.f32 0.0, %v945
      %v947 = vpop.f32.mrb[0].mxu0
      %v948 = vpop.f32.mrb[0].mxu0
      %v949 = vadd.f32 0.0, %v948
      %v950 = vpop.f32.mrb[0].mxu0
      %951 = vmatprep.mubr.bf16.mxu0 0
      %952 = vmatmul.mubr.bf16.gmra.mrb[0].mxu0 %v739
      %v953 = vpop.f32.mrb[0].mxu0
      %v954 = vadd.f32 0.0, %v953
      %v955 = vpop.f32.mrb[0].mxu0
      %v956 = vpop.f32.mrb[0].mxu0
      %v957 = vadd.f32 0.0, %v956
      %v958 = vpop.f32.mrb[0].mxu0
      %959 = vmatprep.mubr.bf16.mxu0 0
      %960 = vmatmul.mubr.bf16.gmra.mrb[0].mxu0 %v740
      %v961 = vpop.f32.mrb[0].mxu0
      %v962 = vadd.f32 0.0, %v961
      %v963 = vpop.f32.mrb[0].mxu0
      %v964 = vpop.f32.mrb[0].mxu0
      %v965 = vadd.f32 0.0, %v964
      %v966 = vpop.f32.mrb[0].mxu0
      %967 = vmatprep.mubr.bf16.mxu0 0
      %968 = vmatmul.mubr.bf16.gmra.mrb[0].mxu0 %v741
      %v969 = vpop.f32.mrb[0].mxu0
      %v970 = vadd.f32 0.0, %v969
      %v971 = vpop.f32.mrb[0].mxu0
      %v972 = vpop.f32.mrb[0].mxu0
      %v973 = vadd.f32 0.0, %v972
      %v974 = vpop.f32.mrb[0].mxu0
      %975 = vmatprep.mubr.bf16.mxu0 0
      %976 = vmatmul.mubr.bf16.gmra.mrb[0].mxu0 %v742
      %v977 = vpop.f32.mrb[0].mxu0
      %v978 = vadd.f32 0.0, %v977
      %v979 = vpop.f32.mrb[0].mxu0
      %v980 = vpop.f32.mrb[0].mxu0
      %v981 = vadd.f32 0.0, %v980
      %v982 = vpop.f32.mrb[0].mxu0
      %983 = vmatprep.mubr.bf16.mxu0 0
      %984 = vmatmul.mubr.bf16.gmra.mrb[0].mxu0 %v743
      %v985 = vpop.f32.mrb[0].mxu0
      %v986 = vadd.f32 0.0, %v985
      %v987 = vpop.f32.mrb[0].mxu0
      %v988 = vpop.f32.mrb[0].mxu0
      %v989 = vadd.f32 0.0, %v988
      %v990 = vpop.f32.mrb[0].mxu0
      %991 = vmatprep.mubr.bf16.mxu0 0
      %992 = vmatmul.mubr.bf16.gmra.mrb[0].mxu0 %v744
      %v993 = vpop.f32.mrb[0].mxu0
      %v994 = vadd.f32 0.0, %v993
      %v995 = vpop.f32.mrb[0].mxu0
      %v996 = vpop.f32.mrb[0].mxu0
      %v997 = vadd.f32 0.0, %v996
      %v998 = vpop.f32.mrb[0].mxu0
      %999 = vmatprep.mubr.bf16.mxu0 0
      %1000 = vmatmul.mubr.bf16.gmra.mrb[0].mxu0 %v745
      %v1001 = vpop.f32.mrb[0].mxu0
      %v1002 = vadd.f32 0.0, %v1001
      %v1003 = vpop.f32.mrb[0].mxu0
      %v1004 = vpop.f32.mrb[0].mxu0
      %v1005 = vadd.f32 0.0, %v1004
      %v1006 = vpop.f32.mrb[0].mxu0
      %1007 = vmatprep.mubr.bf16.mxu0 0
      %1008 = vmatmul.mubr.bf16.gmra.mrb[0].mxu0 %v746
      %v1009 = vpop.f32.mrb[0].mxu0
      %v1010 = vadd.f32 0.0, %v1009
      %v1011 = vpop.f32.mrb[0].mxu0
      %v1012 = vpop.f32.mrb[0].mxu0
      %v1013 = vadd.f32 0.0, %v1012
      %v1014 = vpop.f32.mrb[0].mxu0
      %1015 = vmatprep.mubr.bf16.mxu0 0
      %1016 = vmatmul.mubr.bf16.gmra.mrb[0].mxu0 %v747
      %v1017 = vpop.f32.mrb[0].mxu0
      %v1018 = vadd.f32 0.0, %v1017
      %v1019 = vpop.f32.mrb[0].mxu0
      %v1020 = vpop.f32.mrb[0].mxu0
      %v1021 = vadd.f32 0.0, %v1020
      %v1022 = vpop.f32.mrb[0].mxu0
      %1023 = vmatprep.mubr.bf16.mxu0 0
      %1024 = vmatmul.mubr.bf16.gmra.mrb[0].mxu0 %v748
      %v1025 = vpop.f32.mrb[0].mxu0
      %v1026 = vadd.f32 0.0, %v1025
      %v1027 = vpop.f32.mrb[0].mxu0
      %v1028 = vpop.f32.mrb[0].mxu0
      %v1029 = vadd.f32 0.0, %v1028
      %v1030 = vpop.f32.mrb[0].mxu0
      %1031 = vmatprep.mubr.bf16.mxu0 0
      %1032 = vmatmul.mubr.bf16.gmra.mrb[0].mxu0 %v749
      %v1033 = vpop.f32.mrb[0].mxu0
      %v1034 = vadd.f32 0.0, %v1033
      %v1035 = vpop.f32.mrb[0].mxu0
      %v1036 = vpop.f32.mrb[0].mxu0
      %v1037 = vadd.f32 0.0, %v1036
      %v1038 = vpop.f32.mrb[0].mxu0
      %1039 = vmatprep.mubr.bf16.mxu0 0
      %1040 = vmatmul.mubr.bf16.gmra.mrb[0].mxu0 %v750
      %v1041 = vpop.f32.mrb[0].mxu0
      %v1042 = vadd.f32 0.0, %v1041
      %v1043 = vpop.f32.mrb[0].mxu0
      %v1044 = vpop.f32.mrb[0].mxu0
      %v1045 = vadd.f32 0.0, %v1044
      %v1046 = vpop.f32.mrb[0].mxu0
      %1047 = vmatprep.mubr.bf16.mxu0 0
      %1048 = vmatmul.mubr.bf16.gmra.mrb[0].mxu0 %v751
      %v1049 = vpop.f32.mrb[0].mxu0
      %v1050 = vadd.f32 0.0, %v1049
      %v1051 = vpop.f32.mrb[0].mxu0
      %v1052 = vpop.f32.mrb[0].mxu0
      %v1053 = vadd.f32 0.0, %v1052
      %v1054 = vpop.f32.mrb[0].mxu0
      %1055 = vmatprep.mubr.bf16.mxu0 0
      %1056 = vmatmul.mubr.bf16.gmra.mrb[0].mxu0 %v752
      %v1057 = vpop.f32.mrb[0].mxu0
      %v1058 = vadd.f32 0.0, %v1057
      %v1059 = vpop.f32.mrb[0].mxu0
      %v1060 = vpop.f32.mrb[0].mxu0
      %v1061 = vadd.f32 0.0, %v1060
      %v1062 = vpop.f32.mrb[0].mxu0
      %1063 = vmatprep.mubr.bf16.mxu0 0
      %1064 = vmatmul.mubr.bf16.gmra.mrb[0].mxu0 %v753
      %v1065 = vpop.f32.mrb[0].mxu0
      %v1066 = vadd.f32 0.0, %v1065
      %v1067 = vpop.f32.mrb[0].mxu0
      %v1068 = vpop.f32.mrb[0].mxu0
      %v1069 = vadd.f32 0.0, %v1068
      %v1070 = vpop.f32.mrb[0].mxu0
      %1071 = vmatprep.mubr.bf16.mxu0 0
      %1072 = vmatmul.mubr.bf16.gmra.mrb[0].mxu0 %v754
      %v1073 = vpop.f32.mrb[0].mxu0
      %v1074 = vadd.f32 0.0, %v1073
      %v1075 = vpop.f32.mrb[0].mxu0
      %v1076 = vpop.f32.mrb[0].mxu0
      %v1077 = vadd.f32 0.0, %v1076
      %v1078 = vpop.f32.mrb[0].mxu0
      %1079 = vmatprep.mubr.bf16.mxu0 0
      %1080 = vmatmul.mubr.bf16.gmra.mrb[0].mxu0 %v755
      %v1081 = vpop.f32.mrb[0].mxu0
      %v1082 = vadd.f32 0.0, %v1081
      %v1083 = vpop.f32.mrb[0].mxu0
      %v1084 = vpop.f32.mrb[0].mxu0
      %v1085 = vadd.f32 0.0, %v1084
      %v1086 = vpop.f32.mrb[0].mxu0
      %1087 = vmatprep.mubr.bf16.mxu0 0
      %1088 = vmatmul.mubr.bf16.gmra.mrb[0].mxu0 %v756
      %v1089 = vpop.f32.mrb[0].mxu0
      %v1090 = vadd.f32 0.0, %v1089
      %v1091 = vpop.f32.mrb[0].mxu0
      %v1092 = vpop.f32.mrb[0].mxu0
      %v1093 = vadd.f32 0.0, %v1092
      %v1094 = vpop.f32.mrb[0].mxu0
      %1095 = vmatprep.mubr.bf16.mxu0 0
      %1096 = vmatmul.mubr.bf16.gmra.mrb[0].mxu0 %v757
      %v1097 = vpop.f32.mrb[0].mxu0
      %v1098 = vadd.f32 0.0, %v1097
      %v1099 = vpop.f32.mrb[0].mxu0
      %v1100 = vpop.f32.mrb[0].mxu0
      %v1101 = vadd.f32 0.0, %v1100
      %v1102 = vpop.f32.mrb[0].mxu0
      %1103 = vmatprep.mubr.bf16.mxu0 0
      %1104 = vmatmul.mubr.bf16.gmra.mrb[0].mxu0 %v758
      %v1105 = vpop.f32.mrb[0].mxu0
      %v1106 = vadd.f32 0.0, %v1105
      %v1107 = vpop.f32.mrb[0].mxu0
      %v1108 = vpop.f32.mrb[0].mxu0
      %v1109 = vadd.f32 0.0, %v1108
      %v1110 = vpop.f32.mrb[0].mxu0
      %1111 = vdwg.mxu0
      %v1112 = vld [vmem:[%s370] sm:$0xf]
      %v1113 = vld [vmem:[%s370 + $0x4] sm:$0xf]
      %v1114 = vld [vmem:[%s370 + $0x8] sm:$0xf]
      %v1115 = vld [vmem:[%s370 + $0xc] sm:$0xf]
      %v1116 = vld [vmem:[%s370 + $0x10] sm:$0xf]
      %v1117 = vld [vmem:[%s370 + $0x14] sm:$0xf]
      %v1118 = vld [vmem:[%s370 + $0x18] sm:$0xf]
      %v1119 = vld [vmem:[%s370 + $0x1c] sm:$0xf]
      %v1120 = vld [vmem:[%s370 + $0x20] sm:$0xf]
      %v1121 = vld [vmem:[%s370 + $0x24] sm:$0xf]
      %v1122 = vld [vmem:[%s370 + $0x28] sm:$0xf]
      %v1123 = vld [vmem:[%s370 + $0x2c] sm:$0xf]
      %v1124 = vld [vmem:[%s370 + $0x30] sm:$0xf]
      %v1125 = vld [vmem:[%s370 + $0x34] sm:$0xf]
      %v1126 = vld [vmem:[%s370 + $0x38] sm:$0xf]
      %v1127 = vld [vmem:[%s370 + $0x3c] sm:$0xf]
      %v1128 = vld [vmem:[%s370 + $0x40] sm:$0xf]
      %v1129 = vld [vmem:[%s370 + $0x44] sm:$0xf]
      %v1130 = vld [vmem:[%s370 + $0x48] sm:$0xf]
      %v1131 = vld [vmem:[%s370 + $0x4c] sm:$0xf]
      %v1132 = vld [vmem:[%s370 + $0x50] sm:$0xf]
      %v1133 = vld [vmem:[%s370 + $0x54] sm:$0xf]
      %v1134 = vld [vmem:[%s370 + $0x58] sm:$0xf]
      %v1135 = vld [vmem:[%s370 + $0x5c] sm:$0xf]
      %v1136 = vld [vmem:[%s370 + $0x60] sm:$0xf]
      %v1137 = vld [vmem:[%s370 + $0x64] sm:$0xf]
      %v1138 = vld [vmem:[%s370 + $0x68] sm:$0xf]
      %v1139 = vld [vmem:[%s370 + $0x6c] sm:$0xf]
      %v1140 = vld [vmem:[%s370 + $0x70] sm:$0xf]
      %v1141 = vld [vmem:[%s370 + $0x74] sm:$0xf]
      %v1142 = vld [vmem:[%s370 + $0x78] sm:$0xf]
      %v1143 = vld [vmem:[%s370 + $0x7c] sm:$0xf]
      %v1144 = vld [vmem:[%s370 + $0x80] sm:$0xf]
      %v1145 = vld [vmem:[%s370 + $0x84] sm:$0xf]
      %v1146 = vld [vmem:[%s370 + $0x88] sm:$0xf]
      %v1147 = vld [vmem:[%s370 + $0x8c] sm:$0xf]
      %v1148 = vld [vmem:[%s370 + $0x90] sm:$0xf]
      %v1149 = vld [vmem:[%s370 + $0x94] sm:$0xf]
      %v1150 = vld [vmem:[%s370 + $0x98] sm:$0xf]
      %v1151 = vld [vmem:[%s370 + $0x9c] sm:$0xf]
      %v1152 = vld [vmem:[%s370 + $0xa0] sm:$0xf]
      %v1153 = vld [vmem:[%s370 + $0xa4] sm:$0xf]
      %v1154 = vld [vmem:[%s370 + $0xa8] sm:$0xf]
      %v1155 = vld [vmem:[%s370 + $0xac] sm:$0xf]
      %v1156 = vld [vmem:[%s370 + $0xb0] sm:$0xf]
      %v1157 = vld [vmem:[%s370 + $0xb4] sm:$0xf]
      %v1158 = vld [vmem:[%s370 + $0xb8] sm:$0xf]
      %v1159 = vld [vmem:[%s370 + $0xbc] sm:$0xf]
      %v1160 = vld [vmem:[%s370 + $0xc0] sm:$0xf]
      %v1161 = vld [vmem:[%s370 + $0xc4] sm:$0xf]
      %v1162 = vld [vmem:[%s370 + $0xc8] sm:$0xf]
      %v1163 = vld [vmem:[%s370 + $0xcc] sm:$0xf]
      %v1164 = vld [vmem:[%s370 + $0xd0] sm:$0xf]
      %v1165 = vld [vmem:[%s370 + $0xd4] sm:$0xf]
      %v1166 = vld [vmem:[%s370 + $0xd8] sm:$0xf]
      %v1167 = vld [vmem:[%s370 + $0xdc] sm:$0xf]
      %v1168 = vld [vmem:[%s370 + $0xe0] sm:$0xf]
      %v1169 = vld [vmem:[%s370 + $0xe4] sm:$0xf]
      %v1170 = vld [vmem:[%s370 + $0xe8] sm:$0xf]
      %v1171 = vld [vmem:[%s370 + $0xec] sm:$0xf]
      %v1172 = vld [vmem:[%s370 + $0xf0] sm:$0xf]
      %v1173 = vld [vmem:[%s370 + $0xf4] sm:$0xf]
      %v1174 = vld [vmem:[%s370 + $0xf8] sm:$0xf]
      %v1175 = vld [vmem:[%s370 + $0xfc] sm:$0xf]
      %v1176 = vld [vmem:[%s5] sm:$0xf]
      %v1177 = vld [vmem:[%s5 + $0x4] sm:$0xf]
      %v1178 = vld [vmem:[%s5 + $0x8] sm:$0xf]
      %v1179 = vld [vmem:[%s5 + $0xc] sm:$0xf]
      %v1180 = vld [vmem:[%s5 + $0x10] sm:$0xf]
      %v1181 = vld [vmem:[%s5 + $0x14] sm:$0xf]
      %v1182 = vld [vmem:[%s5 + $0x18] sm:$0xf]
      %v1183 = vld [vmem:[%s5 + $0x1c] sm:$0xf]
      %v1184 = vld [vmem:[%s5 + $0x20] sm:$0xf]
      %v1185 = vld [vmem:[%s5 + $0x24] sm:$0xf]
      %v1186 = vld [vmem:[%s5 + $0x28] sm:$0xf]
      %v1187 = vld [vmem:[%s5 + $0x2c] sm:$0xf]
      %v1188 = vld [vmem:[%s5 + $0x30] sm:$0xf]
      %v1189 = vld [vmem:[%s5 + $0x34] sm:$0xf]
      %v1190 = vld [vmem:[%s5 + $0x38] sm:$0xf]
      %v1191 = vld [vmem:[%s5 + $0x3c] sm:$0xf]
      %v1256 = vunpack.c.l.b16 %v1112
      %v1257 = vunpack.c.l.b16 %v1113
      %v1258 = vunpack.c.l.b16 %v1114
      %v1259 = vunpack.c.l.b16 %v1115
      %v1260 = vunpack.c.l.b16 %v1116
      %v1261 = vunpack.c.l.b16 %v1117
      %v1262 = vunpack.c.l.b16 %v1118
      %v1263 = vunpack.c.l.b16 %v1119
      %v1264 = vunpack.c.l.b16 %v1120
      %v1265 = vunpack.c.l.b16 %v1121
      %v1266 = vunpack.c.l.b16 %v1122
      %v1267 = vunpack.c.l.b16 %v1123
      %v1268 = vunpack.c.l.b16 %v1124
      %v1269 = vunpack.c.l.b16 %v1125
      %v1270 = vunpack.c.l.b16 %v1126
      %v1271 = vunpack.c.l.b16 %v1127
      %v1272 = vunpack.c.l.b16 %v1128
      %v1273 = vunpack.c.l.b16 %v1129
      %v1274 = vunpack.c.l.b16 %v1130
      %v1275 = vunpack.c.l.b16 %v1131
      %v1276 = vunpack.c.l.b16 %v1132
      %v1277 = vunpack.c.l.b16 %v1133
      %v1278 = vunpack.c.l.b16 %v1134
      %v1279 = vunpack.c.l.b16 %v1135
      %v1280 = vunpack.c.l.b16 %v1136
      %v1281 = vunpack.c.l.b16 %v1137
      %v1282 = vunpack.c.l.b16 %v1138
      %v1283 = vunpack.c.l.b16 %v1139
      %v1284 = vunpack.c.l.b16 %v1140
      %v1285 = vunpack.c.l.b16 %v1141
      %v1286 = vunpack.c.l.b16 %v1142
      %v1287 = vunpack.c.l.b16 %v1143
      %v1288 = vunpack.c.l.b16 %v1144
      %v1289 = vunpack.c.l.b16 %v1145
      %v1290 = vunpack.c.l.b16 %v1146
      %v1291 = vunpack.c.l.b16 %v1147
      %v1292 = vunpack.c.l.b16 %v1148
      %v1293 = vunpack.c.l.b16 %v1149
      %v1294 = vunpack.c.l.b16 %v1150
      %v1295 = vunpack.c.l.b16 %v1151
      %v1296 = vunpack.c.l.b16 %v1152
      %v1297 = vunpack.c.l.b16 %v1153
      %v1298 = vunpack.c.l.b16 %v1154
      %v1299 = vunpack.c.l.b16 %v1155
      %v1300 = vunpack.c.l.b16 %v1156
      %v1301 = vunpack.c.l.b16 %v1157
      %v1302 = vunpack.c.l.b16 %v1158
      %v1303 = vunpack.c.l.b16 %v1159
      %v1304 = vunpack.c.l.b16 %v1160
      %v1305 = vunpack.c.l.b16 %v1161
      %v1306 = vunpack.c.l.b16 %v1162
      %v1307 = vunpack.c.l.b16 %v1163
      %v1308 = vunpack.c.l.b16 %v1164
      %v1309 = vunpack.c.l.b16 %v1165
      %v1310 = vunpack.c.l.b16 %v1166
      %v1311 = vunpack.c.l.b16 %v1167
      %v1312 = vunpack.c.l.b16 %v1168
      %v1313 = vunpack.c.l.b16 %v1169
      %v1314 = vunpack.c.l.b16 %v1170
      %v1315 = vunpack.c.l.b16 %v1171
      %v1316 = vunpack.c.l.b16 %v1172
      %v1317 = vunpack.c.l.b16 %v1173
      %v1318 = vunpack.c.l.b16 %v1174
      %v1319 = vunpack.c.l.b16 %v1175
      %v1320 = vpack.c.b16 %v1257, %v1256
      %v1321 = vpack.c.b16 %v1259, %v1258
      %v1322 = vpack.c.b16 %v1261, %v1260
      %v1323 = vpack.c.b16 %v1263, %v1262
      %v1324 = vpack.c.b16 %v1265, %v1264
      %v1325 = vpack.c.b16 %v1267, %v1266
      %v1326 = vpack.c.b16 %v1269, %v1268
      %v1327 = vpack.c.b16 %v1271, %v1270
      %v1328 = vpack.c.b16 %v1273, %v1272
      %v1329 = vpack.c.b16 %v1275, %v1274
      %v1330 = vpack.c.b16 %v1277, %v1276
      %v1331 = vpack.c.b16 %v1279, %v1278
      %v1332 = vpack.c.b16 %v1281, %v1280
      %v1333 = vpack.c.b16 %v1283, %v1282
      %v1334 = vpack.c.b16 %v1285, %v1284
      %v1335 = vpack.c.b16 %v1287, %v1286
      %v1336 = vpack.c.b16 %v1289, %v1288
      %v1337 = vpack.c.b16 %v1291, %v1290
      %v1338 = vpack.c.b16 %v1293, %v1292
      %v1339 = vpack.c.b16 %v1295, %v1294
      %v1340 = vpack.c.b16 %v1297, %v1296
      %v1341 = vpack.c.b16 %v1299, %v1298
      %v1342 = vpack.c.b16 %v1301, %v1300
      %v1343 = vpack.c.b16 %v1303, %v1302
      %v1344 = vpack.c.b16 %v1305, %v1304
      %v1345 = vpack.c.b16 %v1307, %v1306
      %v1346 = vpack.c.b16 %v1309, %v1308
      %v1347 = vpack.c.b16 %v1311, %v1310
      %v1348 = vpack.c.b16 %v1313, %v1312
      %v1349 = vpack.c.b16 %v1315, %v1314
      %v1350 = vpack.c.b16 %v1317, %v1316
      %v1351 = vpack.c.b16 %v1319, %v1318
      %v1400 = vunpack.c.l.b16 %v1176
      %v1401 = vunpack.c.l.b16 %v1177
      %v1402 = vunpack.c.l.b16 %v1178
      %v1403 = vunpack.c.l.b16 %v1179
      %v1404 = vunpack.c.l.b16 %v1180
      %v1405 = vunpack.c.l.b16 %v1181
      %v1406 = vunpack.c.l.b16 %v1182
      %v1407 = vunpack.c.l.b16 %v1183
      %v1408 = vunpack.c.l.b16 %v1184
      %v1409 = vunpack.c.l.b16 %v1185
      %v1410 = vunpack.c.l.b16 %v1186
      %v1411 = vunpack.c.l.b16 %v1187
      %v1412 = vunpack.c.l.b16 %v1188
      %v1413 = vunpack.c.l.b16 %v1189
      %v1414 = vunpack.c.l.b16 %v1190
      %v1415 = vunpack.c.l.b16 %v1191
      %v1416 = vpack.c.b16 %v1401, %v1400
      %v1417 = vpack.c.b16 %v1403, %v1402
      %v1418 = vpack.c.b16 %v1405, %v1404
      %v1419 = vpack.c.b16 %v1407, %v1406
      %v1420 = vpack.c.b16 %v1409, %v1408
      %v1421 = vpack.c.b16 %v1411, %v1410
      %v1422 = vpack.c.b16 %v1413, %v1412
      %v1423 = vpack.c.b16 %v1415, %v1414
      %1432 = vmatprep.subr.bf16.mxu0 0
      %1433 = vmatpush1.bf16.msra.mxu0 %v1416
      %1434 = vmatprep.subr.bf16.mxu0 0
      %1435 = vmatpush1.bf16.msra.mxu0 %v1417
      %1436 = vmatprep.subr.bf16.mxu0 0
      %1437 = vmatpush1.bf16.msra.mxu0 %v1418
      %1438 = vmatprep.subr.bf16.mxu0 0
      %1439 = vmatpush1.bf16.msra.mxu0 %v1419
      %1440 = vmatprep.subr.bf16.mxu0 0
      %1441 = vmatpush1.bf16.msra.mxu0 %v1420
      %1442 = vmatprep.subr.bf16.mxu0 0
      %1443 = vmatpush1.bf16.msra.mxu0 %v1421
      %1444 = vmatprep.subr.bf16.mxu0 0
      %1445 = vmatpush1.bf16.msra.mxu0 %v1422
      %1446 = vmatprep.subr.bf16.mxu0 0
      %1447 = vmatpush1.bf16.msra.mxu0 %v1423
      %1448 = vmatprep.subr.bf16.mxu0 0
      %1449 = vmatpush1.bf16.msra.mxu0 0
      %1450 = vmatprep.subr.bf16.mxu0 0
      %1451 = vmatpush1.bf16.msra.mxu0 0
      %1452 = vmatprep.subr.bf16.mxu0 0
      %1453 = vmatpush1.bf16.msra.mxu0 0
      %1454 = vmatprep.subr.bf16.mxu0 0
      %1455 = vmatpush1.bf16.msra.mxu0 0
      %1456 = vmatprep.subr.bf16.mxu0 0
      %1457 = vmatpush1.bf16.msra.mxu0 0
      %1458 = vmatprep.subr.bf16.mxu0 0
      %1459 = vmatpush1.bf16.msra.mxu0 0
      %1460 = vmatprep.subr.bf16.mxu0 0
      %1461 = vmatpush1.bf16.msra.mxu0 0
      %1462 = vmatprep.subr.bf16.mxu0 0
      %1463 = vmatpush1.bf16.msra.mxu0 0
      %1464 = vmatprep.mubr.bf16.mxu0 0
      %1465 = vmatmul.mubr.bf16.gmra.mrb[0].mxu0 %v1320
      %v1466 = vpop.f32.mrb[0].mxu0
      %v1467 = vadd.f32 0.0, %v1466
      %v1468 = vpop.f32.mrb[0].mxu0
      %v1469 = vpop.f32.mrb[0].mxu0
      %v1470 = vadd.f32 0.0, %v1469
      %v1471 = vpop.f32.mrb[0].mxu0
      %1472 = vmatprep.mubr.bf16.mxu0 0
      %1473 = vmatmul.mubr.bf16.gmra.mrb[0].mxu0 %v1321
      %v1474 = vpop.f32.mrb[0].mxu0
      %v1475 = vadd.f32 0.0, %v1474
      %v1476 = vpop.f32.mrb[0].mxu0
      %v1477 = vpop.f32.mrb[0].mxu0
      %v1478 = vadd.f32 0.0, %v1477
      %v1479 = vpop.f32.mrb[0].mxu0
      %1480 = vmatprep.mubr.bf16.mxu0 0
      %1481 = vmatmul.mubr.bf16.gmra.mrb[0].mxu0 %v1322
      %v1482 = vpop.f32.mrb[0].mxu0
      %v1483 = vadd.f32 0.0, %v1482
      %v1484 = vpop.f32.mrb[0].mxu0
      %v1485 = vpop.f32.mrb[0].mxu0
      %v1486 = vadd.f32 0.0, %v1485
      %v1487 = vpop.f32.mrb[0].mxu0
      %1488 = vmatprep.mubr.bf16.mxu0 0
      %1489 = vmatmul.mubr.bf16.gmra.mrb[0].mxu0 %v1323
      %v1490 = vpop.f32.mrb[0].mxu0
      %v1491 = vadd.f32 0.0, %v1490
      %v1492 = vpop.f32.mrb[0].mxu0
      %v1493 = vpop.f32.mrb[0].mxu0
      %v1494 = vadd.f32 0.0, %v1493
      %v1495 = vpop.f32.mrb[0].mxu0
      %1496 = vmatprep.mubr.bf16.mxu0 0
      %1497 = vmatmul.mubr.bf16.gmra.mrb[0].mxu0 %v1324
      %v1498 = vpop.f32.mrb[0].mxu0
      %v1499 = vadd.f32 0.0, %v1498
      %v1500 = vpop.f32.mrb[0].mxu0
      %v1501 = vpop.f32.mrb[0].mxu0
      %v1502 = vadd.f32 0.0, %v1501
      %v1503 = vpop.f32.mrb[0].mxu0
      %1504 = vmatprep.mubr.bf16.mxu0 0
      %1505 = vmatmul.mubr.bf16.gmra.mrb[0].mxu0 %v1325
      %v1506 = vpop.f32.mrb[0].mxu0
      %v1507 = vadd.f32 0.0, %v1506
      %v1508 = vpop.f32.mrb[0].mxu0
      %v1509 = vpop.f32.mrb[0].mxu0
      %v1510 = vadd.f32 0.0, %v1509
      %v1511 = vpop.f32.mrb[0].mxu0
      %1512 = vmatprep.mubr.bf16.mxu0 0
      %1513 = vmatmul.mubr.bf16.gmra.mrb[0].mxu0 %v1326
      %v1514 = vpop.f32.mrb[0].mxu0
      %v1515 = vadd.f32 0.0, %v1514
      %v1516 = vpop.f32.mrb[0].mxu0
      %v1517 = vpop.f32.mrb[0].mxu0
      %v1518 = vadd.f32 0.0, %v1517
      %v1519 = vpop.f32.mrb[0].mxu0
      %1520 = vmatprep.mubr.bf16.mxu0 0
      %1521 = vmatmul.mubr.bf16.gmra.mrb[0].mxu0 %v1327
      %v1522 = vpop.f32.mrb[0].mxu0
      %v1523 = vadd.f32 0.0, %v1522
      %v1524 = vpop.f32.mrb[0].mxu0
      %v1525 = vpop.f32.mrb[0].mxu0
      %v1526 = vadd.f32 0.0, %v1525
      %v1527 = vpop.f32.mrb[0].mxu0
      %1528 = vmatprep.mubr.bf16.mxu0 0
      %1529 = vmatmul.mubr.bf16.gmra.mrb[0].mxu0 %v1328
      %v1530 = vpop.f32.mrb[0].mxu0
      %v1531 = vadd.f32 0.0, %v1530
      %v1532 = vpop.f32.mrb[0].mxu0
      %v1533 = vpop.f32.mrb[0].mxu0
      %v1534 = vadd.f32 0.0, %v1533
      %v1535 = vpop.f32.mrb[0].mxu0
      %1536 = vmatprep.mubr.bf16.mxu0 0
      %1537 = vmatmul.mubr.bf16.gmra.mrb[0].mxu0 %v1329
      %v1538 = vpop.f32.mrb[0].mxu0
      %v1539 = vadd.f32 0.0, %v1538
      %v1540 = vpop.f32.mrb[0].mxu0
      %v1541 = vpop.f32.mrb[0].mxu0
      %v1542 = vadd.f32 0.0, %v1541
      %v1543 = vpop.f32.mrb[0].mxu0
      %1544 = vmatprep.mubr.bf16.mxu0 0
      %1545 = vmatmul.mubr.bf16.gmra.mrb[0].mxu0 %v1330
      %v1546 = vpop.f32.mrb[0].mxu0
      %v1547 = vadd.f32 0.0, %v1546
      %v1548 = vpop.f32.mrb[0].mxu0
      %v1549 = vpop.f32.mrb[0].mxu0
      %v1550 = vadd.f32 0.0, %v1549
      %v1551 = vpop.f32.mrb[0].mxu0
      %1552 = vmatprep.mubr.bf16.mxu0 0
      %1553 = vmatmul.mubr.bf16.gmra.mrb[0].mxu0 %v1331
      %v1554 = vpop.f32.mrb[0].mxu0
      %v1555 = vadd.f32 0.0, %v1554
      %v1556 = vpop.f32.mrb[0].mxu0
      %v1557 = vpop.f32.mrb[0].mxu0
      %v1558 = vadd.f32 0.0, %v1557
      %v1559 = vpop.f32.mrb[0].mxu0
      %1560 = vmatprep.mubr.bf16.mxu0 0
      %1561 = vmatmul.mubr.bf16.gmra.mrb[0].mxu0 %v1332
      %v1562 = vpop.f32.mrb[0].mxu0
      %v1563 = vadd.f32 0.0, %v1562
      %v1564 = vpop.f32.mrb[0].mxu0
      %v1565 = vpop.f32.mrb[0].mxu0
      %v1566 = vadd.f32 0.0, %v1565
      %v1567 = vpop.f32.mrb[0].mxu0
      %1568 = vmatprep.mubr.bf16.mxu0 0
      %1569 = vmatmul.mubr.bf16.gmra.mrb[0].mxu0 %v1333
      %v1570 = vpop.f32.mrb[0].mxu0
      %v1571 = vadd.f32 0.0, %v1570
      %v1572 = vpop.f32.mrb[0].mxu0
      %v1573 = vpop.f32.mrb[0].mxu0
      %v1574 = vadd.f32 0.0, %v1573
      %v1575 = vpop.f32.mrb[0].mxu0
      %1576 = vmatprep.mubr.bf16.mxu0 0
      %1577 = vmatmul.mubr.bf16.gmra.mrb[0].mxu0 %v1334
      %v1578 = vpop.f32.mrb[0].mxu0
      %v1579 = vadd.f32 0.0, %v1578
      %v1580 = vpop.f32.mrb[0].mxu0
      %v1581 = vpop.f32.mrb[0].mxu0
      %v1582 = vadd.f32 0.0, %v1581
      %v1583 = vpop.f32.mrb[0].mxu0
      %1584 = vmatprep.mubr.bf16.mxu0 0
      %1585 = vmatmul.mubr.bf16.gmra.mrb[0].mxu0 %v1335
      %v1586 = vpop.f32.mrb[0].mxu0
      %v1587 = vadd.f32 0.0, %v1586
      %v1588 = vpop.f32.mrb[0].mxu0
      %v1589 = vpop.f32.mrb[0].mxu0
      %v1590 = vadd.f32 0.0, %v1589
      %v1591 = vpop.f32.mrb[0].mxu0
      %1592 = vmatprep.mubr.bf16.mxu0 0
      %1593 = vmatmul.mubr.bf16.gmra.mrb[0].mxu0 %v1336
      %v1594 = vpop.f32.mrb[0].mxu0
      %v1595 = vadd.f32 0.0, %v1594
      %v1596 = vpop.f32.mrb[0].mxu0
      %v1597 = vpop.f32.mrb[0].mxu0
      %v1598 = vadd.f32 0.0, %v1597
      %v1599 = vpop.f32.mrb[0].mxu0
      %1600 = vmatprep.mubr.bf16.mxu0 0
      %1601 = vmatmul.mubr.bf16.gmra.mrb[0].mxu0 %v1337
      %v1602 = vpop.f32.mrb[0].mxu0
      %v1603 = vadd.f32 0.0, %v1602
      %v1604 = vpop.f32.mrb[0].mxu0
      %v1605 = vpop.f32.mrb[0].mxu0
      %v1606 = vadd.f32 0.0, %v1605
      %v1607 = vpop.f32.mrb[0].mxu0
      %1608 = vmatprep.mubr.bf16.mxu0 0
      %1609 = vmatmul.mubr.bf16.gmra.mrb[0].mxu0 %v1338
      %v1610 = vpop.f32.mrb[0].mxu0
      %v1611 = vadd.f32 0.0, %v1610
      %v1612 = vpop.f32.mrb[0].mxu0
      %v1613 = vpop.f32.mrb[0].mxu0
      %v1614 = vadd.f32 0.0, %v1613
      %v1615 = vpop.f32.mrb[0].mxu0
      %1616 = vmatprep.mubr.bf16.mxu0 0
      %1617 = vmatmul.mubr.bf16.gmra.mrb[0].mxu0 %v1339
      %v1618 = vpop.f32.mrb[0].mxu0
      %v1619 = vadd.f32 0.0, %v1618
      %v1620 = vpop.f32.mrb[0].mxu0
      %v1621 = vpop.f32.mrb[0].mxu0
      %v1622 = vadd.f32 0.0, %v1621
      %v1623 = vpop.f32.mrb[0].mxu0
      %1624 = vmatprep.mubr.bf16.mxu0 0
      %1625 = vmatmul.mubr.bf16.gmra.mrb[0].mxu0 %v1340
      %v1626 = vpop.f32.mrb[0].mxu0
      %v1627 = vadd.f32 0.0, %v1626
      %v1628 = vpop.f32.mrb[0].mxu0
      %v1629 = vpop.f32.mrb[0].mxu0
      %v1630 = vadd.f32 0.0, %v1629
      %v1631 = vpop.f32.mrb[0].mxu0
      %1632 = vmatprep.mubr.bf16.mxu0 0
      %1633 = vmatmul.mubr.bf16.gmra.mrb[0].mxu0 %v1341
      %v1634 = vpop.f32.mrb[0].mxu0
      %v1635 = vadd.f32 0.0, %v1634
      %v1636 = vpop.f32.mrb[0].mxu0
      %v1637 = vpop.f32.mrb[0].mxu0
      %v1638 = vadd.f32 0.0, %v1637
      %v1639 = vpop.f32.mrb[0].mxu0
      %1640 = vmatprep.mubr.bf16.mxu0 0
      %1641 = vmatmul.mubr.bf16.gmra.mrb[0].mxu0 %v1342
      %v1642 = vpop.f32.mrb[0].mxu0
      %v1643 = vadd.f32 0.0, %v1642
      %v1644 = vpop.f32.mrb[0].mxu0
      %v1645 = vpop.f32.mrb[0].mxu0
      %v1646 = vadd.f32 0.0, %v1645
      %v1647 = vpop.f32.mrb[0].mxu0
      %1648 = vmatprep.mubr.bf16.mxu0 0
      %1649 = vmatmul.mubr.bf16.gmra.mrb[0].mxu0 %v1343
      %v1650 = vpop.f32.mrb[0].mxu0
      %v1651 = vadd.f32 0.0, %v1650
      %v1652 = vpop.f32.mrb[0].mxu0
      %v1653 = vpop.f32.mrb[0].mxu0
      %v1654 = vadd.f32 0.0, %v1653
      %v1655 = vpop.f32.mrb[0].mxu0
      %1656 = vmatprep.mubr.bf16.mxu0 0
      %1657 = vmatmul.mubr.bf16.gmra.mrb[0].mxu0 %v1344
      %v1658 = vpop.f32.mrb[0].mxu0
      %v1659 = vadd.f32 0.0, %v1658
      %v1660 = vpop.f32.mrb[0].mxu0
      %v1661 = vpop.f32.mrb[0].mxu0
      %v1662 = vadd.f32 0.0, %v1661
      %v1663 = vpop.f32.mrb[0].mxu0
      %1664 = vmatprep.mubr.bf16.mxu0 0
      %1665 = vmatmul.mubr.bf16.gmra.mrb[0].mxu0 %v1345
      %v1666 = vpop.f32.mrb[0].mxu0
      %v1667 = vadd.f32 0.0, %v1666
      %v1668 = vpop.f32.mrb[0].mxu0
      %v1669 = vpop.f32.mrb[0].mxu0
      %v1670 = vadd.f32 0.0, %v1669
      %v1671 = vpop.f32.mrb[0].mxu0
      %1672 = vmatprep.mubr.bf16.mxu0 0
      %1673 = vmatmul.mubr.bf16.gmra.mrb[0].mxu0 %v1346
      %v1674 = vpop.f32.mrb[0].mxu0
      %v1675 = vadd.f32 0.0, %v1674
      %v1676 = vpop.f32.mrb[0].mxu0
      %v1677 = vpop.f32.mrb[0].mxu0
      %v1678 = vadd.f32 0.0, %v1677
      %v1679 = vpop.f32.mrb[0].mxu0
      %1680 = vmatprep.mubr.bf16.mxu0 0
      %1681 = vmatmul.mubr.bf16.gmra.mrb[0].mxu0 %v1347
      %v1682 = vpop.f32.mrb[0].mxu0
      %v1683 = vadd.f32 0.0, %v1682
      %v1684 = vpop.f32.mrb[0].mxu0
      %v1685 = vpop.f32.mrb[0].mxu0
      %v1686 = vadd.f32 0.0, %v1685
      %v1687 = vpop.f32.mrb[0].mxu0
      %1688 = vmatprep.mubr.bf16.mxu0 0
      %1689 = vmatmul.mubr.bf16.gmra.mrb[0].mxu0 %v1348
      %v1690 = vpop.f32.mrb[0].mxu0
      %v1691 = vadd.f32 0.0, %v1690
      %v1692 = vpop.f32.mrb[0].mxu0
      %v1693 = vpop.f32.mrb[0].mxu0
      %v1694 = vadd.f32 0.0, %v1693
      %v1695 = vpop.f32.mrb[0].mxu0
      %1696 = vmatprep.mubr.bf16.mxu0 0
      %1697 = vmatmul.mubr.bf16.gmra.mrb[0].mxu0 %v1349
      %v1698 = vpop.f32.mrb[0].mxu0
      %v1699 = vadd.f32 0.0, %v1698
      %v1700 = vpop.f32.mrb[0].mxu0
      %v1701 = vpop.f32.mrb[0].mxu0
      %v1702 = vadd.f32 0.0, %v1701
      %v1703 = vpop.f32.mrb[0].mxu0
      %1704 = vmatprep.mubr.bf16.mxu0 0
      %1705 = vmatmul.mubr.bf16.gmra.mrb[0].mxu0 %v1350
      %v1706 = vpop.f32.mrb[0].mxu0
      %v1707 = vadd.f32 0.0, %v1706
      %v1708 = vpop.f32.mrb[0].mxu0
      %v1709 = vpop.f32.mrb[0].mxu0
      %v1710 = vadd.f32 0.0, %v1709
      %v1711 = vpop.f32.mrb[0].mxu0
      %1712 = vmatprep.mubr.bf16.mxu0 0
      %1713 = vmatmul.mubr.bf16.gmra.mrb[0].mxu0 %v1351
      %v1714 = vpop.f32.mrb[0].mxu0
      %v1715 = vadd.f32 0.0, %v1714
      %v1716 = vpop.f32.mrb[0].mxu0
      %v1717 = vpop.f32.mrb[0].mxu0
      %v1718 = vadd.f32 0.0, %v1717
      %v1719 = vpop.f32.mrb[0].mxu0
      %1720 = vdwg.mxu0
      %v1721 = vpack.c.bf16 %v861, %v858
      %v1722 = vpack.c.bf16 %v869, %v866
      %v1723 = vpack.c.bf16 %v877, %v874
      %v1724 = vpack.c.bf16 %v885, %v882
      %v1725 = vpack.c.bf16 %v893, %v890
      %v1726 = vpack.c.bf16 %v901, %v898
      %v1727 = vpack.c.bf16 %v909, %v906
      %v1728 = vpack.c.bf16 %v917, %v914
      %v1729 = vpack.c.bf16 %v925, %v922
      %v1730 = vpack.c.bf16 %v933, %v930
      %v1731 = vpack.c.bf16 %v941, %v938
      %v1732 = vpack.c.bf16 %v949, %v946
      %v1733 = vpack.c.bf16 %v957, %v954
      %v1734 = vpack.c.bf16 %v965, %v962
      %v1735 = vpack.c.bf16 %v973, %v970
      %v1736 = vpack.c.bf16 %v981, %v978
      %v1737 = vpack.c.bf16 %v989, %v986
      %v1738 = vpack.c.bf16 %v997, %v994
      %v1739 = vpack.c.bf16 %v1005, %v1002
      %v1740 = vpack.c.bf16 %v1013, %v1010
      %v1741 = vpack.c.bf16 %v1021, %v1018
      %v1742 = vpack.c.bf16 %v1029, %v1026
      %v1743 = vpack.c.bf16 %v1037, %v1034
      %v1744 = vpack.c.bf16 %v1045, %v1042
      %v1745 = vpack.c.bf16 %v1053, %v1050
      %v1746 = vpack.c.bf16 %v1061, %v1058
      %v1747 = vpack.c.bf16 %v1069, %v1066
      %v1748 = vpack.c.bf16 %v1077, %v1074
      %v1749 = vpack.c.bf16 %v1085, %v1082
      %v1750 = vpack.c.bf16 %v1093, %v1090
      %v1751 = vpack.c.bf16 %v1101, %v1098
      %v1752 = vpack.c.bf16 %v1109, %v1106
      %v1785 = vunpack.c.l.b16 %v1721
      %v1786 = vunpack.c.h.b16 %v1721
      %v1787 = vunpack.c.l.b16 %v1722
      %v1788 = vunpack.c.h.b16 %v1722
      %v1789 = vunpack.c.l.b16 %v1723
      %v1790 = vunpack.c.h.b16 %v1723
      %v1791 = vunpack.c.l.b16 %v1724
      %v1792 = vunpack.c.h.b16 %v1724
      %v1793 = vunpack.c.l.b16 %v1725
      %v1794 = vunpack.c.h.b16 %v1725
      %v1795 = vunpack.c.l.b16 %v1726
      %v1796 = vunpack.c.h.b16 %v1726
      %v1797 = vunpack.c.l.b16 %v1727
      %v1798 = vunpack.c.h.b16 %v1727
      %v1799 = vunpack.c.l.b16 %v1728
      %v1800 = vunpack.c.h.b16 %v1728
      %v1801 = vunpack.c.l.b16 %v1729
      %v1802 = vunpack.c.h.b16 %v1729
      %v1803 = vunpack.c.l.b16 %v1730
      %v1804 = vunpack.c.h.b16 %v1730
      %v1805 = vunpack.c.l.b16 %v1731
      %v1806 = vunpack.c.h.b16 %v1731
      %v1807 = vunpack.c.l.b16 %v1732
      %v1808 = vunpack.c.h.b16 %v1732
      %v1809 = vunpack.c.l.b16 %v1733
      %v1810 = vunpack.c.h.b16 %v1733
      %v1811 = vunpack.c.l.b16 %v1734
      %v1812 = vunpack.c.h.b16 %v1734
      %v1813 = vunpack.c.l.b16 %v1735
      %v1814 = vunpack.c.h.b16 %v1735
      %v1815 = vunpack.c.l.b16 %v1736
      %v1816 = vunpack.c.h.b16 %v1736
      %v1817 = vunpack.c.l.b16 %v1737
      %v1818 = vunpack.c.h.b16 %v1737
      %v1819 = vunpack.c.l.b16 %v1738
      %v1820 = vunpack.c.h.b16 %v1738
      %v1821 = vunpack.c.l.b16 %v1739
      %v1822 = vunpack.c.h.b16 %v1739
      %v1823 = vunpack.c.l.b16 %v1740
      %v1824 = vunpack.c.h.b16 %v1740
      %v1825 = vunpack.c.l.b16 %v1741
      %v1826 = vunpack.c.h.b16 %v1741
      %v1827 = vunpack.c.l.b16 %v1742
      %v1828 = vunpack.c.h.b16 %v1742
      %v1829 = vunpack.c.l.b16 %v1743
      %v1830 = vunpack.c.h.b16 %v1743
      %v1831 = vunpack.c.l.b16 %v1744
      %v1832 = vunpack.c.h.b16 %v1744
      %v1833 = vunpack.c.l.b16 %v1745
      %v1834 = vunpack.c.h.b16 %v1745
      %v1835 = vunpack.c.l.b16 %v1746
      %v1836 = vunpack.c.h.b16 %v1746
      %v1837 = vunpack.c.l.b16 %v1747
      %v1838 = vunpack.c.h.b16 %v1747
      %v1839 = vunpack.c.l.b16 %v1748
      %v1840 = vunpack.c.h.b16 %v1748
      %v1841 = vunpack.c.l.b16 %v1749
      %v1842 = vunpack.c.h.b16 %v1749
      %v1843 = vunpack.c.l.b16 %v1750
      %v1844 = vunpack.c.h.b16 %v1750
      %v1845 = vunpack.c.l.b16 %v1751
      %v1846 = vunpack.c.h.b16 %v1751
      %v1847 = vunpack.c.l.b16 %v1752
      %v1848 = vunpack.c.h.b16 %v1752
      %v1849 = vpack.c.b16 %v1785, %v1785
      %v1850 = vpack.c.b16 %v1786, %v1786
      %v1851 = vpack.c.b16 %v1787, %v1787
      %v1852 = vpack.c.b16 %v1788, %v1788
      %v1853 = vpack.c.b16 %v1789, %v1789
      %v1854 = vpack.c.b16 %v1790, %v1790
      %v1855 = vpack.c.b16 %v1791, %v1791
      %v1856 = vpack.c.b16 %v1792, %v1792
      %v1857 = vpack.c.b16 %v1793, %v1793
      %v1858 = vpack.c.b16 %v1794, %v1794
      %v1859 = vpack.c.b16 %v1795, %v1795
      %v1860 = vpack.c.b16 %v1796, %v1796
      %v1861 = vpack.c.b16 %v1797, %v1797
      %v1862 = vpack.c.b16 %v1798, %v1798
      %v1863 = vpack.c.b16 %v1799, %v1799
      %v1864 = vpack.c.b16 %v1800, %v1800
      %v1865 = vpack.c.b16 %v1801, %v1801
      %v1866 = vpack.c.b16 %v1802, %v1802
      %v1867 = vpack.c.b16 %v1803, %v1803
      %v1868 = vpack.c.b16 %v1804, %v1804
      %v1869 = vpack.c.b16 %v1805, %v1805
      %v1870 = vpack.c.b16 %v1806, %v1806
      %v1871 = vpack.c.b16 %v1807, %v1807
      %v1872 = vpack.c.b16 %v1808, %v1808
      %v1873 = vpack.c.b16 %v1809, %v1809
      %v1874 = vpack.c.b16 %v1810, %v1810
      %v1875 = vpack.c.b16 %v1811, %v1811
      %v1876 = vpack.c.b16 %v1812, %v1812
      %v1877 = vpack.c.b16 %v1813, %v1813
      %v1878 = vpack.c.b16 %v1814, %v1814
      %v1879 = vpack.c.b16 %v1815, %v1815
      %v1880 = vpack.c.b16 %v1816, %v1816
      %v1881 = vpack.c.b16 %v1817, %v1817
      %v1882 = vpack.c.b16 %v1818, %v1818
      %v1883 = vpack.c.b16 %v1819, %v1819
      %v1884 = vpack.c.b16 %v1820, %v1820
      %v1885 = vpack.c.b16 %v1821, %v1821
      %v1886 = vpack.c.b16 %v1822, %v1822
      %v1887 = vpack.c.b16 %v1823, %v1823
      %v1888 = vpack.c.b16 %v1824, %v1824
      %v1889 = vpack.c.b16 %v1825, %v1825
      %v1890 = vpack.c.b16 %v1826, %v1826
      %v1891 = vpack.c.b16 %v1827, %v1827
      %v1892 = vpack.c.b16 %v1828, %v1828
      %v1893 = vpack.c.b16 %v1829, %v1829
      %v1894 = vpack.c.b16 %v1830, %v1830
      %v1895 = vpack.c.b16 %v1831, %v1831
      %v1896 = vpack.c.b16 %v1832, %v1832
      %v1897 = vpack.c.b16 %v1833, %v1833
      %v1898 = vpack.c.b16 %v1834, %v1834
      %v1899 = vpack.c.b16 %v1835, %v1835
      %v1900 = vpack.c.b16 %v1836, %v1836
      %v1901 = vpack.c.b16 %v1837, %v1837
      %v1902 = vpack.c.b16 %v1838, %v1838
      %v1903 = vpack.c.b16 %v1839, %v1839
      %v1904 = vpack.c.b16 %v1840, %v1840
      %v1905 = vpack.c.b16 %v1841, %v1841
      %v1906 = vpack.c.b16 %v1842, %v1842
      %v1907 = vpack.c.b16 %v1843, %v1843
      %v1908 = vpack.c.b16 %v1844, %v1844
      %v1909 = vpack.c.b16 %v1845, %v1845
      %v1910 = vpack.c.b16 %v1846, %v1846
      %v1911 = vpack.c.b16 %v1847, %v1847
      %v1912 = vpack.c.b16 %v1848, %v1848
      %1977 = vst [vmem:[%s376] sm:$0xf] %v1849
      %1978 = vst [vmem:[%s376 + $0x4] sm:$0xf] %v1850
      %1979 = vst [vmem:[%s376 + $0x8] sm:$0xf] %v1851
      %1980 = vst [vmem:[%s376 + $0xc] sm:$0xf] %v1852
      %1981 = vst [vmem:[%s376 + $0x10] sm:$0xf] %v1853
      %1982 = vst [vmem:[%s376 + $0x14] sm:$0xf] %v1854
      %1983 = vst [vmem:[%s376 + $0x18] sm:$0xf] %v1855
      %1984 = vst [vmem:[%s376 + $0x1c] sm:$0xf] %v1856
      %1985 = vst [vmem:[%s376 + $0x20] sm:$0xf] %v1857
      %1986 = vst [vmem:[%s376 + $0x24] sm:$0xf] %v1858
      %1987 = vst [vmem:[%s376 + $0x28] sm:$0xf] %v1859
      %1988 = vst [vmem:[%s376 + $0x2c] sm:$0xf] %v1860
      %1989 = vst [vmem:[%s376 + $0x30] sm:$0xf] %v1861
      %1990 = vst [vmem:[%s376 + $0x34] sm:$0xf] %v1862
      %1991 = vst [vmem:[%s376 + $0x38] sm:$0xf] %v1863
      %1992 = vst [vmem:[%s376 + $0x3c] sm:$0xf] %v1864
      %1993 = vst [vmem:[%s376 + $0x40] sm:$0xf] %v1865
      %1994 = vst [vmem:[%s376 + $0x44] sm:$0xf] %v1866
      %1995 = vst [vmem:[%s376 + $0x48] sm:$0xf] %v1867
      %1996 = vst [vmem:[%s376 + $0x4c] sm:$0xf] %v1868
      %1997 = vst [vmem:[%s376 + $0x50] sm:$0xf] %v1869
      %1998 = vst [vmem:[%s376 + $0x54] sm:$0xf] %v1870
      %1999 = vst [vmem:[%s376 + $0x58] sm:$0xf] %v1871
      %2000 = vst [vmem:[%s376 + $0x5c] sm:$0xf] %v1872
      %2001 = vst [vmem:[%s376 + $0x60] sm:$0xf] %v1873
      %2002 = vst [vmem:[%s376 + $0x64] sm:$0xf] %v1874
      %2003 = vst [vmem:[%s376 + $0x68] sm:$0xf] %v1875
      %2004 = vst [vmem:[%s376 + $0x6c] sm:$0xf] %v1876
      %2005 = vst [vmem:[%s376 + $0x70] sm:$0xf] %v1877
      %2006 = vst [vmem:[%s376 + $0x74] sm:$0xf] %v1878
      %2007 = vst [vmem:[%s376 + $0x78] sm:$0xf] %v1879
      %2008 = vst [vmem:[%s376 + $0x7c] sm:$0xf] %v1880
      %2009 = vst [vmem:[%s376 + $0x80] sm:$0xf] %v1881
      %2010 = vst [vmem:[%s376 + $0x84] sm:$0xf] %v1882
      %2011 = vst [vmem:[%s376 + $0x88] sm:$0xf] %v1883
      %2012 = vst [vmem:[%s376 + $0x8c] sm:$0xf] %v1884
      %2013 = vst [vmem:[%s376 + $0x90] sm:$0xf] %v1885
      %2014 = vst [vmem:[%s376 + $0x94] sm:$0xf] %v1886
      %2015 = vst [vmem:[%s376 + $0x98] sm:$0xf] %v1887
      %2016 = vst [vmem:[%s376 + $0x9c] sm:$0xf] %v1888
      %2017 = vst [vmem:[%s376 + $0xa0] sm:$0xf] %v1889
      %2018 = vst [vmem:[%s376 + $0xa4] sm:$0xf] %v1890
      %2019 = vst [vmem:[%s376 + $0xa8] sm:$0xf] %v1891
      %2020 = vst [vmem:[%s376 + $0xac] sm:$0xf] %v1892
      %2021 = vst [vmem:[%s376 + $0xb0] sm:$0xf] %v1893
      %2022 = vst [vmem:[%s376 + $0xb4] sm:$0xf] %v1894
      %2023 = vst [vmem:[%s376 + $0xb8] sm:$0xf] %v1895
      %2024 = vst [vmem:[%s376 + $0xbc] sm:$0xf] %v1896
      %2025 = vst [vmem:[%s376 + $0xc0] sm:$0xf] %v1897
      %2026 = vst [vmem:[%s376 + $0xc4] sm:$0xf] %v1898
      %2027 = vst [vmem:[%s376 + $0xc8] sm:$0xf] %v1899
      %2028 = vst [vmem:[%s376 + $0xcc] sm:$0xf] %v1900
      %2029 = vst [vmem:[%s376 + $0xd0] sm:$0xf] %v1901
      %2030 = vst [vmem:[%s376 + $0xd4] sm:$0xf] %v1902
      %2031 = vst [vmem:[%s376 + $0xd8] sm:$0xf] %v1903
      %2032 = vst [vmem:[%s376 + $0xdc] sm:$0xf] %v1904
      %2033 = vst [vmem:[%s376 + $0xe0] sm:$0xf] %v1905
      %2034 = vst [vmem:[%s376 + $0xe4] sm:$0xf] %v1906
      %2035 = vst [vmem:[%s376 + $0xe8] sm:$0xf] %v1907
      %2036 = vst [vmem:[%s376 + $0xec] sm:$0xf] %v1908
      %2037 = vst [vmem:[%s376 + $0xf0] sm:$0xf] %v1909
      %2038 = vst [vmem:[%s376 + $0xf4] sm:$0xf] %v1910
      %2039 = vst [vmem:[%s376 + $0xf8] sm:$0xf] %v1911
      %2040 = vst [vmem:[%s376 + $0xfc] sm:$0xf] %v1912
      %v2041 = vpack.c.bf16 %v1470, %v1467
      %v2042 = vpack.c.bf16 %v1478, %v1475
      %v2043 = vpack.c.bf16 %v1486, %v1483
      %v2044 = vpack.c.bf16 %v1494, %v1491
      %v2045 = vpack.c.bf16 %v1502, %v1499
      %v2046 = vpack.c.bf16 %v1510, %v1507
      %v2047 = vpack.c.bf16 %v1518, %v1515
      %v2048 = vpack.c.bf16 %v1526, %v1523
      %v2049 = vpack.c.bf16 %v1534, %v1531
      %v2050 = vpack.c.bf16 %v1542, %v1539
      %v2051 = vpack.c.bf16 %v1550, %v1547
      %v2052 = vpack.c.bf16 %v1558, %v1555
      %v2053 = vpack.c.bf16 %v1566, %v1563
      %v2054 = vpack.c.bf16 %v1574, %v1571
      %v2055 = vpack.c.bf16 %v1582, %v1579
      %v2056 = vpack.c.bf16 %v1590, %v1587
      %v2057 = vpack.c.bf16 %v1598, %v1595
      %v2058 = vpack.c.bf16 %v1606, %v1603
      %v2059 = vpack.c.bf16 %v1614, %v1611
      %v2060 = vpack.c.bf16 %v1622, %v1619
      %v2061 = vpack.c.bf16 %v1630, %v1627
      %v2062 = vpack.c.bf16 %v1638, %v1635
      %v2063 = vpack.c.bf16 %v1646, %v1643
      %v2064 = vpack.c.bf16 %v1654, %v1651
      %v2065 = vpack.c.bf16 %v1662, %v1659
      %v2066 = vpack.c.bf16 %v1670, %v1667
      %v2067 = vpack.c.bf16 %v1678, %v1675
      %v2068 = vpack.c.bf16 %v1686, %v1683
      %v2069 = vpack.c.bf16 %v1694, %v1691
      %v2070 = vpack.c.bf16 %v1702, %v1699
      %v2071 = vpack.c.bf16 %v1710, %v1707
      %v2072 = vpack.c.bf16 %v1718, %v1715
      %v2105 = vunpack.c.l.b16 %v2041
      %v2106 = vunpack.c.h.b16 %v2041
      %v2107 = vunpack.c.l.b16 %v2042
      %v2108 = vunpack.c.h.b16 %v2042
      %v2109 = vunpack.c.l.b16 %v2043
      %v2110 = vunpack.c.h.b16 %v2043
      %v2111 = vunpack.c.l.b16 %v2044
      %v2112 = vunpack.c.h.b16 %v2044
      %v2113 = vunpack.c.l.b16 %v2045
      %v2114 = vunpack.c.h.b16 %v2045
      %v2115 = vunpack.c.l.b16 %v2046
      %v2116 = vunpack.c.h.b16 %v2046
      %v2117 = vunpack.c.l.b16 %v2047
      %v2118 = vunpack.c.h.b16 %v2047
      %v2119 = vunpack.c.l.b16 %v2048
      %v2120 = vunpack.c.h.b16 %v2048
      %v2121 = vunpack.c.l.b16 %v2049
      %v2122 = vunpack.c.h.b16 %v2049
      %v2123 = vunpack.c.l.b16 %v2050
      %v2124 = vunpack.c.h.b16 %v2050
      %v2125 = vunpack.c.l.b16 %v2051
      %v2126 = vunpack.c.h.b16 %v2051
      %v2127 = vunpack.c.l.b16 %v2052
      %v2128 = vunpack.c.h.b16 %v2052
      %v2129 = vunpack.c.l.b16 %v2053
      %v2130 = vunpack.c.h.b16 %v2053
      %v2131 = vunpack.c.l.b16 %v2054
      %v2132 = vunpack.c.h.b16 %v2054
      %v2133 = vunpack.c.l.b16 %v2055
      %v2134 = vunpack.c.h.b16 %v2055
      %v2135 = vunpack.c.l.b16 %v2056
      %v2136 = vunpack.c.h.b16 %v2056
      %v2137 = vunpack.c.l.b16 %v2057
      %v2138 = vunpack.c.h.b16 %v2057
      %v2139 = vunpack.c.l.b16 %v2058
      %v2140 = vunpack.c.h.b16 %v2058
      %v2141 = vunpack.c.l.b16 %v2059
      %v2142 = vunpack.c.h.b16 %v2059
      %v2143 = vunpack.c.l.b16 %v2060
      %v2144 = vunpack.c.h.b16 %v2060
      %v2145 = vunpack.c.l.b16 %v2061
      %v2146 = vunpack.c.h.b16 %v2061
      %v2147 = vunpack.c.l.b16 %v2062
      %v2148 = vunpack.c.h.b16 %v2062
      %v2149 = vunpack.c.l.b16 %v2063
      %v2150 = vunpack.c.h.b16 %v2063
      %v2151 = vunpack.c.l.b16 %v2064
      %v2152 = vunpack.c.h.b16 %v2064
      %v2153 = vunpack.c.l.b16 %v2065
      %v2154 = vunpack.c.h.b16 %v2065
      %v2155 = vunpack.c.l.b16 %v2066
      %v2156 = vunpack.c.h.b16 %v2066
      %v2157 = vunpack.c.l.b16 %v2067
      %v2158 = vunpack.c.h.b16 %v2067
      %v2159 = vunpack.c.l.b16 %v2068
      %v2160 = vunpack.c.h.b16 %v2068
      %v2161 = vunpack.c.l.b16 %v2069
      %v2162 = vunpack.c.h.b16 %v2069
      %v2163 = vunpack.c.l.b16 %v2070
      %v2164 = vunpack.c.h.b16 %v2070
      %v2165 = vunpack.c.l.b16 %v2071
      %v2166 = vunpack.c.h.b16 %v2071
      %v2167 = vunpack.c.l.b16 %v2072
      %v2168 = vunpack.c.h.b16 %v2072
      %v2169 = vpack.c.b16 %v2105, %v2105
      %v2170 = vpack.c.b16 %v2106, %v2106
      %v2171 = vpack.c.b16 %v2107, %v2107
      %v2172 = vpack.c.b16 %v2108, %v2108
      %v2173 = vpack.c.b16 %v2109, %v2109
      %v2174 = vpack.c.b16 %v2110, %v2110
      %v2175 = vpack.c.b16 %v2111, %v2111
      %v2176 = vpack.c.b16 %v2112, %v2112
      %v2177 = vpack.c.b16 %v2113, %v2113
      %v2178 = vpack.c.b16 %v2114, %v2114
      %v2179 = vpack.c.b16 %v2115, %v2115
      %v2180 = vpack.c.b16 %v2116, %v2116
      %v2181 = vpack.c.b16 %v2117, %v2117
      %v2182 = vpack.c.b16 %v2118, %v2118
      %v2183 = vpack.c.b16 %v2119, %v2119
      %v2184 = vpack.c.b16 %v2120, %v2120
      %v2185 = vpack.c.b16 %v2121, %v2121
      %v2186 = vpack.c.b16 %v2122, %v2122
      %v2187 = vpack.c.b16 %v2123, %v2123
      %v2188 = vpack.c.b16 %v2124, %v2124
      %v2189 = vpack.c.b16 %v2125, %v2125
      %v2190 = vpack.c.b16 %v2126, %v2126
      %v2191 = vpack.c.b16 %v2127, %v2127
      %v2192 = vpack.c.b16 %v2128, %v2128
      %v2193 = vpack.c.b16 %v2129, %v2129
      %v2194 = vpack.c.b16 %v2130, %v2130
      %v2195 = vpack.c.b16 %v2131, %v2131
      %v2196 = vpack.c.b16 %v2132, %v2132
      %v2197 = vpack.c.b16 %v2133, %v2133
      %v2198 = vpack.c.b16 %v2134, %v2134
      %v2199 = vpack.c.b16 %v2135, %v2135
      %v2200 = vpack.c.b16 %v2136, %v2136
      %v2201 = vpack.c.b16 %v2137, %v2137
      %v2202 = vpack.c.b16 %v2138, %v2138
      %v2203 = vpack.c.b16 %v2139, %v2139
      %v2204 = vpack.c.b16 %v2140, %v2140
      %v2205 = vpack.c.b16 %v2141, %v2141
      %v2206 = vpack.c.b16 %v2142, %v2142
      %v2207 = vpack.c.b16 %v2143, %v2143
      %v2208 = vpack.c.b16 %v2144, %v2144
      %v2209 = vpack.c.b16 %v2145, %v2145
      %v2210 = vpack.c.b16 %v2146, %v2146
      %v2211 = vpack.c.b16 %v2147, %v2147
      %v2212 = vpack.c.b16 %v2148, %v2148
      %v2213 = vpack.c.b16 %v2149, %v2149
      %v2214 = vpack.c.b16 %v2150, %v2150
      %v2215 = vpack.c.b16 %v2151, %v2151
      %v2216 = vpack.c.b16 %v2152, %v2152
      %v2217 = vpack.c.b16 %v2153, %v2153
      %v2218 = vpack.c.b16 %v2154, %v2154
      %v2219 = vpack.c.b16 %v2155, %v2155
      %v2220 = vpack.c.b16 %v2156, %v2156
      %v2221 = vpack.c.b16 %v2157, %v2157
      %v2222 = vpack.c.b16 %v2158, %v2158
      %v2223 = vpack.c.b16 %v2159, %v2159
      %v2224 = vpack.c.b16 %v2160, %v2160
      %v2225 = vpack.c.b16 %v2161, %v2161
      %v2226 = vpack.c.b16 %v2162, %v2162
      %v2227 = vpack.c.b16 %v2163, %v2163
      %v2228 = vpack.c.b16 %v2164, %v2164
      %v2229 = vpack.c.b16 %v2165, %v2165
      %v2230 = vpack.c.b16 %v2166, %v2166
      %v2231 = vpack.c.b16 %v2167, %v2167
      %v2232 = vpack.c.b16 %v2168, %v2168
      %2297 = vst [vmem:[%s382] sm:$0xf] %v2169
      %2298 = vst [vmem:[%s382 + $0x4] sm:$0xf] %v2170
      %2299 = vst [vmem:[%s382 + $0x8] sm:$0xf] %v2171
      %2300 = vst [vmem:[%s382 + $0xc] sm:$0xf] %v2172
      %2301 = vst [vmem:[%s382 + $0x10] sm:$0xf] %v2173
      %2302 = vst [vmem:[%s382 + $0x14] sm:$0xf] %v2174
      %2303 = vst [vmem:[%s382 + $0x18] sm:$0xf] %v2175
      %2304 = vst [vmem:[%s382 + $0x1c] sm:$0xf] %v2176
      %2305 = vst [vmem:[%s382 + $0x20] sm:$0xf] %v2177
      %2306 = vst [vmem:[%s382 + $0x24] sm:$0xf] %v2178
      %2307 = vst [vmem:[%s382 + $0x28] sm:$0xf] %v2179
      %2308 = vst [vmem:[%s382 + $0x2c] sm:$0xf] %v2180
      %2309 = vst [vmem:[%s382 + $0x30] sm:$0xf] %v2181
      %2310 = vst [vmem:[%s382 + $0x34] sm:$0xf] %v2182
      %2311 = vst [vmem:[%s382 + $0x38] sm:$0xf] %v2183
      %2312 = vst [vmem:[%s382 + $0x3c] sm:$0xf] %v2184
      %2313 = vst [vmem:[%s382 + $0x40] sm:$0xf] %v2185
      %2314 = vst [vmem:[%s382 + $0x44] sm:$0xf] %v2186
      %2315 = vst [vmem:[%s382 + $0x48] sm:$0xf] %v2187
      %2316 = vst [vmem:[%s382 + $0x4c] sm:$0xf] %v2188
      %2317 = vst [vmem:[%s382 + $0x50] sm:$0xf] %v2189
      %2318 = vst [vmem:[%s382 + $0x54] sm:$0xf] %v2190
      %2319 = vst [vmem:[%s382 + $0x58] sm:$0xf] %v2191
      %2320 = vst [vmem:[%s382 + $0x5c] sm:$0xf] %v2192
      %2321 = vst [vmem:[%s382 + $0x60] sm:$0xf] %v2193
      %2322 = vst [vmem:[%s382 + $0x64] sm:$0xf] %v2194
      %2323 = vst [vmem:[%s382 + $0x68] sm:$0xf] %v2195
      %2324 = vst [vmem:[%s382 + $0x6c] sm:$0xf] %v2196
      %2325 = vst [vmem:[%s382 + $0x70] sm:$0xf] %v2197
      %2326 = vst [vmem:[%s382 + $0x74] sm:$0xf] %v2198
      %2327 = vst [vmem:[%s382 + $0x78] sm:$0xf] %v2199
      %2328 = vst [vmem:[%s382 + $0x7c] sm:$0xf] %v2200
      %2329 = vst [vmem:[%s382 + $0x80] sm:$0xf] %v2201
      %2330 = vst [vmem:[%s382 + $0x84] sm:$0xf] %v2202
      %2331 = vst [vmem:[%s382 + $0x88] sm:$0xf] %v2203
      %2332 = vst [vmem:[%s382 + $0x8c] sm:$0xf] %v2204
      %2333 = vst [vmem:[%s382 + $0x90] sm:$0xf] %v2205
      %2334 = vst [vmem:[%s382 + $0x94] sm:$0xf] %v2206
      %2335 = vst [vmem:[%s382 + $0x98] sm:$0xf] %v2207
      %2336 = vst [vmem:[%s382 + $0x9c] sm:$0xf] %v2208
      %2337 = vst [vmem:[%s382 + $0xa0] sm:$0xf] %v2209
      %2338 = vst [vmem:[%s382 + $0xa4] sm:$0xf] %v2210
      %2339 = vst [vmem:[%s382 + $0xa8] sm:$0xf] %v2211
      %2340 = vst [vmem:[%s382 + $0xac] sm:$0xf] %v2212
      %2341 = vst [vmem:[%s382 + $0xb0] sm:$0xf] %v2213
      %2342 = vst [vmem:[%s382 + $0xb4] sm:$0xf] %v2214
      %2343 = vst [vmem:[%s382 + $0xb8] sm:$0xf] %v2215
      %2344 = vst [vmem:[%s382 + $0xbc] sm:$0xf] %v2216
      %2345 = vst [vmem:[%s382 + $0xc0] sm:$0xf] %v2217
      %2346 = vst [vmem:[%s382 + $0xc4] sm:$0xf] %v2218
      %2347 = vst [vmem:[%s382 + $0xc8] sm:$0xf] %v2219
      %2348 = vst [vmem:[%s382 + $0xcc] sm:$0xf] %v2220
      %2349 = vst [vmem:[%s382 + $0xd0] sm:$0xf] %v2221
      %2350 = vst [vmem:[%s382 + $0xd4] sm:$0xf] %v2222
      %2351 = vst [vmem:[%s382 + $0xd8] sm:$0xf] %v2223
      %2352 = vst [vmem:[%s382 + $0xdc] sm:$0xf] %v2224
      %2353 = vst [vmem:[%s382 + $0xe0] sm:$0xf] %v2225
      %2354 = vst [vmem:[%s382 + $0xe4] sm:$0xf] %v2226
      %2355 = vst [vmem:[%s382 + $0xe8] sm:$0xf] %v2227
      %2356 = vst [vmem:[%s382 + $0xec] sm:$0xf] %v2228
      %2357 = vst [vmem:[%s382 + $0xf0] sm:$0xf] %v2229
      %2358 = vst [vmem:[%s382 + $0xf4] sm:$0xf] %v2230
      %2359 = vst [vmem:[%s382 + $0xf8] sm:$0xf] %v2231
      %2360 = vst [vmem:[%s382 + $0xfc] sm:$0xf] %v2232
      %v2361 = vadd.f32 %v858, %v861
      %v2362 = vadd.f32 %v2361, %v866
      %v2363 = vadd.f32 %v2362, %v869
      %v2364 = vadd.f32 %v2363, %v874
      %v2365 = vadd.f32 %v2364, %v877
      %v2366 = vadd.f32 %v2365, %v882
      %v2367 = vadd.f32 %v2366, %v885
      %v2368 = vadd.f32 %v2367, %v890
      %v2369 = vadd.f32 %v2368, %v893
      %v2370 = vadd.f32 %v2369, %v898
      %v2371 = vadd.f32 %v2370, %v901
      %v2372 = vadd.f32 %v2371, %v906
      %v2373 = vadd.f32 %v2372, %v909
      %v2374 = vadd.f32 %v2373, %v914
      %v2375 = vadd.f32 %v2374, %v917
      %v2376 = vadd.f32 %v2375, %v922
      %v2377 = vadd.f32 %v2376, %v925
      %v2378 = vadd.f32 %v2377, %v930
      %v2379 = vadd.f32 %v2378, %v933
      %v2380 = vadd.f32 %v2379, %v938
      %v2381 = vadd.f32 %v2380, %v941
      %v2382 = vadd.f32 %v2381, %v946
      %v2383 = vadd.f32 %v2382, %v949
      %v2384 = vadd.f32 %v2383, %v954
      %v2385 = vadd.f32 %v2384, %v957
      %v2386 = vadd.f32 %v2385, %v962
      %v2387 = vadd.f32 %v2386, %v965
      %v2388 = vadd.f32 %v2387, %v970
      %v2389 = vadd.f32 %v2388, %v973
      %v2390 = vadd.f32 %v2389, %v978
      %v2391 = vadd.f32 %v2390, %v981
      %v2392 = vadd.f32 %v2391, %v986
      %v2393 = vadd.f32 %v2392, %v989
      %v2394 = vadd.f32 %v2393, %v994
      %v2395 = vadd.f32 %v2394, %v997
      %v2396 = vadd.f32 %v2395, %v1002
      %v2397 = vadd.f32 %v2396, %v1005
      %v2398 = vadd.f32 %v2397, %v1010
      %v2399 = vadd.f32 %v2398, %v1013
      %v2400 = vadd.f32 %v2399, %v1018
      %v2401 = vadd.f32 %v2400, %v1021
      %v2402 = vadd.f32 %v2401, %v1026
      %v2403 = vadd.f32 %v2402, %v1029
      %v2404 = vadd.f32 %v2403, %v1034
      %v2405 = vadd.f32 %v2404, %v1037
      %v2406 = vadd.f32 %v2405, %v1042
      %v2407 = vadd.f32 %v2406, %v1045
      %v2408 = vadd.f32 %v2407, %v1050
      %v2409 = vadd.f32 %v2408, %v1053
      %v2410 = vadd.f32 %v2409, %v1058
      %v2411 = vadd.f32 %v2410, %v1061
      %v2412 = vadd.f32 %v2411, %v1066
      %v2413 = vadd.f32 %v2412, %v1069
      %v2414 = vadd.f32 %v2413, %v1074
      %v2415 = vadd.f32 %v2414, %v1077
      %v2416 = vadd.f32 %v2415, %v1082
      %v2417 = vadd.f32 %v2416, %v1085
      %v2418 = vadd.f32 %v2417, %v1090
      %v2419 = vadd.f32 %v2418, %v1093
      %v2420 = vadd.f32 %v2419, %v1098
      %v2421 = vadd.f32 %v2420, %v1101
      %v2422 = vadd.f32 %v2421, %v1106
      %v2423 = vadd.f32 %v2422, %v1109
      %v2424 = vrot.slane %v2423, 4
      %v2425 = vadd.f32 %v2423, %v2424
      %v2426 = vrot.slane %v2425, 2
      %v2427 = vadd.f32 %v2425, %v2426
      %v2428 = vrot.slane %v2427, 1
      %v2429 = vadd.f32 %v2427, %v2428
      %v2430 = vmul.f32 %v858, %v858
      %v2431 = vmul.f32 %v861, %v861
      %v2432 = vmul.f32 %v866, %v866
      %v2433 = vmul.f32 %v869, %v869
      %v2434 = vmul.f32 %v874, %v874
      %v2435 = vmul.f32 %v877, %v877
      %v2436 = vmul.f32 %v882, %v882
      %v2437 = vmul.f32 %v885, %v885
      %v2438 = vmul.f32 %v890, %v890
      %v2439 = vmul.f32 %v893, %v893
      %v2440 = vmul.f32 %v898, %v898
      %v2441 = vmul.f32 %v901, %v901
      %v2442 = vmul.f32 %v906, %v906
      %v2443 = vmul.f32 %v909, %v909
      %v2444 = vmul.f32 %v914, %v914
      %v2445 = vmul.f32 %v917, %v917
      %v2446 = vmul.f32 %v922, %v922
      %v2447 = vmul.f32 %v925, %v925
      %v2448 = vmul.f32 %v930, %v930
      %v2449 = vmul.f32 %v933, %v933
      %v2450 = vmul.f32 %v938, %v938
      %v2451 = vmul.f32 %v941, %v941
      %v2452 = vmul.f32 %v946, %v946
      %v2453 = vmul.f32 %v949, %v949
      %v2454 = vmul.f32 %v954, %v954
      %v2455 = vmul.f32 %v957, %v957
      %v2456 = vmul.f32 %v962, %v962
      %v2457 = vmul.f32 %v965, %v965
      %v2458 = vmul.f32 %v970, %v970
      %v2459 = vmul.f32 %v973, %v973
      %v2460 = vmul.f32 %v978, %v978
      %v2461 = vmul.f32 %v981, %v981
      %v2462 = vmul.f32 %v986, %v986
      %v2463 = vmul.f32 %v989, %v989
      %v2464 = vmul.f32 %v994, %v994
      %v2465 = vmul.f32 %v997, %v997
      %v2466 = vmul.f32 %v1002, %v1002
      %v2467 = vmul.f32 %v1005, %v1005
      %v2468 = vmul.f32 %v1010, %v1010
      %v2469 = vmul.f32 %v1013, %v1013
      %v2470 = vmul.f32 %v1018, %v1018
      %v2471 = vmul.f32 %v1021, %v1021
      %v2472 = vmul.f32 %v1026, %v1026
      %v2473 = vmul.f32 %v1029, %v1029
      %v2474 = vmul.f32 %v1034, %v1034
      %v2475 = vmul.f32 %v1037, %v1037
      %v2476 = vmul.f32 %v1042, %v1042
      %v2477 = vmul.f32 %v1045, %v1045
      %v2478 = vmul.f32 %v1050, %v1050
      %v2479 = vmul.f32 %v1053, %v1053
      %v2480 = vmul.f32 %v1058, %v1058
      %v2481 = vmul.f32 %v1061, %v1061
      %v2482 = vmul.f32 %v1066, %v1066
      %v2483 = vmul.f32 %v1069, %v1069
      %v2484 = vmul.f32 %v1074, %v1074
      %v2485 = vmul.f32 %v1077, %v1077
      %v2486 = vmul.f32 %v1082, %v1082
      %v2487 = vmul.f32 %v1085, %v1085
      %v2488 = vmul.f32 %v1090, %v1090
      %v2489 = vmul.f32 %v1093, %v1093
      %v2490 = vmul.f32 %v1098, %v1098
      %v2491 = vmul.f32 %v1101, %v1101
      %v2492 = vmul.f32 %v1106, %v1106
      %v2493 = vmul.f32 %v1109, %v1109
      %v2494 = vadd.f32 %v2430, %v2431
      %v2495 = vadd.f32 %v2494, %v2432
      %v2496 = vadd.f32 %v2495, %v2433
      %v2497 = vadd.f32 %v2496, %v2434
      %v2498 = vadd.f32 %v2497, %v2435
      %v2499 = vadd.f32 %v2498, %v2436
      %v2500 = vadd.f32 %v2499, %v2437
      %v2501 = vadd.f32 %v2500, %v2438
      %v2502 = vadd.f32 %v2501, %v2439
      %v2503 = vadd.f32 %v2502, %v2440
      %v2504 = vadd.f32 %v2503, %v2441
      %v2505 = vadd.f32 %v2504, %v2442
      %v2506 = vadd.f32 %v2505, %v2443
      %v2507 = vadd.f32 %v2506, %v2444
      %v2508 = vadd.f32 %v2507, %v2445
      %v2509 = vadd.f32 %v2508, %v2446
      %v2510 = vadd.f32 %v2509, %v2447
      %v2511 = vadd.f32 %v2510, %v2448
      %v2512 = vadd.f32 %v2511, %v2449
      %v2513 = vadd.f32 %v2512, %v2450
      %v2514 = vadd.f32 %v2513, %v2451
      %v2515 = vadd.f32 %v2514, %v2452
      %v2516 = vadd.f32 %v2515, %v2453
      %v2517 = vadd.f32 %v2516, %v2454
      %v2518 = vadd.f32 %v2517, %v2455
      %v2519 = vadd.f32 %v2518, %v2456
      %v2520 = vadd.f32 %v2519, %v2457
      %v2521 = vadd.f32 %v2520, %v2458
      %v2522 = vadd.f32 %v2521, %v2459
      %v2523 = vadd.f32 %v2522, %v2460
      %v2524 = vadd.f32 %v2523, %v2461
      %v2525 = vadd.f32 %v2524, %v2462
      %v2526 = vadd.f32 %v2525, %v2463
      %v2527 = vadd.f32 %v2526, %v2464
      %v2528 = vadd.f32 %v2527, %v2465
      %v2529 = vadd.f32 %v2528, %v2466
      %v2530 = vadd.f32 %v2529, %v2467
      %v2531 = vadd.f32 %v2530, %v2468
      %v2532 = vadd.f32 %v2531, %v2469
      %v2533 = vadd.f32 %v2532, %v2470
      %v2534 = vadd.f32 %v2533, %v2471
      %v2535 = vadd.f32 %v2534, %v2472
      %v2536 = vadd.f32 %v2535, %v2473
      %v2537 = vadd.f32 %v2536, %v2474
      %v2538 = vadd.f32 %v2537, %v2475
      %v2539 = vadd.f32 %v2538, %v2476
      %v2540 = vadd.f32 %v2539, %v2477
      %v2541 = vadd.f32 %v2540, %v2478
      %v2542 = vadd.f32 %v2541, %v2479
      %v2543 = vadd.f32 %v2542, %v2480
      %v2544 = vadd.f32 %v2543, %v2481
      %v2545 = vadd.f32 %v2544, %v2482
      %v2546 = vadd.f32 %v2545, %v2483
      %v2547 = vadd.f32 %v2546, %v2484
      %v2548 = vadd.f32 %v2547, %v2485
      %v2549 = vadd.f32 %v2548, %v2486
      %v2550 = vadd.f32 %v2549, %v2487
      %v2551 = vadd.f32 %v2550, %v2488
      %v2552 = vadd.f32 %v2551, %v2489
      %v2553 = vadd.f32 %v2552, %v2490
      %v2554 = vadd.f32 %v2553, %v2491
      %v2555 = vadd.f32 %v2554, %v2492
      %v2556 = vadd.f32 %v2555, %v2493
      %v2557 = vrot.slane %v2556, 4
      %v2558 = vadd.f32 %v2556, %v2557
      %v2559 = vrot.slane %v2558, 2
      %v2560 = vadd.f32 %v2558, %v2559
      %v2561 = vrot.slane %v2560, 1
      %v2562 = vadd.f32 %v2560, %v2561
      %vm2563 = vcmask 1040384
      %v2564 = vsel %vm2563, %v2429, %v2562
      %vm2565 = vcmask 1041408
      %v2566 = vsel %vm2565, %v2564, 0.0
      %2567 = vst [vmem:[%s387] sm:$0xff] %v2566
      %v2568 = vadd.f32 %v1467, %v1470
      %v2569 = vadd.f32 %v2568, %v1475
      %v2570 = vadd.f32 %v2569, %v1478
      %v2571 = vadd.f32 %v2570, %v1483
      %v2572 = vadd.f32 %v2571, %v1486
      %v2573 = vadd.f32 %v2572, %v1491
      %v2574 = vadd.f32 %v2573, %v1494
      %v2575 = vadd.f32 %v2574, %v1499
      %v2576 = vadd.f32 %v2575, %v1502
      %v2577 = vadd.f32 %v2576, %v1507
      %v2578 = vadd.f32 %v2577, %v1510
      %v2579 = vadd.f32 %v2578, %v1515
      %v2580 = vadd.f32 %v2579, %v1518
      %v2581 = vadd.f32 %v2580, %v1523
      %v2582 = vadd.f32 %v2581, %v1526
      %v2583 = vadd.f32 %v2582, %v1531
      %v2584 = vadd.f32 %v2583, %v1534
      %v2585 = vadd.f32 %v2584, %v1539
      %v2586 = vadd.f32 %v2585, %v1542
      %v2587 = vadd.f32 %v2586, %v1547
      %v2588 = vadd.f32 %v2587, %v1550
      %v2589 = vadd.f32 %v2588, %v1555
      %v2590 = vadd.f32 %v2589, %v1558
      %v2591 = vadd.f32 %v2590, %v1563
      %v2592 = vadd.f32 %v2591, %v1566
      %v2593 = vadd.f32 %v2592, %v1571
      %v2594 = vadd.f32 %v2593, %v1574
      %v2595 = vadd.f32 %v2594, %v1579
      %v2596 = vadd.f32 %v2595, %v1582
      %v2597 = vadd.f32 %v2596, %v1587
      %v2598 = vadd.f32 %v2597, %v1590
      %v2599 = vadd.f32 %v2598, %v1595
      %v2600 = vadd.f32 %v2599, %v1598
      %v2601 = vadd.f32 %v2600, %v1603
      %v2602 = vadd.f32 %v2601, %v1606
      %v2603 = vadd.f32 %v2602, %v1611
      %v2604 = vadd.f32 %v2603, %v1614
      %v2605 = vadd.f32 %v2604, %v1619
      %v2606 = vadd.f32 %v2605, %v1622
      %v2607 = vadd.f32 %v2606, %v1627
      %v2608 = vadd.f32 %v2607, %v1630
      %v2609 = vadd.f32 %v2608, %v1635
      %v2610 = vadd.f32 %v2609, %v1638
      %v2611 = vadd.f32 %v2610, %v1643
      %v2612 = vadd.f32 %v2611, %v1646
      %v2613 = vadd.f32 %v2612, %v1651
      %v2614 = vadd.f32 %v2613, %v1654
      %v2615 = vadd.f32 %v2614, %v1659
      %v2616 = vadd.f32 %v2615, %v1662
      %v2617 = vadd.f32 %v2616, %v1667
      %v2618 = vadd.f32 %v2617, %v1670
      %v2619 = vadd.f32 %v2618, %v1675
      %v2620 = vadd.f32 %v2619, %v1678
      %v2621 = vadd.f32 %v2620, %v1683
      %v2622 = vadd.f32 %v2621, %v1686
      %v2623 = vadd.f32 %v2622, %v1691
      %v2624 = vadd.f32 %v2623, %v1694
      %v2625 = vadd.f32 %v2624, %v1699
      %v2626 = vadd.f32 %v2625, %v1702
      %v2627 = vadd.f32 %v2626, %v1707
      %v2628 = vadd.f32 %v2627, %v1710
      %v2629 = vadd.f32 %v2628, %v1715
      %v2630 = vadd.f32 %v2629, %v1718
      %v2631 = vrot.slane %v2630, 4
      %v2632 = vadd.f32 %v2630, %v2631
      %v2633 = vrot.slane %v2632, 2
      %v2634 = vadd.f32 %v2632, %v2633
      %v2635 = vrot.slane %v2634, 1
      %v2636 = vadd.f32 %v2634, %v2635
      %v2637 = vmul.f32 %v1467, %v1467
      %v2638 = vmul.f32 %v1470, %v1470
      %v2639 = vmul.f32 %v1475, %v1475
      %v2640 = vmul.f32 %v1478, %v1478
      %v2641 = vmul.f32 %v1483, %v1483
      %v2642 = vmul.f32 %v1486, %v1486
      %v2643 = vmul.f32 %v1491, %v1491
      %v2644 = vmul.f32 %v1494, %v1494
      %v2645 = vmul.f32 %v1499, %v1499
      %v2646 = vmul.f32 %v1502, %v1502
      %v2647 = vmul.f32 %v1507, %v1507
      %v2648 = vmul.f32 %v1510, %v1510
      %v2649 = vmul.f32 %v1515, %v1515
      %v2650 = vmul.f32 %v1518, %v1518
      %v2651 = vmul.f32 %v1523, %v1523
      %v2652 = vmul.f32 %v1526, %v1526
      %v2653 = vmul.f32 %v1531, %v1531
      %v2654 = vmul.f32 %v1534, %v1534
      %v2655 = vmul.f32 %v1539, %v1539
      %v2656 = vmul.f32 %v1542, %v1542
      %v2657 = vmul.f32 %v1547, %v1547
      %v2658 = vmul.f32 %v1550, %v1550
      %v2659 = vmul.f32 %v1555, %v1555
      %v2660 = vmul.f32 %v1558, %v1558
      %v2661 = vmul.f32 %v1563, %v1563
      %v2662 = vmul.f32 %v1566, %v1566
      %v2663 = vmul.f32 %v1571, %v1571
      %v2664 = vmul.f32 %v1574, %v1574
      %v2665 = vmul.f32 %v1579, %v1579
      %v2666 = vmul.f32 %v1582, %v1582
      %v2667 = vmul.f32 %v1587, %v1587
      %v2668 = vmul.f32 %v1590, %v1590
      %v2669 = vmul.f32 %v1595, %v1595
      %v2670 = vmul.f32 %v1598, %v1598
      %v2671 = vmul.f32 %v1603, %v1603
      %v2672 = vmul.f32 %v1606, %v1606
      %v2673 = vmul.f32 %v1611, %v1611
      %v2674 = vmul.f32 %v1614, %v1614
      %v2675 = vmul.f32 %v1619, %v1619
      %v2676 = vmul.f32 %v1622, %v1622
      %v2677 = vmul.f32 %v1627, %v1627
      %v2678 = vmul.f32 %v1630, %v1630
      %v2679 = vmul.f32 %v1635, %v1635
      %v2680 = vmul.f32 %v1638, %v1638
      %v2681 = vmul.f32 %v1643, %v1643
      %v2682 = vmul.f32 %v1646, %v1646
      %v2683 = vmul.f32 %v1651, %v1651
      %v2684 = vmul.f32 %v1654, %v1654
      %v2685 = vmul.f32 %v1659, %v1659
      %v2686 = vmul.f32 %v1662, %v1662
      %v2687 = vmul.f32 %v1667, %v1667
      %v2688 = vmul.f32 %v1670, %v1670
      %v2689 = vmul.f32 %v1675, %v1675
      %v2690 = vmul.f32 %v1678, %v1678
      %v2691 = vmul.f32 %v1683, %v1683
      %v2692 = vmul.f32 %v1686, %v1686
      %v2693 = vmul.f32 %v1691, %v1691
      %v2694 = vmul.f32 %v1694, %v1694
      %v2695 = vmul.f32 %v1699, %v1699
      %v2696 = vmul.f32 %v1702, %v1702
      %v2697 = vmul.f32 %v1707, %v1707
      %v2698 = vmul.f32 %v1710, %v1710
      %v2699 = vmul.f32 %v1715, %v1715
      %v2700 = vmul.f32 %v1718, %v1718
      %v2701 = vadd.f32 %v2637, %v2638
      %v2702 = vadd.f32 %v2701, %v2639
      %v2703 = vadd.f32 %v2702, %v2640
      %v2704 = vadd.f32 %v2703, %v2641
      %v2705 = vadd.f32 %v2704, %v2642
      %v2706 = vadd.f32 %v2705, %v2643
      %v2707 = vadd.f32 %v2706, %v2644
      %v2708 = vadd.f32 %v2707, %v2645
      %v2709 = vadd.f32 %v2708, %v2646
      %v2710 = vadd.f32 %v2709, %v2647
      %v2711 = vadd.f32 %v2710, %v2648
      %v2712 = vadd.f32 %v2711, %v2649
      %v2713 = vadd.f32 %v2712, %v2650
      %v2714 = vadd.f32 %v2713, %v2651
      %v2715 = vadd.f32 %v2714, %v2652
      %v2716 = vadd.f32 %v2715, %v2653
      %v2717 = vadd.f32 %v2716, %v2654
      %v2718 = vadd.f32 %v2717, %v2655
      %v2719 = vadd.f32 %v2718, %v2656
      %v2720 = vadd.f32 %v2719, %v2657
      %v2721 = vadd.f32 %v2720, %v2658
      %v2722 = vadd.f32 %v2721, %v2659
      %v2723 = vadd.f32 %v2722, %v2660
      %v2724 = vadd.f32 %v2723, %v2661
      %v2725 = vadd.f32 %v2724, %v2662
      %v2726 = vadd.f32 %v2725, %v2663
      %v2727 = vadd.f32 %v2726, %v2664
      %v2728 = vadd.f32 %v2727, %v2665
      %v2729 = vadd.f32 %v2728, %v2666
      %v2730 = vadd.f32 %v2729, %v2667
      %v2731 = vadd.f32 %v2730, %v2668
      %v2732 = vadd.f32 %v2731, %v2669
      %v2733 = vadd.f32 %v2732, %v2670
      %v2734 = vadd.f32 %v2733, %v2671
      %v2735 = vadd.f32 %v2734, %v2672
      %v2736 = vadd.f32 %v2735, %v2673
      %v2737 = vadd.f32 %v2736, %v2674
      %v2738 = vadd.f32 %v2737, %v2675
      %v2739 = vadd.f32 %v2738, %v2676
      %v2740 = vadd.f32 %v2739, %v2677
      %v2741 = vadd.f32 %v2740, %v2678
      %v2742 = vadd.f32 %v2741, %v2679
      %v2743 = vadd.f32 %v2742, %v2680
      %v2744 = vadd.f32 %v2743, %v2681
      %v2745 = vadd.f32 %v2744, %v2682
      %v2746 = vadd.f32 %v2745, %v2683
      %v2747 = vadd.f32 %v2746, %v2684
      %v2748 = vadd.f32 %v2747, %v2685
      %v2749 = vadd.f32 %v2748, %v2686
      %v2750 = vadd.f32 %v2749, %v2687
      %v2751 = vadd.f32 %v2750, %v2688
      %v2752 = vadd.f32 %v2751, %v2689
      %v2753 = vadd.f32 %v2752, %v2690
      %v2754 = vadd.f32 %v2753, %v2691
      %v2755 = vadd.f32 %v2754, %v2692
      %v2756 = vadd.f32 %v2755, %v2693
      %v2757 = vadd.f32 %v2756, %v2694
      %v2758 = vadd.f32 %v2757, %v2695
      %v2759 = vadd.f32 %v2758, %v2696
      %v2760 = vadd.f32 %v2759, %v2697
      %v2761 = vadd.f32 %v2760, %v2698
      %v2762 = vadd.f32 %v2761, %v2699
      %v2763 = vadd.f32 %v2762, %v2700
      %v2764 = vrot.slane %v2763, 4
      %v2765 = vadd.f32 %v2763, %v2764
      %v2766 = vrot.slane %v2765, 2
      %v2767 = vadd.f32 %v2765, %v2766
      %v2768 = vrot.slane %v2767, 1
      %v2769 = vadd.f32 %v2767, %v2768
      %v2770 = vsel %vm2563, %v2636, %v2769
      %v2771 = vsel %vm2565, %v2770, 0.0
      %2772 = vst [vmem:[%s391] sm:$0xff] %v2771
      %s2773 = smul.u32 64, %s21
      %p2774 = scmp.lt.s32.totalorder %s2773, 127
      %s2775 = scalar_select %p2774, %s2773, 127
      %s2776 = smul.addr %s2775, 4
      %s2777 = scalar_lea.vmem %s6, %s2776
      %s2778 = smul.u32 64, %s21
      %p2779 = scmp.lt.s32.totalorder %s2778, 127
      %s2780 = scalar_select %p2779, %s2778, 127
      %s2781 = smul.addr %s2780, 4
      %s2782 = scalar_lea.vmem %s7, %s2781
      %p2783 = scmp.lt.s32.totalorder %s21, 1
      %s2784 = scalar_select %p2783, %s21, 1
      %s2785 = smul.addr %s2784, 8
      %s2786 = scalar_lea.vmem %s8, %s2785
      %p2787 = scmp.lt.s32.totalorder %s21, 1
      %s2788 = scalar_select %p2787, %s21, 1
      %s2789 = smul.addr %s2788, 8
      %s2790 = scalar_lea.vmem %s9, %s2789
      // Predicated region
      $region45: #{bottleneck_forward.6} parent=43 // pred_check
        %p2791 = pneg %p175
      $region46: #{bottleneck_forward.6} parent=43 // pred_check_branch
        %2793 = sbr.rel (%p2791) target = $region48
      $region47: #{bottleneck_forward.6} parent=43 // pred_region
        %s2794 = smul.u32 64, %s21
      $region48: #{bottleneck_forward.6} parent=43 // pred_fallthru
        _
      // Predicated region
      $region49: #{bottleneck_forward.6} parent=43 // pred_check
        %p2795 = pneg %p201
      $region50: #{bottleneck_forward.6} parent=43 // pred_check_branch
        %2797 = sbr.rel (%p2795) target = $region52
      $region51: #{bottleneck_forward.6} parent=43 // pred_region
        %s2798 = smul.u32 64, %s21
      $region52: #{bottleneck_forward.6} parent=43 // pred_fallthru
        _
      // Predicated region
      $region53: #{bottleneck_forward.6} parent=43 // pred_check
        %p2799 = pneg %p227
      $region54: #{bottleneck_forward.6} parent=43 // pred_check_branch
        %2801 = sbr.rel (%p2799) target = $region56
      $region55: #{bottleneck_forward.6} parent=43 // pred_region
        _
      $region56: #{bottleneck_forward.6} parent=43 // pred_fallthru
        _
      // Predicated region
      $region57: #{bottleneck_forward.6} parent=43 // pred_check
        %p2802 = pneg %p253
      $region58: #{bottleneck_forward.6} parent=43 // pred_check_branch
        %2804 = sbr.rel (%p2802) target = $region60
      $region59: #{bottleneck_forward.6} parent=43 // pred_region
        _
      $region60: #{bottleneck_forward.6} parent=43 // pred_fallthru
        _
    $region44: #{bottleneck_forward.6} parent=5 // pred_fallthru
      _
    %p2805 = scmp.le.s32.totalorder 2, %s16
    // Predicated region
    $region61: #{bottleneck_forward.6} parent=5 // pred_check
      %p2806 = pneg %p2805
    $region62: #{bottleneck_forward.6} parent=5 // pred_check_branch
      %2808 = sbr.rel (%p2806) target = $region64
    $region63: #{bottleneck_forward.6} parent=5 // pred_region
      %s2809 = ssub.s32 %s16, 2
      // Predicated region
      $region65: #{bottleneck_forward.6} parent=63 // pred_check
        %p2810 = pneg %p181
      $region66: #{bottleneck_forward.6} parent=63 // pred_check_branch
        %2812 = sbr.rel (%p2810) target = $region68
      $region67: #{bottleneck_forward.6} parent=63 // pred_region
        %s2813 = smul.u32 64, %s22
        %p2814 = scmp.lt.s32.totalorder %s2813, 127
        %s2815 = scalar_select %p2814, %s2813, 127
        %s2816 = smul.addr %s2815, 4
        %s2817 = scalar_lea.vmem %s6, %s2816
      $region68: #{bottleneck_forward.6} parent=63 // pred_fallthru
        _
      // Predicated region
      $region69: #{bottleneck_forward.6} parent=63 // pred_check
        %p2818 = pneg %p207
      $region70: #{bottleneck_forward.6} parent=63 // pred_check_branch
        %2820 = sbr.rel (%p2818) target = $region72
      $region71: #{bottleneck_forward.6} parent=63 // pred_region
        %s2821 = smul.u32 64, %s22
        %p2822 = scmp.lt.s32.totalorder %s2821, 127
        %s2823 = scalar_select %p2822, %s2821, 127
        %s2824 = smul.addr %s2823, 4
        %s2825 = scalar_lea.vmem %s7, %s2824
      $region72: #{bottleneck_forward.6} parent=63 // pred_fallthru
        _
      // Predicated region
      $region73: #{bottleneck_forward.6} parent=63 // pred_check
        %p2826 = pneg %p233
      $region74: #{bottleneck_forward.6} parent=63 // pred_check_branch
        %2828 = sbr.rel (%p2826) target = $region76
      $region75: #{bottleneck_forward.6} parent=63 // pred_region
        %p2829 = scmp.lt.s32.totalorder %s22, 1
        %s2830 = scalar_select %p2829, %s22, 1
        %s2831 = smul.addr %s2830, 8
        %s2832 = scalar_lea.vmem %s8, %s2831
      $region76: #{bottleneck_forward.6} parent=63 // pred_fallthru
        _
      // Predicated region
      $region77: #{bottleneck_forward.6} parent=63 // pred_check
        %p2833 = pneg %p259
      $region78: #{bottleneck_forward.6} parent=63 // pred_check_branch
        %2835 = sbr.rel (%p2833) target = $region80
      $region79: #{bottleneck_forward.6} parent=63 // pred_region
        %p2836 = scmp.lt.s32.totalorder %s22, 1
        %s2837 = scalar_select %p2836, %s22, 1
        %s2838 = smul.addr %s2837, 8
        %s2839 = scalar_lea.vmem %s9, %s2838
      $region80: #{bottleneck_forward.6} parent=63 // pred_fallthru
        _
    $region64: #{bottleneck_forward.6} parent=5 // pred_fallthru
      _
  $region6: #{bottleneck_forward.6} parent=0 // loop_footer
    %s20 = sadd.s32 1, %s16
  $region7: #{bottleneck_forward.6} parent=0 // loop_footer_branch
    %15 = sbr.rel target = $region3
  $region8: #{bottleneck_forward.6} parent=0 // loop_exit
    _

// kernel: bottleneck_forward.5
$region0: #{bottleneck_forward.5}
  #allocation0 [shape = 'u32[]', space=smem, size = 0x4, offset = 0x4, fixed_abs, tag = 'smem constant byte address 0x4 - core index']
  #allocation1 [shape = 'u32[144,128]{1,0:T(1,128)}', space=vmem, size = 0x12000, scoped, tag = 'internal scratch']
  #allocation2 [shape = 'bf16[18,16,384]{2,1,0:T(16,128)(2,1)}', space=vmem, size = 0x36000, scoped, tag = 'scratch operand']
  %s0 = inlined_call_operand.vmem [shape: bf16[4,16,16,128], index: 0, kind: input, shape index: {}]
  %s1 = inlined_call_operand.vmem [shape: f32[1,128], index: 1, kind: input, shape index: {}]
  %s2 = inlined_call_operand.vmem [shape: f32[1,128], index: 2, kind: input, shape index: {}]
  %s3 = inlined_call_operand.vmem [shape: bf16[3,384,128], index: 3, kind: input, shape index: {}]
  %s4 = inlined_call_operand.vmem [shape: bf16[4,16,16,128], index: 4, kind: output, shape index: {0}]
  %s5 = inlined_call_operand.vmem [shape: f32[4,8,128], index: 5, kind: output, shape index: {1}]
  %6 = xla_tuple %s4, %s5
  %s7 = sld [smem:[#allocation0]]
  $region57: #{bottleneck_forward.5} parent=0
    _
  %s9 = ssub.s32 1, %s7
  %s10 = scalar_select 0, %s9, %s7
  loop: start=0, step=1, limit=6
  $region2: #{bottleneck_forward.5} parent=0 // loop_pre_header
    _
  $region3: #{bottleneck_forward.5} parent=0 // loop_header
    %s12 = sphi 0, %s16
    %p13 = scmp.ge.s32.totalorder %s12, 6
    %s22 = sphi 0, %s24
    %s25 = sphi 0, %s22
    %s26 = sphi 0, %s25
    %s42 = sphi 0, %s26
    %s46 = sphi 0, %s46
    %s48 = sphi 0, %s46
    %s49 = sphi 0, %s48
    %s63 = sphi 0, %s49
    %s67 = sphi 0, %s67
    %s69 = sphi 0, %s67
    %s70 = sphi 0, %s69
    %s84 = sphi 0, %s70
    %s88 = sphi 0, %s88
    %s90 = sphi 0, %s88
    %s91 = sphi 0, %s90
    %s105 = sphi 0, %s91
    %s111 = sphi 0, %s113
    %s114 = sphi 0, %s111
    %s115 = sphi 0, %s114
    %s131 = sphi 0, %s115
    %s137 = sphi 0, %s139
    %s140 = sphi 0, %s137
    %s141 = sphi 0, %s140
    %s157 = sphi 0, %s141
  $region4: #{bottleneck_forward.5} parent=0 // loop_header_branch
    %15 = sbr.rel (%p13) target = $region8
  $region5: #{bottleneck_forward.5} parent=0 // loop_body
    %s17 = ssub.s32 %s12, 1
    %s18 = ssub.s32 %s12, 2
    %s19 = sadd.s32 %s12, 1
    %s20 = ssub.s32 %s12, %s19
    %p21 = scmp.eq.s32.totalorder %s20, 0
    %s23 = sadd.s32 %s22, 1
    %s24 = scalar_select %p21, %s22, %s23
    %p27 = pneg %p21
    %p28 = scmp.eq.s32.totalorder %s12, 3
    %p29 = por %p27, %p28
    %p30 = scmp.ne.s32.totalorder %s22, %s25
    %p31 = scmp.eq.s32.totalorder %s12, 0
    %p32 = por %p30, %p31
    %p33 = scmp.ne.s32.totalorder %s22, %s25
    %p34 = scmp.eq.s32.totalorder %s17, 3
    %p35 = por %p33, %p34
    %p36 = scmp.ne.s32.totalorder %s25, %s26
    %p37 = scmp.eq.s32.totalorder %s17, 0
    %p38 = por %p36, %p37
    %p39 = scmp.ne.s32.totalorder %s25, %s26
    %p40 = scmp.eq.s32.totalorder %s18, 3
    %p41 = por %p39, %p40
    %p43 = scmp.ne.s32.totalorder %s26, %s42
    %p44 = scmp.eq.s32.totalorder %s18, 0
    %p45 = por %p43, %p44
    %s47 = sadd.s32 %s46, 1
    %p50 = scmp.eq.s32.totalorder %s12, 3
    %p51 = scmp.ne.s32.totalorder %s46, %s48
    %p52 = scmp.eq.s32.totalorder %s12, 0
    %p53 = por %p51, %p52
    %p54 = scmp.ne.s32.totalorder %s46, %s48
    %p55 = scmp.eq.s32.totalorder %s17, 3
    %p56 = por %p54, %p55
    %p57 = scmp.ne.s32.totalorder %s48, %s49
    %p58 = scmp.eq.s32.totalorder %s17, 0
    %p59 = por %p57, %p58
    %p60 = scmp.ne.s32.totalorder %s48, %s49
    %p61 = scmp.eq.s32.totalorder %s18, 3
    %p62 = por %p60, %p61
    %p64 = scmp.ne.s32.totalorder %s49, %s63
    %p65 = scmp.eq.s32.totalorder %s18, 0
    %p66 = por %p64, %p65
    %s68 = sadd.s32 %s67, 1
    %p71 = scmp.eq.s32.totalorder %s12, 3
    %p72 = scmp.ne.s32.totalorder %s67, %s69
    %p73 = scmp.eq.s32.totalorder %s12, 0
    %p74 = por %p72, %p73
    %p75 = scmp.ne.s32.totalorder %s67, %s69
    %p76 = scmp.eq.s32.totalorder %s17, 3
    %p77 = por %p75, %p76
    %p78 = scmp.ne.s32.totalorder %s69, %s70
    %p79 = scmp.eq.s32.totalorder %s17, 0
    %p80 = por %p78, %p79
    %p81 = scmp.ne.s32.totalorder %s69, %s70
    %p82 = scmp.eq.s32.totalorder %s18, 3
    %p83 = por %p81, %p82
    %p85 = scmp.ne.s32.totalorder %s70, %s84
    %p86 = scmp.eq.s32.totalorder %s18, 0
    %p87 = por %p85, %p86
    %s89 = sadd.s32 %s88, 1
    %p92 = scmp.eq.s32.totalorder %s12, 3
    %p93 = scmp.ne.s32.totalorder %s88, %s90
    %p94 = scmp.eq.s32.totalorder %s12, 0
    %p95 = por %p93, %p94
    %p96 = scmp.ne.s32.totalorder %s88, %s90
    %p97 = scmp.eq.s32.totalorder %s17, 3
    %p98 = por %p96, %p97
    %p99 = scmp.ne.s32.totalorder %s90, %s91
    %p100 = scmp.eq.s32.totalorder %s17, 0
    %p101 = por %p99, %p100
    %p102 = scmp.ne.s32.totalorder %s90, %s91
    %p103 = scmp.eq.s32.totalorder %s18, 3
    %p104 = por %p102, %p103
    %p106 = scmp.ne.s32.totalorder %s91, %s105
    %p107 = scmp.eq.s32.totalorder %s18, 0
    %p108 = por %p106, %p107
    %s109 = ssub.s32 %s12, %s19
    %p110 = scmp.eq.s32.totalorder %s109, 0
    %s112 = sadd.s32 %s111, 1
    %s113 = scalar_select %p110, %s111, %s112
    %p116 = pneg %p110
    %p117 = scmp.eq.s32.totalorder %s12, 3
    %p118 = por %p116, %p117
    %p119 = scmp.ne.s32.totalorder %s111, %s114
    %p120 = scmp.eq.s32.totalorder %s12, 0
    %p121 = por %p119, %p120
    %p122 = scmp.ne.s32.totalorder %s111, %s114
    %p123 = scmp.eq.s32.totalorder %s17, 3
    %p124 = por %p122, %p123
    %p125 = scmp.ne.s32.totalorder %s114, %s115
    %p126 = scmp.eq.s32.totalorder %s17, 0
    %p127 = por %p125, %p126
    %p128 = scmp.ne.s32.totalorder %s114, %s115
    %p129 = scmp.eq.s32.totalorder %s18, 3
    %p130 = por %p128, %p129
    %p132 = scmp.ne.s32.totalorder %s115, %s131
    %p133 = scmp.eq.s32.totalorder %s18, 0
    %p134 = por %p132, %p133
    %s135 = ssub.s32 %s12, %s19
    %p136 = scmp.eq.s32.totalorder %s135, 0
    %s138 = sadd.s32 %s137, 1
    %s139 = scalar_select %p136, %s137, %s138
    %p142 = pneg %p136
    %p143 = scmp.eq.s32.totalorder %s12, 3
    %p144 = por %p142, %p143
    %p145 = scmp.ne.s32.totalorder %s137, %s140
    %p146 = scmp.eq.s32.totalorder %s12, 0
    %p147 = por %p145, %p146
    %p148 = scmp.ne.s32.totalorder %s137, %s140
    %p149 = scmp.eq.s32.totalorder %s17, 3
    %p150 = por %p148, %p149
    %p151 = scmp.ne.s32.totalorder %s140, %s141
    %p152 = scmp.eq.s32.totalorder %s17, 0
    %p153 = por %p151, %p152
    %p154 = scmp.ne.s32.totalorder %s140, %s141
    %p155 = scmp.eq.s32.totalorder %s18, 3
    %p156 = por %p154, %p155
    %p158 = scmp.ne.s32.totalorder %s141, %s157
    %p159 = scmp.eq.s32.totalorder %s18, 0
    %p160 = por %p158, %p159
    %p161 = scmp.le.s32.totalorder 1, %s12
    %p162 = scmp.lt.s32.totalorder %s12, 5
    %p163 = pnand %p161, %p162
    %p164 = pneg %p163
    // Predicated region
    $region9: #{bottleneck_forward.5} parent=5 // pred_check
      _
    $region10: #{bottleneck_forward.5} parent=5 // pred_check_branch
      %166 = sbr.rel (%p163) target = $region12
    $region11: #{bottleneck_forward.5} parent=5 // pred_region
      %s167 = ssub.s32 %s12, 1
      // Predicated region
      $region13: #{bottleneck_forward.5} parent=11 // pred_check
        %p168 = pneg %p59
      $region14: #{bottleneck_forward.5} parent=11 // pred_check_branch
        %170 = sbr.rel (%p168) target = $region16
      $region15: #{bottleneck_forward.5} parent=11 // pred_region
        _
      $region16: #{bottleneck_forward.5} parent=11 // pred_fallthru
        _
      // Predicated region
      $region17: #{bottleneck_forward.5} parent=11 // pred_check
        %p171 = pneg %p80
      $region18: #{bottleneck_forward.5} parent=11 // pred_check_branch
        %173 = sbr.rel (%p171) target = $region20
      $region19: #{bottleneck_forward.5} parent=11 // pred_region
        _
      $region20: #{bottleneck_forward.5} parent=11 // pred_fallthru
        _
      // Predicated region
      $region21: #{bottleneck_forward.5} parent=11 // pred_check
        %p174 = pneg %p101
      $region22: #{bottleneck_forward.5} parent=11 // pred_check_branch
        %176 = sbr.rel (%p174) target = $region24
      $region23: #{bottleneck_forward.5} parent=11 // pred_region
        _
      $region24: #{bottleneck_forward.5} parent=11 // pred_fallthru
        _
    $region12: #{bottleneck_forward.5} parent=5 // pred_fallthru
      _
    %p177 = scmp.lt.s32.totalorder %s12, 4
    // Predicated region
    $region25: #{bottleneck_forward.5} parent=5 // pred_check
      %p178 = pneg %p177
    $region26: #{bottleneck_forward.5} parent=5 // pred_check_branch
      %180 = sbr.rel (%p178) target = $region28
    $region27: #{bottleneck_forward.5} parent=5 // pred_region
      // Predicated region
      $region29: #{bottleneck_forward.5} parent=27 // pred_check
        %p181 = pneg %p32
      $region30: #{bottleneck_forward.5} parent=27 // pred_check_branch
        %183 = sbr.rel (%p181) target = $region32
      $region31: #{bottleneck_forward.5} parent=27 // pred_region
        %p184 = scmp.lt.s32.totalorder %s12, 3
        %s185 = scalar_select %p184, %s12, 3
        %s186 = smul.addr %s185, 32
        %s187 = smul.addr %s186, 4
        %s188 = scalar_lea.vmem %s0, %s187
      $region32: #{bottleneck_forward.5} parent=27 // pred_fallthru
        _
    $region28: #{bottleneck_forward.5} parent=5 // pred_fallthru
      _
    %p189 = scmp.le.s32.totalorder 1, %s12
    %p190 = scmp.lt.s32.totalorder %s12, 5
    %p191 = pnand %p189, %p190
    %p192 = pneg %p191
    // Predicated region
    $region33: #{bottleneck_forward.5} parent=5 // pred_check
      _
    $region34: #{bottleneck_forward.5} parent=5 // pred_check_branch
      %194 = sbr.rel (%p191) target = $region36
    $region35: #{bottleneck_forward.5} parent=5 // pred_region
      %s195 = ssub.s32 %s12, 1
      %p196 = scmp.lt.s32.totalorder %s17, 3
      %s197 = scalar_select %p196, %s17, 3
      %s198 = smul.addr %s197, 32
      %s199 = smul.addr %s198, 4
      %s200 = scalar_lea.vmem %s0, %s199
      %p201 = pneg %p38
      %p202 = pneg %p35
      %p203 = pneg %p59
      %p204 = pneg %p56
      %p205 = pneg %p80
      %p206 = pneg %p77
      %p207 = pneg %p101
      %p208 = pneg %p98
      %p209 = pneg %p127
      %p210 = pneg %p124
      %p211 = scmp.lt.s32.totalorder %s17, 3
      %s212 = scalar_select %p211, %s17, 3
      %s213 = smul.addr %s212, 32
      %s214 = smul.addr %s213, 4
      %s215 = scalar_lea.vmem %s4, %s214
      %p216 = pneg %p153
      %p217 = pneg %p150
      %p218 = scmp.lt.s32.totalorder %s17, 3
      %s219 = scalar_select %p218, %s17, 3
      %s220 = smul.addr %s219, 8
      %s221 = scalar_lea.vmem %s5, %s220
      %p222 = scmp.lt.s32.totalorder %s17, 3
      %s223 = scalar_select %p222, %s17, 3
      %s224 = smul.addr %s223, 32
      %s225 = smul.addr %s224, 4
      %s226 = scalar_lea.vmem %s0, %s225
      %p227 = scmp.lt.s32.totalorder %s17, 3
      %s228 = scalar_select %p227, %s17, 3
      %s229 = smul.addr %s228, 32
      %s230 = smul.addr %s229, 4
      %s231 = scalar_lea.vmem %s4, %s230
      %p232 = scmp.lt.s32.totalorder %s17, 3
      %s233 = scalar_select %p232, %s17, 3
      %s234 = smul.addr %s233, 8
      %s235 = scalar_lea.vmem %s5, %s234
      %v237 = vld [vmem:[%s1] sm:$0x1]
      %v238 = vld [vmem:[%s2] sm:$0x1]
      %v239 = vld [vmem:[%s226] sm:$0xf]
      %v240 = vld [vmem:[%s226 + $0x4] sm:$0xf]
      %v241 = vld [vmem:[%s226 + $0x8] sm:$0xf]
      %v242 = vld [vmem:[%s226 + $0xc] sm:$0xf]
      %v243 = vld [vmem:[%s226 + $0x10] sm:$0xf]
      %v244 = vld [vmem:[%s226 + $0x14] sm:$0xf]
      %v245 = vld [vmem:[%s226 + $0x18] sm:$0xf]
      %v246 = vld [vmem:[%s226 + $0x1c] sm:$0xf]
      %v247 = vld [vmem:[%s226 + $0x20] sm:$0xf]
      %v248 = vld [vmem:[%s226 + $0x24] sm:$0xf]
      %v249 = vld [vmem:[%s226 + $0x28] sm:$0xf]
      %v250 = vld [vmem:[%s226 + $0x2c] sm:$0xf]
      %v251 = vld [vmem:[%s226 + $0x30] sm:$0xf]
      %v252 = vld [vmem:[%s226 + $0x34] sm:$0xf]
      %v253 = vld [vmem:[%s226 + $0x38] sm:$0xf]
      %v254 = vld [vmem:[%s226 + $0x3c] sm:$0xf]
      %v255 = vld [vmem:[%s226 + $0x40] sm:$0xf]
      %v256 = vld [vmem:[%s226 + $0x44] sm:$0xf]
      %v257 = vld [vmem:[%s226 + $0x48] sm:$0xf]
      %v258 = vld [vmem:[%s226 + $0x4c] sm:$0xf]
      %v259 = vld [vmem:[%s226 + $0x50] sm:$0xf]
      %v260 = vld [vmem:[%s226 + $0x54] sm:$0xf]
      %v261 = vld [vmem:[%s226 + $0x58] sm:$0xf]
      %v262 = vld [vmem:[%s226 + $0x5c] sm:$0xf]
      %v263 = vld [vmem:[%s226 + $0x60] sm:$0xf]
      %v264 = vld [vmem:[%s226 + $0x64] sm:$0xf]
      %v265 = vld [vmem:[%s226 + $0x68] sm:$0xf]
      %v266 = vld [vmem:[%s226 + $0x6c] sm:$0xf]
      %v267 = vld [vmem:[%s226 + $0x70] sm:$0xf]
      %v268 = vld [vmem:[%s226 + $0x74] sm:$0xf]
      %v269 = vld [vmem:[%s226 + $0x78] sm:$0xf]
      %v270 = vld [vmem:[%s226 + $0x7c] sm:$0xf]
      %v271 = vunpack.c.l.bf16 %v239
      %v272 = vunpack.c.l.bf16 %v240
      %v273 = vunpack.c.l.bf16 %v241
      %v274 = vunpack.c.l.bf16 %v242
      %v275 = vunpack.c.l.bf16 %v243
      %v276 = vunpack.c.l.bf16 %v244
      %v277 = vunpack.c.l.bf16 %v245
      %v278 = vunpack.c.l.bf16 %v246
      %v279 = vunpack.c.l.bf16 %v247
      %v280 = vunpack.c.l.bf16 %v248
      %v281 = vunpack.c.l.bf16 %v249
      %v282 = vunpack.c.l.bf16 %v250
      %v283 = vunpack.c.l.bf16 %v251
      %v284 = vunpack.c.l.bf16 %v252
      %v285 = vunpack.c.l.bf16 %v253
      %v286 = vunpack.c.l.bf16 %v254
      %v287 = vunpack.c.l.bf16 %v255
      %v288 = vunpack.c.l.bf16 %v256
      %v289 = vunpack.c.l.bf16 %v257
      %v290 = vunpack.c.l.bf16 %v258
      %v291 = vunpack.c.l.bf16 %v259
      %v292 = vunpack.c.l.bf16 %v260
      %v293 = vunpack.c.l.bf16 %v261
      %v294 = vunpack.c.l.bf16 %v262
      %v295 = vunpack.c.l.bf16 %v263
      %v296 = vunpack.c.l.bf16 %v264
      %v297 = vunpack.c.l.bf16 %v265
      %v298 = vunpack.c.l.bf16 %v266
      %v299 = vunpack.c.l.bf16 %v267
      %v300 = vunpack.c.l.bf16 %v268
      %v301 = vunpack.c.l.bf16 %v269
      %v302 = vunpack.c.l.bf16 %v270
      %v304 = vlaneseq
      %v305 = vshrl.u32 %v304, 7
      %v306 = vsub.s32 0, %v305
      %v307 = vrot.slane %v237, %v306
      %v309 = vmul.f32 %v271, %v307
      %v310 = vmul.f32 %v272, %v307
      %v311 = vmul.f32 %v273, %v307
      %v312 = vmul.f32 %v274, %v307
      %v313 = vmul.f32 %v275, %v307
      %v314 = vmul.f32 %v276, %v307
      %v315 = vmul.f32 %v277, %v307
      %v316 = vmul.f32 %v278, %v307
      %v317 = vmul.f32 %v279, %v307
      %v318 = vmul.f32 %v280, %v307
      %v319 = vmul.f32 %v281, %v307
      %v320 = vmul.f32 %v282, %v307
      %v321 = vmul.f32 %v283, %v307
      %v322 = vmul.f32 %v284, %v307
      %v323 = vmul.f32 %v285, %v307
      %v324 = vmul.f32 %v286, %v307
      %v325 = vmul.f32 %v287, %v307
      %v326 = vmul.f32 %v288, %v307
      %v327 = vmul.f32 %v289, %v307
      %v328 = vmul.f32 %v290, %v307
      %v329 = vmul.f32 %v291, %v307
      %v330 = vmul.f32 %v292, %v307
      %v331 = vmul.f32 %v293, %v307
      %v332 = vmul.f32 %v294, %v307
      %v333 = vmul.f32 %v295, %v307
      %v334 = vmul.f32 %v296, %v307
      %v335 = vmul.f32 %v297, %v307
      %v336 = vmul.f32 %v298, %v307
      %v337 = vmul.f32 %v299, %v307
      %v338 = vmul.f32 %v300, %v307
      %v339 = vmul.f32 %v301, %v307
      %v340 = vmul.f32 %v302, %v307
      %v342 = vlaneseq
      %v343 = vshrl.u32 %v342, 7
      %v344 = vsub.s32 0, %v343
      %v345 = vrot.slane %v238, %v344
      %v347 = vadd.f32 %v309, %v345
      %v348 = vadd.f32 %v310, %v345
      %v349 = vadd.f32 %v311, %v345
      %v350 = vadd.f32 %v312, %v345
      %v351 = vadd.f32 %v313, %v345
      %v352 = vadd.f32 %v314, %v345
      %v353 = vadd.f32 %v315, %v345
      %v354 = vadd.f32 %v316, %v345
      %v355 = vadd.f32 %v317, %v345
      %v356 = vadd.f32 %v318, %v345
      %v357 = vadd.f32 %v319, %v345
      %v358 = vadd.f32 %v320, %v345
      %v359 = vadd.f32 %v321, %v345
      %v360 = vadd.f32 %v322, %v345
      %v361 = vadd.f32 %v323, %v345
      %v362 = vadd.f32 %v324, %v345
      %v363 = vadd.f32 %v325, %v345
      %v364 = vadd.f32 %v326, %v345
      %v365 = vadd.f32 %v327, %v345
      %v366 = vadd.f32 %v328, %v345
      %v367 = vadd.f32 %v329, %v345
      %v368 = vadd.f32 %v330, %v345
      %v369 = vadd.f32 %v331, %v345
      %v370 = vadd.f32 %v332, %v345
      %v371 = vadd.f32 %v333, %v345
      %v372 = vadd.f32 %v334, %v345
      %v373 = vadd.f32 %v335, %v345
      %v374 = vadd.f32 %v336, %v345
      %v375 = vadd.f32 %v337, %v345
      %v376 = vadd.f32 %v338, %v345
      %v377 = vadd.f32 %v339, %v345
      %v378 = vadd.f32 %v340, %v345
      %v379 = vmax.f32 %v347, 0.0
      %v380 = vmax.f32 %v348, 0.0
      %v381 = vmax.f32 %v349, 0.0
      %v382 = vmax.f32 %v350, 0.0
      %v383 = vmax.f32 %v351, 0.0
      %v384 = vmax.f32 %v352, 0.0
      %v385 = vmax.f32 %v353, 0.0
      %v386 = vmax.f32 %v354, 0.0
      %v387 = vmax.f32 %v355, 0.0
      %v388 = vmax.f32 %v356, 0.0
      %v389 = vmax.f32 %v357, 0.0
      %v390 = vmax.f32 %v358, 0.0
      %v391 = vmax.f32 %v359, 0.0
      %v392 = vmax.f32 %v360, 0.0
      %v393 = vmax.f32 %v361, 0.0
      %v394 = vmax.f32 %v362, 0.0
      %v395 = vmax.f32 %v363, 0.0
      %v396 = vmax.f32 %v364, 0.0
      %v397 = vmax.f32 %v365, 0.0
      %v398 = vmax.f32 %v366, 0.0
      %v399 = vmax.f32 %v367, 0.0
      %v400 = vmax.f32 %v368, 0.0
      %v401 = vmax.f32 %v369, 0.0
      %v402 = vmax.f32 %v370, 0.0
      %v403 = vmax.f32 %v371, 0.0
      %v404 = vmax.f32 %v372, 0.0
      %v405 = vmax.f32 %v373, 0.0
      %v406 = vmax.f32 %v374, 0.0
      %v407 = vmax.f32 %v375, 0.0
      %v408 = vmax.f32 %v376, 0.0
      %v409 = vmax.f32 %v377, 0.0
      %v410 = vmax.f32 %v378, 0.0
      %v411 = vpack.c.bf16 %v380, %v379
      %v412 = vpack.c.bf16 %v382, %v381
      %v413 = vpack.c.bf16 %v384, %v383
      %v414 = vpack.c.bf16 %v386, %v385
      %v415 = vpack.c.bf16 %v388, %v387
      %v416 = vpack.c.bf16 %v390, %v389
      %v417 = vpack.c.bf16 %v392, %v391
      %v418 = vpack.c.bf16 %v394, %v393
      %v419 = vpack.c.bf16 %v396, %v395
      %v420 = vpack.c.bf16 %v398, %v397
      %v421 = vpack.c.bf16 %v400, %v399
      %v422 = vpack.c.bf16 %v402, %v401
      %v423 = vpack.c.bf16 %v404, %v403
      %v424 = vpack.c.bf16 %v406, %v405
      %v425 = vpack.c.bf16 %v408, %v407
      %v426 = vpack.c.bf16 %v410, %v409
      %427 = vst [vmem:[#allocation2] sm:$0xff] 0
      %428 = vst [vmem:[#allocation2 + $0x8] sm:$0xff] 0
      %429 = vst [vmem:[#allocation2 + $0x10] sm:$0xff] 0
      %s430 = scalar_lea.vmem [#allocation2], 408
      %431 = vst [vmem:[%s430] sm:$0xff] 0
      %432 = vst [vmem:[%s430 + $0x8] sm:$0xff] 0
      %433 = vst [vmem:[%s430 + $0x10] sm:$0xff] 0
      %s434 = scalar_lea.vmem [#allocation2], 24
      %vm435 = vcmask 1040384
      %vm436 = vsmask.f32 256
      %vm437 = vmand %vm435, %vm436
      %v438 = vld [vmem:[%s434] sm:$0x1]
      %v439 = vsel %vm437, 0, %v438
      %440 = vst [vmem:[%s434] sm:$0x1] %v439
      %v441 = vld [vmem:[%s434 + $0x18] sm:$0x1]
      %v442 = vsel %vm437, 0, %v441
      %443 = vst [vmem:[%s434 + $0x18] sm:$0x1] %v442
      %v444 = vld [vmem:[%s434 + $0x30] sm:$0x1]
      %v445 = vsel %vm437, 0, %v444
      %446 = vst [vmem:[%s434 + $0x30] sm:$0x1] %v445
      %v447 = vld [vmem:[%s434 + $0x48] sm:$0x1]
      %v448 = vsel %vm437, 0, %v447
      %449 = vst [vmem:[%s434 + $0x48] sm:$0x1] %v448
      %v450 = vld [vmem:[%s434 + $0x60] sm:$0x1]
      %v451 = vsel %vm437, 0, %v450
      %452 = vst [vmem:[%s434 + $0x60] sm:$0x1] %v451
      %v453 = vld [vmem:[%s434 + $0x78] sm:$0x1]
      %v454 = vsel %vm437, 0, %v453
      %455 = vst [vmem:[%s434 + $0x78] sm:$0x1] %v454
      %v456 = vld [vmem:[%s434 + $0x90] sm:$0x1]
      %v457 = vsel %vm437, 0, %v456
      %458 = vst [vmem:[%s434 + $0x90] sm:$0x1] %v457
      %v459 = vld [vmem:[%s434 + $0xa8] sm:$0x1]
      %v460 = vsel %vm437, 0, %v459
      %461 = vst [vmem:[%s434 + $0xa8] sm:$0x1] %v460
      %v462 = vld [vmem:[%s434 + $0xc0] sm:$0x1]
      %v463 = vsel %vm437, 0, %v462
      %464 = vst [vmem:[%s434 + $0xc0] sm:$0x1] %v463
      %v465 = vld [vmem:[%s434 + $0xd8] sm:$0x1]
      %v466 = vsel %vm437, 0, %v465
      %467 = vst [vmem:[%s434 + $0xd8] sm:$0x1] %v466
      %v468 = vld [vmem:[%s434 + $0xf0] sm:$0x1]
      %v469 = vsel %vm437, 0, %v468
      %470 = vst [vmem:[%s434 + $0xf0] sm:$0x1] %v469
      %v471 = vld [vmem:[%s434 + $0x108] sm:$0x1]
      %v472 = vsel %vm437, 0, %v471
      %473 = vst [vmem:[%s434 + $0x108] sm:$0x1] %v472
      %v474 = vld [vmem:[%s434 + $0x120] sm:$0x1]
      %v475 = vsel %vm437, 0, %v474
      %476 = vst [vmem:[%s434 + $0x120] sm:$0x1] %v475
      %v477 = vld [vmem:[%s434 + $0x138] sm:$0x1]
      %v478 = vsel %vm437, 0, %v477
      %479 = vst [vmem:[%s434 + $0x138] sm:$0x1] %v478
      %v480 = vld [vmem:[%s434 + $0x150] sm:$0x1]
      %v481 = vsel %vm437, 0, %v480
      %482 = vst [vmem:[%s434 + $0x150] sm:$0x1] %v481
      %v483 = vld [vmem:[%s434 + $0x168] sm:$0x1]
      %v484 = vsel %vm437, 0, %v483
      %485 = vst [vmem:[%s434 + $0x168] sm:$0x1] %v484
      %vm486 = vcmask 1047559
      %vm487 = vsmask.f32 7966
      %vm488 = vmand %vm486, %vm487
      %v489 = vld [vmem:[%s434 + $0x10] sm:$0x80]
      %v490 = vsel %vm488, 0, %v489
      %491 = vst [vmem:[%s434 + $0x10] sm:$0x80] %v490
      %v492 = vld [vmem:[%s434 + $0x28] sm:$0x80]
      %v493 = vsel %vm488, 0, %v492
      %494 = vst [vmem:[%s434 + $0x28] sm:$0x80] %v493
      %v495 = vld [vmem:[%s434 + $0x40] sm:$0x80]
      %v496 = vsel %vm488, 0, %v495
      %497 = vst [vmem:[%s434 + $0x40] sm:$0x80] %v496
      %v498 = vld [vmem:[%s434 + $0x58] sm:$0x80]
      %v499 = vsel %vm488, 0, %v498
      %500 = vst [vmem:[%s434 + $0x58] sm:$0x80] %v499
      %v501 = vld [vmem:[%s434 + $0x70] sm:$0x80]
      %v502 = vsel %vm488, 0, %v501
      %503 = vst [vmem:[%s434 + $0x70] sm:$0x80] %v502
      %v504 = vld [vmem:[%s434 + $0x88] sm:$0x80]
      %v505 = vsel %vm488, 0, %v504
      %506 = vst [vmem:[%s434 + $0x88] sm:$0x80] %v505
      %v507 = vld [vmem:[%s434 + $0xa0] sm:$0x80]
      %v508 = vsel %vm488, 0, %v507
      %509 = vst [vmem:[%s434 + $0xa0] sm:$0x80] %v508
      %v510 = vld [vmem:[%s434 + $0xb8] sm:$0x80]
      %v511 = vsel %vm488, 0, %v510
      %512 = vst [vmem:[%s434 + $0xb8] sm:$0x80] %v511
      %v513 = vld [vmem:[%s434 + $0xd0] sm:$0x80]
      %v514 = vsel %vm488, 0, %v513
      %515 = vst [vmem:[%s434 + $0xd0] sm:$0x80] %v514
      %v516 = vld [vmem:[%s434 + $0xe8] sm:$0x80]
      %v517 = vsel %vm488, 0, %v516
      %518 = vst [vmem:[%s434 + $0xe8] sm:$0x80] %v517
      %v519 = vld [vmem:[%s434 + $0x100] sm:$0x80]
      %v520 = vsel %vm488, 0, %v519
      %521 = vst [vmem:[%s434 + $0x100] sm:$0x80] %v520
      %v522 = vld [vmem:[%s434 + $0x118] sm:$0x80]
      %v523 = vsel %vm488, 0, %v522
      %524 = vst [vmem:[%s434 + $0x118] sm:$0x80] %v523
      %v525 = vld [vmem:[%s434 + $0x130] sm:$0x80]
      %v526 = vsel %vm488, 0, %v525
      %527 = vst [vmem:[%s434 + $0x130] sm:$0x80] %v526
      %v528 = vld [vmem:[%s434 + $0x148] sm:$0x80]
      %v529 = vsel %vm488, 0, %v528
      %530 = vst [vmem:[%s434 + $0x148] sm:$0x80] %v529
      %v531 = vld [vmem:[%s434 + $0x160] sm:$0x80]
      %v532 = vsel %vm488, 0, %v531
      %533 = vst [vmem:[%s434 + $0x160] sm:$0x80] %v532
      %v534 = vld [vmem:[%s434 + $0x178] sm:$0x80]
      %v535 = vsel %vm488, 0, %v534
      %536 = vst [vmem:[%s434 + $0x178] sm:$0x80] %v535
      %v538 = vshrl.u32 %v411, 16
      %v540 = vrot.slane %v538, 7
      %v541 = vshll.u32 %v411, 16
      %v543 = vor.u32 %v540, %v541
      %v545 = vshrl.u32 %v412, 16
      %v547 = vrot.slane %v545, 7
      %v548 = vshll.u32 %v412, 16
      %v550 = vor.u32 %v547, %v548
      %v552 = vshrl.u32 %v413, 16
      %v554 = vrot.slane %v552, 7
      %v555 = vshll.u32 %v413, 16
      %v557 = vor.u32 %v554, %v555
      %v559 = vshrl.u32 %v414, 16
      %v561 = vrot.slane %v559, 7
      %v562 = vshll.u32 %v414, 16
      %v564 = vor.u32 %v561, %v562
      %v566 = vshrl.u32 %v415, 16
      %v568 = vrot.slane %v566, 7
      %v569 = vshll.u32 %v415, 16
      %v571 = vor.u32 %v568, %v569
      %v573 = vshrl.u32 %v416, 16
      %v575 = vrot.slane %v573, 7
      %v576 = vshll.u32 %v416, 16
      %v578 = vor.u32 %v575, %v576
      %v580 = vshrl.u32 %v417, 16
      %v582 = vrot.slane %v580, 7
      %v583 = vshll.u32 %v417, 16
      %v585 = vor.u32 %v582, %v583
      %v587 = vshrl.u32 %v418, 16
      %v589 = vrot.slane %v587, 7
      %v590 = vshll.u32 %v418, 16
      %v592 = vor.u32 %v589, %v590
      %v594 = vshrl.u32 %v419, 16
      %v596 = vrot.slane %v594, 7
      %v597 = vshll.u32 %v419, 16
      %v599 = vor.u32 %v596, %v597
      %v601 = vshrl.u32 %v420, 16
      %v603 = vrot.slane %v601, 7
      %v604 = vshll.u32 %v420, 16
      %v606 = vor.u32 %v603, %v604
      %v608 = vshrl.u32 %v421, 16
      %v610 = vrot.slane %v608, 7
      %v611 = vshll.u32 %v421, 16
      %v613 = vor.u32 %v610, %v611
      %v615 = vshrl.u32 %v422, 16
      %v617 = vrot.slane %v615, 7
      %v618 = vshll.u32 %v422, 16
      %v620 = vor.u32 %v617, %v618
      %v622 = vshrl.u32 %v423, 16
      %v624 = vrot.slane %v622, 7
      %v625 = vshll.u32 %v423, 16
      %v627 = vor.u32 %v624, %v625
      %v629 = vshrl.u32 %v424, 16
      %v631 = vrot.slane %v629, 7
      %v632 = vshll.u32 %v424, 16
      %v634 = vor.u32 %v631, %v632
      %v636 = vshrl.u32 %v425, 16
      %v638 = vrot.slane %v636, 7
      %v639 = vshll.u32 %v425, 16
      %v641 = vor.u32 %v638, %v639
      %v643 = vshrl.u32 %v426, 16
      %v645 = vrot.slane %v643, 7
      %v646 = vshll.u32 %v426, 16
      %v648 = vor.u32 %v645, %v646
      %vm665 = vcmask 1047552
      %vm666 = vsmask.f32 7938
      %vm667 = vmand %vm665, %vm666
      %v668 = vld [vmem:[%s434] sm:$0xff]
      %v669 = vsel %vm667, %v543, %v668
      %670 = vst [vmem:[%s434] sm:$0xff] %v669
      %v671 = vld [vmem:[%s434 + $0x18] sm:$0xff]
      %v672 = vsel %vm667, %v550, %v671
      %673 = vst [vmem:[%s434 + $0x18] sm:$0xff] %v672
      %v674 = vld [vmem:[%s434 + $0x30] sm:$0xff]
      %v675 = vsel %vm667, %v557, %v674
      %676 = vst [vmem:[%s434 + $0x30] sm:$0xff] %v675
      %v677 = vld [vmem:[%s434 + $0x48] sm:$0xff]
      %v678 = vsel %vm667, %v564, %v677
      %679 = vst [vmem:[%s434 + $0x48] sm:$0xff] %v678
      %v680 = vld [vmem:[%s434 + $0x60] sm:$0xff]
      %v681 = vsel %vm667, %v571, %v680
      %682 = vst [vmem:[%s434 + $0x60] sm:$0xff] %v681
      %v683 = vld [vmem:[%s434 + $0x78] sm:$0xff]
      %v684 = vsel %vm667, %v578, %v683
      %685 = vst [vmem:[%s434 + $0x78] sm:$0xff] %v684
      %v686 = vld [vmem:[%s434 + $0x90] sm:$0xff]
      %v687 = vsel %vm667, %v585, %v686
      %688 = vst [vmem:[%s434 + $0x90] sm:$0xff] %v687
      %v689 = vld [vmem:[%s434 + $0xa8] sm:$0xff]
      %v690 = vsel %vm667, %v592, %v689
      %691 = vst [vmem:[%s434 + $0xa8] sm:$0xff] %v690
      %v692 = vld [vmem:[%s434 + $0xc0] sm:$0xff]
      %v693 = vsel %vm667, %v599, %v692
      %694 = vst [vmem:[%s434 + $0xc0] sm:$0xff] %v693
      %v695 = vld [vmem:[%s434 + $0xd8] sm:$0xff]
      %v696 = vsel %vm667, %v606, %v695
      %697 = vst [vmem:[%s434 + $0xd8] sm:$0xff] %v696
      %v698 = vld [vmem:[%s434 + $0xf0] sm:$0xff]
      %v699 = vsel %vm667, %v613, %v698
      %700 = vst [vmem:[%s434 + $0xf0] sm:$0xff] %v699
      %v701 = vld [vmem:[%s434 + $0x108] sm:$0xff]
      %v702 = vsel %vm667, %v620, %v701
      %703 = vst [vmem:[%s434 + $0x108] sm:$0xff] %v702
      %v704 = vld [vmem:[%s434 + $0x120] sm:$0xff]
      %v705 = vsel %vm667, %v627, %v704
      %706 = vst [vmem:[%s434 + $0x120] sm:$0xff] %v705
      %v707 = vld [vmem:[%s434 + $0x138] sm:$0xff]
      %v708 = vsel %vm667, %v634, %v707
      %709 = vst [vmem:[%s434 + $0x138] sm:$0xff] %v708
      %v710 = vld [vmem:[%s434 + $0x150] sm:$0xff]
      %v711 = vsel %vm667, %v641, %v710
      %712 = vst [vmem:[%s434 + $0x150] sm:$0xff] %v711
      %v713 = vld [vmem:[%s434 + $0x168] sm:$0xff]
      %v714 = vsel %vm667, %v648, %v713
      %715 = vst [vmem:[%s434 + $0x168] sm:$0xff] %v714
      %716 = vst [vmem:[%s434 + $0x8] sm:$0xff] %v411
      %717 = vst [vmem:[%s434 + $0x20] sm:$0xff] %v412
      %718 = vst [vmem:[%s434 + $0x38] sm:$0xff] %v413
      %719 = vst [vmem:[%s434 + $0x50] sm:$0xff] %v414
      %720 = vst [vmem:[%s434 + $0x68] sm:$0xff] %v415
      %721 = vst [vmem:[%s434 + $0x80] sm:$0xff] %v416
      %722 = vst [vmem:[%s434 + $0x98] sm:$0xff] %v417
      %723 = vst [vmem:[%s434 + $0xb0] sm:$0xff] %v418
      %724 = vst [vmem:[%s434 + $0xc8] sm:$0xff] %v419
      %725 = vst [vmem:[%s434 + $0xe0] sm:$0xff] %v420
      %726 = vst [vmem:[%s434 + $0xf8] sm:$0xff] %v421
      %727 = vst [vmem:[%s434 + $0x110] sm:$0xff] %v422
      %728 = vst [vmem:[%s434 + $0x128] sm:$0xff] %v423
      %729 = vst [vmem:[%s434 + $0x140] sm:$0xff] %v424
      %730 = vst [vmem:[%s434 + $0x158] sm:$0xff] %v425
      %731 = vst [vmem:[%s434 + $0x170] sm:$0xff] %v426
      %v732 = vrot.slane %v541, 1
      %v733 = vor.u32 %v538, %v732
      %v734 = vrot.slane %v548, 1
      %v735 = vor.u32 %v545, %v734
      %v736 = vrot.slane %v555, 1
      %v737 = vor.u32 %v552, %v736
      %v738 = vrot.slane %v562, 1
      %v739 = vor.u32 %v559, %v738
      %v740 = vrot.slane %v569, 1
      %v741 = vor.u32 %v566, %v740
      %v742 = vrot.slane %v576, 1
      %v743 = vor.u32 %v573, %v742
      %v744 = vrot.slane %v583, 1
      %v745 = vor.u32 %v580, %v744
      %v746 = vrot.slane %v590, 1
      %v747 = vor.u32 %v587, %v746
      %v748 = vrot.slane %v597, 1
      %v749 = vor.u32 %v594, %v748
      %v750 = vrot.slane %v604, 1
      %v751 = vor.u32 %v601, %v750
      %v752 = vrot.slane %v611, 1
      %v753 = vor.u32 %v608, %v752
      %v754 = vrot.slane %v618, 1
      %v755 = vor.u32 %v615, %v754
      %v756 = vrot.slane %v625, 1
      %v757 = vor.u32 %v622, %v756
      %v758 = vrot.slane %v632, 1
      %v759 = vor.u32 %v629, %v758
      %v760 = vrot.slane %v639, 1
      %v761 = vor.u32 %v636, %v760
      %v762 = vrot.slane %v646, 1
      %v763 = vor.u32 %v643, %v762
      %vm780 = vsmask.f32 7424
      %vm781 = vmand %vm665, %vm780
      %v782 = vld [vmem:[%s434 + $0x10] sm:$0xff]
      %v783 = vsel %vm781, %v733, %v782
      %784 = vst [vmem:[%s434 + $0x10] sm:$0xff] %v783
      %v785 = vld [vmem:[%s434 + $0x28] sm:$0xff]
      %v786 = vsel %vm781, %v735, %v785
      %787 = vst [vmem:[%s434 + $0x28] sm:$0xff] %v786
      %v788 = vld [vmem:[%s434 + $0x40] sm:$0xff]
      %v789 = vsel %vm781, %v737, %v788
      %790 = vst [vmem:[%s434 + $0x40] sm:$0xff] %v789
      %v791 = vld [vmem:[%s434 + $0x58] sm:$0xff]
      %v792 = vsel %vm781, %v739, %v791
      %793 = vst [vmem:[%s434 + $0x58] sm:$0xff] %v792
      %v794 = vld [vmem:[%s434 + $0x70] sm:$0xff]
      %v795 = vsel %vm781, %v741, %v794
      %796 = vst [vmem:[%s434 + $0x70] sm:$0xff] %v795
      %v797 = vld [vmem:[%s434 + $0x88] sm:$0xff]
      %v798 = vsel %vm781, %v743, %v797
      %799 = vst [vmem:[%s434 + $0x88] sm:$0xff] %v798
      %v800 = vld [vmem:[%s434 + $0xa0] sm:$0xff]
      %v801 = vsel %vm781, %v745, %v800
      %802 = vst [vmem:[%s434 + $0xa0] sm:$0xff] %v801
      %v803 = vld [vmem:[%s434 + $0xb8] sm:$0xff]
      %v804 = vsel %vm781, %v747, %v803
      %805 = vst [vmem:[%s434 + $0xb8] sm:$0xff] %v804
      %v806 = vld [vmem:[%s434 + $0xd0] sm:$0xff]
      %v807 = vsel %vm781, %v749, %v806
      %808 = vst [vmem:[%s434 + $0xd0] sm:$0xff] %v807
      %v809 = vld [vmem:[%s434 + $0xe8] sm:$0xff]
      %v810 = vsel %vm781, %v751, %v809
      %811 = vst [vmem:[%s434 + $0xe8] sm:$0xff] %v810
      %v812 = vld [vmem:[%s434 + $0x100] sm:$0xff]
      %v813 = vsel %vm781, %v753, %v812
      %814 = vst [vmem:[%s434 + $0x100] sm:$0xff] %v813
      %v815 = vld [vmem:[%s434 + $0x118] sm:$0xff]
      %v816 = vsel %vm781, %v755, %v815
      %817 = vst [vmem:[%s434 + $0x118] sm:$0xff] %v816
      %v818 = vld [vmem:[%s434 + $0x130] sm:$0xff]
      %v819 = vsel %vm781, %v757, %v818
      %820 = vst [vmem:[%s434 + $0x130] sm:$0xff] %v819
      %v821 = vld [vmem:[%s434 + $0x148] sm:$0xff]
      %v822 = vsel %vm781, %v759, %v821
      %823 = vst [vmem:[%s434 + $0x148] sm:$0xff] %v822
      %v824 = vld [vmem:[%s434 + $0x160] sm:$0xff]
      %v825 = vsel %vm781, %v761, %v824
      %826 = vst [vmem:[%s434 + $0x160] sm:$0xff] %v825
      %v827 = vld [vmem:[%s434 + $0x178] sm:$0xff]
      %v828 = vsel %vm781, %v763, %v827
      %829 = vst [vmem:[%s434 + $0x178] sm:$0xff] %v828
      %v830 = vld [vmem:[#allocation2] sm:$0xff]
      %v831 = vld [vmem:[#allocation2 + $0x8] sm:$0xff]
      %v832 = vld [vmem:[#allocation2 + $0x10] sm:$0xff]
      %v833 = vld [vmem:[#allocation2 + $0x18] sm:$0xff]
      %v834 = vld [vmem:[#allocation2 + $0x20] sm:$0xff]
      %v835 = vld [vmem:[#allocation2 + $0x28] sm:$0xff]
      %v836 = vld [vmem:[#allocation2 + $0x30] sm:$0xff]
      %v837 = vld [vmem:[#allocation2 + $0x38] sm:$0xff]
      %v838 = vld [vmem:[#allocation2 + $0x40] sm:$0xff]
      %v839 = vld [vmem:[#allocation2 + $0x48] sm:$0xff]
      %v840 = vld [vmem:[#allocation2 + $0x50] sm:$0xff]
      %v841 = vld [vmem:[#allocation2 + $0x58] sm:$0xff]
      %v842 = vld [vmem:[#allocation2 + $0x60] sm:$0xff]
      %v843 = vld [vmem:[#allocation2 + $0x68] sm:$0xff]
      %v844 = vld [vmem:[#allocation2 + $0x70] sm:$0xff]
      %v845 = vld [vmem:[#allocation2 + $0x78] sm:$0xff]
      %v846 = vld [vmem:[#allocation2 + $0x80] sm:$0xff]
      %v847 = vld [vmem:[#allocation2 + $0x88] sm:$0xff]
      %v848 = vld [vmem:[#allocation2 + $0x90] sm:$0xff]
      %v849 = vld [vmem:[#allocation2 + $0x98] sm:$0xff]
      %v850 = vld [vmem:[#allocation2 + $0xa0] sm:$0xff]
      %v851 = vld [vmem:[#allocation2 + $0xa8] sm:$0xff]
      %v852 = vld [vmem:[#allocation2 + $0xb0] sm:$0xff]
      %v853 = vld [vmem:[#allocation2 + $0xb8] sm:$0xff]
      %v854 = vld [vmem:[#allocation2 + $0xc0] sm:$0xff]
      %v855 = vld [vmem:[#allocation2 + $0xc8] sm:$0xff]
      %v856 = vld [vmem:[#allocation2 + $0xd0] sm:$0xff]
      %v857 = vld [vmem:[#allocation2 + $0xd8] sm:$0xff]
      %v858 = vld [vmem:[#allocation2 + $0xe0] sm:$0xff]
      %v859 = vld [vmem:[#allocation2 + $0xe8] sm:$0xff]
      %v860 = vld [vmem:[#allocation2 + $0xf0] sm:$0xff]
      %v861 = vld [vmem:[#allocation2 + $0xf8] sm:$0xff]
      %v862 = vld [vmem:[#allocation2 + $0x100] sm:$0xff]
      %v863 = vld [vmem:[#allocation2 + $0x108] sm:$0xff]
      %v864 = vld [vmem:[#allocation2 + $0x110] sm:$0xff]
      %v865 = vld [vmem:[#allocation2 + $0x118] sm:$0xff]
      %v866 = vld [vmem:[#allocation2 + $0x120] sm:$0xff]
      %v867 = vld [vmem:[#allocation2 + $0x128] sm:$0xff]
      %v868 = vld [vmem:[#allocation2 + $0x130] sm:$0xff]
      %v869 = vld [vmem:[#allocation2 + $0x138] sm:$0xff]
      %v870 = vld [vmem:[#allocation2 + $0x140] sm:$0xff]
      %v871 = vld [vmem:[#allocation2 + $0x148] sm:$0xff]
      %v872 = vld [vmem:[#allocation2 + $0x150] sm:$0xff]
      %v873 = vld [vmem:[#allocation2 + $0x158] sm:$0xff]
      %v874 = vld [vmem:[#allocation2 + $0x160] sm:$0xff]
      %v875 = vld [vmem:[#allocation2 + $0x168] sm:$0xff]
      %v876 = vld [vmem:[#allocation2 + $0x170] sm:$0xff]
      %v877 = vld [vmem:[#allocation2 + $0x178] sm:$0xff]
      %v878 = vld [vmem:[%s3] sm:$0xf]
      %v879 = vld [vmem:[%s3 + $0x4] sm:$0xf]
      %v880 = vld [vmem:[%s3 + $0x8] sm:$0xf]
      %v881 = vld [vmem:[%s3 + $0xc] sm:$0xf]
      %v882 = vld [vmem:[%s3 + $0x10] sm:$0xf]
      %v883 = vld [vmem:[%s3 + $0x14] sm:$0xf]
      %v884 = vld [vmem:[%s3 + $0x18] sm:$0xf]
      %v885 = vld [vmem:[%s3 + $0x1c] sm:$0xf]
      %v886 = vld [vmem:[%s3 + $0x20] sm:$0xf]
      %v887 = vld [vmem:[%s3 + $0x24] sm:$0xf]
      %v888 = vld [vmem:[%s3 + $0x28] sm:$0xf]
      %v889 = vld [vmem:[%s3 + $0x2c] sm:$0xf]
      %v890 = vld [vmem:[%s3 + $0x30] sm:$0xf]
      %v891 = vld [vmem:[%s3 + $0x34] sm:$0xf]
      %v892 = vld [vmem:[%s3 + $0x38] sm:$0xf]
      %v893 = vld [vmem:[%s3 + $0x3c] sm:$0xf]
      %v894 = vld [vmem:[%s3 + $0x40] sm:$0xf]
      %v895 = vld [vmem:[%s3 + $0x44] sm:$0xf]
      %v896 = vld [vmem:[%s3 + $0x48] sm:$0xf]
      %v897 = vld [vmem:[%s3 + $0x4c] sm:$0xf]
      %v898 = vld [vmem:[%s3 + $0x50] sm:$0xf]
      %v899 = vld [vmem:[%s3 + $0x54] sm:$0xf]
      %v900 = vld [vmem:[%s3 + $0x58] sm:$0xf]
      %v901 = vld [vmem:[%s3 + $0x5c] sm:$0xf]
      %v902 = vld [vmem:[%s3 + $0x60] sm:$0xf]
      %v903 = vld [vmem:[%s3 + $0x64] sm:$0xf]
      %v904 = vld [vmem:[%s3 + $0x68] sm:$0xf]
      %v905 = vld [vmem:[%s3 + $0x6c] sm:$0xf]
      %v906 = vld [vmem:[%s3 + $0x70] sm:$0xf]
      %v907 = vld [vmem:[%s3 + $0x74] sm:$0xf]
      %v908 = vld [vmem:[%s3 + $0x78] sm:$0xf]
      %v909 = vld [vmem:[%s3 + $0x7c] sm:$0xf]
      %v910 = vld [vmem:[%s3 + $0x80] sm:$0xf]
      %v911 = vld [vmem:[%s3 + $0x84] sm:$0xf]
      %v912 = vld [vmem:[%s3 + $0x88] sm:$0xf]
      %v913 = vld [vmem:[%s3 + $0x8c] sm:$0xf]
      %v914 = vld [vmem:[%s3 + $0x90] sm:$0xf]
      %v915 = vld [vmem:[%s3 + $0x94] sm:$0xf]
      %v916 = vld [vmem:[%s3 + $0x98] sm:$0xf]
      %v917 = vld [vmem:[%s3 + $0x9c] sm:$0xf]
      %v918 = vld [vmem:[%s3 + $0xa0] sm:$0xf]
      %v919 = vld [vmem:[%s3 + $0xa4] sm:$0xf]
      %v920 = vld [vmem:[%s3 + $0xa8] sm:$0xf]
      %v921 = vld [vmem:[%s3 + $0xac] sm:$0xf]
      %v922 = vld [vmem:[%s3 + $0xb0] sm:$0xf]
      %v923 = vld [vmem:[%s3 + $0xb4] sm:$0xf]
      %v924 = vld [vmem:[%s3 + $0xb8] sm:$0xf]
      %v925 = vld [vmem:[%s3 + $0xbc] sm:$0xf]
      %v926 = vld [vmem:[%s434] sm:$0xff]
      %v927 = vld [vmem:[%s434 + $0x8] sm:$0xff]
      %v928 = vld [vmem:[%s434 + $0x10] sm:$0xff]
      %v929 = vld [vmem:[%s434 + $0x18] sm:$0xff]
      %v930 = vld [vmem:[%s434 + $0x20] sm:$0xff]
      %v931 = vld [vmem:[%s434 + $0x28] sm:$0xff]
      %v932 = vld [vmem:[%s434 + $0x30] sm:$0xff]
      %v933 = vld [vmem:[%s434 + $0x38] sm:$0xff]
      %v934 = vld [vmem:[%s434 + $0x40] sm:$0xff]
      %v935 = vld [vmem:[%s434 + $0x48] sm:$0xff]
      %v936 = vld [vmem:[%s434 + $0x50] sm:$0xff]
      %v937 = vld [vmem:[%s434 + $0x58] sm:$0xff]
      %v938 = vld [vmem:[%s434 + $0x60] sm:$0xff]
      %v939 = vld [vmem:[%s434 + $0x68] sm:$0xff]
      %v940 = vld [vmem:[%s434 + $0x70] sm:$0xff]
      %v941 = vld [vmem:[%s434 + $0x78] sm:$0xff]
      %v942 = vld [vmem:[%s434 + $0x80] sm:$0xff]
      %v943 = vld [vmem:[%s434 + $0x88] sm:$0xff]
      %v944 = vld [vmem:[%s434 + $0x90] sm:$0xff]
      %v945 = vld [vmem:[%s434 + $0x98] sm:$0xff]
      %v946 = vld [vmem:[%s434 + $0xa0] sm:$0xff]
      %v947 = vld [vmem:[%s434 + $0xa8] sm:$0xff]
      %v948 = vld [vmem:[%s434 + $0xb0] sm:$0xff]
      %v949 = vld [vmem:[%s434 + $0xb8] sm:$0xff]
      %v950 = vld [vmem:[%s434 + $0xc0] sm:$0xff]
      %v951 = vld [vmem:[%s434 + $0xc8] sm:$0xff]
      %v952 = vld [vmem:[%s434 + $0xd0] sm:$0xff]
      %v953 = vld [vmem:[%s434 + $0xd8] sm:$0xff]
      %v954 = vld [vmem:[%s434 + $0xe0] sm:$0xff]
      %v955 = vld [vmem:[%s434 + $0xe8] sm:$0xff]
      %v956 = vld [vmem:[%s434 + $0xf0] sm:$0xff]
      %v957 = vld [vmem:[%s434 + $0xf8] sm:$0xff]
      %v958 = vld [vmem:[%s434 + $0x100] sm:$0xff]
      %v959 = vld [vmem:[%s434 + $0x108] sm:$0xff]
      %v960 = vld [vmem:[%s434 + $0x110] sm:$0xff]
      %v961 = vld [vmem:[%s434 + $0x118] sm:$0xff]
      %v962 = vld [vmem:[%s434 + $0x120] sm:$0xff]
      %v963 = vld [vmem:[%s434 + $0x128] sm:$0xff]
      %v964 = vld [vmem:[%s434 + $0x130] sm:$0xff]
      %v965 = vld [vmem:[%s434 + $0x138] sm:$0xff]
      %v966 = vld [vmem:[%s434 + $0x140] sm:$0xff]
      %v967 = vld [vmem:[%s434 + $0x148] sm:$0xff]
      %v968 = vld [vmem:[%s434 + $0x150] sm:$0xff]
      %v969 = vld [vmem:[%s434 + $0x158] sm:$0xff]
      %v970 = vld [vmem:[%s434 + $0x160] sm:$0xff]
      %v971 = vld [vmem:[%s434 + $0x168] sm:$0xff]
      %v972 = vld [vmem:[%s434 + $0x170] sm:$0xff]
      %v973 = vld [vmem:[%s434 + $0x178] sm:$0xff]
      %s974 = scalar_lea.vmem %s3, 192
      %v975 = vld [vmem:[%s974] sm:$0xf]
      %v976 = vld [vmem:[%s974 + $0x4] sm:$0xf]
      %v977 = vld [vmem:[%s974 + $0x8] sm:$0xf]
      %v978 = vld [vmem:[%s974 + $0xc] sm:$0xf]
      %v979 = vld [vmem:[%s974 + $0x10] sm:$0xf]
      %v980 = vld [vmem:[%s974 + $0x14] sm:$0xf]
      %v981 = vld [vmem:[%s974 + $0x18] sm:$0xf]
      %v982 = vld [vmem:[%s974 + $0x1c] sm:$0xf]
      %v983 = vld [vmem:[%s974 + $0x20] sm:$0xf]
      %v984 = vld [vmem:[%s974 + $0x24] sm:$0xf]
      %v985 = vld [vmem:[%s974 + $0x28] sm:$0xf]
      %v986 = vld [vmem:[%s974 + $0x2c] sm:$0xf]
      %v987 = vld [vmem:[%s974 + $0x30] sm:$0xf]
      %v988 = vld [vmem:[%s974 + $0x34] sm:$0xf]
      %v989 = vld [vmem:[%s974 + $0x38] sm:$0xf]
      %v990 = vld [vmem:[%s974 + $0x3c] sm:$0xf]
      %v991 = vld [vmem:[%s974 + $0x40] sm:$0xf]
      %v992 = vld [vmem:[%s974 + $0x44] sm:$0xf]
      %v993 = vld [vmem:[%s974 + $0x48] sm:$0xf]
      %v994 = vld [vmem:[%s974 + $0x4c] sm:$0xf]
      %v995 = vld [vmem:[%s974 + $0x50] sm:$0xf]
      %v996 = vld [vmem:[%s974 + $0x54] sm:$0xf]
      %v997 = vld [vmem:[%s974 + $0x58] sm:$0xf]
      %v998 = vld [vmem:[%s974 + $0x5c] sm:$0xf]
      %v999 = vld [vmem:[%s974 + $0x60] sm:$0xf]
      %v1000 = vld [vmem:[%s974 + $0x64] sm:$0xf]
      %v1001 = vld [vmem:[%s974 + $0x68] sm:$0xf]
      %v1002 = vld [vmem:[%s974 + $0x6c] sm:$0xf]
      %v1003 = vld [vmem:[%s974 + $0x70] sm:$0xf]
      %v1004 = vld [vmem:[%s974 + $0x74] sm:$0xf]
      %v1005 = vld [vmem:[%s974 + $0x78] sm:$0xf]
      %v1006 = vld [vmem:[%s974 + $0x7c] sm:$0xf]
      %v1007 = vld [vmem:[%s974 + $0x80] sm:$0xf]
      %v1008 = vld [vmem:[%s974 + $0x84] sm:$0xf]
      %v1009 = vld [vmem:[%s974 + $0x88] sm:$0xf]
      %v1010 = vld [vmem:[%s974 + $0x8c] sm:$0xf]
      %v1011 = vld [vmem:[%s974 + $0x90] sm:$0xf]
      %v1012 = vld [vmem:[%s974 + $0x94] sm:$0xf]
      %v1013 = vld [vmem:[%s974 + $0x98] sm:$0xf]
      %v1014 = vld [vmem:[%s974 + $0x9c] sm:$0xf]
      %v1015 = vld [vmem:[%s974 + $0xa0] sm:$0xf]
      %v1016 = vld [vmem:[%s974 + $0xa4] sm:$0xf]
      %v1017 = vld [vmem:[%s974 + $0xa8] sm:$0xf]
      %v1018 = vld [vmem:[%s974 + $0xac] sm:$0xf]
      %v1019 = vld [vmem:[%s974 + $0xb0] sm:$0xf]
      %v1020 = vld [vmem:[%s974 + $0xb4] sm:$0xf]
      %v1021 = vld [vmem:[%s974 + $0xb8] sm:$0xf]
      %v1022 = vld [vmem:[%s974 + $0xbc] sm:$0xf]
      %v1071 = vunpack.c.l.b16 %v975
      %v1072 = vunpack.c.l.b16 %v976
      %v1073 = vunpack.c.l.b16 %v977
      %v1074 = vunpack.c.l.b16 %v978
      %v1075 = vunpack.c.l.b16 %v979
      %v1076 = vunpack.c.l.b16 %v980
      %v1077 = vunpack.c.l.b16 %v981
      %v1078 = vunpack.c.l.b16 %v982
      %v1079 = vunpack.c.l.b16 %v983
      %v1080 = vunpack.c.l.b16 %v984
      %v1081 = vunpack.c.l.b16 %v985
      %v1082 = vunpack.c.l.b16 %v986
      %v1083 = vunpack.c.l.b16 %v987
      %v1084 = vunpack.c.l.b16 %v988
      %v1085 = vunpack.c.l.b16 %v989
      %v1086 = vunpack.c.l.b16 %v990
      %v1087 = vunpack.c.l.b16 %v991
      %v1088 = vunpack.c.l.b16 %v992
      %v1089 = vunpack.c.l.b16 %v993
      %v1090 = vunpack.c.l.b16 %v994
      %v1091 = vunpack.c.l.b16 %v995
      %v1092 = vunpack.c.l.b16 %v996
      %v1093 = vunpack.c.l.b16 %v997
      %v1094 = vunpack.c.l.b16 %v998
      %v1095 = vunpack.c.l.b16 %v999
      %v1096 = vunpack.c.l.b16 %v1000
      %v1097 = vunpack.c.l.b16 %v1001
      %v1098 = vunpack.c.l.b16 %v1002
      %v1099 = vunpack.c.l.b16 %v1003
      %v1100 = vunpack.c.l.b16 %v1004
      %v1101 = vunpack.c.l.b16 %v1005
      %v1102 = vunpack.c.l.b16 %v1006
      %v1103 = vunpack.c.l.b16 %v1007
      %v1104 = vunpack.c.l.b16 %v1008
      %v1105 = vunpack.c.l.b16 %v1009
      %v1106 = vunpack.c.l.b16 %v1010
      %v1107 = vunpack.c.l.b16 %v1011
      %v1108 = vunpack.c.l.b16 %v1012
      %v1109 = vunpack.c.l.b16 %v1013
      %v1110 = vunpack.c.l.b16 %v1014
      %v1111 = vunpack.c.l.b16 %v1015
      %v1112 = vunpack.c.l.b16 %v1016
      %v1113 = vunpack.c.l.b16 %v1017
      %v1114 = vunpack.c.l.b16 %v1018
      %v1115 = vunpack.c.l.b16 %v1019
      %v1116 = vunpack.c.l.b16 %v1020
      %v1117 = vunpack.c.l.b16 %v1021
      %v1118 = vunpack.c.l.b16 %v1022
      %v1119 = vpack.c.b16 %v1072, %v1071
      %v1120 = vpack.c.b16 %v1074, %v1073
      %v1121 = vpack.c.b16 %v1076, %v1075
      %v1122 = vpack.c.b16 %v1078, %v1077
      %v1123 = vpack.c.b16 %v1080, %v1079
      %v1124 = vpack.c.b16 %v1082, %v1081
      %v1125 = vpack.c.b16 %v1084, %v1083
      %v1126 = vpack.c.b16 %v1086, %v1085
      %v1127 = vpack.c.b16 %v1088, %v1087
      %v1128 = vpack.c.b16 %v1090, %v1089
      %v1129 = vpack.c.b16 %v1092, %v1091
      %v1130 = vpack.c.b16 %v1094, %v1093
      %v1131 = vpack.c.b16 %v1096, %v1095
      %v1132 = vpack.c.b16 %v1098, %v1097
      %v1133 = vpack.c.b16 %v1100, %v1099
      %v1134 = vpack.c.b16 %v1102, %v1101
      %v1135 = vpack.c.b16 %v1104, %v1103
      %v1136 = vpack.c.b16 %v1106, %v1105
      %v1137 = vpack.c.b16 %v1108, %v1107
      %v1138 = vpack.c.b16 %v1110, %v1109
      %v1139 = vpack.c.b16 %v1112, %v1111
      %v1140 = vpack.c.b16 %v1114, %v1113
      %v1141 = vpack.c.b16 %v1116, %v1115
      %v1142 = vpack.c.b16 %v1118, %v1117
      %1167 = vmatprep.subr.bf16.mxu0 0
      %1168 = vmatpush1.bf16.msra.mxu0 %v1119
      %1169 = vmatprep.subr.bf16.mxu0 0
      %1170 = vmatpush1.bf16.msra.mxu0 %v1120
      %1171 = vmatprep.subr.bf16.mxu0 0
      %1172 = vmatpush1.bf16.msra.mxu0 %v1121
      %1173 = vmatprep.subr.bf16.mxu0 0
      %1174 = vmatpush1.bf16.msra.mxu0 %v1122
      %1175 = vmatprep.subr.bf16.mxu0 0
      %1176 = vmatpush1.bf16.msra.mxu0 %v1123
      %1177 = vmatprep.subr.bf16.mxu0 0
      %1178 = vmatpush1.bf16.msra.mxu0 %v1124
      %1179 = vmatprep.subr.bf16.mxu0 0
      %1180 = vmatpush1.bf16.msra.mxu0 %v1125
      %1181 = vmatprep.subr.bf16.mxu0 0
      %1182 = vmatpush1.bf16.msra.mxu0 %v1126
      %1183 = vmatprep.subr.bf16.mxu0 0
      %1184 = vmatpush1.bf16.msra.mxu0 %v1127
      %1185 = vmatprep.subr.bf16.mxu0 0
      %1186 = vmatpush1.bf16.msra.mxu0 %v1128
      %1187 = vmatprep.subr.bf16.mxu0 0
      %1188 = vmatpush1.bf16.msra.mxu0 %v1129
      %1189 = vmatprep.subr.bf16.mxu0 0
      %1190 = vmatpush1.bf16.msra.mxu0 %v1130
      %1191 = vmatprep.subr.bf16.mxu0 0
      %1192 = vmatpush1.bf16.msra.mxu0 %v1131
      %1193 = vmatprep.subr.bf16.mxu0 0
      %1194 = vmatpush1.bf16.msra.mxu0 %v1132
      %1195 = vmatprep.subr.bf16.mxu0 0
      %1196 = vmatpush1.bf16.msra.mxu0 %v1133
      %1197 = vmatprep.subr.bf16.mxu0 0
      %1198 = vmatpush1.bf16.msra.mxu0 %v1134
      %1199 = vmatprep.mubr.bf16.mxu0 %v927
      %1200 = vmatmul.mubr.bf16.gmra.mrb[0].mxu0 %v926
      %v1201 = vpop.f32.mrb[0].mxu0
      %v1202 = vadd.f32 0.0, %v1201
      %v1203 = vpop.f32.mrb[0].mxu0
      %v1204 = vpop.f32.mrb[0].mxu0
      %v1205 = vadd.f32 0.0, %v1204
      %v1206 = vpop.f32.mrb[0].mxu0
      %1207 = vmatprep.mubr.bf16.mxu0 %v930
      %1208 = vmatmul.mubr.bf16.gmra.mrb[0].mxu0 %v929
      %v1209 = vpop.f32.mrb[0].mxu0
      %v1210 = vadd.f32 0.0, %v1209
      %v1211 = vpop.f32.mrb[0].mxu0
      %v1212 = vpop.f32.mrb[0].mxu0
      %v1213 = vadd.f32 0.0, %v1212
      %v1214 = vpop.f32.mrb[0].mxu0
      %1215 = vmatprep.mubr.bf16.mxu0 %v933
      %1216 = vmatmul.mubr.bf16.gmra.mrb[0].mxu0 %v932
      %v1217 = vpop.f32.mrb[0].mxu0
      %v1218 = vadd.f32 0.0, %v1217
      %v1219 = vpop.f32.mrb[0].mxu0
      %v1220 = vpop.f32.mrb[0].mxu0
      %v1221 = vadd.f32 0.0, %v1220
      %v1222 = vpop.f32.mrb[0].mxu0
      %1223 = vmatprep.mubr.bf16.mxu0 %v936
      %1224 = vmatmul.mubr.bf16.gmra.mrb[0].mxu0 %v935
      %v1225 = vpop.f32.mrb[0].mxu0
      %v1226 = vadd.f32 0.0, %v1225
      %v1227 = vpop.f32.mrb[0].mxu0
      %v1228 = vpop.f32.mrb[0].mxu0
      %v1229 = vadd.f32 0.0, %v1228
      %v1230 = vpop.f32.mrb[0].mxu0
      %1231 = vmatprep.mubr.bf16.mxu0 %v939
      %1232 = vmatmul.mubr.bf16.gmra.mrb[0].mxu0 %v938
      %v1233 = vpop.f32.mrb[0].mxu0
      %v1234 = vadd.f32 0.0, %v1233
      %v1235 = vpop.f32.mrb[0].mxu0
      %v1236 = vpop.f32.mrb[0].mxu0
      %v1237 = vadd.f32 0.0, %v1236
      %v1238 = vpop.f32.mrb[0].mxu0
      %1239 = vmatprep.mubr.bf16.mxu0 %v942
      %1240 = vmatmul.mubr.bf16.gmra.mrb[0].mxu0 %v941
      %v1241 = vpop.f32.mrb[0].mxu0
      %v1242 = vadd.f32 0.0, %v1241
      %v1243 = vpop.f32.mrb[0].mxu0
      %v1244 = vpop.f32.mrb[0].mxu0
      %v1245 = vadd.f32 0.0, %v1244
      %v1246 = vpop.f32.mrb[0].mxu0
      %1247 = vmatprep.mubr.bf16.mxu0 %v945
      %1248 = vmatmul.mubr.bf16.gmra.mrb[0].mxu0 %v944
      %v1249 = vpop.f32.mrb[0].mxu0
      %v1250 = vadd.f32 0.0, %v1249
      %v1251 = vpop.f32.mrb[0].mxu0
      %v1252 = vpop.f32.mrb[0].mxu0
      %v1253 = vadd.f32 0.0, %v1252
      %v1254 = vpop.f32.mrb[0].mxu0
      %1255 = vmatprep.mubr.bf16.mxu0 %v948
      %1256 = vmatmul.mubr.bf16.gmra.mrb[0].mxu0 %v947
      %v1257 = vpop.f32.mrb[0].mxu0
      %v1258 = vadd.f32 0.0, %v1257
      %v1259 = vpop.f32.mrb[0].mxu0
      %v1260 = vpop.f32.mrb[0].mxu0
      %v1261 = vadd.f32 0.0, %v1260
      %v1262 = vpop.f32.mrb[0].mxu0
      %1263 = vmatprep.mubr.bf16.mxu0 %v951
      %1264 = vmatmul.mubr.bf16.gmra.mrb[0].mxu0 %v950
      %v1265 = vpop.f32.mrb[0].mxu0
      %v1266 = vadd.f32 0.0, %v1265
      %v1267 = vpop.f32.mrb[0].mxu0
      %v1268 = vpop.f32.mrb[0].mxu0
      %v1269 = vadd.f32 0.0, %v1268
      %v1270 = vpop.f32.mrb[0].mxu0
      %1271 = vmatprep.mubr.bf16.mxu0 %v954
      %1272 = vmatmul.mubr.bf16.gmra.mrb[0].mxu0 %v953
      %v1273 = vpop.f32.mrb[0].mxu0
      %v1274 = vadd.f32 0.0, %v1273
      %v1275 = vpop.f32.mrb[0].mxu0
      %v1276 = vpop.f32.mrb[0].mxu0
      %v1277 = vadd.f32 0.0, %v1276
      %v1278 = vpop.f32.mrb[0].mxu0
      %1279 = vmatprep.mubr.bf16.mxu0 %v957
      %1280 = vmatmul.mubr.bf16.gmra.mrb[0].mxu0 %v956
      %v1281 = vpop.f32.mrb[0].mxu0
      %v1282 = vadd.f32 0.0, %v1281
      %v1283 = vpop.f32.mrb[0].mxu0
      %v1284 = vpop.f32.mrb[0].mxu0
      %v1285 = vadd.f32 0.0, %v1284
      %v1286 = vpop.f32.mrb[0].mxu0
      %1287 = vmatprep.mubr.bf16.mxu0 %v960
      %1288 = vmatmul.mubr.bf16.gmra.mrb[0].mxu0 %v959
      %v1289 = vpop.f32.mrb[0].mxu0
      %v1290 = vadd.f32 0.0, %v1289
      %v1291 = vpop.f32.mrb[0].mxu0
      %v1292 = vpop.f32.mrb[0].mxu0
      %v1293 = vadd.f32 0.0, %v1292
      %v1294 = vpop.f32.mrb[0].mxu0
      %1295 = vmatprep.mubr.bf16.mxu0 %v963
      %1296 = vmatmul.mubr.bf16.gmra.mrb[0].mxu0 %v962
      %v1297 = vpop.f32.mrb[0].mxu0
      %v1298 = vadd.f32 0.0, %v1297
      %v1299 = vpop.f32.mrb[0].mxu0
      %v1300 = vpop.f32.mrb[0].mxu0
      %v1301 = vadd.f32 0.0, %v1300
      %v1302 = vpop.f32.mrb[0].mxu0
      %1303 = vmatprep.mubr.bf16.mxu0 %v966
      %1304 = vmatmul.mubr.bf16.gmra.mrb[0].mxu0 %v965
      %v1305 = vpop.f32.mrb[0].mxu0
      %v1306 = vadd.f32 0.0, %v1305
      %v1307 = vpop.f32.mrb[0].mxu0
      %v1308 = vpop.f32.mrb[0].mxu0
      %v1309 = vadd.f32 0.0, %v1308
      %v1310 = vpop.f32.mrb[0].mxu0
      %1311 = vmatprep.mubr.bf16.mxu0 %v969
      %1312 = vmatmul.mubr.bf16.gmra.mrb[0].mxu0 %v968
      %v1313 = vpop.f32.mrb[0].mxu0
      %v1314 = vadd.f32 0.0, %v1313
      %v1315 = vpop.f32.mrb[0].mxu0
      %v1316 = vpop.f32.mrb[0].mxu0
      %v1317 = vadd.f32 0.0, %v1316
      %v1318 = vpop.f32.mrb[0].mxu0
      %1319 = vmatprep.mubr.bf16.mxu0 %v972
      %1320 = vmatmul.mubr.bf16.gmra.mrb[0].mxu0 %v971
      %v1321 = vpop.f32.mrb[0].mxu0
      %v1322 = vadd.f32 0.0, %v1321
      %v1323 = vpop.f32.mrb[0].mxu0
      %v1324 = vpop.f32.mrb[0].mxu0
      %v1325 = vadd.f32 0.0, %v1324
      %v1326 = vpop.f32.mrb[0].mxu0
      %1327 = vdwg.mxu0
      %1328 = vmatprep.subr.bf16.mxu0 0
      %1329 = vmatpush1.bf16.msra.mxu0 %v1135
      %1330 = vmatprep.subr.bf16.mxu0 0
      %1331 = vmatpush1.bf16.msra.mxu0 %v1136
      %1332 = vmatprep.subr.bf16.mxu0 0
      %1333 = vmatpush1.bf16.msra.mxu0 %v1137
      %1334 = vmatprep.subr.bf16.mxu0 0
      %1335 = vmatpush1.bf16.msra.mxu0 %v1138
      %1336 = vmatprep.subr.bf16.mxu0 0
      %1337 = vmatpush1.bf16.msra.mxu0 %v1139
      %1338 = vmatprep.subr.bf16.mxu0 0
      %1339 = vmatpush1.bf16.msra.mxu0 %v1140
      %1340 = vmatprep.subr.bf16.mxu0 0
      %1341 = vmatpush1.bf16.msra.mxu0 %v1141
      %1342 = vmatprep.subr.bf16.mxu0 0
      %1343 = vmatpush1.bf16.msra.mxu0 %v1142
      %1344 = vmatprep.subr.bf16.mxu0 0
      %1345 = vmatpush1.bf16.msra.mxu0 0
      %1346 = vmatprep.subr.bf16.mxu0 0
      %1347 = vmatpush1.bf16.msra.mxu0 0
      %1348 = vmatprep.subr.bf16.mxu0 0
      %1349 = vmatpush1.bf16.msra.mxu0 0
      %1350 = vmatprep.subr.bf16.mxu0 0
      %1351 = vmatpush1.bf16.msra.mxu0 0
      %1352 = vmatprep.subr.bf16.mxu0 0
      %1353 = vmatpush1.bf16.msra.mxu0 0
      %1354 = vmatprep.subr.bf16.mxu0 0
      %1355 = vmatpush1.bf16.msra.mxu0 0
      %1356 = vmatprep.subr.bf16.mxu0 0
      %1357 = vmatpush1.bf16.msra.mxu0 0
      %1358 = vmatprep.subr.bf16.mxu0 0
      %1359 = vmatpush1.bf16.msra.mxu0 0
      %1360 = vmatprep.mubr.bf16.mxu0 0
      %1361 = vmatmul.mubr.bf16.gmra.mrb[0].mxu0 %v928
      %v1362 = vpop.f32.mrb[0].mxu0
      %v1363 = vadd.f32 %v1202, %v1362
      %v1364 = vpop.f32.mrb[0].mxu0
      %v1365 = vpop.f32.mrb[0].mxu0
      %v1366 = vadd.f32 %v1205, %v1365
      %v1367 = vpop.f32.mrb[0].mxu0
      %1368 = vmatprep.mubr.bf16.mxu0 0
      %1369 = vmatmul.mubr.bf16.gmra.mrb[0].mxu0 %v931
      %v1370 = vpop.f32.mrb[0].mxu0
      %v1371 = vadd.f32 %v1210, %v1370
      %v1372 = vpop.f32.mrb[0].mxu0
      %v1373 = vpop.f32.mrb[0].mxu0
      %v1374 = vadd.f32 %v1213, %v1373
      %v1375 = vpop.f32.mrb[0].mxu0
      %1376 = vmatprep.mubr.bf16.mxu0 0
      %1377 = vmatmul.mubr.bf16.gmra.mrb[0].mxu0 %v934
      %v1378 = vpop.f32.mrb[0].mxu0
      %v1379 = vadd.f32 %v1218, %v1378
      %v1380 = vpop.f32.mrb[0].mxu0
      %v1381 = vpop.f32.mrb[0].mxu0
      %v1382 = vadd.f32 %v1221, %v1381
      %v1383 = vpop.f32.mrb[0].mxu0
      %1384 = vmatprep.mubr.bf16.mxu0 0
      %1385 = vmatmul.mubr.bf16.gmra.mrb[0].mxu0 %v937
      %v1386 = vpop.f32.mrb[0].mxu0
      %v1387 = vadd.f32 %v1226, %v1386
      %v1388 = vpop.f32.mrb[0].mxu0
      %v1389 = vpop.f32.mrb[0].mxu0
      %v1390 = vadd.f32 %v1229, %v1389
      %v1391 = vpop.f32.mrb[0].mxu0
      %1392 = vmatprep.mubr.bf16.mxu0 0
      %1393 = vmatmul.mubr.bf16.gmra.mrb[0].mxu0 %v940
      %v1394 = vpop.f32.mrb[0].mxu0
      %v1395 = vadd.f32 %v1234, %v1394
      %v1396 = vpop.f32.mrb[0].mxu0
      %v1397 = vpop.f32.mrb[0].mxu0
      %v1398 = vadd.f32 %v1237, %v1397
      %v1399 = vpop.f32.mrb[0].mxu0
      %1400 = vmatprep.mubr.bf16.mxu0 0
      %1401 = vmatmul.mubr.bf16.gmra.mrb[0].mxu0 %v943
      %v1402 = vpop.f32.mrb[0].mxu0
      %v1403 = vadd.f32 %v1242, %v1402
      %v1404 = vpop.f32.mrb[0].mxu0
      %v1405 = vpop.f32.mrb[0].mxu0
      %v1406 = vadd.f32 %v1245, %v1405
      %v1407 = vpop.f32.mrb[0].mxu0
      %1408 = vmatprep.mubr.bf16.mxu0 0
      %1409 = vmatmul.mubr.bf16.gmra.mrb[0].mxu0 %v946
      %v1410 = vpop.f32.mrb[0].mxu0
      %v1411 = vadd.f32 %v1250, %v1410
      %v1412 = vpop.f32.mrb[0].mxu0
      %v1413 = vpop.f32.mrb[0].mxu0
      %v1414 = vadd.f32 %v1253, %v1413
      %v1415 = vpop.f32.mrb[0].mxu0
      %1416 = vmatprep.mubr.bf16.mxu0 0
      %1417 = vmatmul.mubr.bf16.gmra.mrb[0].mxu0 %v949
      %v1418 = vpop.f32.mrb[0].mxu0
      %v1419 = vadd.f32 %v1258, %v1418
      %v1420 = vpop.f32.mrb[0].mxu0
      %v1421 = vpop.f32.mrb[0].mxu0
      %v1422 = vadd.f32 %v1261, %v1421
      %v1423 = vpop.f32.mrb[0].mxu0
      %1424 = vmatprep.mubr.bf16.mxu0 0
      %1425 = vmatmul.mubr.bf16.gmra.mrb[0].mxu0 %v952
      %v1426 = vpop.f32.mrb[0].mxu0
      %v1427 = vadd.f32 %v1266, %v1426
      %v1428 = vpop.f32.mrb[0].mxu0
      %v1429 = vpop.f32.mrb[0].mxu0
      %v1430 = vadd.f32 %v1269, %v1429
      %v1431 = vpop.f32.mrb[0].mxu0
      %1432 = vmatprep.mubr.bf16.mxu0 0
      %1433 = vmatmul.mubr.bf16.gmra.mrb[0].mxu0 %v955
      %v1434 = vpop.f32.mrb[0].mxu0
      %v1435 = vadd.f32 %v1274, %v1434
      %v1436 = vpop.f32.mrb[0].mxu0
      %v1437 = vpop.f32.mrb[0].mxu0
      %v1438 = vadd.f32 %v1277, %v1437
      %v1439 = vpop.f32.mrb[0].mxu0
      %1440 = vmatprep.mubr.bf16.mxu0 0
      %1441 = vmatmul.mubr.bf16.gmra.mrb[0].mxu0 %v958
      %v1442 = vpop.f32.mrb[0].mxu0
      %v1443 = vadd.f32 %v1282, %v1442
      %v1444 = vpop.f32.mrb[0].mxu0
      %v1445 = vpop.f32.mrb[0].mxu0
      %v1446 = vadd.f32 %v1285, %v1445
      %v1447 = vpop.f32.mrb[0].mxu0
      %1448 = vmatprep.mubr.bf16.mxu0 0
      %1449 = vmatmul.mubr.bf16.gmra.mrb[0].mxu0 %v961
      %v1450 = vpop.f32.mrb[0].mxu0
      %v1451 = vadd.f32 %v1290, %v1450
      %v1452 = vpop.f32.mrb[0].mxu0
      %v1453 = vpop.f32.mrb[0].mxu0
      %v1454 = vadd.f32 %v1293, %v1453
      %v1455 = vpop.f32.mrb[0].mxu0
      %1456 = vmatprep.mubr.bf16.mxu0 0
      %1457 = vmatmul.mubr.bf16.gmra.mrb[0].mxu0 %v964
      %v1458 = vpop.f32.mrb[0].mxu0
      %v1459 = vadd.f32 %v1298, %v1458
      %v1460 = vpop.f32.mrb[0].mxu0
      %v1461 = vpop.f32.mrb[0].mxu0
      %v1462 = vadd.f32 %v1301, %v1461
      %v1463 = vpop.f32.mrb[0].mxu0
      %1464 = vmatprep.mubr.bf16.mxu0 0
      %1465 = vmatmul.mubr.bf16.gmra.mrb[0].mxu0 %v967
      %v1466 = vpop.f32.mrb[0].mxu0
      %v1467 = vadd.f32 %v1306, %v1466
      %v1468 = vpop.f32.mrb[0].mxu0
      %v1469 = vpop.f32.mrb[0].mxu0
      %v1470 = vadd.f32 %v1309, %v1469
      %v1471 = vpop.f32.mrb[0].mxu0
      %1472 = vmatprep.mubr.bf16.mxu0 0
      %1473 = vmatmul.mubr.bf16.gmra.mrb[0].mxu0 %v970
      %v1474 = vpop.f32.mrb[0].mxu0
      %v1475 = vadd.f32 %v1314, %v1474
      %v1476 = vpop.f32.mrb[0].mxu0
      %v1477 = vpop.f32.mrb[0].mxu0
      %v1478 = vadd.f32 %v1317, %v1477
      %v1479 = vpop.f32.mrb[0].mxu0
      %1480 = vmatprep.mubr.bf16.mxu0 0
      %1481 = vmatmul.mubr.bf16.gmra.mrb[0].mxu0 %v973
      %v1482 = vpop.f32.mrb[0].mxu0
      %v1483 = vadd.f32 %v1322, %v1482
      %v1484 = vpop.f32.mrb[0].mxu0
      %v1485 = vpop.f32.mrb[0].mxu0
      %v1486 = vadd.f32 %v1325, %v1485
      %v1487 = vpop.f32.mrb[0].mxu0
      %1488 = vdwg.mxu0
      %v1537 = vunpack.c.l.b16 %v878
      %v1538 = vunpack.c.l.b16 %v879
      %v1539 = vunpack.c.l.b16 %v880
      %v1540 = vunpack.c.l.b16 %v881
      %v1541 = vunpack.c.l.b16 %v882
      %v1542 = vunpack.c.l.b16 %v883
      %v1543 = vunpack.c.l.b16 %v884
      %v1544 = vunpack.c.l.b16 %v885
      %v1545 = vunpack.c.l.b16 %v886
      %v1546 = vunpack.c.l.b16 %v887
      %v1547 = vunpack.c.l.b16 %v888
      %v1548 = vunpack.c.l.b16 %v889
      %v1549 = vunpack.c.l.b16 %v890
      %v1550 = vunpack.c.l.b16 %v891
      %v1551 = vunpack.c.l.b16 %v892
      %v1552 = vunpack.c.l.b16 %v893
      %v1553 = vunpack.c.l.b16 %v894
      %v1554 = vunpack.c.l.b16 %v895
      %v1555 = vunpack.c.l.b16 %v896
      %v1556 = vunpack.c.l.b16 %v897
      %v1557 = vunpack.c.l.b16 %v898
      %v1558 = vunpack.c.l.b16 %v899
      %v1559 = vunpack.c.l.b16 %v900
      %v1560 = vunpack.c.l.b16 %v901
      %v1561 = vunpack.c.l.b16 %v902
      %v1562 = vunpack.c.l.b16 %v903
      %v1563 = vunpack.c.l.b16 %v904
      %v1564 = vunpack.c.l.b16 %v905
      %v1565 = vunpack.c.l.b16 %v906
      %v1566 = vunpack.c.l.b16 %v907
      %v1567 = vunpack.c.l.b16 %v908
      %v1568 = vunpack.c.l.b16 %v909
      %v1569 = vunpack.c.l.b16 %v910
      %v1570 = vunpack.c.l.b16 %v911
      %v1571 = vunpack.c.l.b16 %v912
      %v1572 = vunpack.c.l.b16 %v913
      %v1573 = vunpack.c.l.b16 %v914
      %v1574 = vunpack.c.l.b16 %v915
      %v1575 = vunpack.c.l.b16 %v916
      %v1576 = vunpack.c.l.b16 %v917
      %v1577 = vunpack.c.l.b16 %v918
      %v1578 = vunpack.c.l.b16 %v919
      %v1579 = vunpack.c.l.b16 %v920
      %v1580 = vunpack.c.l.b16 %v921
      %v1581 = vunpack.c.l.b16 %v922
      %v1582 = vunpack.c.l.b16 %v923
      %v1583 = vunpack.c.l.b16 %v924
      %v1584 = vunpack.c.l.b16 %v925
      %v1585 = vpack.c.b16 %v1538, %v1537
      %v1586 = vpack.c.b16 %v1540, %v1539
      %v1587 = vpack.c.b16 %v1542, %v1541
      %v1588 = vpack.c.b16 %v1544, %v1543
      %v1589 = vpack.c.b16 %v1546, %v1545
      %v1590 = vpack.c.b16 %v1548, %v1547
      %v1591 = vpack.c.b16 %v1550, %v1549
      %v1592 = vpack.c.b16 %v1552, %v1551
      %v1593 = vpack.c.b16 %v1554, %v1553
      %v1594 = vpack.c.b16 %v1556, %v1555
      %v1595 = vpack.c.b16 %v1558, %v1557
      %v1596 = vpack.c.b16 %v1560, %v1559
      %v1597 = vpack.c.b16 %v1562, %v1561
      %v1598 = vpack.c.b16 %v1564, %v1563
      %v1599 = vpack.c.b16 %v1566, %v1565
      %v1600 = vpack.c.b16 %v1568, %v1567
      %v1601 = vpack.c.b16 %v1570, %v1569
      %v1602 = vpack.c.b16 %v1572, %v1571
      %v1603 = vpack.c.b16 %v1574, %v1573
      %v1604 = vpack.c.b16 %v1576, %v1575
      %v1605 = vpack.c.b16 %v1578, %v1577
      %v1606 = vpack.c.b16 %v1580, %v1579
      %v1607 = vpack.c.b16 %v1582, %v1581
      %v1608 = vpack.c.b16 %v1584, %v1583
      %1633 = vmatprep.subr.bf16.mxu0 0
      %1634 = vmatpush1.bf16.msra.mxu0 %v1585
      %1635 = vmatprep.subr.bf16.mxu0 0
      %1636 = vmatpush1.bf16.msra.mxu0 %v1586
      %1637 = vmatprep.subr.bf16.mxu0 0
      %1638 = vmatpush1.bf16.msra.mxu0 %v1587
      %1639 = vmatprep.subr.bf16.mxu0 0
      %1640 = vmatpush1.bf16.msra.mxu0 %v1588
      %1641 = vmatprep.subr.bf16.mxu0 0
      %1642 = vmatpush1.bf16.msra.mxu0 %v1589
      %1643 = vmatprep.subr.bf16.mxu0 0
      %1644 = vmatpush1.bf16.msra.mxu0 %v1590
      %1645 = vmatprep.subr.bf16.mxu0 0
      %1646 = vmatpush1.bf16.msra.mxu0 %v1591
      %1647 = vmatprep.subr.bf16.mxu0 0
      %1648 = vmatpush1.bf16.msra.mxu0 %v1592
      %1649 = vmatprep.subr.bf16.mxu0 0
      %1650 = vmatpush1.bf16.msra.mxu0 %v1593
      %1651 = vmatprep.subr.bf16.mxu0 0
      %1652 = vmatpush1.bf16.msra.mxu0 %v1594
      %1653 = vmatprep.subr.bf16.mxu0 0
      %1654 = vmatpush1.bf16.msra.mxu0 %v1595
      %1655 = vmatprep.subr.bf16.mxu0 0
      %1656 = vmatpush1.bf16.msra.mxu0 %v1596
      %1657 = vmatprep.subr.bf16.mxu0 0
      %1658 = vmatpush1.bf16.msra.mxu0 %v1597
      %1659 = vmatprep.subr.bf16.mxu0 0
      %1660 = vmatpush1.bf16.msra.mxu0 %v1598
      %1661 = vmatprep.subr.bf16.mxu0 0
      %1662 = vmatpush1.bf16.msra.mxu0 %v1599
      %1663 = vmatprep.subr.bf16.mxu0 0
      %1664 = vmatpush1.bf16.msra.mxu0 %v1600
      %1665 = vmatprep.mubr.bf16.mxu0 %v831
      %1666 = vmatmul.mubr.bf16.gmra.mrb[0].mxu0 %v830
      %v1667 = vpop.f32.mrb[0].mxu0
      %v1668 = vadd.f32 %v1363, %v1667
      %v1669 = vpop.f32.mrb[0].mxu0
      %v1670 = vpop.f32.mrb[0].mxu0
      %v1671 = vadd.f32 %v1366, %v1670
      %v1672 = vpop.f32.mrb[0].mxu0
      %1673 = vmatprep.mubr.bf16.mxu0 %v834
      %1674 = vmatmul.mubr.bf16.gmra.mrb[0].mxu0 %v833
      %v1675 = vpop.f32.mrb[0].mxu0
      %v1676 = vadd.f32 %v1371, %v1675
      %v1677 = vpop.f32.mrb[0].mxu0
      %v1678 = vpop.f32.mrb[0].mxu0
      %v1679 = vadd.f32 %v1374, %v1678
      %v1680 = vpop.f32.mrb[0].mxu0
      %1681 = vmatprep.mubr.bf16.mxu0 %v837
      %1682 = vmatmul.mubr.bf16.gmra.mrb[0].mxu0 %v836
      %v1683 = vpop.f32.mrb[0].mxu0
      %v1684 = vadd.f32 %v1379, %v1683
      %v1685 = vpop.f32.mrb[0].mxu0
      %v1686 = vpop.f32.mrb[0].mxu0
      %v1687 = vadd.f32 %v1382, %v1686
      %v1688 = vpop.f32.mrb[0].mxu0
      %1689 = vmatprep.mubr.bf16.mxu0 %v840
      %1690 = vmatmul.mubr.bf16.gmra.mrb[0].mxu0 %v839
      %v1691 = vpop.f32.mrb[0].mxu0
      %v1692 = vadd.f32 %v1387, %v1691
      %v1693 = vpop.f32.mrb[0].mxu0
      %v1694 = vpop.f32.mrb[0].mxu0
      %v1695 = vadd.f32 %v1390, %v1694
      %v1696 = vpop.f32.mrb[0].mxu0
      %1697 = vmatprep.mubr.bf16.mxu0 %v843
      %1698 = vmatmul.mubr.bf16.gmra.mrb[0].mxu0 %v842
      %v1699 = vpop.f32.mrb[0].mxu0
      %v1700 = vadd.f32 %v1395, %v1699
      %v1701 = vpop.f32.mrb[0].mxu0
      %v1702 = vpop.f32.mrb[0].mxu0
      %v1703 = vadd.f32 %v1398, %v1702
      %v1704 = vpop.f32.mrb[0].mxu0
      %1705 = vmatprep.mubr.bf16.mxu0 %v846
      %1706 = vmatmul.mubr.bf16.gmra.mrb[0].mxu0 %v845
      %v1707 = vpop.f32.mrb[0].mxu0
      %v1708 = vadd.f32 %v1403, %v1707
      %v1709 = vpop.f32.mrb[0].mxu0
      %v1710 = vpop.f32.mrb[0].mxu0
      %v1711 = vadd.f32 %v1406, %v1710
      %v1712 = vpop.f32.mrb[0].mxu0
      %1713 = vmatprep.mubr.bf16.mxu0 %v849
      %1714 = vmatmul.mubr.bf16.gmra.mrb[0].mxu0 %v848
      %v1715 = vpop.f32.mrb[0].mxu0
      %v1716 = vadd.f32 %v1411, %v1715
      %v1717 = vpop.f32.mrb[0].mxu0
      %v1718 = vpop.f32.mrb[0].mxu0
      %v1719 = vadd.f32 %v1414, %v1718
      %v1720 = vpop.f32.mrb[0].mxu0
      %1721 = vmatprep.mubr.bf16.mxu0 %v852
      %1722 = vmatmul.mubr.bf16.gmra.mrb[0].mxu0 %v851
      %v1723 = vpop.f32.mrb[0].mxu0
      %v1724 = vadd.f32 %v1419, %v1723
      %v1725 = vpop.f32.mrb[0].mxu0
      %v1726 = vpop.f32.mrb[0].mxu0
      %v1727 = vadd.f32 %v1422, %v1726
      %v1728 = vpop.f32.mrb[0].mxu0
      %1729 = vmatprep.mubr.bf16.mxu0 %v855
      %1730 = vmatmul.mubr.bf16.gmra.mrb[0].mxu0 %v854
      %v1731 = vpop.f32.mrb[0].mxu0
      %v1732 = vadd.f32 %v1427, %v1731
      %v1733 = vpop.f32.mrb[0].mxu0
      %v1734 = vpop.f32.mrb[0].mxu0
      %v1735 = vadd.f32 %v1430, %v1734
      %v1736 = vpop.f32.mrb[0].mxu0
      %1737 = vmatprep.mubr.bf16.mxu0 %v858
      %1738 = vmatmul.mubr.bf16.gmra.mrb[0].mxu0 %v857
      %v1739 = vpop.f32.mrb[0].mxu0
      %v1740 = vadd.f32 %v1435, %v1739
      %v1741 = vpop.f32.mrb[0].mxu0
      %v1742 = vpop.f32.mrb[0].mxu0
      %v1743 = vadd.f32 %v1438, %v1742
      %v1744 = vpop.f32.mrb[0].mxu0
      %1745 = vmatprep.mubr.bf16.mxu0 %v861
      %1746 = vmatmul.mubr.bf16.gmra.mrb[0].mxu0 %v860
      %v1747 = vpop.f32.mrb[0].mxu0
      %v1748 = vadd.f32 %v1443, %v1747
      %v1749 = vpop.f32.mrb[0].mxu0
      %v1750 = vpop.f32.mrb[0].mxu0
      %v1751 = vadd.f32 %v1446, %v1750
      %v1752 = vpop.f32.mrb[0].mxu0
      %1753 = vmatprep.mubr.bf16.mxu0 %v864
      %1754 = vmatmul.mubr.bf16.gmra.mrb[0].mxu0 %v863
      %v1755 = vpop.f32.mrb[0].mxu0
      %v1756 = vadd.f32 %v1451, %v1755
      %v1757 = vpop.f32.mrb[0].mxu0
      %v1758 = vpop.f32.mrb[0].mxu0
      %v1759 = vadd.f32 %v1454, %v1758
      %v1760 = vpop.f32.mrb[0].mxu0
      %1761 = vmatprep.mubr.bf16.mxu0 %v867
      %1762 = vmatmul.mubr.bf16.gmra.mrb[0].mxu0 %v866
      %v1763 = vpop.f32.mrb[0].mxu0
      %v1764 = vadd.f32 %v1459, %v1763
      %v1765 = vpop.f32.mrb[0].mxu0
      %v1766 = vpop.f32.mrb[0].mxu0
      %v1767 = vadd.f32 %v1462, %v1766
      %v1768 = vpop.f32.mrb[0].mxu0
      %1769 = vmatprep.mubr.bf16.mxu0 %v870
      %1770 = vmatmul.mubr.bf16.gmra.mrb[0].mxu0 %v869
      %v1771 = vpop.f32.mrb[0].mxu0
      %v1772 = vadd.f32 %v1467, %v1771
      %v1773 = vpop.f32.mrb[0].mxu0
      %v1774 = vpop.f32.mrb[0].mxu0
      %v1775 = vadd.f32 %v1470, %v1774
      %v1776 = vpop.f32.mrb[0].mxu0
      %1777 = vmatprep.mubr.bf16.mxu0 %v873
      %1778 = vmatmul.mubr.bf16.gmra.mrb[0].mxu0 %v872
      %v1779 = vpop.f32.mrb[0].mxu0
      %v1780 = vadd.f32 %v1475, %v1779
      %v1781 = vpop.f32.mrb[0].mxu0
      %v1782 = vpop.f32.mrb[0].mxu0
      %v1783 = vadd.f32 %v1478, %v1782
      %v1784 = vpop.f32.mrb[0].mxu0
      %1785 = vmatprep.mubr.bf16.mxu0 %v876
      %1786 = vmatmul.mubr.bf16.gmra.mrb[0].mxu0 %v875
      %v1787 = vpop.f32.mrb[0].mxu0
      %v1788 = vadd.f32 %v1483, %v1787
      %v1789 = vpop.f32.mrb[0].mxu0
      %v1790 = vpop.f32.mrb[0].mxu0
      %v1791 = vadd.f32 %v1486, %v1790
      %v1792 = vpop.f32.mrb[0].mxu0
      %1793 = vdwg.mxu0
      %1794 = vmatprep.subr.bf16.mxu0 0
      %1795 = vmatpush1.bf16.msra.mxu0 %v1601
      %1796 = vmatprep.subr.bf16.mxu0 0
      %1797 = vmatpush1.bf16.msra.mxu0 %v1602
      %1798 = vmatprep.subr.bf16.mxu0 0
      %1799 = vmatpush1.bf16.msra.mxu0 %v1603
      %1800 = vmatprep.subr.bf16.mxu0 0
      %1801 = vmatpush1.bf16.msra.mxu0 %v1604
      %1802 = vmatprep.subr.bf16.mxu0 0
      %1803 = vmatpush1.bf16.msra.mxu0 %v1605
      %1804 = vmatprep.subr.bf16.mxu0 0
      %1805 = vmatpush1.bf16.msra.mxu0 %v1606
      %1806 = vmatprep.subr.bf16.mxu0 0
      %1807 = vmatpush1.bf16.msra.mxu0 %v1607
      %1808 = vmatprep.subr.bf16.mxu0 0
      %1809 = vmatpush1.bf16.msra.mxu0 %v1608
      %1810 = vmatprep.subr.bf16.mxu0 0
      %1811 = vmatpush1.bf16.msra.mxu0 0
      %1812 = vmatprep.subr.bf16.mxu0 0
      %1813 = vmatpush1.bf16.msra.mxu0 0
      %1814 = vmatprep.subr.bf16.mxu0 0
      %1815 = vmatpush1.bf16.msra.mxu0 0
      %1816 = vmatprep.subr.bf16.mxu0 0
      %1817 = vmatpush1.bf16.msra.mxu0 0
      %1818 = vmatprep.subr.bf16.mxu0 0
      %1819 = vmatpush1.bf16.msra.mxu0 0
      %1820 = vmatprep.subr.bf16.mxu0 0
      %1821 = vmatpush1.bf16.msra.mxu0 0
      %1822 = vmatprep.subr.bf16.mxu0 0
      %1823 = vmatpush1.bf16.msra.mxu0 0
      %1824 = vmatprep.subr.bf16.mxu0 0
      %1825 = vmatpush1.bf16.msra.mxu0 0
      %1826 = vmatprep.mubr.bf16.mxu0 0
      %1827 = vmatmul.mubr.bf16.gmra.mrb[0].mxu0 %v832
      %v1828 = vpop.f32.mrb[0].mxu0
      %v1829 = vadd.f32 %v1668, %v1828
      %v1830 = vpop.f32.mrb[0].mxu0
      %v1831 = vpop.f32.mrb[0].mxu0
      %v1832 = vadd.f32 %v1671, %v1831
      %v1833 = vpop.f32.mrb[0].mxu0
      %1834 = vmatprep.mubr.bf16.mxu0 0
      %1835 = vmatmul.mubr.bf16.gmra.mrb[0].mxu0 %v835
      %v1836 = vpop.f32.mrb[0].mxu0
      %v1837 = vadd.f32 %v1676, %v1836
      %v1838 = vpop.f32.mrb[0].mxu0
      %v1839 = vpop.f32.mrb[0].mxu0
      %v1840 = vadd.f32 %v1679, %v1839
      %v1841 = vpop.f32.mrb[0].mxu0
      %1842 = vmatprep.mubr.bf16.mxu0 0
      %1843 = vmatmul.mubr.bf16.gmra.mrb[0].mxu0 %v838
      %v1844 = vpop.f32.mrb[0].mxu0
      %v1845 = vadd.f32 %v1684, %v1844
      %v1846 = vpop.f32.mrb[0].mxu0
      %v1847 = vpop.f32.mrb[0].mxu0
      %v1848 = vadd.f32 %v1687, %v1847
      %v1849 = vpop.f32.mrb[0].mxu0
      %1850 = vmatprep.mubr.bf16.mxu0 0
      %1851 = vmatmul.mubr.bf16.gmra.mrb[0].mxu0 %v841
      %v1852 = vpop.f32.mrb[0].mxu0
      %v1853 = vadd.f32 %v1692, %v1852
      %v1854 = vpop.f32.mrb[0].mxu0
      %v1855 = vpop.f32.mrb[0].mxu0
      %v1856 = vadd.f32 %v1695, %v1855
      %v1857 = vpop.f32.mrb[0].mxu0
      %1858 = vmatprep.mubr.bf16.mxu0 0
      %1859 = vmatmul.mubr.bf16.gmra.mrb[0].mxu0 %v844
      %v1860 = vpop.f32.mrb[0].mxu0
      %v1861 = vadd.f32 %v1700, %v1860
      %v1862 = vpop.f32.mrb[0].mxu0
      %v1863 = vpop.f32.mrb[0].mxu0
      %v1864 = vadd.f32 %v1703, %v1863
      %v1865 = vpop.f32.mrb[0].mxu0
      %1866 = vmatprep.mubr.bf16.mxu0 0
      %1867 = vmatmul.mubr.bf16.gmra.mrb[0].mxu0 %v847
      %v1868 = vpop.f32.mrb[0].mxu0
      %v1869 = vadd.f32 %v1708, %v1868
      %v1870 = vpop.f32.mrb[0].mxu0
      %v1871 = vpop.f32.mrb[0].mxu0
      %v1872 = vadd.f32 %v1711, %v1871
      %v1873 = vpop.f32.mrb[0].mxu0
      %1874 = vmatprep.mubr.bf16.mxu0 0
      %1875 = vmatmul.mubr.bf16.gmra.mrb[0].mxu0 %v850
      %v1876 = vpop.f32.mrb[0].mxu0
      %v1877 = vadd.f32 %v1716, %v1876
      %v1878 = vpop.f32.mrb[0].mxu0
      %v1879 = vpop.f32.mrb[0].mxu0
      %v1880 = vadd.f32 %v1719, %v1879
      %v1881 = vpop.f32.mrb[0].mxu0
      %1882 = vmatprep.mubr.bf16.mxu0 0
      %1883 = vmatmul.mubr.bf16.gmra.mrb[0].mxu0 %v853
      %v1884 = vpop.f32.mrb[0].mxu0
      %v1885 = vadd.f32 %v1724, %v1884
      %v1886 = vpop.f32.mrb[0].mxu0
      %v1887 = vpop.f32.mrb[0].mxu0
      %v1888 = vadd.f32 %v1727, %v1887
      %v1889 = vpop.f32.mrb[0].mxu0
      %1890 = vmatprep.mubr.bf16.mxu0 0
      %1891 = vmatmul.mubr.bf16.gmra.mrb[0].mxu0 %v856
      %v1892 = vpop.f32.mrb[0].mxu0
      %v1893 = vadd.f32 %v1732, %v1892
      %v1894 = vpop.f32.mrb[0].mxu0
      %v1895 = vpop.f32.mrb[0].mxu0
      %v1896 = vadd.f32 %v1735, %v1895
      %v1897 = vpop.f32.mrb[0].mxu0
      %1898 = vmatprep.mubr.bf16.mxu0 0
      %1899 = vmatmul.mubr.bf16.gmra.mrb[0].mxu0 %v859
      %v1900 = vpop.f32.mrb[0].mxu0
      %v1901 = vadd.f32 %v1740, %v1900
      %v1902 = vpop.f32.mrb[0].mxu0
      %v1903 = vpop.f32.mrb[0].mxu0
      %v1904 = vadd.f32 %v1743, %v1903
      %v1905 = vpop.f32.mrb[0].mxu0
      %1906 = vmatprep.mubr.bf16.mxu0 0
      %1907 = vmatmul.mubr.bf16.gmra.mrb[0].mxu0 %v862
      %v1908 = vpop.f32.mrb[0].mxu0
      %v1909 = vadd.f32 %v1748, %v1908
      %v1910 = vpop.f32.mrb[0].mxu0
      %v1911 = vpop.f32.mrb[0].mxu0
      %v1912 = vadd.f32 %v1751, %v1911
      %v1913 = vpop.f32.mrb[0].mxu0
      %1914 = vmatprep.mubr.bf16.mxu0 0
      %1915 = vmatmul.mubr.bf16.gmra.mrb[0].mxu0 %v865
      %v1916 = vpop.f32.mrb[0].mxu0
      %v1917 = vadd.f32 %v1756, %v1916
      %v1918 = vpop.f32.mrb[0].mxu0
      %v1919 = vpop.f32.mrb[0].mxu0
      %v1920 = vadd.f32 %v1759, %v1919
      %v1921 = vpop.f32.mrb[0].mxu0
      %1922 = vmatprep.mubr.bf16.mxu0 0
      %1923 = vmatmul.mubr.bf16.gmra.mrb[0].mxu0 %v868
      %v1924 = vpop.f32.mrb[0].mxu0
      %v1925 = vadd.f32 %v1764, %v1924
      %v1926 = vpop.f32.mrb[0].mxu0
      %v1927 = vpop.f32.mrb[0].mxu0
      %v1928 = vadd.f32 %v1767, %v1927
      %v1929 = vpop.f32.mrb[0].mxu0
      %1930 = vmatprep.mubr.bf16.mxu0 0
      %1931 = vmatmul.mubr.bf16.gmra.mrb[0].mxu0 %v871
      %v1932 = vpop.f32.mrb[0].mxu0
      %v1933 = vadd.f32 %v1772, %v1932
      %v1934 = vpop.f32.mrb[0].mxu0
      %v1935 = vpop.f32.mrb[0].mxu0
      %v1936 = vadd.f32 %v1775, %v1935
      %v1937 = vpop.f32.mrb[0].mxu0
      %1938 = vmatprep.mubr.bf16.mxu0 0
      %1939 = vmatmul.mubr.bf16.gmra.mrb[0].mxu0 %v874
      %v1940 = vpop.f32.mrb[0].mxu0
      %v1941 = vadd.f32 %v1780, %v1940
      %v1942 = vpop.f32.mrb[0].mxu0
      %v1943 = vpop.f32.mrb[0].mxu0
      %v1944 = vadd.f32 %v1783, %v1943
      %v1945 = vpop.f32.mrb[0].mxu0
      %1946 = vmatprep.mubr.bf16.mxu0 0
      %1947 = vmatmul.mubr.bf16.gmra.mrb[0].mxu0 %v877
      %v1948 = vpop.f32.mrb[0].mxu0
      %v1949 = vadd.f32 %v1788, %v1948
      %v1950 = vpop.f32.mrb[0].mxu0
      %v1951 = vpop.f32.mrb[0].mxu0
      %v1952 = vadd.f32 %v1791, %v1951
      %v1953 = vpop.f32.mrb[0].mxu0
      %1954 = vdwg.mxu0
      %s1955 = scalar_lea.vmem [#allocation2], 48
      %v1956 = vld [vmem:[%s1955] sm:$0xff]
      %v1957 = vld [vmem:[%s1955 + $0x8] sm:$0xff]
      %v1958 = vld [vmem:[%s1955 + $0x10] sm:$0xff]
      %v1959 = vld [vmem:[%s1955 + $0x18] sm:$0xff]
      %v1960 = vld [vmem:[%s1955 + $0x20] sm:$0xff]
      %v1961 = vld [vmem:[%s1955 + $0x28] sm:$0xff]
      %v1962 = vld [vmem:[%s1955 + $0x30] sm:$0xff]
      %v1963 = vld [vmem:[%s1955 + $0x38] sm:$0xff]
      %v1964 = vld [vmem:[%s1955 + $0x40] sm:$0xff]
      %v1965 = vld [vmem:[%s1955 + $0x48] sm:$0xff]
      %v1966 = vld [vmem:[%s1955 + $0x50] sm:$0xff]
      %v1967 = vld [vmem:[%s1955 + $0x58] sm:$0xff]
      %v1968 = vld [vmem:[%s1955 + $0x60] sm:$0xff]
      %v1969 = vld [vmem:[%s1955 + $0x68] sm:$0xff]
      %v1970 = vld [vmem:[%s1955 + $0x70] sm:$0xff]
      %v1971 = vld [vmem:[%s1955 + $0x78] sm:$0xff]
      %v1972 = vld [vmem:[%s1955 + $0x80] sm:$0xff]
      %v1973 = vld [vmem:[%s1955 + $0x88] sm:$0xff]
      %v1974 = vld [vmem:[%s1955 + $0x90] sm:$0xff]
      %v1975 = vld [vmem:[%s1955 + $0x98] sm:$0xff]
      %v1976 = vld [vmem:[%s1955 + $0xa0] sm:$0xff]
      %v1977 = vld [vmem:[%s1955 + $0xa8] sm:$0xff]
      %v1978 = vld [vmem:[%s1955 + $0xb0] sm:$0xff]
      %v1979 = vld [vmem:[%s1955 + $0xb8] sm:$0xff]
      %v1980 = vld [vmem:[%s1955 + $0xc0] sm:$0xff]
      %v1981 = vld [vmem:[%s1955 + $0xc8] sm:$0xff]
      %v1982 = vld [vmem:[%s1955 + $0xd0] sm:$0xff]
      %v1983 = vld [vmem:[%s1955 + $0xd8] sm:$0xff]
      %v1984 = vld [vmem:[%s1955 + $0xe0] sm:$0xff]
      %v1985 = vld [vmem:[%s1955 + $0xe8] sm:$0xff]
      %v1986 = vld [vmem:[%s1955 + $0xf0] sm:$0xff]
      %v1987 = vld [vmem:[%s1955 + $0xf8] sm:$0xff]
      %v1988 = vld [vmem:[%s1955 + $0x100] sm:$0xff]
      %v1989 = vld [vmem:[%s1955 + $0x108] sm:$0xff]
      %v1990 = vld [vmem:[%s1955 + $0x110] sm:$0xff]
      %v1991 = vld [vmem:[%s1955 + $0x118] sm:$0xff]
      %v1992 = vld [vmem:[%s1955 + $0x120] sm:$0xff]
      %v1993 = vld [vmem:[%s1955 + $0x128] sm:$0xff]
      %v1994 = vld [vmem:[%s1955 + $0x130] sm:$0xff]
      %v1995 = vld [vmem:[%s1955 + $0x138] sm:$0xff]
      %v1996 = vld [vmem:[%s1955 + $0x140] sm:$0xff]
      %v1997 = vld [vmem:[%s1955 + $0x148] sm:$0xff]
      %v1998 = vld [vmem:[%s1955 + $0x150] sm:$0xff]
      %v1999 = vld [vmem:[%s1955 + $0x158] sm:$0xff]
      %v2000 = vld [vmem:[%s1955 + $0x160] sm:$0xff]
      %v2001 = vld [vmem:[%s1955 + $0x168] sm:$0xff]
      %v2002 = vld [vmem:[%s1955 + $0x170] sm:$0xff]
      %v2003 = vld [vmem:[%s1955 + $0x178] sm:$0xff]
      %s2004 = scalar_lea.vmem %s3, 384
      %v2005 = vld [vmem:[%s2004] sm:$0xf]
      %v2006 = vld [vmem:[%s2004 + $0x4] sm:$0xf]
      %v2007 = vld [vmem:[%s2004 + $0x8] sm:$0xf]
      %v2008 = vld [vmem:[%s2004 + $0xc] sm:$0xf]
      %v2009 = vld [vmem:[%s2004 + $0x10] sm:$0xf]
      %v2010 = vld [vmem:[%s2004 + $0x14] sm:$0xf]
      %v2011 = vld [vmem:[%s2004 + $0x18] sm:$0xf]
      %v2012 = vld [vmem:[%s2004 + $0x1c] sm:$0xf]
      %v2013 = vld [vmem:[%s2004 + $0x20] sm:$0xf]
      %v2014 = vld [vmem:[%s2004 + $0x24] sm:$0xf]
      %v2015 = vld [vmem:[%s2004 + $0x28] sm:$0xf]
      %v2016 = vld [vmem:[%s2004 + $0x2c] sm:$0xf]
      %v2017 = vld [vmem:[%s2004 + $0x30] sm:$0xf]
      %v2018 = vld [vmem:[%s2004 + $0x34] sm:$0xf]
      %v2019 = vld [vmem:[%s2004 + $0x38] sm:$0xf]
      %v2020 = vld [vmem:[%s2004 + $0x3c] sm:$0xf]
      %v2021 = vld [vmem:[%s2004 + $0x40] sm:$0xf]
      %v2022 = vld [vmem:[%s2004 + $0x44] sm:$0xf]
      %v2023 = vld [vmem:[%s2004 + $0x48] sm:$0xf]
      %v2024 = vld [vmem:[%s2004 + $0x4c] sm:$0xf]
      %v2025 = vld [vmem:[%s2004 + $0x50] sm:$0xf]
      %v2026 = vld [vmem:[%s2004 + $0x54] sm:$0xf]
      %v2027 = vld [vmem:[%s2004 + $0x58] sm:$0xf]
      %v2028 = vld [vmem:[%s2004 + $0x5c] sm:$0xf]
      %v2029 = vld [vmem:[%s2004 + $0x60] sm:$0xf]
      %v2030 = vld [vmem:[%s2004 + $0x64] sm:$0xf]
      %v2031 = vld [vmem:[%s2004 + $0x68] sm:$0xf]
      %v2032 = vld [vmem:[%s2004 + $0x6c] sm:$0xf]
      %v2033 = vld [vmem:[%s2004 + $0x70] sm:$0xf]
      %v2034 = vld [vmem:[%s2004 + $0x74] sm:$0xf]
      %v2035 = vld [vmem:[%s2004 + $0x78] sm:$0xf]
      %v2036 = vld [vmem:[%s2004 + $0x7c] sm:$0xf]
      %v2037 = vld [vmem:[%s2004 + $0x80] sm:$0xf]
      %v2038 = vld [vmem:[%s2004 + $0x84] sm:$0xf]
      %v2039 = vld [vmem:[%s2004 + $0x88] sm:$0xf]
      %v2040 = vld [vmem:[%s2004 + $0x8c] sm:$0xf]
      %v2041 = vld [vmem:[%s2004 + $0x90] sm:$0xf]
      %v2042 = vld [vmem:[%s2004 + $0x94] sm:$0xf]
      %v2043 = vld [vmem:[%s2004 + $0x98] sm:$0xf]
      %v2044 = vld [vmem:[%s2004 + $0x9c] sm:$0xf]
      %v2045 = vld [vmem:[%s2004 + $0xa0] sm:$0xf]
      %v2046 = vld [vmem:[%s2004 + $0xa4] sm:$0xf]
      %v2047 = vld [vmem:[%s2004 + $0xa8] sm:$0xf]
      %v2048 = vld [vmem:[%s2004 + $0xac] sm:$0xf]
      %v2049 = vld [vmem:[%s2004 + $0xb0] sm:$0xf]
      %v2050 = vld [vmem:[%s2004 + $0xb4] sm:$0xf]
      %v2051 = vld [vmem:[%s2004 + $0xb8] sm:$0xf]
      %v2052 = vld [vmem:[%s2004 + $0xbc] sm:$0xf]
      %v2101 = vunpack.c.l.b16 %v2005
      %v2102 = vunpack.c.l.b16 %v2006
      %v2103 = vunpack.c.l.b16 %v2007
      %v2104 = vunpack.c.l.b16 %v2008
      %v2105 = vunpack.c.l.b16 %v2009
      %v2106 = vunpack.c.l.b16 %v2010
      %v2107 = vunpack.c.l.b16 %v2011
      %v2108 = vunpack.c.l.b16 %v2012
      %v2109 = vunpack.c.l.b16 %v2013
      %v2110 = vunpack.c.l.b16 %v2014
      %v2111 = vunpack.c.l.b16 %v2015
      %v2112 = vunpack.c.l.b16 %v2016
      %v2113 = vunpack.c.l.b16 %v2017
      %v2114 = vunpack.c.l.b16 %v2018
      %v2115 = vunpack.c.l.b16 %v2019
      %v2116 = vunpack.c.l.b16 %v2020
      %v2117 = vunpack.c.l.b16 %v2021
      %v2118 = vunpack.c.l.b16 %v2022
      %v2119 = vunpack.c.l.b16 %v2023
      %v2120 = vunpack.c.l.b16 %v2024
      %v2121 = vunpack.c.l.b16 %v2025
      %v2122 = vunpack.c.l.b16 %v2026
      %v2123 = vunpack.c.l.b16 %v2027
      %v2124 = vunpack.c.l.b16 %v2028
      %v2125 = vunpack.c.l.b16 %v2029
      %v2126 = vunpack.c.l.b16 %v2030
      %v2127 = vunpack.c.l.b16 %v2031
      %v2128 = vunpack.c.l.b16 %v2032
      %v2129 = vunpack.c.l.b16 %v2033
      %v2130 = vunpack.c.l.b16 %v2034
      %v2131 = vunpack.c.l.b16 %v2035
      %v2132 = vunpack.c.l.b16 %v2036
      %v2133 = vunpack.c.l.b16 %v2037
      %v2134 = vunpack.c.l.b16 %v2038
      %v2135 = vunpack.c.l.b16 %v2039
      %v2136 = vunpack.c.l.b16 %v2040
      %v2137 = vunpack.c.l.b16 %v2041
      %v2138 = vunpack.c.l.b16 %v2042
      %v2139 = vunpack.c.l.b16 %v2043
      %v2140 = vunpack.c.l.b16 %v2044
      %v2141 = vunpack.c.l.b16 %v2045
      %v2142 = vunpack.c.l.b16 %v2046
      %v2143 = vunpack.c.l.b16 %v2047
      %v2144 = vunpack.c.l.b16 %v2048
      %v2145 = vunpack.c.l.b16 %v2049
      %v2146 = vunpack.c.l.b16 %v2050
      %v2147 = vunpack.c.l.b16 %v2051
      %v2148 = vunpack.c.l.b16 %v2052
      %v2149 = vpack.c.b16 %v2102, %v2101
      %v2150 = vpack.c.b16 %v2104, %v2103
      %v2151 = vpack.c.b16 %v2106, %v2105
      %v2152 = vpack.c.b16 %v2108, %v2107
      %v2153 = vpack.c.b16 %v2110, %v2109
      %v2154 = vpack.c.b16 %v2112, %v2111
      %v2155 = vpack.c.b16 %v2114, %v2113
      %v2156 = vpack.c.b16 %v2116, %v2115
      %v2157 = vpack.c.b16 %v2118, %v2117
      %v2158 = vpack.c.b16 %v2120, %v2119
      %v2159 = vpack.c.b16 %v2122, %v2121
      %v2160 = vpack.c.b16 %v2124, %v2123
      %v2161 = vpack.c.b16 %v2126, %v2125
      %v2162 = vpack.c.b16 %v2128, %v2127
      %v2163 = vpack.c.b16 %v2130, %v2129
      %v2164 = vpack.c.b16 %v2132, %v2131
      %v2165 = vpack.c.b16 %v2134, %v2133
      %v2166 = vpack.c.b16 %v2136, %v2135
      %v2167 = vpack.c.b16 %v2138, %v2137
      %v2168 = vpack.c.b16 %v2140, %v2139
      %v2169 = vpack.c.b16 %v2142, %v2141
      %v2170 = vpack.c.b16 %v2144, %v2143
      %v2171 = vpack.c.b16 %v2146, %v2145
      %v2172 = vpack.c.b16 %v2148, %v2147
      %2197 = vmatprep.subr.bf16.mxu0 0
      %2198 = vmatpush1.bf16.msra.mxu0 %v2149
      %2199 = vmatprep.subr.bf16.mxu0 0
      %2200 = vmatpush1.bf16.msra.mxu0 %v2150
      %2201 = vmatprep.subr.bf16.mxu0 0
      %2202 = vmatpush1.bf16.msra.mxu0 %v2151
      %2203 = vmatprep.subr.bf16.mxu0 0
      %2204 = vmatpush1.bf16.msra.mxu0 %v2152
      %2205 = vmatprep.subr.bf16.mxu0 0
      %2206 = vmatpush1.bf16.msra.mxu0 %v2153
      %2207 = vmatprep.subr.bf16.mxu0 0
      %2208 = vmatpush1.bf16.msra.mxu0 %v2154
      %2209 = vmatprep.subr.bf16.mxu0 0
      %2210 = vmatpush1.bf16.msra.mxu0 %v2155
      %2211 = vmatprep.subr.bf16.mxu0 0
      %2212 = vmatpush1.bf16.msra.mxu0 %v2156
      %2213 = vmatprep.subr.bf16.mxu0 0
      %2214 = vmatpush1.bf16.msra.mxu0 %v2157
      %2215 = vmatprep.subr.bf16.mxu0 0
      %2216 = vmatpush1.bf16.msra.mxu0 %v2158
      %2217 = vmatprep.subr.bf16.mxu0 0
      %2218 = vmatpush1.bf16.msra.mxu0 %v2159
      %2219 = vmatprep.subr.bf16.mxu0 0
      %2220 = vmatpush1.bf16.msra.mxu0 %v2160
      %2221 = vmatprep.subr.bf16.mxu0 0
      %2222 = vmatpush1.bf16.msra.mxu0 %v2161
      %2223 = vmatprep.subr.bf16.mxu0 0
      %2224 = vmatpush1.bf16.msra.mxu0 %v2162
      %2225 = vmatprep.subr.bf16.mxu0 0
      %2226 = vmatpush1.bf16.msra.mxu0 %v2163
      %2227 = vmatprep.subr.bf16.mxu0 0
      %2228 = vmatpush1.bf16.msra.mxu0 %v2164
      %2229 = vmatprep.mubr.bf16.mxu0 %v1957
      %2230 = vmatmul.mubr.bf16.gmra.mrb[0].mxu0 %v1956
      %v2231 = vpop.f32.mrb[0].mxu0
      %v2232 = vadd.f32 0.0, %v2231
      %v2233 = vpop.f32.mrb[0].mxu0
      %v2234 = vpop.f32.mrb[0].mxu0
      %v2235 = vadd.f32 0.0, %v2234
      %v2236 = vpop.f32.mrb[0].mxu0
      %2237 = vmatprep.mubr.bf16.mxu0 %v1960
      %2238 = vmatmul.mubr.bf16.gmra.mrb[0].mxu0 %v1959
      %v2239 = vpop.f32.mrb[0].mxu0
      %v2240 = vadd.f32 0.0, %v2239
      %v2241 = vpop.f32.mrb[0].mxu0
      %v2242 = vpop.f32.mrb[0].mxu0
      %v2243 = vadd.f32 0.0, %v2242
      %v2244 = vpop.f32.mrb[0].mxu0
      %2245 = vmatprep.mubr.bf16.mxu0 %v1963
      %2246 = vmatmul.mubr.bf16.gmra.mrb[0].mxu0 %v1962
      %v2247 = vpop.f32.mrb[0].mxu0
      %v2248 = vadd.f32 0.0, %v2247
      %v2249 = vpop.f32.mrb[0].mxu0
      %v2250 = vpop.f32.mrb[0].mxu0
      %v2251 = vadd.f32 0.0, %v2250
      %v2252 = vpop.f32.mrb[0].mxu0
      %2253 = vmatprep.mubr.bf16.mxu0 %v1966
      %2254 = vmatmul.mubr.bf16.gmra.mrb[0].mxu0 %v1965
      %v2255 = vpop.f32.mrb[0].mxu0
      %v2256 = vadd.f32 0.0, %v2255
      %v2257 = vpop.f32.mrb[0].mxu0
      %v2258 = vpop.f32.mrb[0].mxu0
      %v2259 = vadd.f32 0.0, %v2258
      %v2260 = vpop.f32.mrb[0].mxu0
      %2261 = vmatprep.mubr.bf16.mxu0 %v1969
      %2262 = vmatmul.mubr.bf16.gmra.mrb[0].mxu0 %v1968
      %v2263 = vpop.f32.mrb[0].mxu0
      %v2264 = vadd.f32 0.0, %v2263
      %v2265 = vpop.f32.mrb[0].mxu0
      %v2266 = vpop.f32.mrb[0].mxu0
      %v2267 = vadd.f32 0.0, %v2266
      %v2268 = vpop.f32.mrb[0].mxu0
      %2269 = vmatprep.mubr.bf16.mxu0 %v1972
      %2270 = vmatmul.mubr.bf16.gmra.mrb[0].mxu0 %v1971
      %v2271 = vpop.f32.mrb[0].mxu0
      %v2272 = vadd.f32 0.0, %v2271
      %v2273 = vpop.f32.mrb[0].mxu0
      %v2274 = vpop.f32.mrb[0].mxu0
      %v2275 = vadd.f32 0.0, %v2274
      %v2276 = vpop.f32.mrb[0].mxu0
      %2277 = vmatprep.mubr.bf16.mxu0 %v1975
      %2278 = vmatmul.mubr.bf16.gmra.mrb[0].mxu0 %v1974
      %v2279 = vpop.f32.mrb[0].mxu0
      %v2280 = vadd.f32 0.0, %v2279
      %v2281 = vpop.f32.mrb[0].mxu0
      %v2282 = vpop.f32.mrb[0].mxu0
      %v2283 = vadd.f32 0.0, %v2282
      %v2284 = vpop.f32.mrb[0].mxu0
      %2285 = vmatprep.mubr.bf16.mxu0 %v1978
      %2286 = vmatmul.mubr.bf16.gmra.mrb[0].mxu0 %v1977
      %v2287 = vpop.f32.mrb[0].mxu0
      %v2288 = vadd.f32 0.0, %v2287
      %v2289 = vpop.f32.mrb[0].mxu0
      %v2290 = vpop.f32.mrb[0].mxu0
      %v2291 = vadd.f32 0.0, %v2290
      %v2292 = vpop.f32.mrb[0].mxu0
      %2293 = vmatprep.mubr.bf16.mxu0 %v1981
      %2294 = vmatmul.mubr.bf16.gmra.mrb[0].mxu0 %v1980
      %v2295 = vpop.f32.mrb[0].mxu0
      %v2296 = vadd.f32 0.0, %v2295
      %v2297 = vpop.f32.mrb[0].mxu0
      %v2298 = vpop.f32.mrb[0].mxu0
      %v2299 = vadd.f32 0.0, %v2298
      %v2300 = vpop.f32.mrb[0].mxu0
      %2301 = vmatprep.mubr.bf16.mxu0 %v1984
      %2302 = vmatmul.mubr.bf16.gmra.mrb[0].mxu0 %v1983
      %v2303 = vpop.f32.mrb[0].mxu0
      %v2304 = vadd.f32 0.0, %v2303
      %v2305 = vpop.f32.mrb[0].mxu0
      %v2306 = vpop.f32.mrb[0].mxu0
      %v2307 = vadd.f32 0.0, %v2306
      %v2308 = vpop.f32.mrb[0].mxu0
      %2309 = vmatprep.mubr.bf16.mxu0 %v1987
      %2310 = vmatmul.mubr.bf16.gmra.mrb[0].mxu0 %v1986
      %v2311 = vpop.f32.mrb[0].mxu0
      %v2312 = vadd.f32 0.0, %v2311
      %v2313 = vpop.f32.mrb[0].mxu0
      %v2314 = vpop.f32.mrb[0].mxu0
      %v2315 = vadd.f32 0.0, %v2314
      %v2316 = vpop.f32.mrb[0].mxu0
      %2317 = vmatprep.mubr.bf16.mxu0 %v1990
      %2318 = vmatmul.mubr.bf16.gmra.mrb[0].mxu0 %v1989
      %v2319 = vpop.f32.mrb[0].mxu0
      %v2320 = vadd.f32 0.0, %v2319
      %v2321 = vpop.f32.mrb[0].mxu0
      %v2322 = vpop.f32.mrb[0].mxu0
      %v2323 = vadd.f32 0.0, %v2322
      %v2324 = vpop.f32.mrb[0].mxu0
      %2325 = vmatprep.mubr.bf16.mxu0 %v1993
      %2326 = vmatmul.mubr.bf16.gmra.mrb[0].mxu0 %v1992
      %v2327 = vpop.f32.mrb[0].mxu0
      %v2328 = vadd.f32 0.0, %v2327
      %v2329 = vpop.f32.mrb[0].mxu0
      %v2330 = vpop.f32.mrb[0].mxu0
      %v2331 = vadd.f32 0.0, %v2330
      %v2332 = vpop.f32.mrb[0].mxu0
      %2333 = vmatprep.mubr.bf16.mxu0 %v1996
      %2334 = vmatmul.mubr.bf16.gmra.mrb[0].mxu0 %v1995
      %v2335 = vpop.f32.mrb[0].mxu0
      %v2336 = vadd.f32 0.0, %v2335
      %v2337 = vpop.f32.mrb[0].mxu0
      %v2338 = vpop.f32.mrb[0].mxu0
      %v2339 = vadd.f32 0.0, %v2338
      %v2340 = vpop.f32.mrb[0].mxu0
      %2341 = vmatprep.mubr.bf16.mxu0 %v1999
      %2342 = vmatmul.mubr.bf16.gmra.mrb[0].mxu0 %v1998
      %v2343 = vpop.f32.mrb[0].mxu0
      %v2344 = vadd.f32 0.0, %v2343
      %v2345 = vpop.f32.mrb[0].mxu0
      %v2346 = vpop.f32.mrb[0].mxu0
      %v2347 = vadd.f32 0.0, %v2346
      %v2348 = vpop.f32.mrb[0].mxu0
      %2349 = vmatprep.mubr.bf16.mxu0 %v2002
      %2350 = vmatmul.mubr.bf16.gmra.mrb[0].mxu0 %v2001
      %v2351 = vpop.f32.mrb[0].mxu0
      %v2352 = vadd.f32 0.0, %v2351
      %v2353 = vpop.f32.mrb[0].mxu0
      %v2354 = vpop.f32.mrb[0].mxu0
      %v2355 = vadd.f32 0.0, %v2354
      %v2356 = vpop.f32.mrb[0].mxu0
      %2357 = vdwg.mxu0
      %2358 = vmatprep.subr.bf16.mxu0 0
      %2359 = vmatpush1.bf16.msra.mxu0 %v2165
      %2360 = vmatprep.subr.bf16.mxu0 0
      %2361 = vmatpush1.bf16.msra.mxu0 %v2166
      %2362 = vmatprep.subr.bf16.mxu0 0
      %2363 = vmatpush1.bf16.msra.mxu0 %v2167
      %2364 = vmatprep.subr.bf16.mxu0 0
      %2365 = vmatpush1.bf16.msra.mxu0 %v2168
      %2366 = vmatprep.subr.bf16.mxu0 0
      %2367 = vmatpush1.bf16.msra.mxu0 %v2169
      %2368 = vmatprep.subr.bf16.mxu0 0
      %2369 = vmatpush1.bf16.msra.mxu0 %v2170
      %2370 = vmatprep.subr.bf16.mxu0 0
      %2371 = vmatpush1.bf16.msra.mxu0 %v2171
      %2372 = vmatprep.subr.bf16.mxu0 0
      %2373 = vmatpush1.bf16.msra.mxu0 %v2172
      %2374 = vmatprep.subr.bf16.mxu0 0
      %2375 = vmatpush1.bf16.msra.mxu0 0
      %2376 = vmatprep.subr.bf16.mxu0 0
      %2377 = vmatpush1.bf16.msra.mxu0 0
      %2378 = vmatprep.subr.bf16.mxu0 0
      %2379 = vmatpush1.bf16.msra.mxu0 0
      %2380 = vmatprep.subr.bf16.mxu0 0
      %2381 = vmatpush1.bf16.msra.mxu0 0
      %2382 = vmatprep.subr.bf16.mxu0 0
      %2383 = vmatpush1.bf16.msra.mxu0 0
      %2384 = vmatprep.subr.bf16.mxu0 0
      %2385 = vmatpush1.bf16.msra.mxu0 0
      %2386 = vmatprep.subr.bf16.mxu0 0
      %2387 = vmatpush1.bf16.msra.mxu0 0
      %2388 = vmatprep.subr.bf16.mxu0 0
      %2389 = vmatpush1.bf16.msra.mxu0 0
      %2390 = vmatprep.mubr.bf16.mxu0 0
      %2391 = vmatmul.mubr.bf16.gmra.mrb[0].mxu0 %v1958
      %v2392 = vpop.f32.mrb[0].mxu0
      %v2393 = vadd.f32 %v2232, %v2392
      %v2394 = vpop.f32.mrb[0].mxu0
      %v2395 = vpop.f32.mrb[0].mxu0
      %v2396 = vadd.f32 %v2235, %v2395
      %v2397 = vpop.f32.mrb[0].mxu0
      %2398 = vmatprep.mubr.bf16.mxu0 0
      %2399 = vmatmul.mubr.bf16.gmra.mrb[0].mxu0 %v1961
      %v2400 = vpop.f32.mrb[0].mxu0
      %v2401 = vadd.f32 %v2240, %v2400
      %v2402 = vpop.f32.mrb[0].mxu0
      %v2403 = vpop.f32.mrb[0].mxu0
      %v2404 = vadd.f32 %v2243, %v2403
      %v2405 = vpop.f32.mrb[0].mxu0
      %2406 = vmatprep.mubr.bf16.mxu0 0
      %2407 = vmatmul.mubr.bf16.gmra.mrb[0].mxu0 %v1964
      %v2408 = vpop.f32.mrb[0].mxu0
      %v2409 = vadd.f32 %v2248, %v2408
      %v2410 = vpop.f32.mrb[0].mxu0
      %v2411 = vpop.f32.mrb[0].mxu0
      %v2412 = vadd.f32 %v2251, %v2411
      %v2413 = vpop.f32.mrb[0].mxu0
      %2414 = vmatprep.mubr.bf16.mxu0 0
      %2415 = vmatmul.mubr.bf16.gmra.mrb[0].mxu0 %v1967
      %v2416 = vpop.f32.mrb[0].mxu0
      %v2417 = vadd.f32 %v2256, %v2416
      %v2418 = vpop.f32.mrb[0].mxu0
      %v2419 = vpop.f32.mrb[0].mxu0
      %v2420 = vadd.f32 %v2259, %v2419
      %v2421 = vpop.f32.mrb[0].mxu0
      %2422 = vmatprep.mubr.bf16.mxu0 0
      %2423 = vmatmul.mubr.bf16.gmra.mrb[0].mxu0 %v1970
      %v2424 = vpop.f32.mrb[0].mxu0
      %v2425 = vadd.f32 %v2264, %v2424
      %v2426 = vpop.f32.mrb[0].mxu0
      %v2427 = vpop.f32.mrb[0].mxu0
      %v2428 = vadd.f32 %v2267, %v2427
      %v2429 = vpop.f32.mrb[0].mxu0
      %2430 = vmatprep.mubr.bf16.mxu0 0
      %2431 = vmatmul.mubr.bf16.gmra.mrb[0].mxu0 %v1973
      %v2432 = vpop.f32.mrb[0].mxu0
      %v2433 = vadd.f32 %v2272, %v2432
      %v2434 = vpop.f32.mrb[0].mxu0
      %v2435 = vpop.f32.mrb[0].mxu0
      %v2436 = vadd.f32 %v2275, %v2435
      %v2437 = vpop.f32.mrb[0].mxu0
      %2438 = vmatprep.mubr.bf16.mxu0 0
      %2439 = vmatmul.mubr.bf16.gmra.mrb[0].mxu0 %v1976
      %v2440 = vpop.f32.mrb[0].mxu0
      %v2441 = vadd.f32 %v2280, %v2440
      %v2442 = vpop.f32.mrb[0].mxu0
      %v2443 = vpop.f32.mrb[0].mxu0
      %v2444 = vadd.f32 %v2283, %v2443
      %v2445 = vpop.f32.mrb[0].mxu0
      %2446 = vmatprep.mubr.bf16.mxu0 0
      %2447 = vmatmul.mubr.bf16.gmra.mrb[0].mxu0 %v1979
      %v2448 = vpop.f32.mrb[0].mxu0
      %v2449 = vadd.f32 %v2288, %v2448
      %v2450 = vpop.f32.mrb[0].mxu0
      %v2451 = vpop.f32.mrb[0].mxu0
      %v2452 = vadd.f32 %v2291, %v2451
      %v2453 = vpop.f32.mrb[0].mxu0
      %2454 = vmatprep.mubr.bf16.mxu0 0
      %2455 = vmatmul.mubr.bf16.gmra.mrb[0].mxu0 %v1982
      %v2456 = vpop.f32.mrb[0].mxu0
      %v2457 = vadd.f32 %v2296, %v2456
      %v2458 = vpop.f32.mrb[0].mxu0
      %v2459 = vpop.f32.mrb[0].mxu0
      %v2460 = vadd.f32 %v2299, %v2459
      %v2461 = vpop.f32.mrb[0].mxu0
      %2462 = vmatprep.mubr.bf16.mxu0 0
      %2463 = vmatmul.mubr.bf16.gmra.mrb[0].mxu0 %v1985
      %v2464 = vpop.f32.mrb[0].mxu0
      %v2465 = vadd.f32 %v2304, %v2464
      %v2466 = vpop.f32.mrb[0].mxu0
      %v2467 = vpop.f32.mrb[0].mxu0
      %v2468 = vadd.f32 %v2307, %v2467
      %v2469 = vpop.f32.mrb[0].mxu0
      %2470 = vmatprep.mubr.bf16.mxu0 0
      %2471 = vmatmul.mubr.bf16.gmra.mrb[0].mxu0 %v1988
      %v2472 = vpop.f32.mrb[0].mxu0
      %v2473 = vadd.f32 %v2312, %v2472
      %v2474 = vpop.f32.mrb[0].mxu0
      %v2475 = vpop.f32.mrb[0].mxu0
      %v2476 = vadd.f32 %v2315, %v2475
      %v2477 = vpop.f32.mrb[0].mxu0
      %2478 = vmatprep.mubr.bf16.mxu0 0
      %2479 = vmatmul.mubr.bf16.gmra.mrb[0].mxu0 %v1991
      %v2480 = vpop.f32.mrb[0].mxu0
      %v2481 = vadd.f32 %v2320, %v2480
      %v2482 = vpop.f32.mrb[0].mxu0
      %v2483 = vpop.f32.mrb[0].mxu0
      %v2484 = vadd.f32 %v2323, %v2483
      %v2485 = vpop.f32.mrb[0].mxu0
      %2486 = vmatprep.mubr.bf16.mxu0 0
      %2487 = vmatmul.mubr.bf16.gmra.mrb[0].mxu0 %v1994
      %v2488 = vpop.f32.mrb[0].mxu0
      %v2489 = vadd.f32 %v2328, %v2488
      %v2490 = vpop.f32.mrb[0].mxu0
      %v2491 = vpop.f32.mrb[0].mxu0
      %v2492 = vadd.f32 %v2331, %v2491
      %v2493 = vpop.f32.mrb[0].mxu0
      %2494 = vmatprep.mubr.bf16.mxu0 0
      %2495 = vmatmul.mubr.bf16.gmra.mrb[0].mxu0 %v1997
      %v2496 = vpop.f32.mrb[0].mxu0
      %v2497 = vadd.f32 %v2336, %v2496
      %v2498 = vpop.f32.mrb[0].mxu0
      %v2499 = vpop.f32.mrb[0].mxu0
      %v2500 = vadd.f32 %v2339, %v2499
      %v2501 = vpop.f32.mrb[0].mxu0
      %2502 = vmatprep.mubr.bf16.mxu0 0
      %2503 = vmatmul.mubr.bf16.gmra.mrb[0].mxu0 %v2000
      %v2504 = vpop.f32.mrb[0].mxu0
      %v2505 = vadd.f32 %v2344, %v2504
      %v2506 = vpop.f32.mrb[0].mxu0
      %v2507 = vpop.f32.mrb[0].mxu0
      %v2508 = vadd.f32 %v2347, %v2507
      %v2509 = vpop.f32.mrb[0].mxu0
      %2510 = vmatprep.mubr.bf16.mxu0 0
      %2511 = vmatmul.mubr.bf16.gmra.mrb[0].mxu0 %v2003
      %v2512 = vpop.f32.mrb[0].mxu0
      %v2513 = vadd.f32 %v2352, %v2512
      %v2514 = vpop.f32.mrb[0].mxu0
      %v2515 = vpop.f32.mrb[0].mxu0
      %v2516 = vadd.f32 %v2355, %v2515
      %v2517 = vpop.f32.mrb[0].mxu0
      %2518 = vdwg.mxu0
      %v2519 = vadd.f32 %v1829, %v2393
      %v2520 = vadd.f32 %v1832, %v2396
      %v2521 = vadd.f32 %v1837, %v2401
      %v2522 = vadd.f32 %v1840, %v2404
      %v2523 = vadd.f32 %v1845, %v2409
      %v2524 = vadd.f32 %v1848, %v2412
      %v2525 = vadd.f32 %v1853, %v2417
      %v2526 = vadd.f32 %v1856, %v2420
      %v2527 = vadd.f32 %v1861, %v2425
      %v2528 = vadd.f32 %v1864, %v2428
      %v2529 = vadd.f32 %v1869, %v2433
      %v2530 = vadd.f32 %v1872, %v2436
      %v2531 = vadd.f32 %v1877, %v2441
      %v2532 = vadd.f32 %v1880, %v2444
      %v2533 = vadd.f32 %v1885, %v2449
      %v2534 = vadd.f32 %v1888, %v2452
      %v2535 = vadd.f32 %v1893, %v2457
      %v2536 = vadd.f32 %v1896, %v2460
      %v2537 = vadd.f32 %v1901, %v2465
      %v2538 = vadd.f32 %v1904, %v2468
      %v2539 = vadd.f32 %v1909, %v2473
      %v2540 = vadd.f32 %v1912, %v2476
      %v2541 = vadd.f32 %v1917, %v2481
      %v2542 = vadd.f32 %v1920, %v2484
      %v2543 = vadd.f32 %v1925, %v2489
      %v2544 = vadd.f32 %v1928, %v2492
      %v2545 = vadd.f32 %v1933, %v2497
      %v2546 = vadd.f32 %v1936, %v2500
      %v2547 = vadd.f32 %v1941, %v2505
      %v2548 = vadd.f32 %v1944, %v2508
      %v2549 = vadd.f32 %v1949, %v2513
      %v2550 = vadd.f32 %v1952, %v2516
      %v2551 = vpack.c.bf16 %v2520, %v2519
      %v2552 = vpack.c.bf16 %v2522, %v2521
      %v2553 = vpack.c.bf16 %v2524, %v2523
      %v2554 = vpack.c.bf16 %v2526, %v2525
      %v2555 = vpack.c.bf16 %v2528, %v2527
      %v2556 = vpack.c.bf16 %v2530, %v2529
      %v2557 = vpack.c.bf16 %v2532, %v2531
      %v2558 = vpack.c.bf16 %v2534, %v2533
      %v2559 = vpack.c.bf16 %v2536, %v2535
      %v2560 = vpack.c.bf16 %v2538, %v2537
      %v2561 = vpack.c.bf16 %v2540, %v2539
      %v2562 = vpack.c.bf16 %v2542, %v2541
      %v2563 = vpack.c.bf16 %v2544, %v2543
      %v2564 = vpack.c.bf16 %v2546, %v2545
      %v2565 = vpack.c.bf16 %v2548, %v2547
      %v2566 = vpack.c.bf16 %v2550, %v2549
      %v2583 = vunpack.c.l.b16 %v2551
      %v2584 = vunpack.c.h.b16 %v2551
      %v2585 = vunpack.c.l.b16 %v2552
      %v2586 = vunpack.c.h.b16 %v2552
      %v2587 = vunpack.c.l.b16 %v2553
      %v2588 = vunpack.c.h.b16 %v2553
      %v2589 = vunpack.c.l.b16 %v2554
      %v2590 = vunpack.c.h.b16 %v2554
      %v2591 = vunpack.c.l.b16 %v2555
      %v2592 = vunpack.c.h.b16 %v2555
      %v2593 = vunpack.c.l.b16 %v2556
      %v2594 = vunpack.c.h.b16 %v2556
      %v2595 = vunpack.c.l.b16 %v2557
      %v2596 = vunpack.c.h.b16 %v2557
      %v2597 = vunpack.c.l.b16 %v2558
      %v2598 = vunpack.c.h.b16 %v2558
      %v2599 = vunpack.c.l.b16 %v2559
      %v2600 = vunpack.c.h.b16 %v2559
      %v2601 = vunpack.c.l.b16 %v2560
      %v2602 = vunpack.c.h.b16 %v2560
      %v2603 = vunpack.c.l.b16 %v2561
      %v2604 = vunpack.c.h.b16 %v2561
      %v2605 = vunpack.c.l.b16 %v2562
      %v2606 = vunpack.c.h.b16 %v2562
      %v2607 = vunpack.c.l.b16 %v2563
      %v2608 = vunpack.c.h.b16 %v2563
      %v2609 = vunpack.c.l.b16 %v2564
      %v2610 = vunpack.c.h.b16 %v2564
      %v2611 = vunpack.c.l.b16 %v2565
      %v2612 = vunpack.c.h.b16 %v2565
      %v2613 = vunpack.c.l.b16 %v2566
      %v2614 = vunpack.c.h.b16 %v2566
      %v2615 = vpack.c.b16 %v2583, %v2583
      %v2616 = vpack.c.b16 %v2584, %v2584
      %v2617 = vpack.c.b16 %v2585, %v2585
      %v2618 = vpack.c.b16 %v2586, %v2586
      %v2619 = vpack.c.b16 %v2587, %v2587
      %v2620 = vpack.c.b16 %v2588, %v2588
      %v2621 = vpack.c.b16 %v2589, %v2589
      %v2622 = vpack.c.b16 %v2590, %v2590
      %v2623 = vpack.c.b16 %v2591, %v2591
      %v2624 = vpack.c.b16 %v2592, %v2592
      %v2625 = vpack.c.b16 %v2593, %v2593
      %v2626 = vpack.c.b16 %v2594, %v2594
      %v2627 = vpack.c.b16 %v2595, %v2595
      %v2628 = vpack.c.b16 %v2596, %v2596
      %v2629 = vpack.c.b16 %v2597, %v2597
      %v2630 = vpack.c.b16 %v2598, %v2598
      %v2631 = vpack.c.b16 %v2599, %v2599
      %v2632 = vpack.c.b16 %v2600, %v2600
      %v2633 = vpack.c.b16 %v2601, %v2601
      %v2634 = vpack.c.b16 %v2602, %v2602
      %v2635 = vpack.c.b16 %v2603, %v2603
      %v2636 = vpack.c.b16 %v2604, %v2604
      %v2637 = vpack.c.b16 %v2605, %v2605
      %v2638 = vpack.c.b16 %v2606, %v2606
      %v2639 = vpack.c.b16 %v2607, %v2607
      %v2640 = vpack.c.b16 %v2608, %v2608
      %v2641 = vpack.c.b16 %v2609, %v2609
      %v2642 = vpack.c.b16 %v2610, %v2610
      %v2643 = vpack.c.b16 %v2611, %v2611
      %v2644 = vpack.c.b16 %v2612, %v2612
      %v2645 = vpack.c.b16 %v2613, %v2613
      %v2646 = vpack.c.b16 %v2614, %v2614
      %2679 = vst [vmem:[%s231] sm:$0xf] %v2615
      %2680 = vst [vmem:[%s231 + $0x4] sm:$0xf] %v2616
      %2681 = vst [vmem:[%s231 + $0x8] sm:$0xf] %v2617
      %2682 = vst [vmem:[%s231 + $0xc] sm:$0xf] %v2618
      %2683 = vst [vmem:[%s231 + $0x10] sm:$0xf] %v2619
      %2684 = vst [vmem:[%s231 + $0x14] sm:$0xf] %v2620
      %2685 = vst [vmem:[%s231 + $0x18] sm:$0xf] %v2621
      %2686 = vst [vmem:[%s231 + $0x1c] sm:$0xf] %v2622
      %2687 = vst [vmem:[%s231 + $0x20] sm:$0xf] %v2623
      %2688 = vst [vmem:[%s231 + $0x24] sm:$0xf] %v2624
      %2689 = vst [vmem:[%s231 + $0x28] sm:$0xf] %v2625
      %2690 = vst [vmem:[%s231 + $0x2c] sm:$0xf] %v2626
      %2691 = vst [vmem:[%s231 + $0x30] sm:$0xf] %v2627
      %2692 = vst [vmem:[%s231 + $0x34] sm:$0xf] %v2628
      %2693 = vst [vmem:[%s231 + $0x38] sm:$0xf] %v2629
      %2694 = vst [vmem:[%s231 + $0x3c] sm:$0xf] %v2630
      %2695 = vst [vmem:[%s231 + $0x40] sm:$0xf] %v2631
      %2696 = vst [vmem:[%s231 + $0x44] sm:$0xf] %v2632
      %2697 = vst [vmem:[%s231 + $0x48] sm:$0xf] %v2633
      %2698 = vst [vmem:[%s231 + $0x4c] sm:$0xf] %v2634
      %2699 = vst [vmem:[%s231 + $0x50] sm:$0xf] %v2635
      %2700 = vst [vmem:[%s231 + $0x54] sm:$0xf] %v2636
      %2701 = vst [vmem:[%s231 + $0x58] sm:$0xf] %v2637
      %2702 = vst [vmem:[%s231 + $0x5c] sm:$0xf] %v2638
      %2703 = vst [vmem:[%s231 + $0x60] sm:$0xf] %v2639
      %2704 = vst [vmem:[%s231 + $0x64] sm:$0xf] %v2640
      %2705 = vst [vmem:[%s231 + $0x68] sm:$0xf] %v2641
      %2706 = vst [vmem:[%s231 + $0x6c] sm:$0xf] %v2642
      %2707 = vst [vmem:[%s231 + $0x70] sm:$0xf] %v2643
      %2708 = vst [vmem:[%s231 + $0x74] sm:$0xf] %v2644
      %2709 = vst [vmem:[%s231 + $0x78] sm:$0xf] %v2645
      %2710 = vst [vmem:[%s231 + $0x7c] sm:$0xf] %v2646
      %v2711 = vadd.f32 %v2519, %v2520
      %v2712 = vadd.f32 %v2711, %v2521
      %v2713 = vadd.f32 %v2712, %v2522
      %v2714 = vadd.f32 %v2713, %v2523
      %v2715 = vadd.f32 %v2714, %v2524
      %v2716 = vadd.f32 %v2715, %v2525
      %v2717 = vadd.f32 %v2716, %v2526
      %v2718 = vadd.f32 %v2717, %v2527
      %v2719 = vadd.f32 %v2718, %v2528
      %v2720 = vadd.f32 %v2719, %v2529
      %v2721 = vadd.f32 %v2720, %v2530
      %v2722 = vadd.f32 %v2721, %v2531
      %v2723 = vadd.f32 %v2722, %v2532
      %v2724 = vadd.f32 %v2723, %v2533
      %v2725 = vadd.f32 %v2724, %v2534
      %v2726 = vadd.f32 %v2725, %v2535
      %v2727 = vadd.f32 %v2726, %v2536
      %v2728 = vadd.f32 %v2727, %v2537
      %v2729 = vadd.f32 %v2728, %v2538
      %v2730 = vadd.f32 %v2729, %v2539
      %v2731 = vadd.f32 %v2730, %v2540
      %v2732 = vadd.f32 %v2731, %v2541
      %v2733 = vadd.f32 %v2732, %v2542
      %v2734 = vadd.f32 %v2733, %v2543
      %v2735 = vadd.f32 %v2734, %v2544
      %v2736 = vadd.f32 %v2735, %v2545
      %v2737 = vadd.f32 %v2736, %v2546
      %v2738 = vadd.f32 %v2737, %v2547
      %v2739 = vadd.f32 %v2738, %v2548
      %v2740 = vadd.f32 %v2739, %v2549
      %v2741 = vadd.f32 %v2740, %v2550
      %v2742 = vrot.slane %v2741, 4
      %v2743 = vadd.f32 %v2741, %v2742
      %v2744 = vrot.slane %v2743, 2
      %v2745 = vadd.f32 %v2743, %v2744
      %v2746 = vrot.slane %v2745, 1
      %v2747 = vadd.f32 %v2745, %v2746
      %v2748 = vmul.f32 %v2519, %v2519
      %v2749 = vmul.f32 %v2520, %v2520
      %v2750 = vmul.f32 %v2521, %v2521
      %v2751 = vmul.f32 %v2522, %v2522
      %v2752 = vmul.f32 %v2523, %v2523
      %v2753 = vmul.f32 %v2524, %v2524
      %v2754 = vmul.f32 %v2525, %v2525
      %v2755 = vmul.f32 %v2526, %v2526
      %v2756 = vmul.f32 %v2527, %v2527
      %v2757 = vmul.f32 %v2528, %v2528
      %v2758 = vmul.f32 %v2529, %v2529
      %v2759 = vmul.f32 %v2530, %v2530
      %v2760 = vmul.f32 %v2531, %v2531
      %v2761 = vmul.f32 %v2532, %v2532
      %v2762 = vmul.f32 %v2533, %v2533
      %v2763 = vmul.f32 %v2534, %v2534
      %v2764 = vmul.f32 %v2535, %v2535
      %v2765 = vmul.f32 %v2536, %v2536
      %v2766 = vmul.f32 %v2537, %v2537
      %v2767 = vmul.f32 %v2538, %v2538
      %v2768 = vmul.f32 %v2539, %v2539
      %v2769 = vmul.f32 %v2540, %v2540
      %v2770 = vmul.f32 %v2541, %v2541
      %v2771 = vmul.f32 %v2542, %v2542
      %v2772 = vmul.f32 %v2543, %v2543
      %v2773 = vmul.f32 %v2544, %v2544
      %v2774 = vmul.f32 %v2545, %v2545
      %v2775 = vmul.f32 %v2546, %v2546
      %v2776 = vmul.f32 %v2547, %v2547
      %v2777 = vmul.f32 %v2548, %v2548
      %v2778 = vmul.f32 %v2549, %v2549
      %v2779 = vmul.f32 %v2550, %v2550
      %v2780 = vadd.f32 %v2748, %v2749
      %v2781 = vadd.f32 %v2780, %v2750
      %v2782 = vadd.f32 %v2781, %v2751
      %v2783 = vadd.f32 %v2782, %v2752
      %v2784 = vadd.f32 %v2783, %v2753
      %v2785 = vadd.f32 %v2784, %v2754
      %v2786 = vadd.f32 %v2785, %v2755
      %v2787 = vadd.f32 %v2786, %v2756
      %v2788 = vadd.f32 %v2787, %v2757
      %v2789 = vadd.f32 %v2788, %v2758
      %v2790 = vadd.f32 %v2789, %v2759
      %v2791 = vadd.f32 %v2790, %v2760
      %v2792 = vadd.f32 %v2791, %v2761
      %v2793 = vadd.f32 %v2792, %v2762
      %v2794 = vadd.f32 %v2793, %v2763
      %v2795 = vadd.f32 %v2794, %v2764
      %v2796 = vadd.f32 %v2795, %v2765
      %v2797 = vadd.f32 %v2796, %v2766
      %v2798 = vadd.f32 %v2797, %v2767
      %v2799 = vadd.f32 %v2798, %v2768
      %v2800 = vadd.f32 %v2799, %v2769
      %v2801 = vadd.f32 %v2800, %v2770
      %v2802 = vadd.f32 %v2801, %v2771
      %v2803 = vadd.f32 %v2802, %v2772
      %v2804 = vadd.f32 %v2803, %v2773
      %v2805 = vadd.f32 %v2804, %v2774
      %v2806 = vadd.f32 %v2805, %v2775
      %v2807 = vadd.f32 %v2806, %v2776
      %v2808 = vadd.f32 %v2807, %v2777
      %v2809 = vadd.f32 %v2808, %v2778
      %v2810 = vadd.f32 %v2809, %v2779
      %v2811 = vrot.slane %v2810, 4
      %v2812 = vadd.f32 %v2810, %v2811
      %v2813 = vrot.slane %v2812, 2
      %v2814 = vadd.f32 %v2812, %v2813
      %v2815 = vrot.slane %v2814, 1
      %v2816 = vadd.f32 %v2814, %v2815
      %vm2817 = vcmask 1040384
      %v2818 = vsel %vm2817, %v2747, %v2816
      %vm2819 = vcmask 1041408
      %v2820 = vsel %vm2819, %v2818, 0.0
      %2821 = vst [vmem:[%s235] sm:$0xff] %v2820
      %p2822 = scmp.lt.s32.totalorder %s17, 3
      %s2823 = scalar_select %p2822, %s17, 3
      %s2824 = smul.addr %s2823, 32
      %s2825 = smul.addr %s2824, 4
      %s2826 = scalar_lea.vmem %s4, %s2825
      %p2827 = scmp.lt.s32.totalorder %s17, 3
      %s2828 = scalar_select %p2827, %s17, 3
      %s2829 = smul.addr %s2828, 8
      %s2830 = scalar_lea.vmem %s5, %s2829
      // Predicated region
      $region37: #{bottleneck_forward.5} parent=35 // pred_check
        %p2831 = pneg %p124
      $region38: #{bottleneck_forward.5} parent=35 // pred_check_branch
        %2833 = sbr.rel (%p2831) target = $region40
      $region39: #{bottleneck_forward.5} parent=35 // pred_region
        _
      $region40: #{bottleneck_forward.5} parent=35 // pred_fallthru
        _
      // Predicated region
      $region41: #{bottleneck_forward.5} parent=35 // pred_check
        %p2834 = pneg %p150
      $region42: #{bottleneck_forward.5} parent=35 // pred_check_branch
        %2836 = sbr.rel (%p2834) target = $region44
      $region43: #{bottleneck_forward.5} parent=35 // pred_region
        _
      $region44: #{bottleneck_forward.5} parent=35 // pred_fallthru
        _
    $region36: #{bottleneck_forward.5} parent=5 // pred_fallthru
      _
    %p2837 = scmp.le.s32.totalorder 2, %s12
    // Predicated region
    $region45: #{bottleneck_forward.5} parent=5 // pred_check
      %p2838 = pneg %p2837
    $region46: #{bottleneck_forward.5} parent=5 // pred_check_branch
      %2840 = sbr.rel (%p2838) target = $region48
    $region47: #{bottleneck_forward.5} parent=5 // pred_region
      %s2841 = ssub.s32 %s12, 2
      // Predicated region
      $region49: #{bottleneck_forward.5} parent=47 // pred_check
        %p2842 = pneg %p130
      $region50: #{bottleneck_forward.5} parent=47 // pred_check_branch
        %2844 = sbr.rel (%p2842) target = $region52
      $region51: #{bottleneck_forward.5} parent=47 // pred_region
        %p2845 = scmp.lt.s32.totalorder %s18, 3
        %s2846 = scalar_select %p2845, %s18, 3
        %s2847 = smul.addr %s2846, 32
        %s2848 = smul.addr %s2847, 4
        %s2849 = scalar_lea.vmem %s4, %s2848
      $region52: #{bottleneck_forward.5} parent=47 // pred_fallthru
        _
      // Predicated region
      $region53: #{bottleneck_forward.5} parent=47 // pred_check
        %p2850 = pneg %p156
      $region54: #{bottleneck_forward.5} parent=47 // pred_check_branch
        %2852 = sbr.rel (%p2850) target = $region56
      $region55: #{bottleneck_forward.5} parent=47 // pred_region
        %p2853 = scmp.lt.s32.totalorder %s18, 3
        %s2854 = scalar_select %p2853, %s18, 3
        %s2855 = smul.addr %s2854, 8
        %s2856 = scalar_lea.vmem %s5, %s2855
      $region56: #{bottleneck_forward.5} parent=47 // pred_fallthru
        _
    $region48: #{bottleneck_forward.5} parent=5 // pred_fallthru
      _
  $region6: #{bottleneck_forward.5} parent=0 // loop_footer
    %s16 = sadd.s32 1, %s12
  $region7: #{bottleneck_forward.5} parent=0 // loop_footer_branch
    %11 = sbr.rel target = $region3
  $region8: #{bottleneck_forward.5} parent=0 // loop_exit
    _

</llo_original>
